<compile_context>
chip_gen: v5e
topology: v5e:2x2
jax: 0.10.0
libtpu: 0.0.40
codegen_flags: <defaults>
</compile_context>

<pallas_src>
import functools

import numpy as np

import jax
import jax.numpy as jnp
from jax.experimental import pallas as pl
from jax.experimental.pallas import tpu as pltpu

EPS = 1e-5
MXU_DTYPE = jnp.bfloat16          # matmul-input dtype; accumulation is f32 everywhere

_VMEM_LIMIT = None


def _vmem_limit_bytes():
    """Per-generation VMEM budget (v7x: 64 MiB physical, v5e/v6e: 128 MiB)."""
    global _VMEM_LIMIT
    if _VMEM_LIMIT is None:
        try:
            cap = pltpu.get_tpu_info().vmem_capacity_bytes
            _VMEM_LIMIT = int(min(cap * 3 // 4, 96 * 1024 * 1024))
        except Exception:
            _VMEM_LIMIT = 32 * 1024 * 1024
    return _VMEM_LIMIT


def _compiler_params():
    # Batch grid axis marked parallel (2-TC sharding on v7x, harmless elsewhere).
    return pltpu.CompilerParams(dimension_semantics=("parallel",),
                                vmem_limit_bytes=_vmem_limit_bytes())


def _interior_mask_np(H, W):
    """1.0 on interior pixels of the (H+2, W+2) padded grid, 0.0 on the border."""
    Hp, Wp = H + 2, W + 2
    m = np.zeros((Hp, Wp), np.float32)
    m[1:H + 1, 1:W + 1] = 1.0
    return m.reshape(1, Hp * Wp)


def _fold_bn(bn, c):
    s = bn["gamma"] / jnp.sqrt(bn["var"] + EPS)
    t = bn["beta"] - bn["mean"] * s
    return s.reshape(c, 1), t.reshape(c, 1)


# ----------------------- fused DenseBlock / conv3x3 kernel -------------------

def dense_block(sources, layer_params, growth, H, W, *, include_input, with_bn):
    """L layers of (BN -> ReLU ->) Conv2d(3x3, pad=1, bias) in ONE pallas_call.

    sources:      list of (N, C_i, HWp) padded-flat activations (channel concat
                  of the sources is fused here -- never materialized in HBM).
    layer_params: list of dicts {"w": (3,3,cin_l,growth), "b": (growth,),
                                 optional "bn": {gamma,beta,mean,var}}.
    Returns (N, c_out, HWp) padded-flat with
        c_out = (sum C_i if include_input else 0) + L*growth.
    (include_input=True  == DenseBlock(upsample=False);
     include_input=False == DenseBlock(upsample=True) / Bottleneck / firstconv.)
    """
    src_channels = tuple(int(s.shape[1]) for s in sources)
    N = sources[0].shape[0]
    Hp, Wp = H + 2, W + 2
    HWp = Hp * Wp
    SL = H * Wp - 2                         # junk-column accumulator length
    C0 = sum(src_channels)
    L = len(layer_params)
    c_out = (C0 if include_input else 0) + L * growth

    mask = jnp.asarray(_interior_mask_np(H, W))
    tap_offsets = tuple(kh * Wp + kw for kh in range(3) for kw in range(3))

    ops = list(sources) + [mask]
    in_specs = [pl.BlockSpec((None, c, HWp), lambda n: (n, 0, 0)) for c in src_channels]
    in_specs.append(pl.BlockSpec((1, HWp), lambda n: (0, 0)))

    cins = []
    for l, p in enumerate(layer_params):
        cin = C0 + l * growth
        cins.append(cin)
        if with_bn:
            s, t = _fold_bn(p["bn"], cin)
            ops += [s, t]
            in_specs += [pl.BlockSpec((cin, 1), lambda n: (0, 0)),
                         pl.BlockSpec((cin, 1), lambda n: (0, 0))]
        # merged tap weight: wcat[g, tap*cin + c] = w[tap_h, tap_w, c, g]
        wcat = jnp.transpose(p["w"].reshape(9, cin, growth),
                             (2, 0, 1)).reshape(growth, 9 * cin).astype(MXU_DTYPE)
        ops += [wcat, p["b"].reshape(growth, 1)]
        in_specs += [pl.BlockSpec((growth, 9 * cin), lambda n: (0, 0)),
                     pl.BlockSpec((growth, 1), lambda n: (0, 0))]

    S = len(sources)
    n_per_layer = 4 if with_bn else 2

    def kernel(*refs):
        src_refs = refs[:S]
        mask_ref = refs[S]
        out_ref = refs[S + 1 + n_per_layer * L]
        m = mask_ref[...] > 0.5                             # (1, HWp) interior mask

        if include_input:                                   # fused source concat
            off = 0
            for s in range(S):
                out_ref[off:off + src_channels[s], :] = src_refs[s][...]
                off += src_channels[s]

        for l in range(L):
            cin = cins[l]
            base = S + 1 + n_per_layer * l
            if include_input:
                prefix = out_ref[0:cin, :]                  # sources + previous layers
            else:
                parts = [r[...] for r in src_refs]
                if l > 0:
                    parts.append(out_ref[0:l * growth, :])
                prefix = parts[0] if len(parts) == 1 else jnp.concatenate(parts, axis=0)

            if with_bn:
                scale = refs[base][...]
                shift = refs[base + 1][...]
                w_ref, b_ref = refs[base + 2], refs[base + 3]
                # fused eval-BN + ReLU; where-select (not multiply) so junk/NaN
                # in the padded border can never leak into the conv.
                h = jnp.where(m, jnp.maximum(prefix * scale + shift, 0.0), 0.0)
            else:
                w_ref, b_ref = refs[base], refs[base + 1]
                h = jnp.where(m, prefix, 0.0)

            hb = h.astype(MXU_DTYPE)                        # cast ONCE per layer
            # in-VMEM im2col: stack the 9 shifted tap slices along the K axis
            hcat = jnp.concatenate([hb[:, t0:t0 + SL] for t0 in tap_offsets], axis=0)
            acc = jnp.dot(w_ref[...], hcat, preferred_element_type=jnp.float32)

            r0 = (C0 if include_input else 0) + l * growth
            # single wide lane-dense store (padded-flat layout, junk border OK)
            out_ref[r0:r0 + growth, Wp + 1:Wp + 1 + SL] = acc + b_ref[...]

    return pl.pallas_call(
        kernel,
        out_shape=jax.ShapeDtypeStruct((N, c_out, HWp), jnp.float32),
        grid=(N,),
        in_specs=in_specs,
        out_specs=pl.BlockSpec((None, c_out, HWp), lambda n: (n, 0, 0)),
        compiler_params=_compiler_params(),
    )(*ops)


# -------------------- TransitionDown: BN+ReLU+1x1 conv+pool ------------------

def transition_down(x, p, H, W):
    """Fused BN -> ReLU -> Conv1x1 -> Dropout(id) -> MaxPool2d(2).

    x: (N, C, HWp) padded-flat.  Returns (N, Cout, HWp_half) padded-flat.
    Full-res 1x1-conv matmul, shifted-slice 2x2 max, then a 0/1 decimation
    matmul writes the half-res padded-flat output in one wide store.
    """
    N, C = x.shape[0], int(x.shape[1])
    Hp, Wp = H + 2, W + 2
    HWp = Hp * Wp
    H2, W2 = H // 2, W // 2
    Hp2, Wp2 = H2 + 2, W2 + 2
    HWp2 = Hp2 * Wp2
    L2 = HWp - Wp - 1
    Cout = p["conv"]["w"].shape[1]

    mask = jnp.asarray(_interior_mask_np(H, W))
    # decimation/scatter: 2x2-max at flat pos (2i+1)*Wp+2j+1 -> half-res (i+1, j+1)
    D = np.zeros((L2, HWp2), np.float32)
    for i in range(H2):
        for j in range(W2):
            D[(2 * i + 1) * Wp + 2 * j + 1, (i + 1) * Wp2 + (j + 1)] = 1.0
    D = jnp.asarray(D)

    scale, shift = _fold_bn(p["bn"], C)
    w1 = jnp.transpose(p["conv"]["w"], (1, 0)).astype(MXU_DTYPE)     # (Cout, C)
    b = p["conv"]["b"].reshape(Cout, 1)

    def kernel(x_ref, m_ref, s_ref, t_ref, w_ref, b_ref, d_ref, o_ref):
        m = m_ref[...] > 0.5
        h = jnp.where(m, jnp.maximum(x_ref[...] * s_ref[...] + t_ref[...], 0.0), 0.0)
        y = jnp.dot(w_ref[...], h.astype(MXU_DTYPE),
                    preferred_element_type=jnp.float32) + b_ref[...]  # (Cout, HWp)
        m1 = jnp.maximum(y[:, :HWp - 1], y[:, 1:])                     # horizontal pair
        m2 = jnp.maximum(m1[:, :L2], m1[:, Wp:Wp + L2])                # vertical pair
        o_ref[...] = jnp.dot(m2, d_ref[...], preferred_element_type=jnp.float32)

    return pl.pallas_call(
        kernel,
        out_shape=jax.ShapeDtypeStruct((N, Cout, HWp2), jnp.float32),
        grid=(N,),
        in_specs=[pl.BlockSpec((None, C, HWp), lambda n: (n, 0, 0)),
                  pl.BlockSpec((1, HWp), lambda n: (0, 0)),
                  pl.BlockSpec((C, 1), lambda n: (0, 0)),
                  pl.BlockSpec((C, 1), lambda n: (0, 0)),
                  pl.BlockSpec((Cout, C), lambda n: (0, 0)),
                  pl.BlockSpec((Cout, 1), lambda n: (0, 0)),
                  pl.BlockSpec((L2, HWp2), lambda n: (0, 0))],
        out_specs=pl.BlockSpec((None, Cout, HWp2), lambda n: (n, 0, 0)),
        compiler_params=_compiler_params(),
    )(x, mask, scale, shift, w1, b, D)


# --------------- TransitionUp: sub-pixel ConvTranspose2d(k3, s2) -------------

def transition_up(x, z, wt, b, H, W):
    """ConvTranspose2d(k=3, s=2, p=0, bias) on cat([x, broadcast(z)], C) followed
    by center-crop to (2H, 2W), emitted directly as padded-flat output.

    x: (N, Cmain, HWp_low) padded-flat, z: (N, Cz), wt: (Cmain+Cz, Cout, 3, 3).
    Sub-pixel decomposition: 4 output parities, <=4 taps each; all parities run
    as one merged matmul; 0/1 scatter matmuls interleave the parities straight
    into the (N, Cout, (2H+2)*(2W+2)) padded-flat output.
    """
    N, Cmain = x.shape[0], int(x.shape[1])
    Cz = int(z.shape[1])
    Cin = Cmain + Cz
    Cout = wt.shape[1]
    Wpl = W + 2
    HWp = (H + 2) * Wpl
    SLt = H * Wpl
    Hu, Wu = 2 * H, 2 * W
    Wpu = Wu + 2
    HWpu = (Hu + 2) * Wpu

    mask = jnp.asarray(_interior_mask_np(H, W))

    # merged sub-pixel weights; tap (da,db) reads inp[a+da, b+db]; kernel index
    # used for parity (py,px) is (ky,kx) = (py-2*da, px-2*db) when <= 2.
    dadb = [(-1, -1), (-1, 0), (0, -1), (0, 0)]
    parities = [(0, 0), (0, 1), (1, 0), (1, 1)]
    wT = jnp.transpose(wt, (2, 3, 1, 0))                     # (3,3,Cout,Cin)
    zero = jnp.zeros((Cout, Cin), jnp.float32)
    rows = []
    for (py, px) in parities:
        blks = []
        for (da, db) in dadb:
            ky, kx = py - 2 * da, px - 2 * db
            blks.append(wT[ky, kx] if (ky <= 2 and kx <= 2) else zero)
        rows.append(jnp.concatenate(blks, axis=1))
    W_all = jnp.concatenate(rows, axis=0).astype(MXU_DTYPE)  # (4*Cout, 4*Cin)

    # scatter matrices: acc_p column a*Wpl+b -> up-res padded pos (2a+py+1, 2b+px+1)
    E = np.zeros((4, SLt, HWpu), np.float32)
    for pidx, (py, px) in enumerate(parities):
        for a in range(H):
            for c in range(W):
                E[pidx, a * Wpl + c, (2 * a + py + 1) * Wpu + (2 * c + px + 1)] = 1.0
    E = jnp.asarray(E)

    tap_offs = tuple((da + 1) * Wpl + (db + 1) for (da, db) in dadb)   # 0,1,Wpl,Wpl+1
    b2 = b.reshape(Cout, 1)
    z3 = z.reshape(N, Cz, 1)

    def kernel(x_ref, z_ref, m_ref, w_ref, b_ref, e_ref, o_ref):
        m = m_ref[...] > 0.5
        xm = jnp.where(m, x_ref[...], 0.0)                   # (Cmain, HWp)
        zm = jnp.where(m, z_ref[...], 0.0)                   # fused z broadcast+concat
        hb = jnp.concatenate([xm, zm], axis=0).astype(MXU_DTYPE)
        hcat = jnp.concatenate([hb[:, o:o + SLt] for o in tap_offs], axis=0)
        acc = jnp.dot(w_ref[...], hcat,
                      preferred_element_type=jnp.float32)    # (4*Cout, SLt)
        bv = b_ref[...]
        total = jnp.zeros((Cout, HWpu), jnp.float32)
        for pidx in range(4):
            total = total + jnp.dot(acc[pidx * Cout:(pidx + 1) * Cout] + bv,
                                    e_ref[pidx],
                                    preferred_element_type=jnp.float32)
        o_ref[...] = total

    return pl.pallas_call(
        kernel,
        out_shape=jax.ShapeDtypeStruct((N, Cout, HWpu), jnp.float32),
        grid=(N,),
        in_specs=[pl.BlockSpec((None, Cmain, HWp), lambda n: (n, 0, 0)),
                  pl.BlockSpec((None, Cz, 1), lambda n: (n, 0, 0)),
                  pl.BlockSpec((1, HWp), lambda n: (0, 0)),
                  pl.BlockSpec((4 * Cout, 4 * Cin), lambda n: (0, 0)),
                  pl.BlockSpec((Cout, 1), lambda n: (0, 0)),
                  pl.BlockSpec((4, SLt, HWpu), lambda n: (0, 0, 0))],
        out_specs=pl.BlockSpec((None, Cout, HWpu), lambda n: (n, 0, 0)),
        compiler_params=_compiler_params(),
    )(x, z3, mask, W_all, b2, E)


# ------------------------- final 1x1 conv + sigmoid --------------------------

def final_conv_sigmoid(x, w, b, H, W):
    """Conv2d(1x1, bias) + Sigmoid on a padded-flat input; lane-dense output."""
    N, C = x.shape[0], int(x.shape[1])
    Wp = W + 2
    HWp = (H + 2) * Wp
    M = H * W
    Cout = w.shape[1]

    mask = jnp.asarray(_interior_mask_np(H, W))
    Df = np.zeros((HWp, M), np.float32)                      # interior gather
    for i in range(H):
        for j in range(W):
            Df[(i + 1) * Wp + (j + 1), i * W + j] = 1.0
    Df = jnp.asarray(Df)
    w1 = jnp.transpose(w, (1, 0)).astype(MXU_DTYPE)
    b2 = b.reshape(Cout, 1)

    def kernel(x_ref, m_ref, w_ref, b_ref, d_ref, o_ref):
        m = m_ref[...] > 0.5
        xm = jnp.where(m, x_ref[...], 0.0)
        y = jnp.dot(w_ref[...], xm.astype(MXU_DTYPE),
                    preferred_element_type=jnp.float32) + b_ref[...]   # (Cout, HWp)
        yi = jnp.dot(y, d_ref[...], preferred_element_type=jnp.float32)  # (Cout, M)
        o_ref[...] = jax.nn.sigmoid(yi)

    out = pl.pallas_call(
        kernel,
        out_shape=jax.ShapeDtypeStruct((N, Cout, M), jnp.float32),
        grid=(N,),
        in_specs=[pl.BlockSpec((None, C, HWp), lambda n: (n, 0, 0)),
                  pl.BlockSpec((1, HWp), lambda n: (0, 0)),
                  pl.BlockSpec((Cout, C), lambda n: (0, 0)),
                  pl.BlockSpec((Cout, 1), lambda n: (0, 0)),
                  pl.BlockSpec((HWp, M), lambda n: (0, 0))],
        out_specs=pl.BlockSpec((None, Cout, M), lambda n: (n, 0, 0)),
        compiler_params=_compiler_params(),
    )(x, mask, w1, b2, Df)
    return out.reshape(N, Cout, H, W)


# ------------------------------ tiny MLP layers -------------------------------
# Far below the (8,128) tile -> plain XLA (per performance review) instead of
# dedicated pallas_calls; they fuse with surrounding ops and run beside the
# conv stack.

def string_net_forward(seq, p):
    h = jnp.maximum(seq @ p["w1"] + p["b1"], 0.0)
    return h @ p["w2"] + p["b2"]


def seq_head_forward(z, p):
    # TODO(synk): exact seq2loc LinearLayer definition not in the spec; using Linear + ReLU.
    return jnp.maximum(z @ p["w"] + p["b"], 0.0)


# --------------------------- parameter construction --------------------------

class ParamGen:
    def __init__(self, key):
        self.key = key

    def _next(self):
        self.key, k = jax.random.split(self.key)
        return k

    def normal(self, shape, scale=0.1):
        return scale * jax.random.normal(self._next(), shape, jnp.float32)

    def uniform(self, shape, lo, hi):
        return jax.random.uniform(self._next(), shape, jnp.float32, lo, hi)

    def bn(self, c):
        return dict(gamma=self.uniform((c,), 0.8, 1.2),
                    beta=self.normal((c,)),
                    mean=self.normal((c,)),
                    var=self.uniform((c,), 0.5, 1.5))

    def conv3(self, cin, cout):
        return dict(w=self.normal((3, 3, cin, cout)), b=self.normal((cout,)))

    def conv1(self, cin, cout):
        return dict(w=self.normal((cin, cout)), b=self.normal((cout,)))

    def convT(self, cin, cout):
        return dict(wt=self.normal((cin, cout, 3, 3)), b=self.normal((cout,)))

    def lin(self, cin, cout):
        return dict(w=self.normal((cin, cout)), b=self.normal((cout,)))


def build_params(key, in_channels, down_blocks, up_blocks, bottleneck_layers,
                 growth_rate, out_chans_first_conv, seq_in_dim, string_hidden,
                 string_out):
    g = ParamGen(key)
    P = {}
    P["string_net"] = dict(w1=g.normal((seq_in_dim, string_hidden)),
                           b1=g.normal((string_hidden,)),
                           w2=g.normal((string_hidden, string_out)),
                           b2=g.normal((string_out,)))
    P["firstconv"] = g.conv3(in_channels, out_chans_first_conv)
    cur = out_chans_first_conv

    skip_counts = []
    P["dense_down"], P["trans_down"] = [], []
    for nb in down_blocks:
        layers, c = [], cur
        for _ in range(nb):
            layers.append(dict(bn=g.bn(c), conv=g.conv3(c, growth_rate)))
            c += growth_rate
        P["dense_down"].append(layers)
        cur += growth_rate * nb
        skip_counts.insert(0, cur)
        P["trans_down"].append(dict(bn=g.bn(cur), conv=g.conv1(cur, cur)))

    layers, c = [], cur
    for _ in range(bottleneck_layers):
        layers.append(dict(bn=g.bn(c), conv=g.conv3(c, growth_rate)))
        c += growth_rate
    P["bottleneck"] = layers
    prev = growth_rate * bottleneck_layers

    P["seq_heads"], P["trans_up"], P["dense_up"] = [], [], []
    n_up = len(up_blocks)
    for i in range(n_up - 1):
        nseq = int(string_out / 2 ** i)
        P["seq_heads"].append(g.lin(string_out, nseq))
        P["trans_up"].append(g.convT(prev + nseq, prev))
        cur = prev + skip_counts[i]
        layers, c = [], cur
        for _ in range(up_blocks[i]):
            layers.append(dict(bn=g.bn(c), conv=g.conv3(c, growth_rate)))
            c += growth_rate
        P["dense_up"].append(layers)
        prev = growth_rate * up_blocks[i]
        cur += prev

    nseq = int(string_out / 2 ** (n_up - 1))
    P["seq_heads"].append(g.lin(string_out, nseq))
    P["trans_up"].append(g.convT(prev + nseq, prev))
    cur = prev + skip_counts[-1]
    layers, c = [], cur
    for _ in range(up_blocks[-1]):
        layers.append(dict(bn=g.bn(c), conv=g.conv3(c, growth_rate)))
        c += growth_rate
    P["dense_up"].append(layers)
    cur += growth_rate * up_blocks[-1]
    P["final"] = g.conv1(cur, 1)
    return P


def _as_layers(block_params):
    return [dict(w=q["conv"]["w"], b=q["conv"]["b"], bn=q["bn"]) for q in block_params]


# ---------------------------------- forward ----------------------------------

def _pad_flat(x):
    N, C, H, W = x.shape
    return jnp.pad(x, ((0, 0), (0, 0), (1, 1), (1, 1))).reshape(N, C, (H + 2) * (W + 2))


def fcdensenet_forward(P, im_in, seq_in, down_blocks, up_blocks, growth_rate):
    N, _, H, W = im_in.shape
    x0 = _pad_flat(im_in)               # the only wrapper-side pad in the network

    # firstconv: Conv2d(3x3, pad 1, bias); no BN/ReLU prologue.
    out = dense_block([x0], [P["firstconv"]], P["firstconv"]["w"].shape[-1],
                      H, W, include_input=False, with_bn=False)

    skips = []
    for i in range(len(down_blocks)):
        out = dense_block([out], _as_layers(P["dense_down"][i]), growth_rate,
                          H, W, include_input=True, with_bn=True)
        skips.append((out, H, W))
        out = transition_down(out, P["trans_down"][i], H, W)
        H, W = H // 2, W // 2

    # Bottleneck = DenseBlock(upsample=True): emit only the newly grown features.
    out = dense_block([out], _as_layers(P["bottleneck"]), growth_rate,
                      H, W, include_input=False, with_bn=True)

    z_seq_tmp = string_net_forward(seq_in, P["string_net"])

    n_up = len(up_blocks)
    for i in range(n_up):
        skip, Hs, Ws = skips.pop()
        z = seq_head_forward(z_seq_tmp, P["seq_heads"][i])           # (N, nseq)
        # TransitionUp with the (out, z_seq) concat and the skip concat both
        # fused into the kernels downstream.
        up = transition_up(out, z, P["trans_up"][i]["wt"], P["trans_up"][i]["b"],
                           H, W)
        assert (2 * H, 2 * W) == (Hs, Ws)
        H, W = Hs, Ws
        out = dense_block([up, skip], _as_layers(P["dense_up"][i]), growth_rate,
                          H, W, include_input=(i == n_up - 1), with_bn=True)

    return final_conv_sigmoid(out, P["final"]["w"], P["final"]["b"], H, W)


# ------------------------------------ main ------------------------------------

if __name__ == "__main__":
    IN_CHANNELS = 3
    DOWN_BLOCKS = (2, 2)
    UP_BLOCKS = (2, 2)
    BOTTLENECK_LAYERS = 2
    GROWTH_RATE = 4
    OUT_CHANS_FIRST_CONV = 8
    SEQ_IN_DIM = 8
    STRING_HIDDEN = 16
    STRING_OUT = 8          # string_net.out_layer.out_features

    B, H, W = 2, 16, 16

    key = jax.random.PRNGKey(0)
    k_im, k_seq, k_par = jax.random.split(key, 3)
    im_in = jax.random.normal(k_im, (B, IN_CHANNELS, H, W), jnp.float32)   # NCHW
    seq_in = jax.random.normal(k_seq, (B, SEQ_IN_DIM), jnp.float32)

    params = build_params(k_par, IN_CHANNELS, DOWN_BLOCKS, UP_BLOCKS,
                          BOTTLENECK_LAYERS, GROWTH_RATE, OUT_CHANS_FIRST_CONV,
                          SEQ_IN_DIM, STRING_HIDDEN, STRING_OUT)

    fwd = jax.jit(functools.partial(fcdensenet_forward,
                                    down_blocks=DOWN_BLOCKS,
                                    up_blocks=UP_BLOCKS,
                                    growth_rate=GROWTH_RATE))
    out = jax.block_until_ready(fwd(params, im_in, seq_in))

    assert out.shape == (B, 1, H, W), out.shape
    assert bool(jnp.all(jnp.isfinite(out)))
    assert bool(jnp.all((out >= 0.0) & (out <= 1.0)))   # sigmoid output range
    print("KERNEL_OK")
</pallas_src>

<mosaic_0001>
module attributes {stable_mosaic.version = 11 : i64} {
  func.func @kernel(%arg0: i32, %arg1: memref<1x3x324xf32, #tpu.memory_space<vmem>>, %arg2: memref<1x324xf32, #tpu.memory_space<vmem>>, %arg3: memref<8x27xbf16, #tpu.memory_space<vmem>>, %arg4: memref<8x1xf32, #tpu.memory_space<vmem>>, %arg5: memref<1x8x324xf32, #tpu.memory_space<vmem>>) attributes {dimension_semantics = [#tpu.dimension_semantics<parallel>], iteration_bounds = array<i64: 2>, scalar_prefetch = 0 : i64, scratch_operands = 0 : i64, tpu.core_type = #tpu.core_type<tc>, window_params = [{transform_indices = @transform_0, window_bounds = array<i64: 1, 3, 324>}, {pipeline_mode = #tpu.pipeline_mode<synchronous>, transform_indices = @transform_1, window_bounds = array<i64: 1, 324>}, {pipeline_mode = #tpu.pipeline_mode<synchronous>, transform_indices = @transform_2, window_bounds = array<i64: 8, 27>}, {pipeline_mode = #tpu.pipeline_mode<synchronous>, transform_indices = @transform_3, window_bounds = array<i64: 8, 1>}, {transform_indices = @transform_4, window_bounds = array<i64: 1, 8, 324>}]} {
    %c0 = arith.constant 0 : index
    %c0_0 = arith.constant 0 : index
    %0 = vector.load %arg2[%c0, %c0_0] : memref<1x324xf32, #tpu.memory_space<vmem>>, vector<1x324xf32>
    %cst = arith.constant 5.000000e-01 : f32
    %1 = vector.broadcast %cst : f32 to vector<1x324xf32>
    %2 = arith.cmpf ogt, %0, %1 : vector<1x324xf32>
    %c0_1 = arith.constant 0 : index
    %c0_2 = arith.constant 0 : index
    %c0_3 = arith.constant 0 : index
    %3 = vector.load %arg1[%c0_1, %c0_2, %c0_3] : memref<1x3x324xf32, #tpu.memory_space<vmem>>, vector<1x3x324xf32>
    %4 = vector.shape_cast %3 : vector<1x3x324xf32> to vector<3x324xf32>
    %cst_4 = arith.constant 0.000000e+00 : f32
    %5 = vector.shape_cast %2 : vector<1x324xi1> to vector<1x324xi1>
    %6 = vector.broadcast %5 : vector<1x324xi1> to vector<3x324xi1>
    %7 = vector.broadcast %cst_4 : f32 to vector<3x324xf32>
    %8 = arith.select %6, %4, %7 : vector<3x324xi1>, vector<3x324xf32>
    %9 = arith.truncf %8 : vector<3x324xf32> to vector<3x324xbf16>
    %10 = vector.extract_strided_slice %9 {offsets = [0, 0], sizes = [3, 286], strides = [1, 1]} : vector<3x324xbf16> to vector<3x286xbf16>
    %11 = vector.extract_strided_slice %9 {offsets = [0, 1], sizes = [3, 286], strides = [1, 1]} : vector<3x324xbf16> to vector<3x286xbf16>
    %12 = vector.extract_strided_slice %9 {offsets = [0, 2], sizes = [3, 286], strides = [1, 1]} : vector<3x324xbf16> to vector<3x286xbf16>
    %13 = vector.extract_strided_slice %9 {offsets = [0, 18], sizes = [3, 286], strides = [1, 1]} : vector<3x324xbf16> to vector<3x286xbf16>
    %14 = vector.extract_strided_slice %9 {offsets = [0, 19], sizes = [3, 286], strides = [1, 1]} : vector<3x324xbf16> to vector<3x286xbf16>
    %15 = vector.extract_strided_slice %9 {offsets = [0, 20], sizes = [3, 286], strides = [1, 1]} : vector<3x324xbf16> to vector<3x286xbf16>
    %16 = vector.extract_strided_slice %9 {offsets = [0, 36], sizes = [3, 286], strides = [1, 1]} : vector<3x324xbf16> to vector<3x286xbf16>
    %17 = vector.extract_strided_slice %9 {offsets = [0, 37], sizes = [3, 286], strides = [1, 1]} : vector<3x324xbf16> to vector<3x286xbf16>
    %18 = vector.extract_strided_slice %9 {offsets = [0, 38], sizes = [3, 286], strides = [1, 1]} : vector<3x324xbf16> to vector<3x286xbf16>
    %19 = tpu.concatenate %10, %11, %12, %13, %14, %15, %16, %17, %18 in 0 : vector<3x286xbf16>, vector<3x286xbf16>, vector<3x286xbf16>, vector<3x286xbf16>, vector<3x286xbf16>, vector<3x286xbf16>, vector<3x286xbf16>, vector<3x286xbf16>, vector<3x286xbf16> -> vector<27x286xbf16>
    %c0_5 = arith.constant 0 : index
    %c0_6 = arith.constant 0 : index
    %20 = vector.load %arg3[%c0_5, %c0_6] : memref<8x27xbf16, #tpu.memory_space<vmem>>, vector<8x27xbf16>
    %cst_7 = arith.constant dense<0.000000e+00> : vector<8x286xf32>
    %21 = tpu.matmul %20, %19, %cst_7 {dimension_numbers = #tpu.dot_dimension_numbers<[1], [0], [0], [1], [0, 0, 1, 1], [], []>} : vector<8x27xbf16>, vector<27x286xbf16>, vector<8x286xf32> -> vector<8x286xf32>
    %c0_8 = arith.constant 0 : index
    %c0_9 = arith.constant 0 : index
    %22 = vector.load %arg4[%c0_8, %c0_9] : memref<8x1xf32, #tpu.memory_space<vmem>>, vector<8x1xf32>
    %23 = vector.broadcast %22 : vector<8x1xf32> to vector<8x286xf32>
    %24 = arith.addf %21, %23 : vector<8x286xf32>
    %c0_10 = arith.constant 0 : index
    %c0_11 = arith.constant 0 : index
    %c19 = arith.constant 19 : index
    %25 = vector.load %arg5[%c0_10, %c0_11, %c19] : memref<1x8x324xf32, #tpu.memory_space<vmem>>, vector<1x8x286xf32>
    %26 = vector.shape_cast %25 : vector<1x8x286xf32> to vector<8x286xf32>
    %27 = vector.shape_cast %24 : vector<8x286xf32> to vector<1x8x286xf32>
    tpu.vector_store %arg5[%c0_10, %c0_11, %c19], %27 {strides = array<i32>} : memref<1x8x324xf32, #tpu.memory_space<vmem>>, vector<1x8x286xf32>,
    return
  }
  func.func @transform_0(%arg0: i32) -> (i32, i32, i32) {
    %c0_i32 = arith.constant 0 : i32
    %c0_i32_0 = arith.constant 0 : i32
    %c0_i32_1 = arith.constant 0 : i32
    return %arg0, %c0_i32, %c0_i32_0 : i32, i32, i32
  }
  func.func @transform_1(%arg0: i32) -> (i32, i32) {
    %c0_i32 = arith.constant 0 : i32
    %c0_i32_0 = arith.constant 0 : i32
    %c0_i32_1 = arith.constant 0 : i32
    return %c0_i32, %c0_i32_0 : i32, i32
  }
  func.func @transform_2(%arg0: i32) -> (i32, i32) {
    %c0_i32 = arith.constant 0 : i32
    %c0_i32_0 = arith.constant 0 : i32
    %c0_i32_1 = arith.constant 0 : i32
    return %c0_i32, %c0_i32_0 : i32, i32
  }
  func.func @transform_3(%arg0: i32) -> (i32, i32) {
    %c0_i32 = arith.constant 0 : i32
    %c0_i32_0 = arith.constant 0 : i32
    %c0_i32_1 = arith.constant 0 : i32
    return %c0_i32, %c0_i32_0 : i32, i32
  }
  func.func @transform_4(%arg0: i32) -> (i32, i32, i32) {
    %c0_i32 = arith.constant 0 : i32
    %c0_i32_0 = arith.constant 0 : i32
    %c0_i32_1 = arith.constant 0 : i32
    return %arg0, %c0_i32, %c0_i32_0 : i32, i32, i32
  }
}

module attributes {stable_mosaic.version = 11 : i64} {
  func.func @kernel(%arg0: i32, %arg1: memref<1x8x324xf32, #tpu.memory_space<vmem>>, %arg2: memref<1x324xf32, #tpu.memory_space<vmem>>, %arg3: memref<8x1xf32, #tpu.memory_space<vmem>>, %arg4: memref<8x1xf32, #tpu.memory_space<vmem>>, %arg5: memref<4x72xbf16, #tpu.memory_space<vmem>>, %arg6: memref<4x1xf32, #tpu.memory_space<vmem>>, %arg7: memref<12x1xf32, #tpu.memory_space<vmem>>, %arg8: memref<12x1xf32, #tpu.memory_space<vmem>>, %arg9: memref<4x108xbf16, #tpu.memory_space<vmem>>, %arg10: memref<4x1xf32, #tpu.memory_space<vmem>>, %arg11: memref<1x16x324xf32, #tpu.memory_space<vmem>>) attributes {dimension_semantics = [#tpu.dimension_semantics<parallel>], iteration_bounds = array<i64: 2>, scalar_prefetch = 0 : i64, scratch_operands = 0 : i64, tpu.core_type = #tpu.core_type<tc>, window_params = [{transform_indices = @transform_0, window_bounds = array<i64: 1, 8, 324>}, {pipeline_mode = #tpu.pipeline_mode<synchronous>, transform_indices = @transform_1, window_bounds = array<i64: 1, 324>}, {pipeline_mode = #tpu.pipeline_mode<synchronous>, transform_indices = @transform_2, window_bounds = array<i64: 8, 1>}, {pipeline_mode = #tpu.pipeline_mode<synchronous>, transform_indices = @transform_3, window_bounds = array<i64: 8, 1>}, {pipeline_mode = #tpu.pipeline_mode<synchronous>, transform_indices = @transform_4, window_bounds = array<i64: 4, 72>}, {pipeline_mode = #tpu.pipeline_mode<synchronous>, transform_indices = @transform_5, window_bounds = array<i64: 4, 1>}, {pipeline_mode = #tpu.pipeline_mode<synchronous>, transform_indices = @transform_6, window_bounds = array<i64: 12, 1>}, {pipeline_mode = #tpu.pipeline_mode<synchronous>, transform_indices = @transform_7, window_bounds = array<i64: 12, 1>}, {pipeline_mode = #tpu.pipeline_mode<synchronous>, transform_indices = @transform_8, window_bounds = array<i64: 4, 108>}, {pipeline_mode = #tpu.pipeline_mode<synchronous>, transform_indices = @transform_9, window_bounds = array<i64: 4, 1>}, {transform_indices = @transform_10, window_bounds = array<i64: 1, 16, 324>}]} {
    %c0 = arith.constant 0 : index
    %c0_0 = arith.constant 0 : index
    %0 = vector.load %arg2[%c0, %c0_0] : memref<1x324xf32, #tpu.memory_space<vmem>>, vector<1x324xf32>
    %cst = arith.constant 5.000000e-01 : f32
    %1 = vector.broadcast %cst : f32 to vector<1x324xf32>
    %2 = arith.cmpf ogt, %0, %1 : vector<1x324xf32>
    %c0_1 = arith.constant 0 : index
    %c0_2 = arith.constant 0 : index
    %c0_3 = arith.constant 0 : index
    %3 = vector.load %arg1[%c0_1, %c0_2, %c0_3] : memref<1x8x324xf32, #tpu.memory_space<vmem>>, vector<1x8x324xf32>
    %4 = vector.shape_cast %3 : vector<1x8x324xf32> to vector<8x324xf32>
    %c0_4 = arith.constant 0 : index
    %c0_5 = arith.constant 0 : index
    %c0_6 = arith.constant 0 : index
    %5 = vector.load %arg11[%c0_4, %c0_5, %c0_6] : memref<1x16x324xf32, #tpu.memory_space<vmem>>, vector<1x8x324xf32>
    %6 = vector.shape_cast %5 : vector<1x8x324xf32> to vector<8x324xf32>
    %7 = vector.shape_cast %4 : vector<8x324xf32> to vector<1x8x324xf32>
    tpu.vector_store %arg11[%c0_4, %c0_5, %c0_6], %7 {strides = array<i32>} : memref<1x16x324xf32, #tpu.memory_space<vmem>>, vector<1x8x324xf32>,
    %c0_7 = arith.constant 0 : index
    %c0_8 = arith.constant 0 : index
    %c0_9 = arith.constant 0 : index
    %8 = vector.load %arg11[%c0_7, %c0_8, %c0_9] : memref<1x16x324xf32, #tpu.memory_space<vmem>>, vector<1x8x324xf32>
    %9 = vector.shape_cast %8 : vector<1x8x324xf32> to vector<8x324xf32>
    %c0_10 = arith.constant 0 : index
    %c0_11 = arith.constant 0 : index
    %10 = vector.load %arg3[%c0_10, %c0_11] : memref<8x1xf32, #tpu.memory_space<vmem>>, vector<8x1xf32>
    %c0_12 = arith.constant 0 : index
    %c0_13 = arith.constant 0 : index
    %11 = vector.load %arg4[%c0_12, %c0_13] : memref<8x1xf32, #tpu.memory_space<vmem>>, vector<8x1xf32>
    %12 = vector.broadcast %10 : vector<8x1xf32> to vector<8x324xf32>
    %13 = arith.mulf %9, %12 : vector<8x324xf32>
    %14 = vector.broadcast %11 : vector<8x1xf32> to vector<8x324xf32>
    %15 = arith.addf %13, %14 : vector<8x324xf32>
    %cst_14 = arith.constant 0.000000e+00 : f32
    %16 = vector.broadcast %cst_14 : f32 to vector<8x324xf32>
    %17 = arith.maximumf %15, %16 : vector<8x324xf32>
    %cst_15 = arith.constant 0.000000e+00 : f32
    %18 = vector.shape_cast %2 : vector<1x324xi1> to vector<1x324xi1>
    %19 = vector.broadcast %18 : vector<1x324xi1> to vector<8x324xi1>
    %20 = vector.broadcast %cst_15 : f32 to vector<8x324xf32>
    %21 = arith.select %19, %17, %20 : vector<8x324xi1>, vector<8x324xf32>
    %22 = arith.truncf %21 : vector<8x324xf32> to vector<8x324xbf16>
    %23 = vector.extract_strided_slice %22 {offsets = [0, 0], sizes = [8, 286], strides = [1, 1]} : vector<8x324xbf16> to vector<8x286xbf16>
    %24 = vector.extract_strided_slice %22 {offsets = [0, 1], sizes = [8, 286], strides = [1, 1]} : vector<8x324xbf16> to vector<8x286xbf16>
    %25 = vector.extract_strided_slice %22 {offsets = [0, 2], sizes = [8, 286], strides = [1, 1]} : vector<8x324xbf16> to vector<8x286xbf16>
    %26 = vector.extract_strided_slice %22 {offsets = [0, 18], sizes = [8, 286], strides = [1, 1]} : vector<8x324xbf16> to vector<8x286xbf16>
    %27 = vector.extract_strided_slice %22 {offsets = [0, 19], sizes = [8, 286], strides = [1, 1]} : vector<8x324xbf16> to vector<8x286xbf16>
    %28 = vector.extract_strided_slice %22 {offsets = [0, 20], sizes = [8, 286], strides = [1, 1]} : vector<8x324xbf16> to vector<8x286xbf16>
    %29 = vector.extract_strided_slice %22 {offsets = [0, 36], sizes = [8, 286], strides = [1, 1]} : vector<8x324xbf16> to vector<8x286xbf16>
    %30 = vector.extract_strided_slice %22 {offsets = [0, 37], sizes = [8, 286], strides = [1, 1]} : vector<8x324xbf16> to vector<8x286xbf16>
    %31 = vector.extract_strided_slice %22 {offsets = [0, 38], sizes = [8, 286], strides = [1, 1]} : vector<8x324xbf16> to vector<8x286xbf16>
    %32 = tpu.concatenate %23, %24, %25, %26, %27, %28, %29, %30, %31 in 0 : vector<8x286xbf16>, vector<8x286xbf16>, vector<8x286xbf16>, vector<8x286xbf16>, vector<8x286xbf16>, vector<8x286xbf16>, vector<8x286xbf16>, vector<8x286xbf16>, vector<8x286xbf16> -> vector<72x286xbf16>
    %c0_16 = arith.constant 0 : index
    %c0_17 = arith.constant 0 : index
    %33 = vector.load %arg5[%c0_16, %c0_17] : memref<4x72xbf16, #tpu.memory_space<vmem>>, vector<4x72xbf16>
    %cst_18 = arith.constant dense<0.000000e+00> : vector<4x286xf32>
    %34 = tpu.matmul %33, %32, %cst_18 {dimension_numbers = #tpu.dot_dimension_numbers<[1], [0], [0], [1], [0, 0, 1, 1], [], []>} : vector<4x72xbf16>, vector<72x286xbf16>, vector<4x286xf32> -> vector<4x286xf32>
    %c0_19 = arith.constant 0 : index
    %c0_20 = arith.constant 0 : index
    %35 = vector.load %arg6[%c0_19, %c0_20] : memref<4x1xf32, #tpu.memory_space<vmem>>, vector<4x1xf32>
    %36 = vector.broadcast %35 : vector<4x1xf32> to vector<4x286xf32>
    %37 = arith.addf %34, %36 : vector<4x286xf32>
    %c0_21 = arith.constant 0 : index
    %c8 = arith.constant 8 : index
    %c19 = arith.constant 19 : index
    %38 = vector.load %arg11[%c0_21, %c8, %c19] : memref<1x16x324xf32, #tpu.memory_space<vmem>>, vector<1x4x286xf32>
    %39 = vector.shape_cast %38 : vector<1x4x286xf32> to vector<4x286xf32>
    %40 = vector.shape_cast %37 : vector<4x286xf32> to vector<1x4x286xf32>
    tpu.vector_store %arg11[%c0_21, %c8, %c19], %40 {strides = array<i32>} : memref<1x16x324xf32, #tpu.memory_space<vmem>>, vector<1x4x286xf32>,
    %c0_22 = arith.constant 0 : index
    %c0_23 = arith.constant 0 : index
    %c0_24 = arith.constant 0 : index
    %41 = vector.load %arg11[%c0_22, %c0_23, %c0_24] : memref<1x16x324xf32, #tpu.memory_space<vmem>>, vector<1x12x324xf32>
    %42 = vector.shape_cast %41 : vector<1x12x324xf32> to vector<12x324xf32>
    %c0_25 = arith.constant 0 : index
    %c0_26 = arith.constant 0 : index
    %43 = vector.load %arg7[%c0_25, %c0_26] : memref<12x1xf32, #tpu.memory_space<vmem>>, vector<12x1xf32>
    %c0_27 = arith.constant 0 : index
    %c0_28 = arith.constant 0 : index
    %44 = vector.load %arg8[%c0_27, %c0_28] : memref<12x1xf32, #tpu.memory_space<vmem>>, vector<12x1xf32>
    %45 = vector.broadcast %43 : vector<12x1xf32> to vector<12x324xf32>
    %46 = arith.mulf %42, %45 : vector<12x324xf32>
    %47 = vector.broadcast %44 : vector<12x1xf32> to vector<12x324xf32>
    %48 = arith.addf %46, %47 : vector<12x324xf32>
    %cst_29 = arith.constant 0.000000e+00 : f32
    %49 = vector.broadcast %cst_29 : f32 to vector<12x324xf32>
    %50 = arith.maximumf %48, %49 : vector<12x324xf32>
    %cst_30 = arith.constant 0.000000e+00 : f32
    %51 = vector.shape_cast %2 : vector<1x324xi1> to vector<1x324xi1>
    %52 = vector.broadcast %51 : vector<1x324xi1> to vector<12x324xi1>
    %53 = vector.broadcast %cst_30 : f32 to vector<12x324xf32>
    %54 = arith.select %52, %50, %53 : vector<12x324xi1>, vector<12x324xf32>
    %55 = arith.truncf %54 : vector<12x324xf32> to vector<12x324xbf16>
    %56 = vector.extract_strided_slice %55 {offsets = [0, 0], sizes = [12, 286], strides = [1, 1]} : vector<12x324xbf16> to vector<12x286xbf16>
    %57 = vector.extract_strided_slice %55 {offsets = [0, 1], sizes = [12, 286], strides = [1, 1]} : vector<12x324xbf16> to vector<12x286xbf16>
    %58 = vector.extract_strided_slice %55 {offsets = [0, 2], sizes = [12, 286], strides = [1, 1]} : vector<12x324xbf16> to vector<12x286xbf16>
    %59 = vector.extract_strided_slice %55 {offsets = [0, 18], sizes = [12, 286], strides = [1, 1]} : vector<12x324xbf16> to vector<12x286xbf16>
    %60 = vector.extract_strided_slice %55 {offsets = [0, 19], sizes = [12, 286], strides = [1, 1]} : vector<12x324xbf16> to vector<12x286xbf16>
    %61 = vector.extract_strided_slice %55 {offsets = [0, 20], sizes = [12, 286], strides = [1, 1]} : vector<12x324xbf16> to vector<12x286xbf16>
    %62 = vector.extract_strided_slice %55 {offsets = [0, 36], sizes = [12, 286], strides = [1, 1]} : vector<12x324xbf16> to vector<12x286xbf16>
    %63 = vector.extract_strided_slice %55 {offsets = [0, 37], sizes = [12, 286], strides = [1, 1]} : vector<12x324xbf16> to vector<12x286xbf16>
    %64 = vector.extract_strided_slice %55 {offsets = [0, 38], sizes = [12, 286], strides = [1, 1]} : vector<12x324xbf16> to vector<12x286xbf16>
    %65 = tpu.concatenate %56, %57, %58, %59, %60, %61, %62, %63, %64 in 0 : vector<12x286xbf16>, vector<12x286xbf16>, vector<12x286xbf16>, vector<12x286xbf16>, vector<12x286xbf16>, vector<12x286xbf16>, vector<12x286xbf16>, vector<12x286xbf16>, vector<12x286xbf16> -> vector<108x286xbf16>
    %c0_31 = arith.constant 0 : index
    %c0_32 = arith.constant 0 : index
    %66 = vector.load %arg9[%c0_31, %c0_32] : memref<4x108xbf16, #tpu.memory_space<vmem>>, vector<4x108xbf16>
    %cst_33 = arith.constant dense<0.000000e+00> : vector<4x286xf32>
    %67 = tpu.matmul %66, %65, %cst_33 {dimension_numbers = #tpu.dot_dimension_numbers<[1], [0], [0], [1], [0, 0, 1, 1], [], []>} : vector<4x108xbf16>, vector<108x286xbf16>, vector<4x286xf32> -> vector<4x286xf32>
    %c0_34 = arith.constant 0 : index
    %c0_35 = arith.constant 0 : index
    %68 = vector.load %arg10[%c0_34, %c0_35] : memref<4x1xf32, #tpu.memory_space<vmem>>, vector<4x1xf32>
    %69 = vector.broadcast %68 : vector<4x1xf32> to vector<4x286xf32>
    %70 = arith.addf %67, %69 : vector<4x286xf32>
    %c0_36 = arith.constant 0 : index
    %c12 = arith.constant 12 : index
    %c19_37 = arith.constant 19 : index
    %71 = vector.load %arg11[%c0_36, %c12, %c19_37] : memref<1x16x324xf32, #tpu.memory_space<vmem>>, vector<1x4x286xf32>
    %72 = vector.shape_cast %71 : vector<1x4x286xf32> to vector<4x286xf32>
    %73 = vector.shape_cast %70 : vector<4x286xf32> to vector<1x4x286xf32>
    tpu.vector_store %arg11[%c0_36, %c12, %c19_37], %73 {strides = array<i32>} : memref<1x16x324xf32, #tpu.memory_space<vmem>>, vector<1x4x286xf32>,
    return
  }
  func.func @transform_0(%arg0: i32) -> (i32, i32, i32) {
    %c0_i32 = arith.constant 0 : i32
    %c0_i32_0 = arith.constant 0 : i32
    %c0_i32_1 = arith.constant 0 : i32
    return %arg0, %c0_i32, %c0_i32_0 : i32, i32, i32
  }
  func.func @transform_1(%arg0: i32) -> (i32, i32) {
    %c0_i32 = arith.constant 0 : i32
    %c0_i32_0 = arith.constant 0 : i32
    %c0_i32_1 = arith.constant 0 : i32
    return %c0_i32, %c0_i32_0 : i32, i32
  }
  func.func @transform_2(%arg0: i32) -> (i32, i32) {
    %c0_i32 = arith.constant 0 : i32
    %c0_i32_0 = arith.constant 0 : i32
    %c0_i32_1 = arith.constant 0 : i32
    return %c0_i32, %c0_i32_0 : i32, i32
  }
  func.func @transform_3(%arg0: i32) -> (i32, i32) {
    %c0_i32 = arith.constant 0 : i32
    %c0_i32_0 = arith.constant 0 : i32
    %c0_i32_1 = arith.constant 0 : i32
    return %c0_i32, %c0_i32_0 : i32, i32
  }
  func.func @transform_4(%arg0: i32) -> (i32, i32) {
    %c0_i32 = arith.constant 0 : i32
    %c0_i32_0 = arith.constant 0 : i32
    %c0_i32_1 = arith.constant 0 : i32
    return %c0_i32, %c0_i32_0 : i32, i32
  }
  func.func @transform_5(%arg0: i32) -> (i32, i32) {
    %c0_i32 = arith.constant 0 : i32
    %c0_i32_0 = arith.constant 0 : i32
    %c0_i32_1 = arith.constant 0 : i32
    return %c0_i32, %c0_i32_0 : i32, i32
  }
  func.func @transform_6(%arg0: i32) -> (i32, i32) {
    %c0_i32 = arith.constant 0 : i32
    %c0_i32_0 = arith.constant 0 : i32
    %c0_i32_1 = arith.constant 0 : i32
    return %c0_i32, %c0_i32_0 : i32, i32
  }
  func.func @transform_7(%arg0: i32) -> (i32, i32) {
    %c0_i32 = arith.constant 0 : i32
    %c0_i32_0 = arith.constant 0 : i32
    %c0_i32_1 = arith.constant 0 : i32
    return %c0_i32, %c0_i32_0 : i32, i32
  }
  func.func @transform_8(%arg0: i32) -> (i32, i32) {
    %c0_i32 = arith.constant 0 : i32
    %c0_i32_0 = arith.constant 0 : i32
    %c0_i32_1 = arith.constant 0 : i32
    return %c0_i32, %c0_i32_0 : i32, i32
  }
  func.func @transform_9(%arg0: i32) -> (i32, i32) {
    %c0_i32 = arith.constant 0 : i32
    %c0_i32_0 = arith.constant 0 : i32
    %c0_i32_1 = arith.constant 0 : i32
    return %c0_i32, %c0_i32_0 : i32, i32
  }
  func.func @transform_10(%arg0: i32) -> (i32, i32, i32) {
    %c0_i32 = arith.constant 0 : i32
    %c0_i32_0 = arith.constant 0 : i32
    %c0_i32_1 = arith.constant 0 : i32
    return %arg0, %c0_i32, %c0_i32_0 : i32, i32, i32
  }
}

module attributes {stable_mosaic.version = 11 : i64} {
  func.func @kernel(%arg0: i32, %arg1: memref<1x16x324xf32, #tpu.memory_space<vmem>>, %arg2: memref<1x324xf32, #tpu.memory_space<vmem>>, %arg3: memref<16x1xf32, #tpu.memory_space<vmem>>, %arg4: memref<16x1xf32, #tpu.memory_space<vmem>>, %arg5: memref<16x16xbf16, #tpu.memory_space<vmem>>, %arg6: memref<16x1xf32, #tpu.memory_space<vmem>>, %arg7: memref<305x100xf32, #tpu.memory_space<vmem>>, %arg8: memref<1x16x100xf32, #tpu.memory_space<vmem>>) attributes {dimension_semantics = [#tpu.dimension_semantics<parallel>], iteration_bounds = array<i64: 2>, scalar_prefetch = 0 : i64, scratch_operands = 0 : i64, tpu.core_type = #tpu.core_type<tc>, window_params = [{transform_indices = @transform_0, window_bounds = array<i64: 1, 16, 324>}, {pipeline_mode = #tpu.pipeline_mode<synchronous>, transform_indices = @transform_1, window_bounds = array<i64: 1, 324>}, {pipeline_mode = #tpu.pipeline_mode<synchronous>, transform_indices = @transform_2, window_bounds = array<i64: 16, 1>}, {pipeline_mode = #tpu.pipeline_mode<synchronous>, transform_indices = @transform_3, window_bounds = array<i64: 16, 1>}, {pipeline_mode = #tpu.pipeline_mode<synchronous>, transform_indices = @transform_4, window_bounds = array<i64: 16, 16>}, {pipeline_mode = #tpu.pipeline_mode<synchronous>, transform_indices = @transform_5, window_bounds = array<i64: 16, 1>}, {pipeline_mode = #tpu.pipeline_mode<synchronous>, transform_indices = @transform_6, window_bounds = array<i64: 305, 100>}, {transform_indices = @transform_7, window_bounds = array<i64: 1, 16, 100>}]} {
    %c0 = arith.constant 0 : index
    %c0_0 = arith.constant 0 : index
    %0 = vector.load %arg2[%c0, %c0_0] : memref<1x324xf32, #tpu.memory_space<vmem>>, vector<1x324xf32>
    %cst = arith.constant 5.000000e-01 : f32
    %1 = vector.broadcast %cst : f32 to vector<1x324xf32>
    %2 = arith.cmpf ogt, %0, %1 : vector<1x324xf32>
    %c0_1 = arith.constant 0 : index
    %c0_2 = arith.constant 0 : index
    %c0_3 = arith.constant 0 : index
    %3 = vector.load %arg1[%c0_1, %c0_2, %c0_3] : memref<1x16x324xf32, #tpu.memory_space<vmem>>, vector<1x16x324xf32>
    %4 = vector.shape_cast %3 : vector<1x16x324xf32> to vector<16x324xf32>
    %c0_4 = arith.constant 0 : index
    %c0_5 = arith.constant 0 : index
    %5 = vector.load %arg3[%c0_4, %c0_5] : memref<16x1xf32, #tpu.memory_space<vmem>>, vector<16x1xf32>
    %6 = vector.broadcast %5 : vector<16x1xf32> to vector<16x324xf32>
    %7 = arith.mulf %4, %6 : vector<16x324xf32>
    %c0_6 = arith.constant 0 : index
    %c0_7 = arith.constant 0 : index
    %8 = vector.load %arg4[%c0_6, %c0_7] : memref<16x1xf32, #tpu.memory_space<vmem>>, vector<16x1xf32>
    %9 = vector.broadcast %8 : vector<16x1xf32> to vector<16x324xf32>
    %10 = arith.addf %7, %9 : vector<16x324xf32>
    %cst_8 = arith.constant 0.000000e+00 : f32
    %11 = vector.broadcast %cst_8 : f32 to vector<16x324xf32>
    %12 = arith.maximumf %10, %11 : vector<16x324xf32>
    %cst_9 = arith.constant 0.000000e+00 : f32
    %13 = vector.shape_cast %2 : vector<1x324xi1> to vector<1x324xi1>
    %14 = vector.broadcast %13 : vector<1x324xi1> to vector<16x324xi1>
    %15 = vector.broadcast %cst_9 : f32 to vector<16x324xf32>
    %16 = arith.select %14, %12, %15 : vector<16x324xi1>, vector<16x324xf32>
    %c0_10 = arith.constant 0 : index
    %c0_11 = arith.constant 0 : index
    %17 = vector.load %arg5[%c0_10, %c0_11] : memref<16x16xbf16, #tpu.memory_space<vmem>>, vector<16x16xbf16>
    %18 = arith.truncf %16 : vector<16x324xf32> to vector<16x324xbf16>
    %cst_12 = arith.constant dense<0.000000e+00> : vector<16x324xf32>
    %19 = tpu.matmul %17, %18, %cst_12 {dimension_numbers = #tpu.dot_dimension_numbers<[1], [0], [0], [1], [0, 0, 1, 1], [], []>} : vector<16x16xbf16>, vector<16x324xbf16>, vector<16x324xf32> -> vector<16x324xf32>
    %c0_13 = arith.constant 0 : index
    %c0_14 = arith.constant 0 : index
    %20 = vector.load %arg6[%c0_13, %c0_14] : memref<16x1xf32, #tpu.memory_space<vmem>>, vector<16x1xf32>
    %21 = vector.broadcast %20 : vector<16x1xf32> to vector<16x324xf32>
    %22 = arith.addf %19, %21 : vector<16x324xf32>
    %23 = vector.extract_strided_slice %22 {offsets = [0, 0], sizes = [16, 323], strides = [1, 1]} : vector<16x324xf32> to vector<16x323xf32>
    %24 = vector.extract_strided_slice %22 {offsets = [0, 1], sizes = [16, 323], strides = [1, 1]} : vector<16x324xf32> to vector<16x323xf32>
    %25 = arith.maximumf %23, %24 : vector<16x323xf32>
    %26 = vector.extract_strided_slice %25 {offsets = [0, 0], sizes = [16, 305], strides = [1, 1]} : vector<16x323xf32> to vector<16x305xf32>
    %27 = vector.extract_strided_slice %25 {offsets = [0, 18], sizes = [16, 305], strides = [1, 1]} : vector<16x323xf32> to vector<16x305xf32>
    %28 = arith.maximumf %26, %27 : vector<16x305xf32>
    %c0_15 = arith.constant 0 : index
    %c0_16 = arith.constant 0 : index
    %29 = vector.load %arg7[%c0_15, %c0_16] : memref<305x100xf32, #tpu.memory_space<vmem>>, vector<305x100xf32>
    %cst_17 = arith.constant dense<0.000000e+00> : vector<16x100xf32>
    %30 = tpu.matmul %28, %29, %cst_17 {dimension_numbers = #tpu.dot_dimension_numbers<[1], [0], [0], [1], [0, 0, 1, 1], [], []>} : vector<16x305xf32>, vector<305x100xf32>, vector<16x100xf32> -> vector<16x100xf32>
    %c0_18 = arith.constant 0 : index
    %c0_19 = arith.constant 0 : index
    %c0_20 = arith.constant 0 : index
    %31 = vector.load %arg8[%c0_18, %c0_19, %c0_20] : memref<1x16x100xf32, #tpu.memory_space<vmem>>, vector<1x16x100xf32>
    %32 = vector.shape_cast %31 : vector<1x16x100xf32> to vector<16x100xf32>
    %33 = vector.shape_cast %30 : vector<16x100xf32> to vector<1x16x100xf32>
    tpu.vector_store %arg8[%c0_18, %c0_19, %c0_20], %33 {strides = array<i32>} : memref<1x16x100xf32, #tpu.memory_space<vmem>>, vector<1x16x100xf32>,
    return
  }
  func.func @transform_0(%arg0: i32) -> (i32, i32, i32) {
    %c0_i32 = arith.constant 0 : i32
    %c0_i32_0 = arith.constant 0 : i32
    %c0_i32_1 = arith.constant 0 : i32
    return %arg0, %c0_i32, %c0_i32_0 : i32, i32, i32
  }
  func.func @transform_1(%arg0: i32) -> (i32, i32) {
    %c0_i32 = arith.constant 0 : i32
    %c0_i32_0 = arith.constant 0 : i32
    %c0_i32_1 = arith.constant 0 : i32
    return %c0_i32, %c0_i32_0 : i32, i32
  }
  func.func @transform_2(%arg0: i32) -> (i32, i32) {
    %c0_i32 = arith.constant 0 : i32
    %c0_i32_0 = arith.constant 0 : i32
    %c0_i32_1 = arith.constant 0 : i32
    return %c0_i32, %c0_i32_0 : i32, i32
  }
  func.func @transform_3(%arg0: i32) -> (i32, i32) {
    %c0_i32 = arith.constant 0 : i32
    %c0_i32_0 = arith.constant 0 : i32
    %c0_i32_1 = arith.constant 0 : i32
    return %c0_i32, %c0_i32_0 : i32, i32
  }
  func.func @transform_4(%arg0: i32) -> (i32, i32) {
    %c0_i32 = arith.constant 0 : i32
    %c0_i32_0 = arith.constant 0 : i32
    %c0_i32_1 = arith.constant 0 : i32
    return %c0_i32, %c0_i32_0 : i32, i32
  }
  func.func @transform_5(%arg0: i32) -> (i32, i32) {
    %c0_i32 = arith.constant 0 : i32
    %c0_i32_0 = arith.constant 0 : i32
    %c0_i32_1 = arith.constant 0 : i32
    return %c0_i32, %c0_i32_0 : i32, i32
  }
  func.func @transform_6(%arg0: i32) -> (i32, i32) {
    %c0_i32 = arith.constant 0 : i32
    %c0_i32_0 = arith.constant 0 : i32
    %c0_i32_1 = arith.constant 0 : i32
    return %c0_i32, %c0_i32_0 : i32, i32
  }
  func.func @transform_7(%arg0: i32) -> (i32, i32, i32) {
    %c0_i32 = arith.constant 0 : i32
    %c0_i32_0 = arith.constant 0 : i32
    %c0_i32_1 = arith.constant 0 : i32
    return %arg0, %c0_i32, %c0_i32_0 : i32, i32, i32
  }
}

module attributes {stable_mosaic.version = 11 : i64} {
  func.func @kernel(%arg0: i32, %arg1: memref<1x16x100xf32, #tpu.memory_space<vmem>>, %arg2: memref<1x100xf32, #tpu.memory_space<vmem>>, %arg3: memref<16x1xf32, #tpu.memory_space<vmem>>, %arg4: memref<16x1xf32, #tpu.memory_space<vmem>>, %arg5: memref<4x144xbf16, #tpu.memory_space<vmem>>, %arg6: memref<4x1xf32, #tpu.memory_space<vmem>>, %arg7: memref<20x1xf32, #tpu.memory_space<vmem>>, %arg8: memref<20x1xf32, #tpu.memory_space<vmem>>, %arg9: memref<4x180xbf16, #tpu.memory_space<vmem>>, %arg10: memref<4x1xf32, #tpu.memory_space<vmem>>, %arg11: memref<1x24x100xf32, #tpu.memory_space<vmem>>) attributes {dimension_semantics = [#tpu.dimension_semantics<parallel>], iteration_bounds = array<i64: 2>, scalar_prefetch = 0 : i64, scratch_operands = 0 : i64, tpu.core_type = #tpu.core_type<tc>, window_params = [{transform_indices = @transform_0, window_bounds = array<i64: 1, 16, 100>}, {pipeline_mode = #tpu.pipeline_mode<synchronous>, transform_indices = @transform_1, window_bounds = array<i64: 1, 100>}, {pipeline_mode = #tpu.pipeline_mode<synchronous>, transform_indices = @transform_2, window_bounds = array<i64: 16, 1>}, {pipeline_mode = #tpu.pipeline_mode<synchronous>, transform_indices = @transform_3, window_bounds = array<i64: 16, 1>}, {pipeline_mode = #tpu.pipeline_mode<synchronous>, transform_indices = @transform_4, window_bounds = array<i64: 4, 144>}, {pipeline_mode = #tpu.pipeline_mode<synchronous>, transform_indices = @transform_5, window_bounds = array<i64: 4, 1>}, {pipeline_mode = #tpu.pipeline_mode<synchronous>, transform_indices = @transform_6, window_bounds = array<i64: 20, 1>}, {pipeline_mode = #tpu.pipeline_mode<synchronous>, transform_indices = @transform_7, window_bounds = array<i64: 20, 1>}, {pipeline_mode = #tpu.pipeline_mode<synchronous>, transform_indices = @transform_8, window_bounds = array<i64: 4, 180>}, {pipeline_mode = #tpu.pipeline_mode<synchronous>, transform_indices = @transform_9, window_bounds = array<i64: 4, 1>}, {transform_indices = @transform_10, window_bounds = array<i64: 1, 24, 100>}]} {
    %c0 = arith.constant 0 : index
    %c0_0 = arith.constant 0 : index
    %0 = vector.load %arg2[%c0, %c0_0] : memref<1x100xf32, #tpu.memory_space<vmem>>, vector<1x100xf32>
    %cst = arith.constant 5.000000e-01 : f32
    %1 = vector.broadcast %cst : f32 to vector<1x100xf32>
    %2 = arith.cmpf ogt, %0, %1 : vector<1x100xf32>
    %c0_1 = arith.constant 0 : index
    %c0_2 = arith.constant 0 : index
    %c0_3 = arith.constant 0 : index
    %3 = vector.load %arg1[%c0_1, %c0_2, %c0_3] : memref<1x16x100xf32, #tpu.memory_space<vmem>>, vector<1x16x100xf32>
    %4 = vector.shape_cast %3 : vector<1x16x100xf32> to vector<16x100xf32>
    %c0_4 = arith.constant 0 : index
    %c0_5 = arith.constant 0 : index
    %c0_6 = arith.constant 0 : index
    %5 = vector.load %arg11[%c0_4, %c0_5, %c0_6] : memref<1x24x100xf32, #tpu.memory_space<vmem>>, vector<1x16x100xf32>
    %6 = vector.shape_cast %5 : vector<1x16x100xf32> to vector<16x100xf32>
    %7 = vector.shape_cast %4 : vector<16x100xf32> to vector<1x16x100xf32>
    tpu.vector_store %arg11[%c0_4, %c0_5, %c0_6], %7 {strides = array<i32>} : memref<1x24x100xf32, #tpu.memory_space<vmem>>, vector<1x16x100xf32>,
    %c0_7 = arith.constant 0 : index
    %c0_8 = arith.constant 0 : index
    %c0_9 = arith.constant 0 : index
    %8 = vector.load %arg11[%c0_7, %c0_8, %c0_9] : memref<1x24x100xf32, #tpu.memory_space<vmem>>, vector<1x16x100xf32>
    %9 = vector.shape_cast %8 : vector<1x16x100xf32> to vector<16x100xf32>
    %c0_10 = arith.constant 0 : index
    %c0_11 = arith.constant 0 : index
    %10 = vector.load %arg3[%c0_10, %c0_11] : memref<16x1xf32, #tpu.memory_space<vmem>>, vector<16x1xf32>
    %c0_12 = arith.constant 0 : index
    %c0_13 = arith.constant 0 : index
    %11 = vector.load %arg4[%c0_12, %c0_13] : memref<16x1xf32, #tpu.memory_space<vmem>>, vector<16x1xf32>
    %12 = vector.broadcast %10 : vector<16x1xf32> to vector<16x100xf32>
    %13 = arith.mulf %9, %12 : vector<16x100xf32>
    %14 = vector.broadcast %11 : vector<16x1xf32> to vector<16x100xf32>
    %15 = arith.addf %13, %14 : vector<16x100xf32>
    %cst_14 = arith.constant 0.000000e+00 : f32
    %16 = vector.broadcast %cst_14 : f32 to vector<16x100xf32>
    %17 = arith.maximumf %15, %16 : vector<16x100xf32>
    %cst_15 = arith.constant 0.000000e+00 : f32
    %18 = vector.shape_cast %2 : vector<1x100xi1> to vector<1x100xi1>
    %19 = vector.broadcast %18 : vector<1x100xi1> to vector<16x100xi1>
    %20 = vector.broadcast %cst_15 : f32 to vector<16x100xf32>
    %21 = arith.select %19, %17, %20 : vector<16x100xi1>, vector<16x100xf32>
    %22 = arith.truncf %21 : vector<16x100xf32> to vector<16x100xbf16>
    %23 = vector.extract_strided_slice %22 {offsets = [0, 0], sizes = [16, 78], strides = [1, 1]} : vector<16x100xbf16> to vector<16x78xbf16>
    %24 = vector.extract_strided_slice %22 {offsets = [0, 1], sizes = [16, 78], strides = [1, 1]} : vector<16x100xbf16> to vector<16x78xbf16>
    %25 = vector.extract_strided_slice %22 {offsets = [0, 2], sizes = [16, 78], strides = [1, 1]} : vector<16x100xbf16> to vector<16x78xbf16>
    %26 = vector.extract_strided_slice %22 {offsets = [0, 10], sizes = [16, 78], strides = [1, 1]} : vector<16x100xbf16> to vector<16x78xbf16>
    %27 = vector.extract_strided_slice %22 {offsets = [0, 11], sizes = [16, 78], strides = [1, 1]} : vector<16x100xbf16> to vector<16x78xbf16>
    %28 = vector.extract_strided_slice %22 {offsets = [0, 12], sizes = [16, 78], strides = [1, 1]} : vector<16x100xbf16> to vector<16x78xbf16>
    %29 = vector.extract_strided_slice %22 {offsets = [0, 20], sizes = [16, 78], strides = [1, 1]} : vector<16x100xbf16> to vector<16x78xbf16>
    %30 = vector.extract_strided_slice %22 {offsets = [0, 21], sizes = [16, 78], strides = [1, 1]} : vector<16x100xbf16> to vector<16x78xbf16>
    %31 = vector.extract_strided_slice %22 {offsets = [0, 22], sizes = [16, 78], strides = [1, 1]} : vector<16x100xbf16> to vector<16x78xbf16>
    %32 = tpu.concatenate %23, %24, %25, %26, %27, %28, %29, %30, %31 in 0 : vector<16x78xbf16>, vector<16x78xbf16>, vector<16x78xbf16>, vector<16x78xbf16>, vector<16x78xbf16>, vector<16x78xbf16>, vector<16x78xbf16>, vector<16x78xbf16>, vector<16x78xbf16> -> vector<144x78xbf16>
    %c0_16 = arith.constant 0 : index
    %c0_17 = arith.constant 0 : index
    %33 = vector.load %arg5[%c0_16, %c0_17] : memref<4x144xbf16, #tpu.memory_space<vmem>>, vector<4x144xbf16>
    %cst_18 = arith.constant dense<0.000000e+00> : vector<4x78xf32>
    %34 = tpu.matmul %33, %32, %cst_18 {dimension_numbers = #tpu.dot_dimension_numbers<[1], [0], [0], [1], [0, 0, 1, 1], [], []>} : vector<4x144xbf16>, vector<144x78xbf16>, vector<4x78xf32> -> vector<4x78xf32>
    %c0_19 = arith.constant 0 : index
    %c0_20 = arith.constant 0 : index
    %35 = vector.load %arg6[%c0_19, %c0_20] : memref<4x1xf32, #tpu.memory_space<vmem>>, vector<4x1xf32>
    %36 = vector.broadcast %35 : vector<4x1xf32> to vector<4x78xf32>
    %37 = arith.addf %34, %36 : vector<4x78xf32>
    %c0_21 = arith.constant 0 : index
    %c16 = arith.constant 16 : index
    %c11 = arith.constant 11 : index
    %38 = vector.load %arg11[%c0_21, %c16, %c11] : memref<1x24x100xf32, #tpu.memory_space<vmem>>, vector<1x4x78xf32>
    %39 = vector.shape_cast %38 : vector<1x4x78xf32> to vector<4x78xf32>
    %40 = vector.shape_cast %37 : vector<4x78xf32> to vector<1x4x78xf32>
    tpu.vector_store %arg11[%c0_21, %c16, %c11], %40 {strides = array<i32>} : memref<1x24x100xf32, #tpu.memory_space<vmem>>, vector<1x4x78xf32>,
    %c0_22 = arith.constant 0 : index
    %c0_23 = arith.constant 0 : index
    %c0_24 = arith.constant 0 : index
    %41 = vector.load %arg11[%c0_22, %c0_23, %c0_24] : memref<1x24x100xf32, #tpu.memory_space<vmem>>, vector<1x20x100xf32>
    %42 = vector.shape_cast %41 : vector<1x20x100xf32> to vector<20x100xf32>
    %c0_25 = arith.constant 0 : index
    %c0_26 = arith.constant 0 : index
    %43 = vector.load %arg7[%c0_25, %c0_26] : memref<20x1xf32, #tpu.memory_space<vmem>>, vector<20x1xf32>
    %c0_27 = arith.constant 0 : index
    %c0_28 = arith.constant 0 : index
    %44 = vector.load %arg8[%c0_27, %c0_28] : memref<20x1xf32, #tpu.memory_space<vmem>>, vector<20x1xf32>
    %45 = vector.broadcast %43 : vector<20x1xf32> to vector<20x100xf32>
    %46 = arith.mulf %42, %45 : vector<20x100xf32>
    %47 = vector.broadcast %44 : vector<20x1xf32> to vector<20x100xf32>
    %48 = arith.addf %46, %47 : vector<20x100xf32>
    %cst_29 = arith.constant 0.000000e+00 : f32
    %49 = vector.broadcast %cst_29 : f32 to vector<20x100xf32>
    %50 = arith.maximumf %48, %49 : vector<20x100xf32>
    %cst_30 = arith.constant 0.000000e+00 : f32
    %51 = vector.shape_cast %2 : vector<1x100xi1> to vector<1x100xi1>
    %52 = vector.broadcast %51 : vector<1x100xi1> to vector<20x100xi1>
    %53 = vector.broadcast %cst_30 : f32 to vector<20x100xf32>
    %54 = arith.select %52, %50, %53 : vector<20x100xi1>, vector<20x100xf32>
    %55 = arith.truncf %54 : vector<20x100xf32> to vector<20x100xbf16>
    %56 = vector.extract_strided_slice %55 {offsets = [0, 0], sizes = [20, 78], strides = [1, 1]} : vector<20x100xbf16> to vector<20x78xbf16>
    %57 = vector.extract_strided_slice %55 {offsets = [0, 1], sizes = [20, 78], strides = [1, 1]} : vector<20x100xbf16> to vector<20x78xbf16>
    %58 = vector.extract_strided_slice %55 {offsets = [0, 2], sizes = [20, 78], strides = [1, 1]} : vector<20x100xbf16> to vector<20x78xbf16>
    %59 = vector.extract_strided_slice %55 {offsets = [0, 10], sizes = [20, 78], strides = [1, 1]} : vector<20x100xbf16> to vector<20x78xbf16>
    %60 = vector.extract_strided_slice %55 {offsets = [0, 11], sizes = [20, 78], strides = [1, 1]} : vector<20x100xbf16> to vector<20x78xbf16>
    %61 = vector.extract_strided_slice %55 {offsets = [0, 12], sizes = [20, 78], strides = [1, 1]} : vector<20x100xbf16> to vector<20x78xbf16>
    %62 = vector.extract_strided_slice %55 {offsets = [0, 20], sizes = [20, 78], strides = [1, 1]} : vector<20x100xbf16> to vector<20x78xbf16>
    %63 = vector.extract_strided_slice %55 {offsets = [0, 21], sizes = [20, 78], strides = [1, 1]} : vector<20x100xbf16> to vector<20x78xbf16>
    %64 = vector.extract_strided_slice %55 {offsets = [0, 22], sizes = [20, 78], strides = [1, 1]} : vector<20x100xbf16> to vector<20x78xbf16>
    %65 = tpu.concatenate %56, %57, %58, %59, %60, %61, %62, %63, %64 in 0 : vector<20x78xbf16>, vector<20x78xbf16>, vector<20x78xbf16>, vector<20x78xbf16>, vector<20x78xbf16>, vector<20x78xbf16>, vector<20x78xbf16>, vector<20x78xbf16>, vector<20x78xbf16> -> vector<180x78xbf16>
    %c0_31 = arith.constant 0 : index
    %c0_32 = arith.constant 0 : index
    %66 = vector.load %arg9[%c0_31, %c0_32] : memref<4x180xbf16, #tpu.memory_space<vmem>>, vector<4x180xbf16>
    %cst_33 = arith.constant dense<0.000000e+00> : vector<4x78xf32>
    %67 = tpu.matmul %66, %65, %cst_33 {dimension_numbers = #tpu.dot_dimension_numbers<[1], [0], [0], [1], [0, 0, 1, 1], [], []>} : vector<4x180xbf16>, vector<180x78xbf16>, vector<4x78xf32> -> vector<4x78xf32>
    %c0_34 = arith.constant 0 : index
    %c0_35 = arith.constant 0 : index
    %68 = vector.load %arg10[%c0_34, %c0_35] : memref<4x1xf32, #tpu.memory_space<vmem>>, vector<4x1xf32>
    %69 = vector.broadcast %68 : vector<4x1xf32> to vector<4x78xf32>
    %70 = arith.addf %67, %69 : vector<4x78xf32>
    %c0_36 = arith.constant 0 : index
    %c20 = arith.constant 20 : index
    %c11_37 = arith.constant 11 : index
    %71 = vector.load %arg11[%c0_36, %c20, %c11_37] : memref<1x24x100xf32, #tpu.memory_space<vmem>>, vector<1x4x78xf32>
    %72 = vector.shape_cast %71 : vector<1x4x78xf32> to vector<4x78xf32>
    %73 = vector.shape_cast %70 : vector<4x78xf32> to vector<1x4x78xf32>
    tpu.vector_store %arg11[%c0_36, %c20, %c11_37], %73 {strides = array<i32>} : memref<1x24x100xf32, #tpu.memory_space<vmem>>, vector<1x4x78xf32>,
    return
  }
  func.func @transform_0(%arg0: i32) -> (i32, i32, i32) {
    %c0_i32 = arith.constant 0 : i32
    %c0_i32_0 = arith.constant 0 : i32
    %c0_i32_1 = arith.constant 0 : i32
    return %arg0, %c0_i32, %c0_i32_0 : i32, i32, i32
  }
  func.func @transform_1(%arg0: i32) -> (i32, i32) {
    %c0_i32 = arith.constant 0 : i32
    %c0_i32_0 = arith.constant 0 : i32
    %c0_i32_1 = arith.constant 0 : i32
    return %c0_i32, %c0_i32_0 : i32, i32
  }
  func.func @transform_2(%arg0: i32) -> (i32, i32) {
    %c0_i32 = arith.constant 0 : i32
    %c0_i32_0 = arith.constant 0 : i32
    %c0_i32_1 = arith.constant 0 : i32
    return %c0_i32, %c0_i32_0 : i32, i32
  }
  func.func @transform_3(%arg0: i32) -> (i32, i32) {
    %c0_i32 = arith.constant 0 : i32
    %c0_i32_0 = arith.constant 0 : i32
    %c0_i32_1 = arith.constant 0 : i32
    return %c0_i32, %c0_i32_0 : i32, i32
  }
  func.func @transform_4(%arg0: i32) -> (i32, i32) {
    %c0_i32 = arith.constant 0 : i32
    %c0_i32_0 = arith.constant 0 : i32
    %c0_i32_1 = arith.constant 0 : i32
    return %c0_i32, %c0_i32_0 : i32, i32
  }
  func.func @transform_5(%arg0: i32) -> (i32, i32) {
    %c0_i32 = arith.constant 0 : i32
    %c0_i32_0 = arith.constant 0 : i32
    %c0_i32_1 = arith.constant 0 : i32
    return %c0_i32, %c0_i32_0 : i32, i32
  }
  func.func @transform_6(%arg0: i32) -> (i32, i32) {
    %c0_i32 = arith.constant 0 : i32
    %c0_i32_0 = arith.constant 0 : i32
    %c0_i32_1 = arith.constant 0 : i32
    return %c0_i32, %c0_i32_0 : i32, i32
  }
  func.func @transform_7(%arg0: i32) -> (i32, i32) {
    %c0_i32 = arith.constant 0 : i32
    %c0_i32_0 = arith.constant 0 : i32
    %c0_i32_1 = arith.constant 0 : i32
    return %c0_i32, %c0_i32_0 : i32, i32
  }
  func.func @transform_8(%arg0: i32) -> (i32, i32) {
    %c0_i32 = arith.constant 0 : i32
    %c0_i32_0 = arith.constant 0 : i32
    %c0_i32_1 = arith.constant 0 : i32
    return %c0_i32, %c0_i32_0 : i32, i32
  }
  func.func @transform_9(%arg0: i32) -> (i32, i32) {
    %c0_i32 = arith.constant 0 : i32
    %c0_i32_0 = arith.constant 0 : i32
    %c0_i32_1 = arith.constant 0 : i32
    return %c0_i32, %c0_i32_0 : i32, i32
  }
  func.func @transform_10(%arg0: i32) -> (i32, i32, i32) {
    %c0_i32 = arith.constant 0 : i32
    %c0_i32_0 = arith.constant 0 : i32
    %c0_i32_1 = arith.constant 0 : i32
    return %arg0, %c0_i32, %c0_i32_0 : i32, i32, i32
  }
}

module attributes {stable_mosaic.version = 11 : i64} {
  func.func @kernel(%arg0: i32, %arg1: memref<1x24x100xf32, #tpu.memory_space<vmem>>, %arg2: memref<1x100xf32, #tpu.memory_space<vmem>>, %arg3: memref<24x1xf32, #tpu.memory_space<vmem>>, %arg4: memref<24x1xf32, #tpu.memory_space<vmem>>, %arg5: memref<24x24xbf16, #tpu.memory_space<vmem>>, %arg6: memref<24x1xf32, #tpu.memory_space<vmem>>, %arg7: memref<89x36xf32, #tpu.memory_space<vmem>>, %arg8: memref<1x24x36xf32, #tpu.memory_space<vmem>>) attributes {dimension_semantics = [#tpu.dimension_semantics<parallel>], iteration_bounds = array<i64: 2>, scalar_prefetch = 0 : i64, scratch_operands = 0 : i64, tpu.core_type = #tpu.core_type<tc>, window_params = [{transform_indices = @transform_0, window_bounds = array<i64: 1, 24, 100>}, {pipeline_mode = #tpu.pipeline_mode<synchronous>, transform_indices = @transform_1, window_bounds = array<i64: 1, 100>}, {pipeline_mode = #tpu.pipeline_mode<synchronous>, transform_indices = @transform_2, window_bounds = array<i64: 24, 1>}, {pipeline_mode = #tpu.pipeline_mode<synchronous>, transform_indices = @transform_3, window_bounds = array<i64: 24, 1>}, {pipeline_mode = #tpu.pipeline_mode<synchronous>, transform_indices = @transform_4, window_bounds = array<i64: 24, 24>}, {pipeline_mode = #tpu.pipeline_mode<synchronous>, transform_indices = @transform_5, window_bounds = array<i64: 24, 1>}, {pipeline_mode = #tpu.pipeline_mode<synchronous>, transform_indices = @transform_6, window_bounds = array<i64: 89, 36>}, {transform_indices = @transform_7, window_bounds = array<i64: 1, 24, 36>}]} {
    %c0 = arith.constant 0 : index
    %c0_0 = arith.constant 0 : index
    %0 = vector.load %arg2[%c0, %c0_0] : memref<1x100xf32, #tpu.memory_space<vmem>>, vector<1x100xf32>
    %cst = arith.constant 5.000000e-01 : f32
    %1 = vector.broadcast %cst : f32 to vector<1x100xf32>
    %2 = arith.cmpf ogt, %0, %1 : vector<1x100xf32>
    %c0_1 = arith.constant 0 : index
    %c0_2 = arith.constant 0 : index
    %c0_3 = arith.constant 0 : index
    %3 = vector.load %arg1[%c0_1, %c0_2, %c0_3] : memref<1x24x100xf32, #tpu.memory_space<vmem>>, vector<1x24x100xf32>
    %4 = vector.shape_cast %3 : vector<1x24x100xf32> to vector<24x100xf32>
    %c0_4 = arith.constant 0 : index
    %c0_5 = arith.constant 0 : index
    %5 = vector.load %arg3[%c0_4, %c0_5] : memref<24x1xf32, #tpu.memory_space<vmem>>, vector<24x1xf32>
    %6 = vector.broadcast %5 : vector<24x1xf32> to vector<24x100xf32>
    %7 = arith.mulf %4, %6 : vector<24x100xf32>
    %c0_6 = arith.constant 0 : index
    %c0_7 = arith.constant 0 : index
    %8 = vector.load %arg4[%c0_6, %c0_7] : memref<24x1xf32, #tpu.memory_space<vmem>>, vector<24x1xf32>
    %9 = vector.broadcast %8 : vector<24x1xf32> to vector<24x100xf32>
    %10 = arith.addf %7, %9 : vector<24x100xf32>
    %cst_8 = arith.constant 0.000000e+00 : f32
    %11 = vector.broadcast %cst_8 : f32 to vector<24x100xf32>
    %12 = arith.maximumf %10, %11 : vector<24x100xf32>
    %cst_9 = arith.constant 0.000000e+00 : f32
    %13 = vector.shape_cast %2 : vector<1x100xi1> to vector<1x100xi1>
    %14 = vector.broadcast %13 : vector<1x100xi1> to vector<24x100xi1>
    %15 = vector.broadcast %cst_9 : f32 to vector<24x100xf32>
    %16 = arith.select %14, %12, %15 : vector<24x100xi1>, vector<24x100xf32>
    %c0_10 = arith.constant 0 : index
    %c0_11 = arith.constant 0 : index
    %17 = vector.load %arg5[%c0_10, %c0_11] : memref<24x24xbf16, #tpu.memory_space<vmem>>, vector<24x24xbf16>
    %18 = arith.truncf %16 : vector<24x100xf32> to vector<24x100xbf16>
    %cst_12 = arith.constant dense<0.000000e+00> : vector<24x100xf32>
    %19 = tpu.matmul %17, %18, %cst_12 {dimension_numbers = #tpu.dot_dimension_numbers<[1], [0], [0], [1], [0, 0, 1, 1], [], []>} : vector<24x24xbf16>, vector<24x100xbf16>, vector<24x100xf32> -> vector<24x100xf32>
    %c0_13 = arith.constant 0 : index
    %c0_14 = arith.constant 0 : index
    %20 = vector.load %arg6[%c0_13, %c0_14] : memref<24x1xf32, #tpu.memory_space<vmem>>, vector<24x1xf32>
    %21 = vector.broadcast %20 : vector<24x1xf32> to vector<24x100xf32>
    %22 = arith.addf %19, %21 : vector<24x100xf32>
    %23 = vector.extract_strided_slice %22 {offsets = [0, 0], sizes = [24, 99], strides = [1, 1]} : vector<24x100xf32> to vector<24x99xf32>
    %24 = vector.extract_strided_slice %22 {offsets = [0, 1], sizes = [24, 99], strides = [1, 1]} : vector<24x100xf32> to vector<24x99xf32>
    %25 = arith.maximumf %23, %24 : vector<24x99xf32>
    %26 = vector.extract_strided_slice %25 {offsets = [0, 0], sizes = [24, 89], strides = [1, 1]} : vector<24x99xf32> to vector<24x89xf32>
    %27 = vector.extract_strided_slice %25 {offsets = [0, 10], sizes = [24, 89], strides = [1, 1]} : vector<24x99xf32> to vector<24x89xf32>
    %28 = arith.maximumf %26, %27 : vector<24x89xf32>
    %c0_15 = arith.constant 0 : index
    %c0_16 = arith.constant 0 : index
    %29 = vector.load %arg7[%c0_15, %c0_16] : memref<89x36xf32, #tpu.memory_space<vmem>>, vector<89x36xf32>
    %cst_17 = arith.constant dense<0.000000e+00> : vector<24x36xf32>
    %30 = tpu.matmul %28, %29, %cst_17 {dimension_numbers = #tpu.dot_dimension_numbers<[1], [0], [0], [1], [0, 0, 1, 1], [], []>} : vector<24x89xf32>, vector<89x36xf32>, vector<24x36xf32> -> vector<24x36xf32>
    %c0_18 = arith.constant 0 : index
    %c0_19 = arith.constant 0 : index
    %c0_20 = arith.constant 0 : index
    %31 = vector.load %arg8[%c0_18, %c0_19, %c0_20] : memref<1x24x36xf32, #tpu.memory_space<vmem>>, vector<1x24x36xf32>
    %32 = vector.shape_cast %31 : vector<1x24x36xf32> to vector<24x36xf32>
    %33 = vector.shape_cast %30 : vector<24x36xf32> to vector<1x24x36xf32>
    tpu.vector_store %arg8[%c0_18, %c0_19, %c0_20], %33 {strides = array<i32>} : memref<1x24x36xf32, #tpu.memory_space<vmem>>, vector<1x24x36xf32>,
    return
  }
  func.func @transform_0(%arg0: i32) -> (i32, i32, i32) {
    %c0_i32 = arith.constant 0 : i32
    %c0_i32_0 = arith.constant 0 : i32
    %c0_i32_1 = arith.constant 0 : i32
    return %arg0, %c0_i32, %c0_i32_0 : i32, i32, i32
  }
  func.func @transform_1(%arg0: i32) -> (i32, i32) {
    %c0_i32 = arith.constant 0 : i32
    %c0_i32_0 = arith.constant 0 : i32
    %c0_i32_1 = arith.constant 0 : i32
    return %c0_i32, %c0_i32_0 : i32, i32
  }
  func.func @transform_2(%arg0: i32) -> (i32, i32) {
    %c0_i32 = arith.constant 0 : i32
    %c0_i32_0 = arith.constant 0 : i32
    %c0_i32_1 = arith.constant 0 : i32
    return %c0_i32, %c0_i32_0 : i32, i32
  }
  func.func @transform_3(%arg0: i32) -> (i32, i32) {
    %c0_i32 = arith.constant 0 : i32
    %c0_i32_0 = arith.constant 0 : i32
    %c0_i32_1 = arith.constant 0 : i32
    return %c0_i32, %c0_i32_0 : i32, i32
  }
  func.func @transform_4(%arg0: i32) -> (i32, i32) {
    %c0_i32 = arith.constant 0 : i32
    %c0_i32_0 = arith.constant 0 : i32
    %c0_i32_1 = arith.constant 0 : i32
    return %c0_i32, %c0_i32_0 : i32, i32
  }
  func.func @transform_5(%arg0: i32) -> (i32, i32) {
    %c0_i32 = arith.constant 0 : i32
    %c0_i32_0 = arith.constant 0 : i32
    %c0_i32_1 = arith.constant 0 : i32
    return %c0_i32, %c0_i32_0 : i32, i32
  }
  func.func @transform_6(%arg0: i32) -> (i32, i32) {
    %c0_i32 = arith.constant 0 : i32
    %c0_i32_0 = arith.constant 0 : i32
    %c0_i32_1 = arith.constant 0 : i32
    return %c0_i32, %c0_i32_0 : i32, i32
  }
  func.func @transform_7(%arg0: i32) -> (i32, i32, i32) {
    %c0_i32 = arith.constant 0 : i32
    %c0_i32_0 = arith.constant 0 : i32
    %c0_i32_1 = arith.constant 0 : i32
    return %arg0, %c0_i32, %c0_i32_0 : i32, i32, i32
  }
}

module attributes {stable_mosaic.version = 11 : i64} {
  func.func @kernel(%arg0: i32, %arg1: memref<1x8x36xf32, #tpu.memory_space<vmem>>, %arg2: memref<1x8x1xf32, #tpu.memory_space<vmem>>, %arg3: memref<1x36xf32, #tpu.memory_space<vmem>>, %arg4: memref<32x64xbf16, #tpu.memory_space<vmem>>, %arg5: memref<8x1xf32, #tpu.memory_space<vmem>>, %arg6: memref<4x24x100xf32, #tpu.memory_space<vmem>>, %arg7: memref<1x8x100xf32, #tpu.memory_space<vmem>>) attributes {dimension_semantics = [#tpu.dimension_semantics<parallel>], iteration_bounds = array<i64: 2>, scalar_prefetch = 0 : i64, scratch_operands = 0 : i64, tpu.core_type = #tpu.core_type<tc>, window_params = [{transform_indices = @transform_0, window_bounds = array<i64: 1, 8, 36>}, {transform_indices = @transform_1, window_bounds = array<i64: 1, 8, 1>}, {pipeline_mode = #tpu.pipeline_mode<synchronous>, transform_indices = @transform_2, window_bounds = array<i64: 1, 36>}, {pipeline_mode = #tpu.pipeline_mode<synchronous>, transform_indices = @transform_3, window_bounds = array<i64: 32, 64>}, {pipeline_mode = #tpu.pipeline_mode<synchronous>, transform_indices = @transform_4, window_bounds = array<i64: 8, 1>}, {pipeline_mode = #tpu.pipeline_mode<synchronous>, transform_indices = @transform_5, window_bounds = array<i64: 4, 24, 100>}, {transform_indices = @transform_6, window_bounds = array<i64: 1, 8, 100>}]} {
    %c0 = arith.constant 0 : index
    %c0_0 = arith.constant 0 : index
    %0 = vector.load %arg3[%c0, %c0_0] : memref<1x36xf32, #tpu.memory_space<vmem>>, vector<1x36xf32>
    %cst = arith.constant 5.000000e-01 : f32
    %1 = vector.broadcast %cst : f32 to vector<1x36xf32>
    %2 = arith.cmpf ogt, %0, %1 : vector<1x36xf32>
    %c0_1 = arith.constant 0 : index
    %c0_2 = arith.constant 0 : index
    %c0_3 = arith.constant 0 : index
    %3 = vector.load %arg1[%c0_1, %c0_2, %c0_3] : memref<1x8x36xf32, #tpu.memory_space<vmem>>, vector<1x8x36xf32>
    %4 = vector.shape_cast %3 : vector<1x8x36xf32> to vector<8x36xf32>
    %cst_4 = arith.constant 0.000000e+00 : f32
    %5 = vector.shape_cast %2 : vector<1x36xi1> to vector<1x36xi1>
    %6 = vector.broadcast %5 : vector<1x36xi1> to vector<8x36xi1>
    %7 = vector.broadcast %cst_4 : f32 to vector<8x36xf32>
    %8 = arith.select %6, %4, %7 : vector<8x36xi1>, vector<8x36xf32>
    %c0_5 = arith.constant 0 : index
    %c0_6 = arith.constant 0 : index
    %c0_7 = arith.constant 0 : index
    %9 = vector.load %arg2[%c0_5, %c0_6, %c0_7] : memref<1x8x1xf32, #tpu.memory_space<vmem>>, vector<1x8x1xf32>
    %10 = vector.shape_cast %9 : vector<1x8x1xf32> to vector<8x1xf32>
    %cst_8 = arith.constant 0.000000e+00 : f32
    %11 = vector.shape_cast %2 : vector<1x36xi1> to vector<1x36xi1>
    %12 = vector.broadcast %11 : vector<1x36xi1> to vector<8x36xi1>
    %13 = vector.shape_cast %10 : vector<8x1xf32> to vector<8x1xf32>
    %14 = vector.broadcast %13 : vector<8x1xf32> to vector<8x36xf32>
    %15 = vector.broadcast %cst_8 : f32 to vector<8x36xf32>
    %16 = arith.select %12, %14, %15 : vector<8x36xi1>, vector<8x36xf32>
    %17 = tpu.concatenate %8, %16 in 0 : vector<8x36xf32>, vector<8x36xf32> -> vector<16x36xf32>
    %18 = arith.truncf %17 : vector<16x36xf32> to vector<16x36xbf16>
    %19 = vector.extract_strided_slice %18 {offsets = [0, 0], sizes = [16, 24], strides = [1, 1]} : vector<16x36xbf16> to vector<16x24xbf16>
    %20 = vector.extract_strided_slice %18 {offsets = [0, 1], sizes = [16, 24], strides = [1, 1]} : vector<16x36xbf16> to vector<16x24xbf16>
    %21 = vector.extract_strided_slice %18 {offsets = [0, 6], sizes = [16, 24], strides = [1, 1]} : vector<16x36xbf16> to vector<16x24xbf16>
    %22 = vector.extract_strided_slice %18 {offsets = [0, 7], sizes = [16, 24], strides = [1, 1]} : vector<16x36xbf16> to vector<16x24xbf16>
    %23 = tpu.concatenate %19, %20, %21, %22 in 0 : vector<16x24xbf16>, vector<16x24xbf16>, vector<16x24xbf16>, vector<16x24xbf16> -> vector<64x24xbf16>
    %c0_9 = arith.constant 0 : index
    %c0_10 = arith.constant 0 : index
    %24 = vector.load %arg4[%c0_9, %c0_10] : memref<32x64xbf16, #tpu.memory_space<vmem>>, vector<32x64xbf16>
    %cst_11 = arith.constant dense<0.000000e+00> : vector<32x24xf32>
    %25 = tpu.matmul %24, %23, %cst_11 {dimension_numbers = #tpu.dot_dimension_numbers<[1], [0], [0], [1], [0, 0, 1, 1], [], []>} : vector<32x64xbf16>, vector<64x24xbf16>, vector<32x24xf32> -> vector<32x24xf32>
    %c0_12 = arith.constant 0 : index
    %c0_13 = arith.constant 0 : index
    %26 = vector.load %arg5[%c0_12, %c0_13] : memref<8x1xf32, #tpu.memory_space<vmem>>, vector<8x1xf32>
    %cst_14 = arith.constant 0.000000e+00 : f32
    %27 = vector.broadcast %cst_14 : f32 to vector<8x100xf32>
    %28 = vector.extract_strided_slice %25 {offsets = [0, 0], sizes = [8, 24], strides = [1, 1]} : vector<32x24xf32> to vector<8x24xf32>
    %29 = vector.broadcast %26 : vector<8x1xf32> to vector<8x24xf32>
    %30 = arith.addf %28, %29 : vector<8x24xf32>
    %c0_15 = arith.constant 0 : index
    %c0_16 = arith.constant 0 : index
    %c0_17 = arith.constant 0 : index
    %31 = vector.load %arg6[%c0_15, %c0_16, %c0_17] : memref<4x24x100xf32, #tpu.memory_space<vmem>>, vector<1x24x100xf32>
    %32 = vector.shape_cast %31 : vector<1x24x100xf32> to vector<24x100xf32>
    %cst_18 = arith.constant dense<0.000000e+00> : vector<8x100xf32>
    %33 = tpu.matmul %30, %32, %cst_18 {dimension_numbers = #tpu.dot_dimension_numbers<[1], [0], [0], [1], [0, 0, 1, 1], [], []>} : vector<8x24xf32>, vector<24x100xf32>, vector<8x100xf32> -> vector<8x100xf32>
    %34 = arith.addf %27, %33 : vector<8x100xf32>
    %35 = vector.extract_strided_slice %25 {offsets = [8, 0], sizes = [8, 24], strides = [1, 1]} : vector<32x24xf32> to vector<8x24xf32>
    %36 = vector.broadcast %26 : vector<8x1xf32> to vector<8x24xf32>
    %37 = arith.addf %35, %36 : vector<8x24xf32>
    %c1 = arith.constant 1 : index
    %c0_19 = arith.constant 0 : index
    %c0_20 = arith.constant 0 : index
    %38 = vector.load %arg6[%c1, %c0_19, %c0_20] : memref<4x24x100xf32, #tpu.memory_space<vmem>>, vector<1x24x100xf32>
    %39 = vector.shape_cast %38 : vector<1x24x100xf32> to vector<24x100xf32>
    %cst_21 = arith.constant dense<0.000000e+00> : vector<8x100xf32>
    %40 = tpu.matmul %37, %39, %cst_21 {dimension_numbers = #tpu.dot_dimension_numbers<[1], [0], [0], [1], [0, 0, 1, 1], [], []>} : vector<8x24xf32>, vector<24x100xf32>, vector<8x100xf32> -> vector<8x100xf32>
    %41 = arith.addf %34, %40 : vector<8x100xf32>
    %42 = vector.extract_strided_slice %25 {offsets = [16, 0], sizes = [8, 24], strides = [1, 1]} : vector<32x24xf32> to vector<8x24xf32>
    %43 = vector.broadcast %26 : vector<8x1xf32> to vector<8x24xf32>
    %44 = arith.addf %42, %43 : vector<8x24xf32>
    %c2 = arith.constant 2 : index
    %c0_22 = arith.constant 0 : index
    %c0_23 = arith.constant 0 : index
    %45 = vector.load %arg6[%c2, %c0_22, %c0_23] : memref<4x24x100xf32, #tpu.memory_space<vmem>>, vector<1x24x100xf32>
    %46 = vector.shape_cast %45 : vector<1x24x100xf32> to vector<24x100xf32>
    %cst_24 = arith.constant dense<0.000000e+00> : vector<8x100xf32>
    %47 = tpu.matmul %44, %46, %cst_24 {dimension_numbers = #tpu.dot_dimension_numbers<[1], [0], [0], [1], [0, 0, 1, 1], [], []>} : vector<8x24xf32>, vector<24x100xf32>, vector<8x100xf32> -> vector<8x100xf32>
    %48 = arith.addf %41, %47 : vector<8x100xf32>
    %49 = vector.extract_strided_slice %25 {offsets = [24, 0], sizes = [8, 24], strides = [1, 1]} : vector<32x24xf32> to vector<8x24xf32>
    %50 = vector.broadcast %26 : vector<8x1xf32> to vector<8x24xf32>
    %51 = arith.addf %49, %50 : vector<8x24xf32>
    %c3 = arith.constant 3 : index
    %c0_25 = arith.constant 0 : index
    %c0_26 = arith.constant 0 : index
    %52 = vector.load %arg6[%c3, %c0_25, %c0_26] : memref<4x24x100xf32, #tpu.memory_space<vmem>>, vector<1x24x100xf32>
    %53 = vector.shape_cast %52 : vector<1x24x100xf32> to vector<24x100xf32>
    %cst_27 = arith.constant dense<0.000000e+00> : vector<8x100xf32>
    %54 = tpu.matmul %51, %53, %cst_27 {dimension_numbers = #tpu.dot_dimension_numbers<[1], [0], [0], [1], [0, 0, 1, 1], [], []>} : vector<8x24xf32>, vector<24x100xf32>, vector<8x100xf32> -> vector<8x100xf32>
    %55 = arith.addf %48, %54 : vector<8x100xf32>
    %c0_28 = arith.constant 0 : index
    %c0_29 = arith.constant 0 : index
    %c0_30 = arith.constant 0 : index
    %56 = vector.load %arg7[%c0_28, %c0_29, %c0_30] : memref<1x8x100xf32, #tpu.memory_space<vmem>>, vector<1x8x100xf32>
    %57 = vector.shape_cast %56 : vector<1x8x100xf32> to vector<8x100xf32>
    %58 = vector.shape_cast %55 : vector<8x100xf32> to vector<1x8x100xf32>
    tpu.vector_store %arg7[%c0_28, %c0_29, %c0_30], %58 {strides = array<i32>} : memref<1x8x100xf32, #tpu.memory_space<vmem>>, vector<1x8x100xf32>,
    return
  }
  func.func @transform_0(%arg0: i32) -> (i32, i32, i32) {
    %c0_i32 = arith.constant 0 : i32
    %c0_i32_0 = arith.constant 0 : i32
    %c0_i32_1 = arith.constant 0 : i32
    return %arg0, %c0_i32, %c0_i32_0 : i32, i32, i32
  }
  func.func @transform_1(%arg0: i32) -> (i32, i32, i32) {
    %c0_i32 = arith.constant 0 : i32
    %c0_i32_0 = arith.constant 0 : i32
    %c0_i32_1 = arith.constant 0 : i32
    return %arg0, %c0_i32, %c0_i32_0 : i32, i32, i32
  }
  func.func @transform_2(%arg0: i32) -> (i32, i32) {
    %c0_i32 = arith.constant 0 : i32
    %c0_i32_0 = arith.constant 0 : i32
    %c0_i32_1 = arith.constant 0 : i32
    return %c0_i32, %c0_i32_0 : i32, i32
  }
  func.func @transform_3(%arg0: i32) -> (i32, i32) {
    %c0_i32 = arith.constant 0 : i32
    %c0_i32_0 = arith.constant 0 : i32
    %c0_i32_1 = arith.constant 0 : i32
    return %c0_i32, %c0_i32_0 : i32, i32
  }
  func.func @transform_4(%arg0: i32) -> (i32, i32) {
    %c0_i32 = arith.constant 0 : i32
    %c0_i32_0 = arith.constant 0 : i32
    %c0_i32_1 = arith.constant 0 : i32
    return %c0_i32, %c0_i32_0 : i32, i32
  }
  func.func @transform_5(%arg0: i32) -> (i32, i32, i32) {
    %c0_i32 = arith.constant 0 : i32
    %c0_i32_0 = arith.constant 0 : i32
    %c0_i32_1 = arith.constant 0 : i32
    %c0_i32_2 = arith.constant 0 : i32
    return %c0_i32, %c0_i32_0, %c0_i32_1 : i32, i32, i32
  }
  func.func @transform_6(%arg0: i32) -> (i32, i32, i32) {
    %c0_i32 = arith.constant 0 : i32
    %c0_i32_0 = arith.constant 0 : i32
    %c0_i32_1 = arith.constant 0 : i32
    return %arg0, %c0_i32, %c0_i32_0 : i32, i32, i32
  }
}

module attributes {stable_mosaic.version = 11 : i64} {
  func.func @kernel(%arg0: i32, %arg1: memref<1x24x36xf32, #tpu.memory_space<vmem>>, %arg2: memref<1x36xf32, #tpu.memory_space<vmem>>, %arg3: memref<24x1xf32, #tpu.memory_space<vmem>>, %arg4: memref<24x1xf32, #tpu.memory_space<vmem>>, %arg5: memref<4x216xbf16, #tpu.memory_space<vmem>>, %arg6: memref<4x1xf32, #tpu.memory_space<vmem>>, %arg7: memref<28x1xf32, #tpu.memory_space<vmem>>, %arg8: memref<28x1xf32, #tpu.memory_space<vmem>>, %arg9: memref<4x252xbf16, #tpu.memory_space<vmem>>, %arg10: memref<4x1xf32, #tpu.memory_space<vmem>>, %arg11: memref<1x8x36xf32, #tpu.memory_space<vmem>>) attributes {dimension_semantics = [#tpu.dimension_semantics<parallel>], iteration_bounds = array<i64: 2>, scalar_prefetch = 0 : i64, scratch_operands = 0 : i64, tpu.core_type = #tpu.core_type<tc>, window_params = [{transform_indices = @transform_0, window_bounds = array<i64: 1, 24, 36>}, {pipeline_mode = #tpu.pipeline_mode<synchronous>, transform_indices = @transform_1, window_bounds = array<i64: 1, 36>}, {pipeline_mode = #tpu.pipeline_mode<synchronous>, transform_indices = @transform_2, window_bounds = array<i64: 24, 1>}, {pipeline_mode = #tpu.pipeline_mode<synchronous>, transform_indices = @transform_3, window_bounds = array<i64: 24, 1>}, {pipeline_mode = #tpu.pipeline_mode<synchronous>, transform_indices = @transform_4, window_bounds = array<i64: 4, 216>}, {pipeline_mode = #tpu.pipeline_mode<synchronous>, transform_indices = @transform_5, window_bounds = array<i64: 4, 1>}, {pipeline_mode = #tpu.pipeline_mode<synchronous>, transform_indices = @transform_6, window_bounds = array<i64: 28, 1>}, {pipeline_mode = #tpu.pipeline_mode<synchronous>, transform_indices = @transform_7, window_bounds = array<i64: 28, 1>}, {pipeline_mode = #tpu.pipeline_mode<synchronous>, transform_indices = @transform_8, window_bounds = array<i64: 4, 252>}, {pipeline_mode = #tpu.pipeline_mode<synchronous>, transform_indices = @transform_9, window_bounds = array<i64: 4, 1>}, {transform_indices = @transform_10, window_bounds = array<i64: 1, 8, 36>}]} {
    %c0 = arith.constant 0 : index
    %c0_0 = arith.constant 0 : index
    %0 = vector.load %arg2[%c0, %c0_0] : memref<1x36xf32, #tpu.memory_space<vmem>>, vector<1x36xf32>
    %cst = arith.constant 5.000000e-01 : f32
    %1 = vector.broadcast %cst : f32 to vector<1x36xf32>
    %2 = arith.cmpf ogt, %0, %1 : vector<1x36xf32>
    %c0_1 = arith.constant 0 : index
    %c0_2 = arith.constant 0 : index
    %c0_3 = arith.constant 0 : index
    %3 = vector.load %arg1[%c0_1, %c0_2, %c0_3] : memref<1x24x36xf32, #tpu.memory_space<vmem>>, vector<1x24x36xf32>
    %4 = vector.shape_cast %3 : vector<1x24x36xf32> to vector<24x36xf32>
    %c0_4 = arith.constant 0 : index
    %c0_5 = arith.constant 0 : index
    %5 = vector.load %arg3[%c0_4, %c0_5] : memref<24x1xf32, #tpu.memory_space<vmem>>, vector<24x1xf32>
    %c0_6 = arith.constant 0 : index
    %c0_7 = arith.constant 0 : index
    %6 = vector.load %arg4[%c0_6, %c0_7] : memref<24x1xf32, #tpu.memory_space<vmem>>, vector<24x1xf32>
    %7 = vector.broadcast %5 : vector<24x1xf32> to vector<24x36xf32>
    %8 = arith.mulf %4, %7 : vector<24x36xf32>
    %9 = vector.broadcast %6 : vector<24x1xf32> to vector<24x36xf32>
    %10 = arith.addf %8, %9 : vector<24x36xf32>
    %cst_8 = arith.constant 0.000000e+00 : f32
    %11 = vector.broadcast %cst_8 : f32 to vector<24x36xf32>
    %12 = arith.maximumf %10, %11 : vector<24x36xf32>
    %cst_9 = arith.constant 0.000000e+00 : f32
    %13 = vector.shape_cast %2 : vector<1x36xi1> to vector<1x36xi1>
    %14 = vector.broadcast %13 : vector<1x36xi1> to vector<24x36xi1>
    %15 = vector.broadcast %cst_9 : f32 to vector<24x36xf32>
    %16 = arith.select %14, %12, %15 : vector<24x36xi1>, vector<24x36xf32>
    %17 = arith.truncf %16 : vector<24x36xf32> to vector<24x36xbf16>
    %18 = vector.extract_strided_slice %17 {offsets = [0, 0], sizes = [24, 22], strides = [1, 1]} : vector<24x36xbf16> to vector<24x22xbf16>
    %19 = vector.extract_strided_slice %17 {offsets = [0, 1], sizes = [24, 22], strides = [1, 1]} : vector<24x36xbf16> to vector<24x22xbf16>
    %20 = vector.extract_strided_slice %17 {offsets = [0, 2], sizes = [24, 22], strides = [1, 1]} : vector<24x36xbf16> to vector<24x22xbf16>
    %21 = vector.extract_strided_slice %17 {offsets = [0, 6], sizes = [24, 22], strides = [1, 1]} : vector<24x36xbf16> to vector<24x22xbf16>
    %22 = vector.extract_strided_slice %17 {offsets = [0, 7], sizes = [24, 22], strides = [1, 1]} : vector<24x36xbf16> to vector<24x22xbf16>
    %23 = vector.extract_strided_slice %17 {offsets = [0, 8], sizes = [24, 22], strides = [1, 1]} : vector<24x36xbf16> to vector<24x22xbf16>
    %24 = vector.extract_strided_slice %17 {offsets = [0, 12], sizes = [24, 22], strides = [1, 1]} : vector<24x36xbf16> to vector<24x22xbf16>
    %25 = vector.extract_strided_slice %17 {offsets = [0, 13], sizes = [24, 22], strides = [1, 1]} : vector<24x36xbf16> to vector<24x22xbf16>
    %26 = vector.extract_strided_slice %17 {offsets = [0, 14], sizes = [24, 22], strides = [1, 1]} : vector<24x36xbf16> to vector<24x22xbf16>
    %27 = tpu.concatenate %18, %19, %20, %21, %22, %23, %24, %25, %26 in 0 : vector<24x22xbf16>, vector<24x22xbf16>, vector<24x22xbf16>, vector<24x22xbf16>, vector<24x22xbf16>, vector<24x22xbf16>, vector<24x22xbf16>, vector<24x22xbf16>, vector<24x22xbf16> -> vector<216x22xbf16>
    %c0_10 = arith.constant 0 : index
    %c0_11 = arith.constant 0 : index
    %28 = vector.load %arg5[%c0_10, %c0_11] : memref<4x216xbf16, #tpu.memory_space<vmem>>, vector<4x216xbf16>
    %cst_12 = arith.constant dense<0.000000e+00> : vector<4x22xf32>
    %29 = tpu.matmul %28, %27, %cst_12 {dimension_numbers = #tpu.dot_dimension_numbers<[1], [0], [0], [1], [0, 0, 1, 1], [], []>} : vector<4x216xbf16>, vector<216x22xbf16>, vector<4x22xf32> -> vector<4x22xf32>
    %c0_13 = arith.constant 0 : index
    %c0_14 = arith.constant 0 : index
    %30 = vector.load %arg6[%c0_13, %c0_14] : memref<4x1xf32, #tpu.memory_space<vmem>>, vector<4x1xf32>
    %31 = vector.broadcast %30 : vector<4x1xf32> to vector<4x22xf32>
    %32 = arith.addf %29, %31 : vector<4x22xf32>
    %c0_15 = arith.constant 0 : index
    %c0_16 = arith.constant 0 : index
    %c7 = arith.constant 7 : index
    %33 = vector.load %arg11[%c0_15, %c0_16, %c7] : memref<1x8x36xf32, #tpu.memory_space<vmem>>, vector<1x4x22xf32>
    %34 = vector.shape_cast %33 : vector<1x4x22xf32> to vector<4x22xf32>
    %35 = vector.shape_cast %32 : vector<4x22xf32> to vector<1x4x22xf32>
    tpu.vector_store %arg11[%c0_15, %c0_16, %c7], %35 {strides = array<i32>} : memref<1x8x36xf32, #tpu.memory_space<vmem>>, vector<1x4x22xf32>,
    %c0_17 = arith.constant 0 : index
    %c0_18 = arith.constant 0 : index
    %c0_19 = arith.constant 0 : index
    %36 = vector.load %arg1[%c0_17, %c0_18, %c0_19] : memref<1x24x36xf32, #tpu.memory_space<vmem>>, vector<1x24x36xf32>
    %37 = vector.shape_cast %36 : vector<1x24x36xf32> to vector<24x36xf32>
    %c0_20 = arith.constant 0 : index
    %c0_21 = arith.constant 0 : index
    %c0_22 = arith.constant 0 : index
    %38 = vector.load %arg11[%c0_20, %c0_21, %c0_22] : memref<1x8x36xf32, #tpu.memory_space<vmem>>, vector<1x4x36xf32>
    %39 = vector.shape_cast %38 : vector<1x4x36xf32> to vector<4x36xf32>
    %40 = tpu.concatenate %37, %39 in 0 : vector<24x36xf32>, vector<4x36xf32> -> vector<28x36xf32>
    %c0_23 = arith.constant 0 : index
    %c0_24 = arith.constant 0 : index
    %41 = vector.load %arg7[%c0_23, %c0_24] : memref<28x1xf32, #tpu.memory_space<vmem>>, vector<28x1xf32>
    %c0_25 = arith.constant 0 : index
    %c0_26 = arith.constant 0 : index
    %42 = vector.load %arg8[%c0_25, %c0_26] : memref<28x1xf32, #tpu.memory_space<vmem>>, vector<28x1xf32>
    %43 = vector.broadcast %41 : vector<28x1xf32> to vector<28x36xf32>
    %44 = arith.mulf %40, %43 : vector<28x36xf32>
    %45 = vector.broadcast %42 : vector<28x1xf32> to vector<28x36xf32>
    %46 = arith.addf %44, %45 : vector<28x36xf32>
    %cst_27 = arith.constant 0.000000e+00 : f32
    %47 = vector.broadcast %cst_27 : f32 to vector<28x36xf32>
    %48 = arith.maximumf %46, %47 : vector<28x36xf32>
    %cst_28 = arith.constant 0.000000e+00 : f32
    %49 = vector.shape_cast %2 : vector<1x36xi1> to vector<1x36xi1>
    %50 = vector.broadcast %49 : vector<1x36xi1> to vector<28x36xi1>
    %51 = vector.broadcast %cst_28 : f32 to vector<28x36xf32>
    %52 = arith.select %50, %48, %51 : vector<28x36xi1>, vector<28x36xf32>
    %53 = arith.truncf %52 : vector<28x36xf32> to vector<28x36xbf16>
    %54 = vector.extract_strided_slice %53 {offsets = [0, 0], sizes = [28, 22], strides = [1, 1]} : vector<28x36xbf16> to vector<28x22xbf16>
    %55 = vector.extract_strided_slice %53 {offsets = [0, 1], sizes = [28, 22], strides = [1, 1]} : vector<28x36xbf16> to vector<28x22xbf16>
    %56 = vector.extract_strided_slice %53 {offsets = [0, 2], sizes = [28, 22], strides = [1, 1]} : vector<28x36xbf16> to vector<28x22xbf16>
    %57 = vector.extract_strided_slice %53 {offsets = [0, 6], sizes = [28, 22], strides = [1, 1]} : vector<28x36xbf16> to vector<28x22xbf16>
    %58 = vector.extract_strided_slice %53 {offsets = [0, 7], sizes = [28, 22], strides = [1, 1]} : vector<28x36xbf16> to vector<28x22xbf16>
    %59 = vector.extract_strided_slice %53 {offsets = [0, 8], sizes = [28, 22], strides = [1, 1]} : vector<28x36xbf16> to vector<28x22xbf16>
    %60 = vector.extract_strided_slice %53 {offsets = [0, 12], sizes = [28, 22], strides = [1, 1]} : vector<28x36xbf16> to vector<28x22xbf16>
    %61 = vector.extract_strided_slice %53 {offsets = [0, 13], sizes = [28, 22], strides = [1, 1]} : vector<28x36xbf16> to vector<28x22xbf16>
    %62 = vector.extract_strided_slice %53 {offsets = [0, 14], sizes = [28, 22], strides = [1, 1]} : vector<28x36xbf16> to vector<28x22xbf16>
    %63 = tpu.concatenate %54, %55, %56, %57, %58, %59, %60, %61, %62 in 0 : vector<28x22xbf16>, vector<28x22xbf16>, vector<28x22xbf16>, vector<28x22xbf16>, vector<28x22xbf16>, vector<28x22xbf16>, vector<28x22xbf16>, vector<28x22xbf16>, vector<28x22xbf16> -> vector<252x22xbf16>
    %c0_29 = arith.constant 0 : index
    %c0_30 = arith.constant 0 : index
    %64 = vector.load %arg9[%c0_29, %c0_30] : memref<4x252xbf16, #tpu.memory_space<vmem>>, vector<4x252xbf16>
    %cst_31 = arith.constant dense<0.000000e+00> : vector<4x22xf32>
    %65 = tpu.matmul %64, %63, %cst_31 {dimension_numbers = #tpu.dot_dimension_numbers<[1], [0], [0], [1], [0, 0, 1, 1], [], []>} : vector<4x252xbf16>, vector<252x22xbf16>, vector<4x22xf32> -> vector<4x22xf32>
    %c0_32 = arith.constant 0 : index
    %c0_33 = arith.constant 0 : index
    %66 = vector.load %arg10[%c0_32, %c0_33] : memref<4x1xf32, #tpu.memory_space<vmem>>, vector<4x1xf32>
    %67 = vector.broadcast %66 : vector<4x1xf32> to vector<4x22xf32>
    %68 = arith.addf %65, %67 : vector<4x22xf32>
    %c0_34 = arith.constant 0 : index
    %c4 = arith.constant 4 : index
    %c7_35 = arith.constant 7 : index
    %69 = vector.load %arg11[%c0_34, %c4, %c7_35] : memref<1x8x36xf32, #tpu.memory_space<vmem>>, vector<1x4x22xf32>
    %70 = vector.shape_cast %69 : vector<1x4x22xf32> to vector<4x22xf32>
    %71 = vector.shape_cast %68 : vector<4x22xf32> to vector<1x4x22xf32>
    tpu.vector_store %arg11[%c0_34, %c4, %c7_35], %71 {strides = array<i32>} : memref<1x8x36xf32, #tpu.memory_space<vmem>>, vector<1x4x22xf32>,
    return
  }
  func.func @transform_0(%arg0: i32) -> (i32, i32, i32) {
    %c0_i32 = arith.constant 0 : i32
    %c0_i32_0 = arith.constant 0 : i32
    %c0_i32_1 = arith.constant 0 : i32
    return %arg0, %c0_i32, %c0_i32_0 : i32, i32, i32
  }
  func.func @transform_1(%arg0: i32) -> (i32, i32) {
    %c0_i32 = arith.constant 0 : i32
    %c0_i32_0 = arith.constant 0 : i32
    %c0_i32_1 = arith.constant 0 : i32
    return %c0_i32, %c0_i32_0 : i32, i32
  }
  func.func @transform_2(%arg0: i32) -> (i32, i32) {
    %c0_i32 = arith.constant 0 : i32
    %c0_i32_0 = arith.constant 0 : i32
    %c0_i32_1 = arith.constant 0 : i32
    return %c0_i32, %c0_i32_0 : i32, i32
  }
  func.func @transform_3(%arg0: i32) -> (i32, i32) {
    %c0_i32 = arith.constant 0 : i32
    %c0_i32_0 = arith.constant 0 : i32
    %c0_i32_1 = arith.constant 0 : i32
    return %c0_i32, %c0_i32_0 : i32, i32
  }
  func.func @transform_4(%arg0: i32) -> (i32, i32) {
    %c0_i32 = arith.constant 0 : i32
    %c0_i32_0 = arith.constant 0 : i32
    %c0_i32_1 = arith.constant 0 : i32
    return %c0_i32, %c0_i32_0 : i32, i32
  }
  func.func @transform_5(%arg0: i32) -> (i32, i32) {
    %c0_i32 = arith.constant 0 : i32
    %c0_i32_0 = arith.constant 0 : i32
    %c0_i32_1 = arith.constant 0 : i32
    return %c0_i32, %c0_i32_0 : i32, i32
  }
  func.func @transform_6(%arg0: i32) -> (i32, i32) {
    %c0_i32 = arith.constant 0 : i32
    %c0_i32_0 = arith.constant 0 : i32
    %c0_i32_1 = arith.constant 0 : i32
    return %c0_i32, %c0_i32_0 : i32, i32
  }
  func.func @transform_7(%arg0: i32) -> (i32, i32) {
    %c0_i32 = arith.constant 0 : i32
    %c0_i32_0 = arith.constant 0 : i32
    %c0_i32_1 = arith.constant 0 : i32
    return %c0_i32, %c0_i32_0 : i32, i32
  }
  func.func @transform_8(%arg0: i32) -> (i32, i32) {
    %c0_i32 = arith.constant 0 : i32
    %c0_i32_0 = arith.constant 0 : i32
    %c0_i32_1 = arith.constant 0 : i32
    return %c0_i32, %c0_i32_0 : i32, i32
  }
  func.func @transform_9(%arg0: i32) -> (i32, i32) {
    %c0_i32 = arith.constant 0 : i32
    %c0_i32_0 = arith.constant 0 : i32
    %c0_i32_1 = arith.constant 0 : i32
    return %c0_i32, %c0_i32_0 : i32, i32
  }
  func.func @transform_10(%arg0: i32) -> (i32, i32, i32) {
    %c0_i32 = arith.constant 0 : i32
    %c0_i32_0 = arith.constant 0 : i32
    %c0_i32_1 = arith.constant 0 : i32
    return %arg0, %c0_i32, %c0_i32_0 : i32, i32, i32
  }
}

module attributes {stable_mosaic.version = 11 : i64} {
  func.func @kernel(%arg0: i32, %arg1: memref<1x8x100xf32, #tpu.memory_space<vmem>>, %arg2: memref<1x24x100xf32, #tpu.memory_space<vmem>>, %arg3: memref<1x100xf32, #tpu.memory_space<vmem>>, %arg4: memref<32x1xf32, #tpu.memory_space<vmem>>, %arg5: memref<32x1xf32, #tpu.memory_space<vmem>>, %arg6: memref<4x288xbf16, #tpu.memory_space<vmem>>, %arg7: memref<4x1xf32, #tpu.memory_space<vmem>>, %arg8: memref<36x1xf32, #tpu.memory_space<vmem>>, %arg9: memref<36x1xf32, #tpu.memory_space<vmem>>, %arg10: memref<4x324xbf16, #tpu.memory_space<vmem>>, %arg11: memref<4x1xf32, #tpu.memory_space<vmem>>, %arg12: memref<1x8x100xf32, #tpu.memory_space<vmem>>) attributes {dimension_semantics = [#tpu.dimension_semantics<parallel>], iteration_bounds = array<i64: 2>, scalar_prefetch = 0 : i64, scratch_operands = 0 : i64, tpu.core_type = #tpu.core_type<tc>, window_params = [{transform_indices = @transform_0, window_bounds = array<i64: 1, 8, 100>}, {transform_indices = @transform_1, window_bounds = array<i64: 1, 24, 100>}, {pipeline_mode = #tpu.pipeline_mode<synchronous>, transform_indices = @transform_2, window_bounds = array<i64: 1, 100>}, {pipeline_mode = #tpu.pipeline_mode<synchronous>, transform_indices = @transform_3, window_bounds = array<i64: 32, 1>}, {pipeline_mode = #tpu.pipeline_mode<synchronous>, transform_indices = @transform_4, window_bounds = array<i64: 32, 1>}, {pipeline_mode = #tpu.pipeline_mode<synchronous>, transform_indices = @transform_5, window_bounds = array<i64: 4, 288>}, {pipeline_mode = #tpu.pipeline_mode<synchronous>, transform_indices = @transform_6, window_bounds = array<i64: 4, 1>}, {pipeline_mode = #tpu.pipeline_mode<synchronous>, transform_indices = @transform_7, window_bounds = array<i64: 36, 1>}, {pipeline_mode = #tpu.pipeline_mode<synchronous>, transform_indices = @transform_8, window_bounds = array<i64: 36, 1>}, {pipeline_mode = #tpu.pipeline_mode<synchronous>, transform_indices = @transform_9, window_bounds = array<i64: 4, 324>}, {pipeline_mode = #tpu.pipeline_mode<synchronous>, transform_indices = @transform_10, window_bounds = array<i64: 4, 1>}, {transform_indices = @transform_11, window_bounds = array<i64: 1, 8, 100>}]} {
    %c0 = arith.constant 0 : index
    %c0_0 = arith.constant 0 : index
    %0 = vector.load %arg3[%c0, %c0_0] : memref<1x100xf32, #tpu.memory_space<vmem>>, vector<1x100xf32>
    %cst = arith.constant 5.000000e-01 : f32
    %1 = vector.broadcast %cst : f32 to vector<1x100xf32>
    %2 = arith.cmpf ogt, %0, %1 : vector<1x100xf32>
    %c0_1 = arith.constant 0 : index
    %c0_2 = arith.constant 0 : index
    %c0_3 = arith.constant 0 : index
    %3 = vector.load %arg1[%c0_1, %c0_2, %c0_3] : memref<1x8x100xf32, #tpu.memory_space<vmem>>, vector<1x8x100xf32>
    %4 = vector.shape_cast %3 : vector<1x8x100xf32> to vector<8x100xf32>
    %c0_4 = arith.constant 0 : index
    %c0_5 = arith.constant 0 : index
    %c0_6 = arith.constant 0 : index
    %5 = vector.load %arg2[%c0_4, %c0_5, %c0_6] : memref<1x24x100xf32, #tpu.memory_space<vmem>>, vector<1x24x100xf32>
    %6 = vector.shape_cast %5 : vector<1x24x100xf32> to vector<24x100xf32>
    %7 = tpu.concatenate %4, %6 in 0 : vector<8x100xf32>, vector<24x100xf32> -> vector<32x100xf32>
    %c0_7 = arith.constant 0 : index
    %c0_8 = arith.constant 0 : index
    %8 = vector.load %arg4[%c0_7, %c0_8] : memref<32x1xf32, #tpu.memory_space<vmem>>, vector<32x1xf32>
    %c0_9 = arith.constant 0 : index
    %c0_10 = arith.constant 0 : index
    %9 = vector.load %arg5[%c0_9, %c0_10] : memref<32x1xf32, #tpu.memory_space<vmem>>, vector<32x1xf32>
    %10 = vector.broadcast %8 : vector<32x1xf32> to vector<32x100xf32>
    %11 = arith.mulf %7, %10 : vector<32x100xf32>
    %12 = vector.broadcast %9 : vector<32x1xf32> to vector<32x100xf32>
    %13 = arith.addf %11, %12 : vector<32x100xf32>
    %cst_11 = arith.constant 0.000000e+00 : f32
    %14 = vector.broadcast %cst_11 : f32 to vector<32x100xf32>
    %15 = arith.maximumf %13, %14 : vector<32x100xf32>
    %cst_12 = arith.constant 0.000000e+00 : f32
    %16 = vector.shape_cast %2 : vector<1x100xi1> to vector<1x100xi1>
    %17 = vector.broadcast %16 : vector<1x100xi1> to vector<32x100xi1>
    %18 = vector.broadcast %cst_12 : f32 to vector<32x100xf32>
    %19 = arith.select %17, %15, %18 : vector<32x100xi1>, vector<32x100xf32>
    %20 = arith.truncf %19 : vector<32x100xf32> to vector<32x100xbf16>
    %21 = vector.extract_strided_slice %20 {offsets = [0, 0], sizes = [32, 78], strides = [1, 1]} : vector<32x100xbf16> to vector<32x78xbf16>
    %22 = vector.extract_strided_slice %20 {offsets = [0, 1], sizes = [32, 78], strides = [1, 1]} : vector<32x100xbf16> to vector<32x78xbf16>
    %23 = vector.extract_strided_slice %20 {offsets = [0, 2], sizes = [32, 78], strides = [1, 1]} : vector<32x100xbf16> to vector<32x78xbf16>
    %24 = vector.extract_strided_slice %20 {offsets = [0, 10], sizes = [32, 78], strides = [1, 1]} : vector<32x100xbf16> to vector<32x78xbf16>
    %25 = vector.extract_strided_slice %20 {offsets = [0, 11], sizes = [32, 78], strides = [1, 1]} : vector<32x100xbf16> to vector<32x78xbf16>
    %26 = vector.extract_strided_slice %20 {offsets = [0, 12], sizes = [32, 78], strides = [1, 1]} : vector<32x100xbf16> to vector<32x78xbf16>
    %27 = vector.extract_strided_slice %20 {offsets = [0, 20], sizes = [32, 78], strides = [1, 1]} : vector<32x100xbf16> to vector<32x78xbf16>
    %28 = vector.extract_strided_slice %20 {offsets = [0, 21], sizes = [32, 78], strides = [1, 1]} : vector<32x100xbf16> to vector<32x78xbf16>
    %29 = vector.extract_strided_slice %20 {offsets = [0, 22], sizes = [32, 78], strides = [1, 1]} : vector<32x100xbf16> to vector<32x78xbf16>
    %30 = tpu.concatenate %21, %22, %23, %24, %25, %26, %27, %28, %29 in 0 : vector<32x78xbf16>, vector<32x78xbf16>, vector<32x78xbf16>, vector<32x78xbf16>, vector<32x78xbf16>, vector<32x78xbf16>, vector<32x78xbf16>, vector<32x78xbf16>, vector<32x78xbf16> -> vector<288x78xbf16>
    %c0_13 = arith.constant 0 : index
    %c0_14 = arith.constant 0 : index
    %31 = vector.load %arg6[%c0_13, %c0_14] : memref<4x288xbf16, #tpu.memory_space<vmem>>, vector<4x288xbf16>
    %cst_15 = arith.constant dense<0.000000e+00> : vector<4x78xf32>
    %32 = tpu.matmul %31, %30, %cst_15 {dimension_numbers = #tpu.dot_dimension_numbers<[1], [0], [0], [1], [0, 0, 1, 1], [], []>} : vector<4x288xbf16>, vector<288x78xbf16>, vector<4x78xf32> -> vector<4x78xf32>
    %c0_16 = arith.constant 0 : index
    %c0_17 = arith.constant 0 : index
    %33 = vector.load %arg7[%c0_16, %c0_17] : memref<4x1xf32, #tpu.memory_space<vmem>>, vector<4x1xf32>
    %34 = vector.broadcast %33 : vector<4x1xf32> to vector<4x78xf32>
    %35 = arith.addf %32, %34 : vector<4x78xf32>
    %c0_18 = arith.constant 0 : index
    %c0_19 = arith.constant 0 : index
    %c11 = arith.constant 11 : index
    %36 = vector.load %arg12[%c0_18, %c0_19, %c11] : memref<1x8x100xf32, #tpu.memory_space<vmem>>, vector<1x4x78xf32>
    %37 = vector.shape_cast %36 : vector<1x4x78xf32> to vector<4x78xf32>
    %38 = vector.shape_cast %35 : vector<4x78xf32> to vector<1x4x78xf32>
    tpu.vector_store %arg12[%c0_18, %c0_19, %c11], %38 {strides = array<i32>} : memref<1x8x100xf32, #tpu.memory_space<vmem>>, vector<1x4x78xf32>,
    %c0_20 = arith.constant 0 : index
    %c0_21 = arith.constant 0 : index
    %c0_22 = arith.constant 0 : index
    %39 = vector.load %arg1[%c0_20, %c0_21, %c0_22] : memref<1x8x100xf32, #tpu.memory_space<vmem>>, vector<1x8x100xf32>
    %40 = vector.shape_cast %39 : vector<1x8x100xf32> to vector<8x100xf32>
    %c0_23 = arith.constant 0 : index
    %c0_24 = arith.constant 0 : index
    %c0_25 = arith.constant 0 : index
    %41 = vector.load %arg2[%c0_23, %c0_24, %c0_25] : memref<1x24x100xf32, #tpu.memory_space<vmem>>, vector<1x24x100xf32>
    %42 = vector.shape_cast %41 : vector<1x24x100xf32> to vector<24x100xf32>
    %c0_26 = arith.constant 0 : index
    %c0_27 = arith.constant 0 : index
    %c0_28 = arith.constant 0 : index
    %43 = vector.load %arg12[%c0_26, %c0_27, %c0_28] : memref<1x8x100xf32, #tpu.memory_space<vmem>>, vector<1x4x100xf32>
    %44 = vector.shape_cast %43 : vector<1x4x100xf32> to vector<4x100xf32>
    %45 = tpu.concatenate %40, %42, %44 in 0 : vector<8x100xf32>, vector<24x100xf32>, vector<4x100xf32> -> vector<36x100xf32>
    %c0_29 = arith.constant 0 : index
    %c0_30 = arith.constant 0 : index
    %46 = vector.load %arg8[%c0_29, %c0_30] : memref<36x1xf32, #tpu.memory_space<vmem>>, vector<36x1xf32>
    %c0_31 = arith.constant 0 : index
    %c0_32 = arith.constant 0 : index
    %47 = vector.load %arg9[%c0_31, %c0_32] : memref<36x1xf32, #tpu.memory_space<vmem>>, vector<36x1xf32>
    %48 = vector.broadcast %46 : vector<36x1xf32> to vector<36x100xf32>
    %49 = arith.mulf %45, %48 : vector<36x100xf32>
    %50 = vector.broadcast %47 : vector<36x1xf32> to vector<36x100xf32>
    %51 = arith.addf %49, %50 : vector<36x100xf32>
    %cst_33 = arith.constant 0.000000e+00 : f32
    %52 = vector.broadcast %cst_33 : f32 to vector<36x100xf32>
    %53 = arith.maximumf %51, %52 : vector<36x100xf32>
    %cst_34 = arith.constant 0.000000e+00 : f32
    %54 = vector.shape_cast %2 : vector<1x100xi1> to vector<1x100xi1>
    %55 = vector.broadcast %54 : vector<1x100xi1> to vector<36x100xi1>
    %56 = vector.broadcast %cst_34 : f32 to vector<36x100xf32>
    %57 = arith.select %55, %53, %56 : vector<36x100xi1>, vector<36x100xf32>
    %58 = arith.truncf %57 : vector<36x100xf32> to vector<36x100xbf16>
    %59 = vector.extract_strided_slice %58 {offsets = [0, 0], sizes = [36, 78], strides = [1, 1]} : vector<36x100xbf16> to vector<36x78xbf16>
    %60 = vector.extract_strided_slice %58 {offsets = [0, 1], sizes = [36, 78], strides = [1, 1]} : vector<36x100xbf16> to vector<36x78xbf16>
    %61 = vector.extract_strided_slice %58 {offsets = [0, 2], sizes = [36, 78], strides = [1, 1]} : vector<36x100xbf16> to vector<36x78xbf16>
    %62 = vector.extract_strided_slice %58 {offsets = [0, 10], sizes = [36, 78], strides = [1, 1]} : vector<36x100xbf16> to vector<36x78xbf16>
    %63 = vector.extract_strided_slice %58 {offsets = [0, 11], sizes = [36, 78], strides = [1, 1]} : vector<36x100xbf16> to vector<36x78xbf16>
    %64 = vector.extract_strided_slice %58 {offsets = [0, 12], sizes = [36, 78], strides = [1, 1]} : vector<36x100xbf16> to vector<36x78xbf16>
    %65 = vector.extract_strided_slice %58 {offsets = [0, 20], sizes = [36, 78], strides = [1, 1]} : vector<36x100xbf16> to vector<36x78xbf16>
    %66 = vector.extract_strided_slice %58 {offsets = [0, 21], sizes = [36, 78], strides = [1, 1]} : vector<36x100xbf16> to vector<36x78xbf16>
    %67 = vector.extract_strided_slice %58 {offsets = [0, 22], sizes = [36, 78], strides = [1, 1]} : vector<36x100xbf16> to vector<36x78xbf16>
    %68 = tpu.concatenate %59, %60, %61, %62, %63, %64, %65, %66, %67 in 0 : vector<36x78xbf16>, vector<36x78xbf16>, vector<36x78xbf16>, vector<36x78xbf16>, vector<36x78xbf16>, vector<36x78xbf16>, vector<36x78xbf16>, vector<36x78xbf16>, vector<36x78xbf16> -> vector<324x78xbf16>
    %c0_35 = arith.constant 0 : index
    %c0_36 = arith.constant 0 : index
    %69 = vector.load %arg10[%c0_35, %c0_36] : memref<4x324xbf16, #tpu.memory_space<vmem>>, vector<4x324xbf16>
    %cst_37 = arith.constant dense<0.000000e+00> : vector<4x78xf32>
    %70 = tpu.matmul %69, %68, %cst_37 {dimension_numbers = #tpu.dot_dimension_numbers<[1], [0], [0], [1], [0, 0, 1, 1], [], []>} : vector<4x324xbf16>, vector<324x78xbf16>, vector<4x78xf32> -> vector<4x78xf32>
    %c0_38 = arith.constant 0 : index
    %c0_39 = arith.constant 0 : index
    %71 = vector.load %arg11[%c0_38, %c0_39] : memref<4x1xf32, #tpu.memory_space<vmem>>, vector<4x1xf32>
    %72 = vector.broadcast %71 : vector<4x1xf32> to vector<4x78xf32>
    %73 = arith.addf %70, %72 : vector<4x78xf32>
    %c0_40 = arith.constant 0 : index
    %c4 = arith.constant 4 : index
    %c11_41 = arith.constant 11 : index
    %74 = vector.load %arg12[%c0_40, %c4, %c11_41] : memref<1x8x100xf32, #tpu.memory_space<vmem>>, vector<1x4x78xf32>
    %75 = vector.shape_cast %74 : vector<1x4x78xf32> to vector<4x78xf32>
    %76 = vector.shape_cast %73 : vector<4x78xf32> to vector<1x4x78xf32>
    tpu.vector_store %arg12[%c0_40, %c4, %c11_41], %76 {strides = array<i32>} : memref<1x8x100xf32, #tpu.memory_space<vmem>>, vector<1x4x78xf32>,
    return
  }
  func.func @transform_0(%arg0: i32) -> (i32, i32, i32) {
    %c0_i32 = arith.constant 0 : i32
    %c0_i32_0 = arith.constant 0 : i32
    %c0_i32_1 = arith.constant 0 : i32
    return %arg0, %c0_i32, %c0_i32_0 : i32, i32, i32
  }
  func.func @transform_1(%arg0: i32) -> (i32, i32, i32) {
    %c0_i32 = arith.constant 0 : i32
    %c0_i32_0 = arith.constant 0 : i32
    %c0_i32_1 = arith.constant 0 : i32
    return %arg0, %c0_i32, %c0_i32_0 : i32, i32, i32
  }
  func.func @transform_2(%arg0: i32) -> (i32, i32) {
    %c0_i32 = arith.constant 0 : i32
    %c0_i32_0 = arith.constant 0 : i32
    %c0_i32_1 = arith.constant 0 : i32
    return %c0_i32, %c0_i32_0 : i32, i32
  }
  func.func @transform_3(%arg0: i32) -> (i32, i32) {
    %c0_i32 = arith.constant 0 : i32
    %c0_i32_0 = arith.constant 0 : i32
    %c0_i32_1 = arith.constant 0 : i32
    return %c0_i32, %c0_i32_0 : i32, i32
  }
  func.func @transform_4(%arg0: i32) -> (i32, i32) {
    %c0_i32 = arith.constant 0 : i32
    %c0_i32_0 = arith.constant 0 : i32
    %c0_i32_1 = arith.constant 0 : i32
    return %c0_i32, %c0_i32_0 : i32, i32
  }
  func.func @transform_5(%arg0: i32) -> (i32, i32) {
    %c0_i32 = arith.constant 0 : i32
    %c0_i32_0 = arith.constant 0 : i32
    %c0_i32_1 = arith.constant 0 : i32
    return %c0_i32, %c0_i32_0 : i32, i32
  }
  func.func @transform_6(%arg0: i32) -> (i32, i32) {
    %c0_i32 = arith.constant 0 : i32
    %c0_i32_0 = arith.constant 0 : i32
    %c0_i32_1 = arith.constant 0 : i32
    return %c0_i32, %c0_i32_0 : i32, i32
  }
  func.func @transform_7(%arg0: i32) -> (i32, i32) {
    %c0_i32 = arith.constant 0 : i32
    %c0_i32_0 = arith.constant 0 : i32
    %c0_i32_1 = arith.constant 0 : i32
    return %c0_i32, %c0_i32_0 : i32, i32
  }
  func.func @transform_8(%arg0: i32) -> (i32, i32) {
    %c0_i32 = arith.constant 0 : i32
    %c0_i32_0 = arith.constant 0 : i32
    %c0_i32_1 = arith.constant 0 : i32
    return %c0_i32, %c0_i32_0 : i32, i32
  }
  func.func @transform_9(%arg0: i32) -> (i32, i32) {
    %c0_i32 = arith.constant 0 : i32
    %c0_i32_0 = arith.constant 0 : i32
    %c0_i32_1 = arith.constant 0 : i32
    return %c0_i32, %c0_i32_0 : i32, i32
  }
  func.func @transform_10(%arg0: i32) -> (i32, i32) {
    %c0_i32 = arith.constant 0 : i32
    %c0_i32_0 = arith.constant 0 : i32
    %c0_i32_1 = arith.constant 0 : i32
    return %c0_i32, %c0_i32_0 : i32, i32
  }
  func.func @transform_11(%arg0: i32) -> (i32, i32, i32) {
    %c0_i32 = arith.constant 0 : i32
    %c0_i32_0 = arith.constant 0 : i32
    %c0_i32_1 = arith.constant 0 : i32
    return %arg0, %c0_i32, %c0_i32_0 : i32, i32, i32
  }
}

module attributes {stable_mosaic.version = 11 : i64} {
  func.func @kernel(%arg0: i32, %arg1: memref<1x8x100xf32, #tpu.memory_space<vmem>>, %arg2: memref<1x4x1xf32, #tpu.memory_space<vmem>>, %arg3: memref<1x100xf32, #tpu.memory_space<vmem>>, %arg4: memref<32x48xbf16, #tpu.memory_space<vmem>>, %arg5: memref<8x1xf32, #tpu.memory_space<vmem>>, %arg6: memref<4x80x324xf32, #tpu.memory_space<vmem>>, %arg7: memref<1x8x324xf32, #tpu.memory_space<vmem>>) attributes {dimension_semantics = [#tpu.dimension_semantics<parallel>], iteration_bounds = array<i64: 2>, scalar_prefetch = 0 : i64, scratch_operands = 0 : i64, tpu.core_type = #tpu.core_type<tc>, window_params = [{transform_indices = @transform_0, window_bounds = array<i64: 1, 8, 100>}, {transform_indices = @transform_1, window_bounds = array<i64: 1, 4, 1>}, {pipeline_mode = #tpu.pipeline_mode<synchronous>, transform_indices = @transform_2, window_bounds = array<i64: 1, 100>}, {pipeline_mode = #tpu.pipeline_mode<synchronous>, transform_indices = @transform_3, window_bounds = array<i64: 32, 48>}, {pipeline_mode = #tpu.pipeline_mode<synchronous>, transform_indices = @transform_4, window_bounds = array<i64: 8, 1>}, {pipeline_mode = #tpu.pipeline_mode<synchronous>, transform_indices = @transform_5, window_bounds = array<i64: 4, 80, 324>}, {transform_indices = @transform_6, window_bounds = array<i64: 1, 8, 324>}]} {
    %c0 = arith.constant 0 : index
    %c0_0 = arith.constant 0 : index
    %0 = vector.load %arg3[%c0, %c0_0] : memref<1x100xf32, #tpu.memory_space<vmem>>, vector<1x100xf32>
    %cst = arith.constant 5.000000e-01 : f32
    %1 = vector.broadcast %cst : f32 to vector<1x100xf32>
    %2 = arith.cmpf ogt, %0, %1 : vector<1x100xf32>
    %c0_1 = arith.constant 0 : index
    %c0_2 = arith.constant 0 : index
    %c0_3 = arith.constant 0 : index
    %3 = vector.load %arg1[%c0_1, %c0_2, %c0_3] : memref<1x8x100xf32, #tpu.memory_space<vmem>>, vector<1x8x100xf32>
    %4 = vector.shape_cast %3 : vector<1x8x100xf32> to vector<8x100xf32>
    %cst_4 = arith.constant 0.000000e+00 : f32
    %5 = vector.shape_cast %2 : vector<1x100xi1> to vector<1x100xi1>
    %6 = vector.broadcast %5 : vector<1x100xi1> to vector<8x100xi1>
    %7 = vector.broadcast %cst_4 : f32 to vector<8x100xf32>
    %8 = arith.select %6, %4, %7 : vector<8x100xi1>, vector<8x100xf32>
    %c0_5 = arith.constant 0 : index
    %c0_6 = arith.constant 0 : index
    %c0_7 = arith.constant 0 : index
    %9 = vector.load %arg2[%c0_5, %c0_6, %c0_7] : memref<1x4x1xf32, #tpu.memory_space<vmem>>, vector<1x4x1xf32>
    %10 = vector.shape_cast %9 : vector<1x4x1xf32> to vector<4x1xf32>
    %cst_8 = arith.constant 0.000000e+00 : f32
    %11 = vector.shape_cast %2 : vector<1x100xi1> to vector<1x100xi1>
    %12 = vector.broadcast %11 : vector<1x100xi1> to vector<4x100xi1>
    %13 = vector.shape_cast %10 : vector<4x1xf32> to vector<4x1xf32>
    %14 = vector.broadcast %13 : vector<4x1xf32> to vector<4x100xf32>
    %15 = vector.broadcast %cst_8 : f32 to vector<4x100xf32>
    %16 = arith.select %12, %14, %15 : vector<4x100xi1>, vector<4x100xf32>
    %17 = tpu.concatenate %8, %16 in 0 : vector<8x100xf32>, vector<4x100xf32> -> vector<12x100xf32>
    %18 = arith.truncf %17 : vector<12x100xf32> to vector<12x100xbf16>
    %19 = vector.extract_strided_slice %18 {offsets = [0, 0], sizes = [12, 80], strides = [1, 1]} : vector<12x100xbf16> to vector<12x80xbf16>
    %20 = vector.extract_strided_slice %18 {offsets = [0, 1], sizes = [12, 80], strides = [1, 1]} : vector<12x100xbf16> to vector<12x80xbf16>
    %21 = vector.extract_strided_slice %18 {offsets = [0, 10], sizes = [12, 80], strides = [1, 1]} : vector<12x100xbf16> to vector<12x80xbf16>
    %22 = vector.extract_strided_slice %18 {offsets = [0, 11], sizes = [12, 80], strides = [1, 1]} : vector<12x100xbf16> to vector<12x80xbf16>
    %23 = tpu.concatenate %19, %20, %21, %22 in 0 : vector<12x80xbf16>, vector<12x80xbf16>, vector<12x80xbf16>, vector<12x80xbf16> -> vector<48x80xbf16>
    %c0_9 = arith.constant 0 : index
    %c0_10 = arith.constant 0 : index
    %24 = vector.load %arg4[%c0_9, %c0_10] : memref<32x48xbf16, #tpu.memory_space<vmem>>, vector<32x48xbf16>
    %cst_11 = arith.constant dense<0.000000e+00> : vector<32x80xf32>
    %25 = tpu.matmul %24, %23, %cst_11 {dimension_numbers = #tpu.dot_dimension_numbers<[1], [0], [0], [1], [0, 0, 1, 1], [], []>} : vector<32x48xbf16>, vector<48x80xbf16>, vector<32x80xf32> -> vector<32x80xf32>
    %c0_12 = arith.constant 0 : index
    %c0_13 = arith.constant 0 : index
    %26 = vector.load %arg5[%c0_12, %c0_13] : memref<8x1xf32, #tpu.memory_space<vmem>>, vector<8x1xf32>
    %cst_14 = arith.constant 0.000000e+00 : f32
    %27 = vector.broadcast %cst_14 : f32 to vector<8x324xf32>
    %28 = vector.extract_strided_slice %25 {offsets = [0, 0], sizes = [8, 80], strides = [1, 1]} : vector<32x80xf32> to vector<8x80xf32>
    %29 = vector.broadcast %26 : vector<8x1xf32> to vector<8x80xf32>
    %30 = arith.addf %28, %29 : vector<8x80xf32>
    %c0_15 = arith.constant 0 : index
    %c0_16 = arith.constant 0 : index
    %c0_17 = arith.constant 0 : index
    %31 = vector.load %arg6[%c0_15, %c0_16, %c0_17] : memref<4x80x324xf32, #tpu.memory_space<vmem>>, vector<1x80x324xf32>
    %32 = vector.shape_cast %31 : vector<1x80x324xf32> to vector<80x324xf32>
    %cst_18 = arith.constant dense<0.000000e+00> : vector<8x324xf32>
    %33 = tpu.matmul %30, %32, %cst_18 {dimension_numbers = #tpu.dot_dimension_numbers<[1], [0], [0], [1], [0, 0, 1, 1], [], []>} : vector<8x80xf32>, vector<80x324xf32>, vector<8x324xf32> -> vector<8x324xf32>
    %34 = arith.addf %27, %33 : vector<8x324xf32>
    %35 = vector.extract_strided_slice %25 {offsets = [8, 0], sizes = [8, 80], strides = [1, 1]} : vector<32x80xf32> to vector<8x80xf32>
    %36 = vector.broadcast %26 : vector<8x1xf32> to vector<8x80xf32>
    %37 = arith.addf %35, %36 : vector<8x80xf32>
    %c1 = arith.constant 1 : index
    %c0_19 = arith.constant 0 : index
    %c0_20 = arith.constant 0 : index
    %38 = vector.load %arg6[%c1, %c0_19, %c0_20] : memref<4x80x324xf32, #tpu.memory_space<vmem>>, vector<1x80x324xf32>
    %39 = vector.shape_cast %38 : vector<1x80x324xf32> to vector<80x324xf32>
    %cst_21 = arith.constant dense<0.000000e+00> : vector<8x324xf32>
    %40 = tpu.matmul %37, %39, %cst_21 {dimension_numbers = #tpu.dot_dimension_numbers<[1], [0], [0], [1], [0, 0, 1, 1], [], []>} : vector<8x80xf32>, vector<80x324xf32>, vector<8x324xf32> -> vector<8x324xf32>
    %41 = arith.addf %34, %40 : vector<8x324xf32>
    %42 = vector.extract_strided_slice %25 {offsets = [16, 0], sizes = [8, 80], strides = [1, 1]} : vector<32x80xf32> to vector<8x80xf32>
    %43 = vector.broadcast %26 : vector<8x1xf32> to vector<8x80xf32>
    %44 = arith.addf %42, %43 : vector<8x80xf32>
    %c2 = arith.constant 2 : index
    %c0_22 = arith.constant 0 : index
    %c0_23 = arith.constant 0 : index
    %45 = vector.load %arg6[%c2, %c0_22, %c0_23] : memref<4x80x324xf32, #tpu.memory_space<vmem>>, vector<1x80x324xf32>
    %46 = vector.shape_cast %45 : vector<1x80x324xf32> to vector<80x324xf32>
    %cst_24 = arith.constant dense<0.000000e+00> : vector<8x324xf32>
    %47 = tpu.matmul %44, %46, %cst_24 {dimension_numbers = #tpu.dot_dimension_numbers<[1], [0], [0], [1], [0, 0, 1, 1], [], []>} : vector<8x80xf32>, vector<80x324xf32>, vector<8x324xf32> -> vector<8x324xf32>
    %48 = arith.addf %41, %47 : vector<8x324xf32>
    %49 = vector.extract_strided_slice %25 {offsets = [24, 0], sizes = [8, 80], strides = [1, 1]} : vector<32x80xf32> to vector<8x80xf32>
    %50 = vector.broadcast %26 : vector<8x1xf32> to vector<8x80xf32>
    %51 = arith.addf %49, %50 : vector<8x80xf32>
    %c3 = arith.constant 3 : index
    %c0_25 = arith.constant 0 : index
    %c0_26 = arith.constant 0 : index
    %52 = vector.load %arg6[%c3, %c0_25, %c0_26] : memref<4x80x324xf32, #tpu.memory_space<vmem>>, vector<1x80x324xf32>
    %53 = vector.shape_cast %52 : vector<1x80x324xf32> to vector<80x324xf32>
    %cst_27 = arith.constant dense<0.000000e+00> : vector<8x324xf32>
    %54 = tpu.matmul %51, %53, %cst_27 {dimension_numbers = #tpu.dot_dimension_numbers<[1], [0], [0], [1], [0, 0, 1, 1], [], []>} : vector<8x80xf32>, vector<80x324xf32>, vector<8x324xf32> -> vector<8x324xf32>
    %55 = arith.addf %48, %54 : vector<8x324xf32>
    %c0_28 = arith.constant 0 : index
    %c0_29 = arith.constant 0 : index
    %c0_30 = arith.constant 0 : index
    %56 = vector.load %arg7[%c0_28, %c0_29, %c0_30] : memref<1x8x324xf32, #tpu.memory_space<vmem>>, vector<1x8x324xf32>
    %57 = vector.shape_cast %56 : vector<1x8x324xf32> to vector<8x324xf32>
    %58 = vector.shape_cast %55 : vector<8x324xf32> to vector<1x8x324xf32>
    tpu.vector_store %arg7[%c0_28, %c0_29, %c0_30], %58 {strides = array<i32>} : memref<1x8x324xf32, #tpu.memory_space<vmem>>, vector<1x8x324xf32>,
    return
  }
  func.func @transform_0(%arg0: i32) -> (i32, i32, i32) {
    %c0_i32 = arith.constant 0 : i32
    %c0_i32_0 = arith.constant 0 : i32
    %c0_i32_1 = arith.constant 0 : i32
    return %arg0, %c0_i32, %c0_i32_0 : i32, i32, i32
  }
  func.func @transform_1(%arg0: i32) -> (i32, i32, i32) {
    %c0_i32 = arith.constant 0 : i32
    %c0_i32_0 = arith.constant 0 : i32
    %c0_i32_1 = arith.constant 0 : i32
    return %arg0, %c0_i32, %c0_i32_0 : i32, i32, i32
  }
  func.func @transform_2(%arg0: i32) -> (i32, i32) {
    %c0_i32 = arith.constant 0 : i32
    %c0_i32_0 = arith.constant 0 : i32
    %c0_i32_1 = arith.constant 0 : i32
    return %c0_i32, %c0_i32_0 : i32, i32
  }
  func.func @transform_3(%arg0: i32) -> (i32, i32) {
    %c0_i32 = arith.constant 0 : i32
    %c0_i32_0 = arith.constant 0 : i32
    %c0_i32_1 = arith.constant 0 : i32
    return %c0_i32, %c0_i32_0 : i32, i32
  }
  func.func @transform_4(%arg0: i32) -> (i32, i32) {
    %c0_i32 = arith.constant 0 : i32
    %c0_i32_0 = arith.constant 0 : i32
    %c0_i32_1 = arith.constant 0 : i32
    return %c0_i32, %c0_i32_0 : i32, i32
  }
  func.func @transform_5(%arg0: i32) -> (i32, i32, i32) {
    %c0_i32 = arith.constant 0 : i32
    %c0_i32_0 = arith.constant 0 : i32
    %c0_i32_1 = arith.constant 0 : i32
    %c0_i32_2 = arith.constant 0 : i32
    return %c0_i32, %c0_i32_0, %c0_i32_1 : i32, i32, i32
  }
  func.func @transform_6(%arg0: i32) -> (i32, i32, i32) {
    %c0_i32 = arith.constant 0 : i32
    %c0_i32_0 = arith.constant 0 : i32
    %c0_i32_1 = arith.constant 0 : i32
    return %arg0, %c0_i32, %c0_i32_0 : i32, i32, i32
  }
}

module attributes {stable_mosaic.version = 11 : i64} {
  func.func @kernel(%arg0: i32, %arg1: memref<1x32x324xf32, #tpu.memory_space<vmem>>, %arg2: memref<1x324xf32, #tpu.memory_space<vmem>>, %arg3: memref<1x32xbf16, #tpu.memory_space<vmem>>, %arg4: memref<1x1xf32, #tpu.memory_space<vmem>>, %arg5: memref<324x256xf32, #tpu.memory_space<vmem>>, %arg6: memref<1x1x256xf32, #tpu.memory_space<vmem>>) attributes {dimension_semantics = [#tpu.dimension_semantics<parallel>], iteration_bounds = array<i64: 2>, scalar_prefetch = 0 : i64, scratch_operands = 0 : i64, tpu.core_type = #tpu.core_type<tc>, window_params = [{transform_indices = @transform_0, window_bounds = array<i64: 1, 32, 324>}, {pipeline_mode = #tpu.pipeline_mode<synchronous>, transform_indices = @transform_1, window_bounds = array<i64: 1, 324>}, {pipeline_mode = #tpu.pipeline_mode<synchronous>, transform_indices = @transform_2, window_bounds = array<i64: 1, 32>}, {pipeline_mode = #tpu.pipeline_mode<synchronous>, transform_indices = @transform_3, window_bounds = array<i64: 1, 1>}, {pipeline_mode = #tpu.pipeline_mode<synchronous>, transform_indices = @transform_4, window_bounds = array<i64: 324, 256>}, {transform_indices = @transform_5, window_bounds = array<i64: 1, 1, 256>}]} {
    %c0 = arith.constant 0 : index
    %c0_0 = arith.constant 0 : index
    %0 = vector.load %arg2[%c0, %c0_0] : memref<1x324xf32, #tpu.memory_space<vmem>>, vector<1x324xf32>
    %cst = arith.constant 5.000000e-01 : f32
    %1 = vector.broadcast %cst : f32 to vector<1x324xf32>
    %2 = arith.cmpf ogt, %0, %1 : vector<1x324xf32>
    %c0_1 = arith.constant 0 : index
    %c0_2 = arith.constant 0 : index
    %c0_3 = arith.constant 0 : index
    %3 = vector.load %arg1[%c0_1, %c0_2, %c0_3] : memref<1x32x324xf32, #tpu.memory_space<vmem>>, vector<1x32x324xf32>
    %4 = vector.shape_cast %3 : vector<1x32x324xf32> to vector<32x324xf32>
    %cst_4 = arith.constant 0.000000e+00 : f32
    %5 = vector.shape_cast %2 : vector<1x324xi1> to vector<1x324xi1>
    %6 = vector.broadcast %5 : vector<1x324xi1> to vector<32x324xi1>
    %7 = vector.broadcast %cst_4 : f32 to vector<32x324xf32>
    %8 = arith.select %6, %4, %7 : vector<32x324xi1>, vector<32x324xf32>
    %c0_5 = arith.constant 0 : index
    %c0_6 = arith.constant 0 : index
    %9 = vector.load %arg3[%c0_5, %c0_6] : memref<1x32xbf16, #tpu.memory_space<vmem>>, vector<1x32xbf16>
    %10 = arith.truncf %8 : vector<32x324xf32> to vector<32x324xbf16>
    %cst_7 = arith.constant dense<0.000000e+00> : vector<1x324xf32>
    %11 = tpu.matmul %9, %10, %cst_7 {dimension_numbers = #tpu.dot_dimension_numbers<[1], [0], [0], [1], [0, 0, 1, 1], [], []>} : vector<1x32xbf16>, vector<32x324xbf16>, vector<1x324xf32> -> vector<1x324xf32>
    %c0_8 = arith.constant 0 : index
    %c0_9 = arith.constant 0 : index
    %12 = vector.load %arg4[%c0_8, %c0_9] : memref<1x1xf32, #tpu.memory_space<vmem>>, vector<1x1xf32>
    %13 = vector.broadcast %12 : vector<1x1xf32> to vector<1x324xf32>
    %14 = arith.addf %11, %13 : vector<1x324xf32>
    %c0_10 = arith.constant 0 : index
    %c0_11 = arith.constant 0 : index
    %15 = vector.load %arg5[%c0_10, %c0_11] : memref<324x256xf32, #tpu.memory_space<vmem>>, vector<324x256xf32>
    %cst_12 = arith.constant dense<0.000000e+00> : vector<1x256xf32>
    %16 = tpu.matmul %14, %15, %cst_12 {dimension_numbers = #tpu.dot_dimension_numbers<[1], [0], [0], [1], [0, 0, 1, 1], [], []>} : vector<1x324xf32>, vector<324x256xf32>, vector<1x256xf32> -> vector<1x256xf32>
    %17 = arith.negf %16 : vector<1x256xf32>
    %18 = math.exp %17 : vector<1x256xf32>
    %cst_13 = arith.constant 1.000000e+00 : f32
    %19 = vector.broadcast %cst_13 : f32 to vector<1x256xf32>
    %20 = arith.addf %19, %18 : vector<1x256xf32>
    %21 = arith.divf %19, %20 : vector<1x256xf32>
    %c0_14 = arith.constant 0 : index
    %c0_15 = arith.constant 0 : index
    %c0_16 = arith.constant 0 : index
    %22 = vector.load %arg6[%c0_14, %c0_15, %c0_16] : memref<1x1x256xf32, #tpu.memory_space<vmem>>, vector<1x1x256xf32>
    %23 = vector.shape_cast %22 : vector<1x1x256xf32> to vector<1x256xf32>
    %24 = vector.shape_cast %21 : vector<1x256xf32> to vector<1x1x256xf32>
    tpu.vector_store %arg6[%c0_14, %c0_15, %c0_16], %24 {strides = array<i32>} : memref<1x1x256xf32, #tpu.memory_space<vmem>>, vector<1x1x256xf32>,
    return
  }
  func.func @transform_0(%arg0: i32) -> (i32, i32, i32) {
    %c0_i32 = arith.constant 0 : i32
    %c0_i32_0 = arith.constant 0 : i32
    %c0_i32_1 = arith.constant 0 : i32
    return %arg0, %c0_i32, %c0_i32_0 : i32, i32, i32
  }
  func.func @transform_1(%arg0: i32) -> (i32, i32) {
    %c0_i32 = arith.constant 0 : i32
    %c0_i32_0 = arith.constant 0 : i32
    %c0_i32_1 = arith.constant 0 : i32
    return %c0_i32, %c0_i32_0 : i32, i32
  }
  func.func @transform_2(%arg0: i32) -> (i32, i32) {
    %c0_i32 = arith.constant 0 : i32
    %c0_i32_0 = arith.constant 0 : i32
    %c0_i32_1 = arith.constant 0 : i32
    return %c0_i32, %c0_i32_0 : i32, i32
  }
  func.func @transform_3(%arg0: i32) -> (i32, i32) {
    %c0_i32 = arith.constant 0 : i32
    %c0_i32_0 = arith.constant 0 : i32
    %c0_i32_1 = arith.constant 0 : i32
    return %c0_i32, %c0_i32_0 : i32, i32
  }
  func.func @transform_4(%arg0: i32) -> (i32, i32) {
    %c0_i32 = arith.constant 0 : i32
    %c0_i32_0 = arith.constant 0 : i32
    %c0_i32_1 = arith.constant 0 : i32
    return %c0_i32, %c0_i32_0 : i32, i32
  }
  func.func @transform_5(%arg0: i32) -> (i32, i32, i32) {
    %c0_i32 = arith.constant 0 : i32
    %c0_i32_0 = arith.constant 0 : i32
    %c0_i32_1 = arith.constant 0 : i32
    return %arg0, %c0_i32, %c0_i32_0 : i32, i32, i32
  }
}

module attributes {stable_mosaic.version = 11 : i64} {
  func.func @kernel(%arg0: i32, %arg1: memref<1x8x324xf32, #tpu.memory_space<vmem>>, %arg2: memref<1x16x324xf32, #tpu.memory_space<vmem>>, %arg3: memref<1x324xf32, #tpu.memory_space<vmem>>, %arg4: memref<24x1xf32, #tpu.memory_space<vmem>>, %arg5: memref<24x1xf32, #tpu.memory_space<vmem>>, %arg6: memref<4x216xbf16, #tpu.memory_space<vmem>>, %arg7: memref<4x1xf32, #tpu.memory_space<vmem>>, %arg8: memref<28x1xf32, #tpu.memory_space<vmem>>, %arg9: memref<28x1xf32, #tpu.memory_space<vmem>>, %arg10: memref<4x252xbf16, #tpu.memory_space<vmem>>, %arg11: memref<4x1xf32, #tpu.memory_space<vmem>>, %arg12: memref<1x32x324xf32, #tpu.memory_space<vmem>>) attributes {dimension_semantics = [#tpu.dimension_semantics<parallel>], iteration_bounds = array<i64: 2>, scalar_prefetch = 0 : i64, scratch_operands = 0 : i64, tpu.core_type = #tpu.core_type<tc>, window_params = [{transform_indices = @transform_0, window_bounds = array<i64: 1, 8, 324>}, {transform_indices = @transform_1, window_bounds = array<i64: 1, 16, 324>}, {pipeline_mode = #tpu.pipeline_mode<synchronous>, transform_indices = @transform_2, window_bounds = array<i64: 1, 324>}, {pipeline_mode = #tpu.pipeline_mode<synchronous>, transform_indices = @transform_3, window_bounds = array<i64: 24, 1>}, {pipeline_mode = #tpu.pipeline_mode<synchronous>, transform_indices = @transform_4, window_bounds = array<i64: 24, 1>}, {pipeline_mode = #tpu.pipeline_mode<synchronous>, transform_indices = @transform_5, window_bounds = array<i64: 4, 216>}, {pipeline_mode = #tpu.pipeline_mode<synchronous>, transform_indices = @transform_6, window_bounds = array<i64: 4, 1>}, {pipeline_mode = #tpu.pipeline_mode<synchronous>, transform_indices = @transform_7, window_bounds = array<i64: 28, 1>}, {pipeline_mode = #tpu.pipeline_mode<synchronous>, transform_indices = @transform_8, window_bounds = array<i64: 28, 1>}, {pipeline_mode = #tpu.pipeline_mode<synchronous>, transform_indices = @transform_9, window_bounds = array<i64: 4, 252>}, {pipeline_mode = #tpu.pipeline_mode<synchronous>, transform_indices = @transform_10, window_bounds = array<i64: 4, 1>}, {transform_indices = @transform_11, window_bounds = array<i64: 1, 32, 324>}]} {
    %c0 = arith.constant 0 : index
    %c0_0 = arith.constant 0 : index
    %0 = vector.load %arg3[%c0, %c0_0] : memref<1x324xf32, #tpu.memory_space<vmem>>, vector<1x324xf32>
    %cst = arith.constant 5.000000e-01 : f32
    %1 = vector.broadcast %cst : f32 to vector<1x324xf32>
    %2 = arith.cmpf ogt, %0, %1 : vector<1x324xf32>
    %c0_1 = arith.constant 0 : index
    %c0_2 = arith.constant 0 : index
    %c0_3 = arith.constant 0 : index
    %3 = vector.load %arg1[%c0_1, %c0_2, %c0_3] : memref<1x8x324xf32, #tpu.memory_space<vmem>>, vector<1x8x324xf32>
    %4 = vector.shape_cast %3 : vector<1x8x324xf32> to vector<8x324xf32>
    %c0_4 = arith.constant 0 : index
    %c0_5 = arith.constant 0 : index
    %c0_6 = arith.constant 0 : index
    %5 = vector.load %arg12[%c0_4, %c0_5, %c0_6] : memref<1x32x324xf32, #tpu.memory_space<vmem>>, vector<1x8x324xf32>
    %6 = vector.shape_cast %5 : vector<1x8x324xf32> to vector<8x324xf32>
    %7 = vector.shape_cast %4 : vector<8x324xf32> to vector<1x8x324xf32>
    tpu.vector_store %arg12[%c0_4, %c0_5, %c0_6], %7 {strides = array<i32>} : memref<1x32x324xf32, #tpu.memory_space<vmem>>, vector<1x8x324xf32>,
    %c0_7 = arith.constant 0 : index
    %c0_8 = arith.constant 0 : index
    %c0_9 = arith.constant 0 : index
    %8 = vector.load %arg2[%c0_7, %c0_8, %c0_9] : memref<1x16x324xf32, #tpu.memory_space<vmem>>, vector<1x16x324xf32>
    %9 = vector.shape_cast %8 : vector<1x16x324xf32> to vector<16x324xf32>
    %c0_10 = arith.constant 0 : index
    %c8 = arith.constant 8 : index
    %c0_11 = arith.constant 0 : index
    %10 = vector.load %arg12[%c0_10, %c8, %c0_11] : memref<1x32x324xf32, #tpu.memory_space<vmem>>, vector<1x16x324xf32>
    %11 = vector.shape_cast %10 : vector<1x16x324xf32> to vector<16x324xf32>
    %12 = vector.shape_cast %9 : vector<16x324xf32> to vector<1x16x324xf32>
    tpu.vector_store %arg12[%c0_10, %c8, %c0_11], %12 {strides = array<i32>} : memref<1x32x324xf32, #tpu.memory_space<vmem>>, vector<1x16x324xf32>,
    %c0_12 = arith.constant 0 : index
    %c0_13 = arith.constant 0 : index
    %c0_14 = arith.constant 0 : index
    %13 = vector.load %arg12[%c0_12, %c0_13, %c0_14] : memref<1x32x324xf32, #tpu.memory_space<vmem>>, vector<1x24x324xf32>
    %14 = vector.shape_cast %13 : vector<1x24x324xf32> to vector<24x324xf32>
    %c0_15 = arith.constant 0 : index
    %c0_16 = arith.constant 0 : index
    %15 = vector.load %arg4[%c0_15, %c0_16] : memref<24x1xf32, #tpu.memory_space<vmem>>, vector<24x1xf32>
    %c0_17 = arith.constant 0 : index
    %c0_18 = arith.constant 0 : index
    %16 = vector.load %arg5[%c0_17, %c0_18] : memref<24x1xf32, #tpu.memory_space<vmem>>, vector<24x1xf32>
    %17 = vector.broadcast %15 : vector<24x1xf32> to vector<24x324xf32>
    %18 = arith.mulf %14, %17 : vector<24x324xf32>
    %19 = vector.broadcast %16 : vector<24x1xf32> to vector<24x324xf32>
    %20 = arith.addf %18, %19 : vector<24x324xf32>
    %cst_19 = arith.constant 0.000000e+00 : f32
    %21 = vector.broadcast %cst_19 : f32 to vector<24x324xf32>
    %22 = arith.maximumf %20, %21 : vector<24x324xf32>
    %cst_20 = arith.constant 0.000000e+00 : f32
    %23 = vector.shape_cast %2 : vector<1x324xi1> to vector<1x324xi1>
    %24 = vector.broadcast %23 : vector<1x324xi1> to vector<24x324xi1>
    %25 = vector.broadcast %cst_20 : f32 to vector<24x324xf32>
    %26 = arith.select %24, %22, %25 : vector<24x324xi1>, vector<24x324xf32>
    %27 = arith.truncf %26 : vector<24x324xf32> to vector<24x324xbf16>
    %28 = vector.extract_strided_slice %27 {offsets = [0, 0], sizes = [24, 286], strides = [1, 1]} : vector<24x324xbf16> to vector<24x286xbf16>
    %29 = vector.extract_strided_slice %27 {offsets = [0, 1], sizes = [24, 286], strides = [1, 1]} : vector<24x324xbf16> to vector<24x286xbf16>
    %30 = vector.extract_strided_slice %27 {offsets = [0, 2], sizes = [24, 286], strides = [1, 1]} : vector<24x324xbf16> to vector<24x286xbf16>
    %31 = vector.extract_strided_slice %27 {offsets = [0, 18], sizes = [24, 286], strides = [1, 1]} : vector<24x324xbf16> to vector<24x286xbf16>
    %32 = vector.extract_strided_slice %27 {offsets = [0, 19], sizes = [24, 286], strides = [1, 1]} : vector<24x324xbf16> to vector<24x286xbf16>
    %33 = vector.extract_strided_slice %27 {offsets = [0, 20], sizes = [24, 286], strides = [1, 1]} : vector<24x324xbf16> to vector<24x286xbf16>
    %34 = vector.extract_strided_slice %27 {offsets = [0, 36], sizes = [24, 286], strides = [1, 1]} : vector<24x324xbf16> to vector<24x286xbf16>
    %35 = vector.extract_strided_slice %27 {offsets = [0, 37], sizes = [24, 286], strides = [1, 1]} : vector<24x324xbf16> to vector<24x286xbf16>
    %36 = vector.extract_strided_slice %27 {offsets = [0, 38], sizes = [24, 286], strides = [1, 1]} : vector<24x324xbf16> to vector<24x286xbf16>
    %37 = tpu.concatenate %28, %29, %30, %31, %32, %33, %34, %35, %36 in 0 : vector<24x286xbf16>, vector<24x286xbf16>, vector<24x286xbf16>, vector<24x286xbf16>, vector<24x286xbf16>, vector<24x286xbf16>, vector<24x286xbf16>, vector<24x286xbf16>, vector<24x286xbf16> -> vector<216x286xbf16>
    %c0_21 = arith.constant 0 : index
    %c0_22 = arith.constant 0 : index
    %38 = vector.load %arg6[%c0_21, %c0_22] : memref<4x216xbf16, #tpu.memory_space<vmem>>, vector<4x216xbf16>
    %cst_23 = arith.constant dense<0.000000e+00> : vector<4x286xf32>
    %39 = tpu.matmul %38, %37, %cst_23 {dimension_numbers = #tpu.dot_dimension_numbers<[1], [0], [0], [1], [0, 0, 1, 1], [], []>} : vector<4x216xbf16>, vector<216x286xbf16>, vector<4x286xf32> -> vector<4x286xf32>
    %c0_24 = arith.constant 0 : index
    %c0_25 = arith.constant 0 : index
    %40 = vector.load %arg7[%c0_24, %c0_25] : memref<4x1xf32, #tpu.memory_space<vmem>>, vector<4x1xf32>
    %41 = vector.broadcast %40 : vector<4x1xf32> to vector<4x286xf32>
    %42 = arith.addf %39, %41 : vector<4x286xf32>
    %c0_26 = arith.constant 0 : index
    %c24 = arith.constant 24 : index
    %c19 = arith.constant 19 : index
    %43 = vector.load %arg12[%c0_26, %c24, %c19] : memref<1x32x324xf32, #tpu.memory_space<vmem>>, vector<1x4x286xf32>
    %44 = vector.shape_cast %43 : vector<1x4x286xf32> to vector<4x286xf32>
    %45 = vector.shape_cast %42 : vector<4x286xf32> to vector<1x4x286xf32>
    tpu.vector_store %arg12[%c0_26, %c24, %c19], %45 {strides = array<i32>} : memref<1x32x324xf32, #tpu.memory_space<vmem>>, vector<1x4x286xf32>,
    %c0_27 = arith.constant 0 : index
    %c0_28 = arith.constant 0 : index
    %c0_29 = arith.constant 0 : index
    %46 = vector.load %arg12[%c0_27, %c0_28, %c0_29] : memref<1x32x324xf32, #tpu.memory_space<vmem>>, vector<1x28x324xf32>
    %47 = vector.shape_cast %46 : vector<1x28x324xf32> to vector<28x324xf32>
    %c0_30 = arith.constant 0 : index
    %c0_31 = arith.constant 0 : index
    %48 = vector.load %arg8[%c0_30, %c0_31] : memref<28x1xf32, #tpu.memory_space<vmem>>, vector<28x1xf32>
    %c0_32 = arith.constant 0 : index
    %c0_33 = arith.constant 0 : index
    %49 = vector.load %arg9[%c0_32, %c0_33] : memref<28x1xf32, #tpu.memory_space<vmem>>, vector<28x1xf32>
    %50 = vector.broadcast %48 : vector<28x1xf32> to vector<28x324xf32>
    %51 = arith.mulf %47, %50 : vector<28x324xf32>
    %52 = vector.broadcast %49 : vector<28x1xf32> to vector<28x324xf32>
    %53 = arith.addf %51, %52 : vector<28x324xf32>
    %cst_34 = arith.constant 0.000000e+00 : f32
    %54 = vector.broadcast %cst_34 : f32 to vector<28x324xf32>
    %55 = arith.maximumf %53, %54 : vector<28x324xf32>
    %cst_35 = arith.constant 0.000000e+00 : f32
    %56 = vector.shape_cast %2 : vector<1x324xi1> to vector<1x324xi1>
    %57 = vector.broadcast %56 : vector<1x324xi1> to vector<28x324xi1>
    %58 = vector.broadcast %cst_35 : f32 to vector<28x324xf32>
    %59 = arith.select %57, %55, %58 : vector<28x324xi1>, vector<28x324xf32>
    %60 = arith.truncf %59 : vector<28x324xf32> to vector<28x324xbf16>
    %61 = vector.extract_strided_slice %60 {offsets = [0, 0], sizes = [28, 286], strides = [1, 1]} : vector<28x324xbf16> to vector<28x286xbf16>
    %62 = vector.extract_strided_slice %60 {offsets = [0, 1], sizes = [28, 286], strides = [1, 1]} : vector<28x324xbf16> to vector<28x286xbf16>
    %63 = vector.extract_strided_slice %60 {offsets = [0, 2], sizes = [28, 286], strides = [1, 1]} : vector<28x324xbf16> to vector<28x286xbf16>
    %64 = vector.extract_strided_slice %60 {offsets = [0, 18], sizes = [28, 286], strides = [1, 1]} : vector<28x324xbf16> to vector<28x286xbf16>
    %65 = vector.extract_strided_slice %60 {offsets = [0, 19], sizes = [28, 286], strides = [1, 1]} : vector<28x324xbf16> to vector<28x286xbf16>
    %66 = vector.extract_strided_slice %60 {offsets = [0, 20], sizes = [28, 286], strides = [1, 1]} : vector<28x324xbf16> to vector<28x286xbf16>
    %67 = vector.extract_strided_slice %60 {offsets = [0, 36], sizes = [28, 286], strides = [1, 1]} : vector<28x324xbf16> to vector<28x286xbf16>
    %68 = vector.extract_strided_slice %60 {offsets = [0, 37], sizes = [28, 286], strides = [1, 1]} : vector<28x324xbf16> to vector<28x286xbf16>
    %69 = vector.extract_strided_slice %60 {offsets = [0, 38], sizes = [28, 286], strides = [1, 1]} : vector<28x324xbf16> to vector<28x286xbf16>
    %70 = tpu.concatenate %61, %62, %63, %64, %65, %66, %67, %68, %69 in 0 : vector<28x286xbf16>, vector<28x286xbf16>, vector<28x286xbf16>, vector<28x286xbf16>, vector<28x286xbf16>, vector<28x286xbf16>, vector<28x286xbf16>, vector<28x286xbf16>, vector<28x286xbf16> -> vector<252x286xbf16>
    %c0_36 = arith.constant 0 : index
    %c0_37 = arith.constant 0 : index
    %71 = vector.load %arg10[%c0_36, %c0_37] : memref<4x252xbf16, #tpu.memory_space<vmem>>, vector<4x252xbf16>
    %cst_38 = arith.constant dense<0.000000e+00> : vector<4x286xf32>
    %72 = tpu.matmul %71, %70, %cst_38 {dimension_numbers = #tpu.dot_dimension_numbers<[1], [0], [0], [1], [0, 0, 1, 1], [], []>} : vector<4x252xbf16>, vector<252x286xbf16>, vector<4x286xf32> -> vector<4x286xf32>
    %c0_39 = arith.constant 0 : index
    %c0_40 = arith.constant 0 : index
    %73 = vector.load %arg11[%c0_39, %c0_40] : memref<4x1xf32, #tpu.memory_space<vmem>>, vector<4x1xf32>
    %74 = vector.broadcast %73 : vector<4x1xf32> to vector<4x286xf32>
    %75 = arith.addf %72, %74 : vector<4x286xf32>
    %c0_41 = arith.constant 0 : index
    %c28 = arith.constant 28 : index
    %c19_42 = arith.constant 19 : index
    %76 = vector.load %arg12[%c0_41, %c28, %c19_42] : memref<1x32x324xf32, #tpu.memory_space<vmem>>, vector<1x4x286xf32>
    %77 = vector.shape_cast %76 : vector<1x4x286xf32> to vector<4x286xf32>
    %78 = vector.shape_cast %75 : vector<4x286xf32> to vector<1x4x286xf32>
    tpu.vector_store %arg12[%c0_41, %c28, %c19_42], %78 {strides = array<i32>} : memref<1x32x324xf32, #tpu.memory_space<vmem>>, vector<1x4x286xf32>,
    return
  }
  func.func @transform_0(%arg0: i32) -> (i32, i32, i32) {
    %c0_i32 = arith.constant 0 : i32
    %c0_i32_0 = arith.constant 0 : i32
    %c0_i32_1 = arith.constant 0 : i32
    return %arg0, %c0_i32, %c0_i32_0 : i32, i32, i32
  }
  func.func @transform_1(%arg0: i32) -> (i32, i32, i32) {
    %c0_i32 = arith.constant 0 : i32
    %c0_i32_0 = arith.constant 0 : i32
    %c0_i32_1 = arith.constant 0 : i32
    return %arg0, %c0_i32, %c0_i32_0 : i32, i32, i32
  }
  func.func @transform_2(%arg0: i32) -> (i32, i32) {
    %c0_i32 = arith.constant 0 : i32
    %c0_i32_0 = arith.constant 0 : i32
    %c0_i32_1 = arith.constant 0 : i32
    return %c0_i32, %c0_i32_0 : i32, i32
  }
  func.func @transform_3(%arg0: i32) -> (i32, i32) {
    %c0_i32 = arith.constant 0 : i32
    %c0_i32_0 = arith.constant 0 : i32
    %c0_i32_1 = arith.constant 0 : i32
    return %c0_i32, %c0_i32_0 : i32, i32
  }
  func.func @transform_4(%arg0: i32) -> (i32, i32) {
    %c0_i32 = arith.constant 0 : i32
    %c0_i32_0 = arith.constant 0 : i32
    %c0_i32_1 = arith.constant 0 : i32
    return %c0_i32, %c0_i32_0 : i32, i32
  }
  func.func @transform_5(%arg0: i32) -> (i32, i32) {
    %c0_i32 = arith.constant 0 : i32
    %c0_i32_0 = arith.constant 0 : i32
    %c0_i32_1 = arith.constant 0 : i32
    return %c0_i32, %c0_i32_0 : i32, i32
  }
  func.func @transform_6(%arg0: i32) -> (i32, i32) {
    %c0_i32 = arith.constant 0 : i32
    %c0_i32_0 = arith.constant 0 : i32
    %c0_i32_1 = arith.constant 0 : i32
    return %c0_i32, %c0_i32_0 : i32, i32
  }
  func.func @transform_7(%arg0: i32) -> (i32, i32) {
    %c0_i32 = arith.constant 0 : i32
    %c0_i32_0 = arith.constant 0 : i32
    %c0_i32_1 = arith.constant 0 : i32
    return %c0_i32, %c0_i32_0 : i32, i32
  }
  func.func @transform_8(%arg0: i32) -> (i32, i32) {
    %c0_i32 = arith.constant 0 : i32
    %c0_i32_0 = arith.constant 0 : i32
    %c0_i32_1 = arith.constant 0 : i32
    return %c0_i32, %c0_i32_0 : i32, i32
  }
  func.func @transform_9(%arg0: i32) -> (i32, i32) {
    %c0_i32 = arith.constant 0 : i32
    %c0_i32_0 = arith.constant 0 : i32
    %c0_i32_1 = arith.constant 0 : i32
    return %c0_i32, %c0_i32_0 : i32, i32
  }
  func.func @transform_10(%arg0: i32) -> (i32, i32) {
    %c0_i32 = arith.constant 0 : i32
    %c0_i32_0 = arith.constant 0 : i32
    %c0_i32_1 = arith.constant 0 : i32
    return %c0_i32, %c0_i32_0 : i32, i32
  }
  func.func @transform_11(%arg0: i32) -> (i32, i32, i32) {
    %c0_i32 = arith.constant 0 : i32
    %c0_i32_0 = arith.constant 0 : i32
    %c0_i32_1 = arith.constant 0 : i32
    return %arg0, %c0_i32, %c0_i32_0 : i32, i32, i32
  }
}

</mosaic_0001>

<llo_original>
// kernel: fcdensenet_forward.12
$region0: #{fcdensenet_forward.12}
  #allocation0 [shape = 'u32[]', space=smem, size = 0x4, offset = 0x4, fixed_abs, tag = 'smem constant byte address 0x4 - core index']
  #allocation1 [shape = 'u32[72,128]{1,0:T(1,128)}', space=vmem, size = 0x9000, scoped, tag = 'internal scratch']
  %s0 = inlined_call_operand.vmem [shape: f32[2,8,324], index: 0, kind: input, shape index: {}]
  %s1 = inlined_call_operand.vmem [shape: f32[1,324], index: 1, kind: input, shape index: {}]
  %s2 = inlined_call_operand.vmem [shape: f32[8,1], index: 2, kind: input, shape index: {}]
  %s3 = inlined_call_operand.vmem [shape: f32[8,1], index: 3, kind: input, shape index: {}]
  %s4 = inlined_call_operand.vmem [shape: bf16[4,72], index: 4, kind: input, shape index: {}]
  %s5 = inlined_call_operand.vmem [shape: f32[4,1], index: 5, kind: input, shape index: {}]
  %s6 = inlined_call_operand.vmem [shape: f32[12,1], index: 6, kind: input, shape index: {}]
  %s7 = inlined_call_operand.vmem [shape: f32[12,1], index: 7, kind: input, shape index: {}]
  %s8 = inlined_call_operand.vmem [shape: bf16[4,108], index: 8, kind: input, shape index: {}]
  %s9 = inlined_call_operand.vmem [shape: f32[4,1], index: 9, kind: input, shape index: {}]
  %s10 = inlined_call_operand.vmem [shape: f32[2,16,324], index: 10, kind: output, shape index: {}]
  %s11 = sld [smem:[#allocation0]]
  $region73: #{fcdensenet_forward.12} parent=0
    _
  %s13 = ssub.s32 1, %s11
  %s14 = scalar_select 0, %s13, %s11
  loop: start=0, step=1, limit=4
  $region2: #{fcdensenet_forward.12} parent=0 // loop_pre_header
    _
  $region3: #{fcdensenet_forward.12} parent=0 // loop_header
    %s16 = sphi 0, %s20
    %p17 = scmp.ge.s32.totalorder %s16, 4
    %s26 = sphi 0, %s28
    %s29 = sphi 0, %s26
    %s30 = sphi 0, %s29
    %s46 = sphi 0, %s30
    %s50 = sphi 0, %s50
    %s52 = sphi 0, %s50
    %s53 = sphi 0, %s52
    %s67 = sphi 0, %s53
    %s71 = sphi 0, %s71
    %s73 = sphi 0, %s71
    %s74 = sphi 0, %s73
    %s88 = sphi 0, %s74
    %s92 = sphi 0, %s92
    %s94 = sphi 0, %s92
    %s95 = sphi 0, %s94
    %s109 = sphi 0, %s95
    %s113 = sphi 0, %s113
    %s115 = sphi 0, %s113
    %s116 = sphi 0, %s115
    %s130 = sphi 0, %s116
    %s134 = sphi 0, %s134
    %s136 = sphi 0, %s134
    %s137 = sphi 0, %s136
    %s151 = sphi 0, %s137
    %s155 = sphi 0, %s155
    %s157 = sphi 0, %s155
    %s158 = sphi 0, %s157
    %s172 = sphi 0, %s158
    %s176 = sphi 0, %s176
    %s178 = sphi 0, %s176
    %s179 = sphi 0, %s178
    %s193 = sphi 0, %s179
    %s197 = sphi 0, %s197
    %s199 = sphi 0, %s197
    %s200 = sphi 0, %s199
    %s214 = sphi 0, %s200
    %s218 = sphi 0, %s218
    %s220 = sphi 0, %s218
    %s221 = sphi 0, %s220
    %s235 = sphi 0, %s221
    %s241 = sphi 0, %s243
    %s244 = sphi 0, %s241
    %s245 = sphi 0, %s244
    %s261 = sphi 0, %s245
  $region4: #{fcdensenet_forward.12} parent=0 // loop_header_branch
    %19 = sbr.rel (%p17) target = $region8
  $region5: #{fcdensenet_forward.12} parent=0 // loop_body
    %s21 = ssub.s32 %s16, 1
    %s22 = ssub.s32 %s16, 2
    %s23 = sadd.s32 %s16, 1
    %s24 = ssub.s32 %s16, %s23
    %p25 = scmp.eq.s32.totalorder %s24, 0
    %s27 = sadd.s32 %s26, 1
    %s28 = scalar_select %p25, %s26, %s27
    %p31 = pneg %p25
    %p32 = scmp.eq.s32.totalorder %s16, 1
    %p33 = por %p31, %p32
    %p34 = scmp.ne.s32.totalorder %s26, %s29
    %p35 = scmp.eq.s32.totalorder %s16, 0
    %p36 = por %p34, %p35
    %p37 = scmp.ne.s32.totalorder %s26, %s29
    %p38 = scmp.eq.s32.totalorder %s21, 1
    %p39 = por %p37, %p38
    %p40 = scmp.ne.s32.totalorder %s29, %s30
    %p41 = scmp.eq.s32.totalorder %s21, 0
    %p42 = por %p40, %p41
    %p43 = scmp.ne.s32.totalorder %s29, %s30
    %p44 = scmp.eq.s32.totalorder %s22, 1
    %p45 = por %p43, %p44
    %p47 = scmp.ne.s32.totalorder %s30, %s46
    %p48 = scmp.eq.s32.totalorder %s22, 0
    %p49 = por %p47, %p48
    %s51 = sadd.s32 %s50, 1
    %p54 = scmp.eq.s32.totalorder %s16, 1
    %p55 = scmp.ne.s32.totalorder %s50, %s52
    %p56 = scmp.eq.s32.totalorder %s16, 0
    %p57 = por %p55, %p56
    %p58 = scmp.ne.s32.totalorder %s50, %s52
    %p59 = scmp.eq.s32.totalorder %s21, 1
    %p60 = por %p58, %p59
    %p61 = scmp.ne.s32.totalorder %s52, %s53
    %p62 = scmp.eq.s32.totalorder %s21, 0
    %p63 = por %p61, %p62
    %p64 = scmp.ne.s32.totalorder %s52, %s53
    %p65 = scmp.eq.s32.totalorder %s22, 1
    %p66 = por %p64, %p65
    %p68 = scmp.ne.s32.totalorder %s53, %s67
    %p69 = scmp.eq.s32.totalorder %s22, 0
    %p70 = por %p68, %p69
    %s72 = sadd.s32 %s71, 1
    %p75 = scmp.eq.s32.totalorder %s16, 1
    %p76 = scmp.ne.s32.totalorder %s71, %s73
    %p77 = scmp.eq.s32.totalorder %s16, 0
    %p78 = por %p76, %p77
    %p79 = scmp.ne.s32.totalorder %s71, %s73
    %p80 = scmp.eq.s32.totalorder %s21, 1
    %p81 = por %p79, %p80
    %p82 = scmp.ne.s32.totalorder %s73, %s74
    %p83 = scmp.eq.s32.totalorder %s21, 0
    %p84 = por %p82, %p83
    %p85 = scmp.ne.s32.totalorder %s73, %s74
    %p86 = scmp.eq.s32.totalorder %s22, 1
    %p87 = por %p85, %p86
    %p89 = scmp.ne.s32.totalorder %s74, %s88
    %p90 = scmp.eq.s32.totalorder %s22, 0
    %p91 = por %p89, %p90
    %s93 = sadd.s32 %s92, 1
    %p96 = scmp.eq.s32.totalorder %s16, 1
    %p97 = scmp.ne.s32.totalorder %s92, %s94
    %p98 = scmp.eq.s32.totalorder %s16, 0
    %p99 = por %p97, %p98
    %p100 = scmp.ne.s32.totalorder %s92, %s94
    %p101 = scmp.eq.s32.totalorder %s21, 1
    %p102 = por %p100, %p101
    %p103 = scmp.ne.s32.totalorder %s94, %s95
    %p104 = scmp.eq.s32.totalorder %s21, 0
    %p105 = por %p103, %p104
    %p106 = scmp.ne.s32.totalorder %s94, %s95
    %p107 = scmp.eq.s32.totalorder %s22, 1
    %p108 = por %p106, %p107
    %p110 = scmp.ne.s32.totalorder %s95, %s109
    %p111 = scmp.eq.s32.totalorder %s22, 0
    %p112 = por %p110, %p111
    %s114 = sadd.s32 %s113, 1
    %p117 = scmp.eq.s32.totalorder %s16, 1
    %p118 = scmp.ne.s32.totalorder %s113, %s115
    %p119 = scmp.eq.s32.totalorder %s16, 0
    %p120 = por %p118, %p119
    %p121 = scmp.ne.s32.totalorder %s113, %s115
    %p122 = scmp.eq.s32.totalorder %s21, 1
    %p123 = por %p121, %p122
    %p124 = scmp.ne.s32.totalorder %s115, %s116
    %p125 = scmp.eq.s32.totalorder %s21, 0
    %p126 = por %p124, %p125
    %p127 = scmp.ne.s32.totalorder %s115, %s116
    %p128 = scmp.eq.s32.totalorder %s22, 1
    %p129 = por %p127, %p128
    %p131 = scmp.ne.s32.totalorder %s116, %s130
    %p132 = scmp.eq.s32.totalorder %s22, 0
    %p133 = por %p131, %p132
    %s135 = sadd.s32 %s134, 1
    %p138 = scmp.eq.s32.totalorder %s16, 1
    %p139 = scmp.ne.s32.totalorder %s134, %s136
    %p140 = scmp.eq.s32.totalorder %s16, 0
    %p141 = por %p139, %p140
    %p142 = scmp.ne.s32.totalorder %s134, %s136
    %p143 = scmp.eq.s32.totalorder %s21, 1
    %p144 = por %p142, %p143
    %p145 = scmp.ne.s32.totalorder %s136, %s137
    %p146 = scmp.eq.s32.totalorder %s21, 0
    %p147 = por %p145, %p146
    %p148 = scmp.ne.s32.totalorder %s136, %s137
    %p149 = scmp.eq.s32.totalorder %s22, 1
    %p150 = por %p148, %p149
    %p152 = scmp.ne.s32.totalorder %s137, %s151
    %p153 = scmp.eq.s32.totalorder %s22, 0
    %p154 = por %p152, %p153
    %s156 = sadd.s32 %s155, 1
    %p159 = scmp.eq.s32.totalorder %s16, 1
    %p160 = scmp.ne.s32.totalorder %s155, %s157
    %p161 = scmp.eq.s32.totalorder %s16, 0
    %p162 = por %p160, %p161
    %p163 = scmp.ne.s32.totalorder %s155, %s157
    %p164 = scmp.eq.s32.totalorder %s21, 1
    %p165 = por %p163, %p164
    %p166 = scmp.ne.s32.totalorder %s157, %s158
    %p167 = scmp.eq.s32.totalorder %s21, 0
    %p168 = por %p166, %p167
    %p169 = scmp.ne.s32.totalorder %s157, %s158
    %p170 = scmp.eq.s32.totalorder %s22, 1
    %p171 = por %p169, %p170
    %p173 = scmp.ne.s32.totalorder %s158, %s172
    %p174 = scmp.eq.s32.totalorder %s22, 0
    %p175 = por %p173, %p174
    %s177 = sadd.s32 %s176, 1
    %p180 = scmp.eq.s32.totalorder %s16, 1
    %p181 = scmp.ne.s32.totalorder %s176, %s178
    %p182 = scmp.eq.s32.totalorder %s16, 0
    %p183 = por %p181, %p182
    %p184 = scmp.ne.s32.totalorder %s176, %s178
    %p185 = scmp.eq.s32.totalorder %s21, 1
    %p186 = por %p184, %p185
    %p187 = scmp.ne.s32.totalorder %s178, %s179
    %p188 = scmp.eq.s32.totalorder %s21, 0
    %p189 = por %p187, %p188
    %p190 = scmp.ne.s32.totalorder %s178, %s179
    %p191 = scmp.eq.s32.totalorder %s22, 1
    %p192 = por %p190, %p191
    %p194 = scmp.ne.s32.totalorder %s179, %s193
    %p195 = scmp.eq.s32.totalorder %s22, 0
    %p196 = por %p194, %p195
    %s198 = sadd.s32 %s197, 1
    %p201 = scmp.eq.s32.totalorder %s16, 1
    %p202 = scmp.ne.s32.totalorder %s197, %s199
    %p203 = scmp.eq.s32.totalorder %s16, 0
    %p204 = por %p202, %p203
    %p205 = scmp.ne.s32.totalorder %s197, %s199
    %p206 = scmp.eq.s32.totalorder %s21, 1
    %p207 = por %p205, %p206
    %p208 = scmp.ne.s32.totalorder %s199, %s200
    %p209 = scmp.eq.s32.totalorder %s21, 0
    %p210 = por %p208, %p209
    %p211 = scmp.ne.s32.totalorder %s199, %s200
    %p212 = scmp.eq.s32.totalorder %s22, 1
    %p213 = por %p211, %p212
    %p215 = scmp.ne.s32.totalorder %s200, %s214
    %p216 = scmp.eq.s32.totalorder %s22, 0
    %p217 = por %p215, %p216
    %s219 = sadd.s32 %s218, 1
    %p222 = scmp.eq.s32.totalorder %s16, 1
    %p223 = scmp.ne.s32.totalorder %s218, %s220
    %p224 = scmp.eq.s32.totalorder %s16, 0
    %p225 = por %p223, %p224
    %p226 = scmp.ne.s32.totalorder %s218, %s220
    %p227 = scmp.eq.s32.totalorder %s21, 1
    %p228 = por %p226, %p227
    %p229 = scmp.ne.s32.totalorder %s220, %s221
    %p230 = scmp.eq.s32.totalorder %s21, 0
    %p231 = por %p229, %p230
    %p232 = scmp.ne.s32.totalorder %s220, %s221
    %p233 = scmp.eq.s32.totalorder %s22, 1
    %p234 = por %p232, %p233
    %p236 = scmp.ne.s32.totalorder %s221, %s235
    %p237 = scmp.eq.s32.totalorder %s22, 0
    %p238 = por %p236, %p237
    %s239 = ssub.s32 %s16, %s23
    %p240 = scmp.eq.s32.totalorder %s239, 0
    %s242 = sadd.s32 %s241, 1
    %s243 = scalar_select %p240, %s241, %s242
    %p246 = pneg %p240
    %p247 = scmp.eq.s32.totalorder %s16, 1
    %p248 = por %p246, %p247
    %p249 = scmp.ne.s32.totalorder %s241, %s244
    %p250 = scmp.eq.s32.totalorder %s16, 0
    %p251 = por %p249, %p250
    %p252 = scmp.ne.s32.totalorder %s241, %s244
    %p253 = scmp.eq.s32.totalorder %s21, 1
    %p254 = por %p252, %p253
    %p255 = scmp.ne.s32.totalorder %s244, %s245
    %p256 = scmp.eq.s32.totalorder %s21, 0
    %p257 = por %p255, %p256
    %p258 = scmp.ne.s32.totalorder %s244, %s245
    %p259 = scmp.eq.s32.totalorder %s22, 1
    %p260 = por %p258, %p259
    %p262 = scmp.ne.s32.totalorder %s245, %s261
    %p263 = scmp.eq.s32.totalorder %s22, 0
    %p264 = por %p262, %p263
    %p265 = scmp.le.s32.totalorder 1, %s16
    %p266 = scmp.lt.s32.totalorder %s16, 3
    %p267 = pnand %p265, %p266
    %p268 = pneg %p267
    // Predicated region
    $region9: #{fcdensenet_forward.12} parent=5 // pred_check
      _
    $region10: #{fcdensenet_forward.12} parent=5 // pred_check_branch
      %270 = sbr.rel (%p267) target = $region12
    $region11: #{fcdensenet_forward.12} parent=5 // pred_region
      %s271 = ssub.s32 %s16, 1
      // Predicated region
      $region13: #{fcdensenet_forward.12} parent=11 // pred_check
        %p272 = pneg %p63
      $region14: #{fcdensenet_forward.12} parent=11 // pred_check_branch
        %274 = sbr.rel (%p272) target = $region16
      $region15: #{fcdensenet_forward.12} parent=11 // pred_region
        _
      $region16: #{fcdensenet_forward.12} parent=11 // pred_fallthru
        _
      // Predicated region
      $region17: #{fcdensenet_forward.12} parent=11 // pred_check
        %p275 = pneg %p84
      $region18: #{fcdensenet_forward.12} parent=11 // pred_check_branch
        %277 = sbr.rel (%p275) target = $region20
      $region19: #{fcdensenet_forward.12} parent=11 // pred_region
        _
      $region20: #{fcdensenet_forward.12} parent=11 // pred_fallthru
        _
      // Predicated region
      $region21: #{fcdensenet_forward.12} parent=11 // pred_check
        %p278 = pneg %p105
      $region22: #{fcdensenet_forward.12} parent=11 // pred_check_branch
        %280 = sbr.rel (%p278) target = $region24
      $region23: #{fcdensenet_forward.12} parent=11 // pred_region
        _
      $region24: #{fcdensenet_forward.12} parent=11 // pred_fallthru
        _
      // Predicated region
      $region25: #{fcdensenet_forward.12} parent=11 // pred_check
        %p281 = pneg %p126
      $region26: #{fcdensenet_forward.12} parent=11 // pred_check_branch
        %283 = sbr.rel (%p281) target = $region28
      $region27: #{fcdensenet_forward.12} parent=11 // pred_region
        _
      $region28: #{fcdensenet_forward.12} parent=11 // pred_fallthru
        _
      // Predicated region
      $region29: #{fcdensenet_forward.12} parent=11 // pred_check
        %p284 = pneg %p147
      $region30: #{fcdensenet_forward.12} parent=11 // pred_check_branch
        %286 = sbr.rel (%p284) target = $region32
      $region31: #{fcdensenet_forward.12} parent=11 // pred_region
        _
      $region32: #{fcdensenet_forward.12} parent=11 // pred_fallthru
        _
      // Predicated region
      $region33: #{fcdensenet_forward.12} parent=11 // pred_check
        %p287 = pneg %p168
      $region34: #{fcdensenet_forward.12} parent=11 // pred_check_branch
        %289 = sbr.rel (%p287) target = $region36
      $region35: #{fcdensenet_forward.12} parent=11 // pred_region
        _
      $region36: #{fcdensenet_forward.12} parent=11 // pred_fallthru
        _
      // Predicated region
      $region37: #{fcdensenet_forward.12} parent=11 // pred_check
        %p290 = pneg %p189
      $region38: #{fcdensenet_forward.12} parent=11 // pred_check_branch
        %292 = sbr.rel (%p290) target = $region40
      $region39: #{fcdensenet_forward.12} parent=11 // pred_region
        _
      $region40: #{fcdensenet_forward.12} parent=11 // pred_fallthru
        _
      // Predicated region
      $region41: #{fcdensenet_forward.12} parent=11 // pred_check
        %p293 = pneg %p210
      $region42: #{fcdensenet_forward.12} parent=11 // pred_check_branch
        %295 = sbr.rel (%p293) target = $region44
      $region43: #{fcdensenet_forward.12} parent=11 // pred_region
        _
      $region44: #{fcdensenet_forward.12} parent=11 // pred_fallthru
        _
      // Predicated region
      $region45: #{fcdensenet_forward.12} parent=11 // pred_check
        %p296 = pneg %p231
      $region46: #{fcdensenet_forward.12} parent=11 // pred_check_branch
        %298 = sbr.rel (%p296) target = $region48
      $region47: #{fcdensenet_forward.12} parent=11 // pred_region
        _
      $region48: #{fcdensenet_forward.12} parent=11 // pred_fallthru
        _
    $region12: #{fcdensenet_forward.12} parent=5 // pred_fallthru
      _
    %p299 = scmp.lt.s32.totalorder %s16, 2
    // Predicated region
    $region49: #{fcdensenet_forward.12} parent=5 // pred_check
      %p300 = pneg %p299
    $region50: #{fcdensenet_forward.12} parent=5 // pred_check_branch
      %302 = sbr.rel (%p300) target = $region52
    $region51: #{fcdensenet_forward.12} parent=5 // pred_region
      // Predicated region
      $region53: #{fcdensenet_forward.12} parent=51 // pred_check
        %p303 = pneg %p36
      $region54: #{fcdensenet_forward.12} parent=51 // pred_check_branch
        %305 = sbr.rel (%p303) target = $region56
      $region55: #{fcdensenet_forward.12} parent=51 // pred_region
        %p306 = scmp.lt.s32.totalorder %s16, 1
        %s307 = scalar_select %p306, %s16, 1
        %s308 = smul.addr %s307, 3
        %s309 = smul.addr %s308, 8
        %s310 = scalar_lea.vmem %s0, %s309
      $region56: #{fcdensenet_forward.12} parent=51 // pred_fallthru
        _
    $region52: #{fcdensenet_forward.12} parent=5 // pred_fallthru
      _
    %p311 = scmp.le.s32.totalorder 1, %s16
    %p312 = scmp.lt.s32.totalorder %s16, 3
    %p313 = pnand %p311, %p312
    %p314 = pneg %p313
    // Predicated region
    $region57: #{fcdensenet_forward.12} parent=5 // pred_check
      _
    $region58: #{fcdensenet_forward.12} parent=5 // pred_check_branch
      %316 = sbr.rel (%p313) target = $region60
    $region59: #{fcdensenet_forward.12} parent=5 // pred_region
      %s317 = ssub.s32 %s16, 1
      %p318 = scmp.lt.s32.totalorder %s21, 1
      %s319 = scalar_select %p318, %s21, 1
      %s320 = smul.addr %s319, 3
      %s321 = smul.addr %s320, 8
      %s322 = scalar_lea.vmem %s0, %s321
      %p323 = pneg %p42
      %p324 = pneg %p39
      %p325 = pneg %p63
      %p326 = pneg %p60
      %p327 = pneg %p84
      %p328 = pneg %p81
      %p329 = pneg %p105
      %p330 = pneg %p102
      %p331 = pneg %p126
      %p332 = pneg %p123
      %p333 = pneg %p147
      %p334 = pneg %p144
      %p335 = pneg %p168
      %p336 = pneg %p165
      %p337 = pneg %p189
      %p338 = pneg %p186
      %p339 = pneg %p210
      %p340 = pneg %p207
      %p341 = pneg %p231
      %p342 = pneg %p228
      %p343 = pneg %p257
      %p344 = pneg %p254
      %p345 = scmp.lt.s32.totalorder %s21, 1
      %s346 = scalar_select %p345, %s21, 1
      %s347 = smul.addr %s346, 6
      %s348 = smul.addr %s347, 8
      %s349 = scalar_lea.vmem %s10, %s348
      %p350 = scmp.lt.s32.totalorder %s21, 1
      %s351 = scalar_select %p350, %s21, 1
      %s352 = smul.addr %s351, 3
      %s353 = smul.addr %s352, 8
      %s354 = scalar_lea.vmem %s0, %s353
      %p355 = scmp.lt.s32.totalorder %s21, 1
      %s356 = scalar_select %p355, %s21, 1
      %s357 = smul.addr %s356, 6
      %s358 = smul.addr %s357, 8
      %s359 = scalar_lea.vmem %s10, %s358
      %v361 = vld [vmem:[%s1] sm:$0x7]
      %vm362 = vcmp.gt.f32.partialorder %v361, 0.5
      %v363 = vld [vmem:[%s354] sm:$0xff]
      %v364 = vld [vmem:[%s354 + $0x8] sm:$0xff]
      %v365 = vld [vmem:[%s354 + $0x10] sm:$0xff]
      %366 = vst [vmem:[%s359] sm:$0xff] %v363
      %367 = vst [vmem:[%s359 + $0x8] sm:$0xff] %v364
      %vm368 = vcmask 556032
      %369 = vst.msk [vmem:[%s359 + $0x10] sm:$0xff] %vm368, %v365
      %v370 = vld [vmem:[%s359] sm:$0xff]
      %v371 = vld [vmem:[%s359 + $0x8] sm:$0xff]
      %v372 = vld [vmem:[%s359 + $0x10] sm:$0xff]
      %v373 = vld [vmem:[%s2] sm:$0xff]
      %v374 = vld [vmem:[%s3] sm:$0xff]
      %376 = vset.pattern.permute.xlu0 0
      %377 = vperm.xlu0 %376, %v373
      %v378 = vpop.permute.xlu0 %377
      %v380 = vmul.f32 %v370, %v378
      %v381 = vmul.f32 %v371, %v378
      %v382 = vmul.f32 %v372, %v378
      %384 = vset.pattern.permute.xlu0 0
      %385 = vperm.xlu0 %384, %v374
      %v386 = vpop.permute.xlu0 %385
      %v388 = vadd.f32 %v380, %v386
      %v389 = vadd.f32 %v381, %v386
      %v390 = vadd.f32 %v382, %v386
      %v391 = vmax.f32 %v388, 0.0
      %v392 = vmax.f32 %v389, 0.0
      %v393 = vmax.f32 %v390, 0.0
      %v394 = vsel %vm362, 1, 0
      %v395 = vperm.slane %v394, 0
      %v396 = vperm.slane %v394, 1
      %v397 = vperm.slane %v394, 2
      %vm398 = vcmp.eq.s32.totalorder %v395, 1
      %vm399 = vcmp.eq.s32.totalorder %v396, 1
      %vm400 = vcmp.eq.s32.totalorder %v397, 1
      %v401 = vsel %vm398, %v391, 0.0
      %v402 = vsel %vm399, %v392, 0.0
      %v403 = vsel %vm400, %v393, 0.0
      %v404 = vpack.c.bf16 %v402, %v401
      %v405 = vpack.c.bf16 %v403, %v403
      %v408 = vunpack.c.l.b16 %v404
      %v409 = vunpack.c.h.b16 %v404
      %v410 = vunpack.c.l.b16 %v405
      %v411 = vpack.c.b16 %v408, %v408
      %v412 = vpack.c.b16 %v409, %v409
      %v413 = vpack.c.b16 %v410, %v410
      %414 = vrot.lane.b32.xlu0 %v411, 127
      %v415 = vpop.permute.xlu0 %414
      %416 = vrot.lane.b32.xlu0 %v412, 127
      %v417 = vpop.permute.xlu0 %416
      %418 = vrot.lane.b32.xlu0 %v413, 127
      %v419 = vpop.permute.xlu0 %418
      %vm420 = vcmask 1039360
      %v421 = vsel %vm420, %v415, %v417
      %v422 = vsel %vm420, %v417, %v419
      %423 = vrot.lane.b32.xlu0 %v411, 126
      %v424 = vpop.permute.xlu0 %423
      %425 = vrot.lane.b32.xlu0 %v412, 126
      %v426 = vpop.permute.xlu0 %425
      %427 = vrot.lane.b32.xlu0 %v413, 126
      %v428 = vpop.permute.xlu0 %427
      %vm429 = vcmask 1031168
      %v430 = vsel %vm429, %v424, %v426
      %v431 = vsel %vm429, %v426, %v428
      %432 = vrot.lane.b32.xlu0 %v411, 110
      %v433 = vpop.permute.xlu0 %432
      %434 = vrot.lane.b32.xlu0 %v412, 110
      %v435 = vpop.permute.xlu0 %434
      %436 = vrot.lane.b32.xlu0 %v413, 110
      %v437 = vpop.permute.xlu0 %436
      %vm438 = vcmask 900096
      %v439 = vsel %vm438, %v433, %v435
      %v440 = vsel %vm438, %v435, %v437
      %441 = vrot.lane.b32.xlu0 %v411, 109
      %v442 = vpop.permute.xlu0 %441
      %443 = vrot.lane.b32.xlu0 %v412, 109
      %v444 = vpop.permute.xlu0 %443
      %445 = vrot.lane.b32.xlu0 %v413, 109
      %v446 = vpop.permute.xlu0 %445
      %vm447 = vcmask 891904
      %v448 = vsel %vm447, %v442, %v444
      %v449 = vsel %vm447, %v444, %v446
      %450 = vrot.lane.b32.xlu0 %v411, 108
      %v451 = vpop.permute.xlu0 %450
      %452 = vrot.lane.b32.xlu0 %v412, 108
      %v453 = vpop.permute.xlu0 %452
      %454 = vrot.lane.b32.xlu0 %v413, 108
      %v455 = vpop.permute.xlu0 %454
      %vm456 = vcmask 883712
      %v457 = vsel %vm456, %v451, %v453
      %v458 = vsel %vm456, %v453, %v455
      %459 = vrot.lane.b32.xlu0 %v411, 92
      %v460 = vpop.permute.xlu0 %459
      %461 = vrot.lane.b32.xlu0 %v412, 92
      %v462 = vpop.permute.xlu0 %461
      %463 = vrot.lane.b32.xlu0 %v413, 92
      %v464 = vpop.permute.xlu0 %463
      %vm465 = vcmask 752640
      %v466 = vsel %vm465, %v460, %v462
      %v467 = vsel %vm465, %v462, %v464
      %468 = vrot.lane.b32.xlu0 %v411, 91
      %v469 = vpop.permute.xlu0 %468
      %470 = vrot.lane.b32.xlu0 %v412, 91
      %v471 = vpop.permute.xlu0 %470
      %472 = vrot.lane.b32.xlu0 %v413, 91
      %v473 = vpop.permute.xlu0 %472
      %vm474 = vcmask 744448
      %v475 = vsel %vm474, %v469, %v471
      %v476 = vsel %vm474, %v471, %v473
      %477 = vrot.lane.b32.xlu0 %v411, 90
      %v478 = vpop.permute.xlu0 %477
      %479 = vrot.lane.b32.xlu0 %v412, 90
      %v480 = vpop.permute.xlu0 %479
      %481 = vrot.lane.b32.xlu0 %v413, 90
      %v482 = vpop.permute.xlu0 %481
      %vm483 = vcmask 736256
      %v484 = vsel %vm483, %v478, %v480
      %v485 = vsel %vm483, %v480, %v482
      %vm486 = vcmask 1043456
      %v489 = vsel %vm486, %v411, %v421
      %v493 = vsel %vm486, %v412, %v422
      %v497 = vsel %vm486, %v413, %v419
      %v501 = vsel %vm486, %v430, %v439
      %v505 = vsel %vm486, %v431, %v440
      %v509 = vsel %vm486, %v428, %v437
      %v513 = vsel %vm486, %v448, %v457
      %v517 = vsel %vm486, %v449, %v458
      %v521 = vsel %vm486, %v446, %v455
      %v525 = vsel %vm486, %v466, %v475
      %v529 = vsel %vm486, %v467, %v476
      %v533 = vsel %vm486, %v464, %v473
      %v535 = vld [vmem:[%s4] sm:$0x3]
      %v536 = vld [vmem:[%s5] sm:$0xf]
      %538 = vset.pattern.permute.xlu0 0
      %539 = vperm.xlu0 %538, %v536
      %v540 = vpop.permute.xlu0 %539
      %vm542 = vcmask 588800
      %v544 = vsel %vm542, %v535, 0
      %v547 = vsel %vm486, %v484, 0
      %v550 = vsel %vm486, %v485, 0
      %v553 = vsel %vm486, %v482, 0
      %555 = vmatpush.bf16.msra.mxu0 0
      %556 = vmatpush.bf16.msra.mxu0 0
      %557 = vmatpush.bf16.msra.mxu0 0
      %558 = vmatpush.bf16.msra.mxu0 %v547
      %559 = vmatpush.bf16.msra.mxu0 %v525
      %560 = vmatpush.bf16.msra.mxu0 %v513
      %561 = vmatpush.bf16.msra.mxu0 %v501
      %562 = vmatpush.bf16.msra.mxu0 %v489
      %563 = vmatmul.bf16.gmra.mxu0 %v544
      %v564 = vpop.f32.mrf.mxu0
      %v565 = vadd.f32 %v540, %v564
      %v566 = vpop.f32.mrf.mxu0
      %567 = vdwg.mxu0
      %568 = vmatpush.bf16.msra.mxu0 0
      %569 = vmatpush.bf16.msra.mxu0 0
      %570 = vmatpush.bf16.msra.mxu0 0
      %571 = vmatpush.bf16.msra.mxu0 %v550
      %572 = vmatpush.bf16.msra.mxu0 %v529
      %573 = vmatpush.bf16.msra.mxu0 %v517
      %574 = vmatpush.bf16.msra.mxu0 %v505
      %575 = vmatpush.bf16.msra.mxu0 %v493
      %576 = vmatmul.bf16.gmra.mxu0 %v544
      %v577 = vpop.f32.mrf.mxu0
      %v578 = vadd.f32 %v540, %v577
      %v579 = vpop.f32.mrf.mxu0
      %580 = vdwg.mxu0
      %581 = vmatpush.bf16.msra.mxu0 0
      %582 = vmatpush.bf16.msra.mxu0 0
      %583 = vmatpush.bf16.msra.mxu0 0
      %584 = vmatpush.bf16.msra.mxu0 %v553
      %585 = vmatpush.bf16.msra.mxu0 %v533
      %586 = vmatpush.bf16.msra.mxu0 %v521
      %587 = vmatpush.bf16.msra.mxu0 %v509
      %588 = vmatpush.bf16.msra.mxu0 %v497
      %589 = vmatmul.bf16.gmra.mxu0 %v544
      %v590 = vpop.f32.mrf.mxu0
      %v591 = vadd.f32 %v540, %v590
      %v592 = vpop.f32.mrf.mxu0
      %593 = vdwg.mxu0
      %597 = vrot.lane.b32.xlu0 %v565, 19
      %v598 = vpop.permute.xlu0 %597
      %599 = vrot.lane.b32.xlu0 %v578, 19
      %v600 = vpop.permute.xlu0 %599
      %601 = vrot.lane.b32.xlu0 %v591, 19
      %v602 = vpop.permute.xlu0 %601
      %vm603 = vcmask 154624
      %v604 = vsel %vm603, %v598, %v600
      %v605 = vsel %vm603, %v600, %v602
      %vm609 = vcmask 1043608
      %610 = vst.msk [vmem:[%s359 + $0x18] sm:$0xf] %vm609, %v598
      %611 = vst [vmem:[%s359 + $0x20] sm:$0xf] %v604
      %vm612 = vcmask 396288
      %613 = vst.msk [vmem:[%s359 + $0x28] sm:$0xf] %vm612, %v605
      %v614 = vld [vmem:[%s359] sm:$0xff]
      %v615 = vld [vmem:[%s359 + $0x8] sm:$0xff]
      %v616 = vld [vmem:[%s359 + $0x10] sm:$0xff]
      %v617 = vld [vmem:[%s359 + $0x18] sm:$0xf]
      %v618 = vld [vmem:[%s359 + $0x20] sm:$0xf]
      %v619 = vld [vmem:[%s359 + $0x28] sm:$0xf]
      %v620 = vld [vmem:[%s6] sm:$0xff]
      %v621 = vld [vmem:[%s6 + $0x8] sm:$0xf]
      %v622 = vld [vmem:[%s7] sm:$0xff]
      %v623 = vld [vmem:[%s7 + $0x8] sm:$0xf]
      %625 = vset.pattern.permute.xlu0 0
      %626 = vperm.xlu0 %625, %v620
      %v627 = vpop.permute.xlu0 %626
      %630 = vset.pattern.permute.xlu0 0
      %631 = vperm.xlu0 %630, %v621
      %v632 = vpop.permute.xlu0 %631
      %v634 = vmul.f32 %v614, %v627
      %v635 = vmul.f32 %v615, %v627
      %v636 = vmul.f32 %v616, %v627
      %v637 = vmul.f32 %v617, %v632
      %v638 = vmul.f32 %v618, %v632
      %v639 = vmul.f32 %v619, %v632
      %641 = vset.pattern.permute.xlu0 0
      %642 = vperm.xlu0 %641, %v622
      %v643 = vpop.permute.xlu0 %642
      %646 = vset.pattern.permute.xlu0 0
      %647 = vperm.xlu0 %646, %v623
      %v648 = vpop.permute.xlu0 %647
      %v650 = vadd.f32 %v634, %v643
      %v651 = vadd.f32 %v635, %v643
      %v652 = vadd.f32 %v636, %v643
      %v653 = vadd.f32 %v637, %v648
      %v654 = vadd.f32 %v638, %v648
      %v655 = vadd.f32 %v639, %v648
      %v656 = vmax.f32 %v650, 0.0
      %v657 = vmax.f32 %v651, 0.0
      %v658 = vmax.f32 %v652, 0.0
      %v659 = vmax.f32 %v653, 0.0
      %v660 = vmax.f32 %v654, 0.0
      %v661 = vmax.f32 %v655, 0.0
      %v662 = vsel %vm398, %v656, 0.0
      %v663 = vsel %vm399, %v657, 0.0
      %v664 = vsel %vm400, %v658, 0.0
      %v665 = vsel %vm398, %v659, 0.0
      %v666 = vsel %vm399, %v660, 0.0
      %v667 = vsel %vm400, %v661, 0.0
      %v668 = vpack.c.bf16 %v663, %v662
      %v669 = vpack.c.bf16 %v664, %v664
      %v670 = vpack.c.bf16 %v666, %v665
      %v671 = vpack.c.bf16 %v667, %v667
      %v676 = vunpack.c.l.b16 %v668
      %v677 = vunpack.c.h.b16 %v668
      %v678 = vunpack.c.l.b16 %v669
      %v679 = vunpack.c.l.b16 %v670
      %v680 = vunpack.c.h.b16 %v670
      %v681 = vunpack.c.l.b16 %v671
      %v682 = vpack.c.b16 %v679, %v676
      %v683 = vpack.c.b16 %v680, %v677
      %v684 = vpack.c.b16 %v681, %v678
      %v685 = vrot.slane %v682, 2
      %v686 = vrot.slane %v683, 2
      %v687 = vrot.slane %v684, 2
      %688 = vrot.lane.b32.xlu0 %v685, 127
      %v689 = vpop.permute.xlu0 %688
      %690 = vrot.lane.b32.xlu0 %v686, 127
      %v691 = vpop.permute.xlu0 %690
      %692 = vrot.lane.b32.xlu0 %v687, 127
      %v693 = vpop.permute.xlu0 %692
      %v694 = vsel %vm420, %v689, %v691
      %v695 = vsel %vm420, %v691, %v693
      %v696 = vpack.c.b16 %v676, %v676
      %v697 = vpack.c.b16 %v677, %v677
      %v698 = vpack.c.b16 %v678, %v678
      %v699 = vpack.c.b16 %v679, %v679
      %v700 = vpack.c.b16 %v680, %v680
      %v701 = vpack.c.b16 %v681, %v681
      %702 = vrot.lane.b32.xlu0 %v696, 126
      %v703 = vpop.permute.xlu0 %702
      %704 = vrot.lane.b32.xlu0 %v697, 126
      %v705 = vpop.permute.xlu0 %704
      %706 = vrot.lane.b32.xlu0 %v698, 126
      %v707 = vpop.permute.xlu0 %706
      %708 = vrot.lane.b32.xlu0 %v699, 126
      %v709 = vpop.permute.xlu0 %708
      %710 = vrot.lane.b32.xlu0 %v700, 126
      %v711 = vpop.permute.xlu0 %710
      %712 = vrot.lane.b32.xlu0 %v701, 126
      %v713 = vpop.permute.xlu0 %712
      %v714 = vsel %vm429, %v703, %v705
      %v715 = vsel %vm429, %v705, %v707
      %v716 = vsel %vm429, %v709, %v711
      %v717 = vsel %vm429, %v711, %v713
      %v718 = vrot.slane %v682, 6
      %v719 = vrot.slane %v683, 6
      %v720 = vrot.slane %v684, 6
      %721 = vrot.lane.b32.xlu0 %v718, 110
      %v722 = vpop.permute.xlu0 %721
      %723 = vrot.lane.b32.xlu0 %v719, 110
      %v724 = vpop.permute.xlu0 %723
      %725 = vrot.lane.b32.xlu0 %v720, 110
      %v726 = vpop.permute.xlu0 %725
      %v727 = vsel %vm438, %v722, %v724
      %v728 = vsel %vm438, %v724, %v726
      %729 = vrot.lane.b32.xlu0 %v682, 109
      %v730 = vpop.permute.xlu0 %729
      %731 = vrot.lane.b32.xlu0 %v683, 109
      %v732 = vpop.permute.xlu0 %731
      %733 = vrot.lane.b32.xlu0 %v684, 109
      %v734 = vpop.permute.xlu0 %733
      %v735 = vsel %vm447, %v730, %v732
      %v736 = vsel %vm447, %v732, %v734
      %737 = vrot.lane.b32.xlu0 %v685, 108
      %v738 = vpop.permute.xlu0 %737
      %739 = vrot.lane.b32.xlu0 %v686, 108
      %v740 = vpop.permute.xlu0 %739
      %741 = vrot.lane.b32.xlu0 %v687, 108
      %v742 = vpop.permute.xlu0 %741
      %v743 = vsel %vm456, %v738, %v740
      %v744 = vsel %vm456, %v740, %v742
      %745 = vrot.lane.b32.xlu0 %v696, 92
      %v746 = vpop.permute.xlu0 %745
      %747 = vrot.lane.b32.xlu0 %v697, 92
      %v748 = vpop.permute.xlu0 %747
      %749 = vrot.lane.b32.xlu0 %v698, 92
      %v750 = vpop.permute.xlu0 %749
      %751 = vrot.lane.b32.xlu0 %v699, 92
      %v752 = vpop.permute.xlu0 %751
      %753 = vrot.lane.b32.xlu0 %v700, 92
      %v754 = vpop.permute.xlu0 %753
      %755 = vrot.lane.b32.xlu0 %v701, 92
      %v756 = vpop.permute.xlu0 %755
      %v757 = vsel %vm465, %v746, %v748
      %v758 = vsel %vm465, %v748, %v750
      %v759 = vsel %vm465, %v752, %v754
      %v760 = vsel %vm465, %v754, %v756
      %761 = vrot.lane.b32.xlu0 %v718, 91
      %v762 = vpop.permute.xlu0 %761
      %763 = vrot.lane.b32.xlu0 %v719, 91
      %v764 = vpop.permute.xlu0 %763
      %765 = vrot.lane.b32.xlu0 %v720, 91
      %v766 = vpop.permute.xlu0 %765
      %v767 = vsel %vm474, %v762, %v764
      %v768 = vsel %vm474, %v764, %v766
      %769 = vrot.lane.b32.xlu0 %v682, 90
      %v770 = vpop.permute.xlu0 %769
      %771 = vrot.lane.b32.xlu0 %v683, 90
      %v772 = vpop.permute.xlu0 %771
      %773 = vrot.lane.b32.xlu0 %v684, 90
      %v774 = vpop.permute.xlu0 %773
      %v775 = vsel %vm483, %v770, %v772
      %v776 = vsel %vm483, %v772, %v774
      %vm777 = vcmask 1045504
      %v780 = vsel %vm777, %v682, %v694
      %v784 = vsel %vm777, %v683, %v695
      %v788 = vsel %vm777, %v684, %v693
      %v791 = vsel %vm486, %v694, %v714
      %v794 = vsel %vm486, %v695, %v715
      %v797 = vsel %vm486, %v693, %v707
      %vm799 = vcmask 1041408
      %v802 = vsel %vm799, %v716, %v727
      %v806 = vsel %vm799, %v717, %v728
      %v810 = vsel %vm799, %v713, %v726
      %v814 = vsel %vm777, %v735, %v743
      %v818 = vsel %vm777, %v736, %v744
      %v822 = vsel %vm777, %v734, %v742
      %v825 = vsel %vm486, %v743, %v757
      %v828 = vsel %vm486, %v744, %v758
      %v831 = vsel %vm486, %v742, %v750
      %v835 = vsel %vm799, %v759, %v767
      %v839 = vsel %vm799, %v760, %v768
      %v843 = vsel %vm799, %v756, %v766
      %v845 = vld [vmem:[%s8] sm:$0x3]
      %v846 = vld [vmem:[%s9] sm:$0xf]
      %848 = vset.pattern.permute.xlu0 0
      %849 = vperm.xlu0 %848, %v846
      %v850 = vpop.permute.xlu0 %849
      %vm852 = vcmask 883712
      %v854 = vsel %vm852, %v845, 0
      %v857 = vsel %vm777, %v775, 0
      %v860 = vsel %vm777, %v776, 0
      %v863 = vsel %vm777, %v774, 0
      %865 = vmatpush.bf16.msra.mxu0 0
      %866 = vmatpush.bf16.msra.mxu0 %v857
      %867 = vmatpush.bf16.msra.mxu0 %v835
      %868 = vmatpush.bf16.msra.mxu0 %v825
      %869 = vmatpush.bf16.msra.mxu0 %v814
      %870 = vmatpush.bf16.msra.mxu0 %v802
      %871 = vmatpush.bf16.msra.mxu0 %v791
      %872 = vmatpush.bf16.msra.mxu0 %v780
      %873 = vmatmul.bf16.gmra.mxu0 %v854
      %v874 = vpop.f32.mrf.mxu0
      %v875 = vadd.f32 %v850, %v874
      %v876 = vpop.f32.mrf.mxu0
      %877 = vdwg.mxu0
      %878 = vmatpush.bf16.msra.mxu0 0
      %879 = vmatpush.bf16.msra.mxu0 %v860
      %880 = vmatpush.bf16.msra.mxu0 %v839
      %881 = vmatpush.bf16.msra.mxu0 %v828
      %882 = vmatpush.bf16.msra.mxu0 %v818
      %883 = vmatpush.bf16.msra.mxu0 %v806
      %884 = vmatpush.bf16.msra.mxu0 %v794
      %885 = vmatpush.bf16.msra.mxu0 %v784
      %886 = vmatmul.bf16.gmra.mxu0 %v854
      %v887 = vpop.f32.mrf.mxu0
      %v888 = vadd.f32 %v850, %v887
      %v889 = vpop.f32.mrf.mxu0
      %890 = vdwg.mxu0
      %891 = vmatpush.bf16.msra.mxu0 0
      %892 = vmatpush.bf16.msra.mxu0 %v863
      %893 = vmatpush.bf16.msra.mxu0 %v843
      %894 = vmatpush.bf16.msra.mxu0 %v831
      %895 = vmatpush.bf16.msra.mxu0 %v822
      %896 = vmatpush.bf16.msra.mxu0 %v810
      %897 = vmatpush.bf16.msra.mxu0 %v797
      %898 = vmatpush.bf16.msra.mxu0 %v788
      %899 = vmatmul.bf16.gmra.mxu0 %v854
      %v900 = vpop.f32.mrf.mxu0
      %v901 = vadd.f32 %v850, %v900
      %v902 = vpop.f32.mrf.mxu0
      %903 = vdwg.mxu0
      %v907 = vrot.slane %v875, 4
      %v908 = vrot.slane %v888, 4
      %v909 = vrot.slane %v901, 4
      %910 = vrot.lane.b32.xlu0 %v907, 19
      %v911 = vpop.permute.xlu0 %910
      %912 = vrot.lane.b32.xlu0 %v908, 19
      %v913 = vpop.permute.xlu0 %912
      %914 = vrot.lane.b32.xlu0 %v909, 19
      %v915 = vpop.permute.xlu0 %914
      %v916 = vsel %vm603, %v911, %v913
      %v917 = vsel %vm603, %v913, %v915
      %vm921 = vcmask 1047708
      %922 = vst.msk [vmem:[%s359 + $0x18] sm:$0xf0] %vm921, %v911
      %923 = vst [vmem:[%s359 + $0x20] sm:$0xf0] %v916
      %vm924 = vcmask 400388
      %925 = vst.msk [vmem:[%s359 + $0x28] sm:$0xf0] %vm924, %v917
      %p926 = scmp.lt.s32.totalorder %s21, 1
      %s927 = scalar_select %p926, %s21, 1
      %s928 = smul.addr %s927, 6
      %s929 = smul.addr %s928, 8
      %s930 = scalar_lea.vmem %s10, %s929
      // Predicated region
      $region61: #{fcdensenet_forward.12} parent=59 // pred_check
        %p931 = pneg %p254
      $region62: #{fcdensenet_forward.12} parent=59 // pred_check_branch
        %933 = sbr.rel (%p931) target = $region64
      $region63: #{fcdensenet_forward.12} parent=59 // pred_region
        _
      $region64: #{fcdensenet_forward.12} parent=59 // pred_fallthru
        _
    $region60: #{fcdensenet_forward.12} parent=5 // pred_fallthru
      _
    %p934 = scmp.le.s32.totalorder 2, %s16
    // Predicated region
    $region65: #{fcdensenet_forward.12} parent=5 // pred_check
      %p935 = pneg %p934
    $region66: #{fcdensenet_forward.12} parent=5 // pred_check_branch
      %937 = sbr.rel (%p935) target = $region68
    $region67: #{fcdensenet_forward.12} parent=5 // pred_region
      %s938 = ssub.s32 %s16, 2
      // Predicated region
      $region69: #{fcdensenet_forward.12} parent=67 // pred_check
        %p939 = pneg %p260
      $region70: #{fcdensenet_forward.12} parent=67 // pred_check_branch
        %941 = sbr.rel (%p939) target = $region72
      $region71: #{fcdensenet_forward.12} parent=67 // pred_region
        %p942 = scmp.lt.s32.totalorder %s22, 1
        %s943 = scalar_select %p942, %s22, 1
        %s944 = smul.addr %s943, 6
        %s945 = smul.addr %s944, 8
        %s946 = scalar_lea.vmem %s10, %s945
      $region72: #{fcdensenet_forward.12} parent=67 // pred_fallthru
        _
    $region68: #{fcdensenet_forward.12} parent=5 // pred_fallthru
      _
  $region6: #{fcdensenet_forward.12} parent=0 // loop_footer
    %s20 = sadd.s32 1, %s16
  $region7: #{fcdensenet_forward.12} parent=0 // loop_footer_branch
    %15 = sbr.rel target = $region3
  $region8: #{fcdensenet_forward.12} parent=0 // loop_exit
    _

// kernel: fcdensenet_forward.11
$region0: #{fcdensenet_forward.11}
  #allocation0 [shape = 'u32[]', space=smem, size = 0x4, offset = 0x4, fixed_abs, tag = 'smem constant byte address 0x4 - core index']
  #allocation1 [shape = 'u32[72,128]{1,0:T(1,128)}', space=vmem, size = 0x9000, scoped, tag = 'internal scratch']
  %s0 = inlined_call_operand.vmem [shape: f32[2,3,324], index: 0, kind: input, shape index: {}]
  %s1 = inlined_call_operand.vmem [shape: f32[1,324], index: 1, kind: input, shape index: {}]
  %s2 = inlined_call_operand.vmem [shape: bf16[8,27], index: 2, kind: input, shape index: {}]
  %s3 = inlined_call_operand.vmem [shape: f32[8,1], index: 3, kind: input, shape index: {}]
  %s4 = inlined_call_operand.vmem [shape: f32[2,8,324], index: 4, kind: output, shape index: {}]
  %s5 = sld [smem:[#allocation0]]
  $region49: #{fcdensenet_forward.11} parent=0
    _
  %s7 = ssub.s32 1, %s5
  %s8 = scalar_select 0, %s7, %s5
  loop: start=0, step=1, limit=4
  $region2: #{fcdensenet_forward.11} parent=0 // loop_pre_header
    _
  $region3: #{fcdensenet_forward.11} parent=0 // loop_header
    %s10 = sphi 0, %s14
    %p11 = scmp.ge.s32.totalorder %s10, 4
    %s20 = sphi 0, %s22
    %s23 = sphi 0, %s20
    %s24 = sphi 0, %s23
    %s40 = sphi 0, %s24
    %s44 = sphi 0, %s44
    %s46 = sphi 0, %s44
    %s47 = sphi 0, %s46
    %s61 = sphi 0, %s47
    %s65 = sphi 0, %s65
    %s67 = sphi 0, %s65
    %s68 = sphi 0, %s67
    %s82 = sphi 0, %s68
    %s86 = sphi 0, %s86
    %s88 = sphi 0, %s86
    %s89 = sphi 0, %s88
    %s103 = sphi 0, %s89
    %s109 = sphi 0, %s111
    %s112 = sphi 0, %s109
    %s113 = sphi 0, %s112
    %s129 = sphi 0, %s113
  $region4: #{fcdensenet_forward.11} parent=0 // loop_header_branch
    %13 = sbr.rel (%p11) target = $region8
  $region5: #{fcdensenet_forward.11} parent=0 // loop_body
    %s15 = ssub.s32 %s10, 1
    %s16 = ssub.s32 %s10, 2
    %s17 = sadd.s32 %s10, 1
    %s18 = ssub.s32 %s10, %s17
    %p19 = scmp.eq.s32.totalorder %s18, 0
    %s21 = sadd.s32 %s20, 1
    %s22 = scalar_select %p19, %s20, %s21
    %p25 = pneg %p19
    %p26 = scmp.eq.s32.totalorder %s10, 1
    %p27 = por %p25, %p26
    %p28 = scmp.ne.s32.totalorder %s20, %s23
    %p29 = scmp.eq.s32.totalorder %s10, 0
    %p30 = por %p28, %p29
    %p31 = scmp.ne.s32.totalorder %s20, %s23
    %p32 = scmp.eq.s32.totalorder %s15, 1
    %p33 = por %p31, %p32
    %p34 = scmp.ne.s32.totalorder %s23, %s24
    %p35 = scmp.eq.s32.totalorder %s15, 0
    %p36 = por %p34, %p35
    %p37 = scmp.ne.s32.totalorder %s23, %s24
    %p38 = scmp.eq.s32.totalorder %s16, 1
    %p39 = por %p37, %p38
    %p41 = scmp.ne.s32.totalorder %s24, %s40
    %p42 = scmp.eq.s32.totalorder %s16, 0
    %p43 = por %p41, %p42
    %s45 = sadd.s32 %s44, 1
    %p48 = scmp.eq.s32.totalorder %s10, 1
    %p49 = scmp.ne.s32.totalorder %s44, %s46
    %p50 = scmp.eq.s32.totalorder %s10, 0
    %p51 = por %p49, %p50
    %p52 = scmp.ne.s32.totalorder %s44, %s46
    %p53 = scmp.eq.s32.totalorder %s15, 1
    %p54 = por %p52, %p53
    %p55 = scmp.ne.s32.totalorder %s46, %s47
    %p56 = scmp.eq.s32.totalorder %s15, 0
    %p57 = por %p55, %p56
    %p58 = scmp.ne.s32.totalorder %s46, %s47
    %p59 = scmp.eq.s32.totalorder %s16, 1
    %p60 = por %p58, %p59
    %p62 = scmp.ne.s32.totalorder %s47, %s61
    %p63 = scmp.eq.s32.totalorder %s16, 0
    %p64 = por %p62, %p63
    %s66 = sadd.s32 %s65, 1
    %p69 = scmp.eq.s32.totalorder %s10, 1
    %p70 = scmp.ne.s32.totalorder %s65, %s67
    %p71 = scmp.eq.s32.totalorder %s10, 0
    %p72 = por %p70, %p71
    %p73 = scmp.ne.s32.totalorder %s65, %s67
    %p74 = scmp.eq.s32.totalorder %s15, 1
    %p75 = por %p73, %p74
    %p76 = scmp.ne.s32.totalorder %s67, %s68
    %p77 = scmp.eq.s32.totalorder %s15, 0
    %p78 = por %p76, %p77
    %p79 = scmp.ne.s32.totalorder %s67, %s68
    %p80 = scmp.eq.s32.totalorder %s16, 1
    %p81 = por %p79, %p80
    %p83 = scmp.ne.s32.totalorder %s68, %s82
    %p84 = scmp.eq.s32.totalorder %s16, 0
    %p85 = por %p83, %p84
    %s87 = sadd.s32 %s86, 1
    %p90 = scmp.eq.s32.totalorder %s10, 1
    %p91 = scmp.ne.s32.totalorder %s86, %s88
    %p92 = scmp.eq.s32.totalorder %s10, 0
    %p93 = por %p91, %p92
    %p94 = scmp.ne.s32.totalorder %s86, %s88
    %p95 = scmp.eq.s32.totalorder %s15, 1
    %p96 = por %p94, %p95
    %p97 = scmp.ne.s32.totalorder %s88, %s89
    %p98 = scmp.eq.s32.totalorder %s15, 0
    %p99 = por %p97, %p98
    %p100 = scmp.ne.s32.totalorder %s88, %s89
    %p101 = scmp.eq.s32.totalorder %s16, 1
    %p102 = por %p100, %p101
    %p104 = scmp.ne.s32.totalorder %s89, %s103
    %p105 = scmp.eq.s32.totalorder %s16, 0
    %p106 = por %p104, %p105
    %s107 = ssub.s32 %s10, %s17
    %p108 = scmp.eq.s32.totalorder %s107, 0
    %s110 = sadd.s32 %s109, 1
    %s111 = scalar_select %p108, %s109, %s110
    %p114 = pneg %p108
    %p115 = scmp.eq.s32.totalorder %s10, 1
    %p116 = por %p114, %p115
    %p117 = scmp.ne.s32.totalorder %s109, %s112
    %p118 = scmp.eq.s32.totalorder %s10, 0
    %p119 = por %p117, %p118
    %p120 = scmp.ne.s32.totalorder %s109, %s112
    %p121 = scmp.eq.s32.totalorder %s15, 1
    %p122 = por %p120, %p121
    %p123 = scmp.ne.s32.totalorder %s112, %s113
    %p124 = scmp.eq.s32.totalorder %s15, 0
    %p125 = por %p123, %p124
    %p126 = scmp.ne.s32.totalorder %s112, %s113
    %p127 = scmp.eq.s32.totalorder %s16, 1
    %p128 = por %p126, %p127
    %p130 = scmp.ne.s32.totalorder %s113, %s129
    %p131 = scmp.eq.s32.totalorder %s16, 0
    %p132 = por %p130, %p131
    %p133 = scmp.le.s32.totalorder 1, %s10
    %p134 = scmp.lt.s32.totalorder %s10, 3
    %p135 = pnand %p133, %p134
    %p136 = pneg %p135
    // Predicated region
    $region9: #{fcdensenet_forward.11} parent=5 // pred_check
      _
    $region10: #{fcdensenet_forward.11} parent=5 // pred_check_branch
      %138 = sbr.rel (%p135) target = $region12
    $region11: #{fcdensenet_forward.11} parent=5 // pred_region
      %s139 = ssub.s32 %s10, 1
      // Predicated region
      $region13: #{fcdensenet_forward.11} parent=11 // pred_check
        %p140 = pneg %p57
      $region14: #{fcdensenet_forward.11} parent=11 // pred_check_branch
        %142 = sbr.rel (%p140) target = $region16
      $region15: #{fcdensenet_forward.11} parent=11 // pred_region
        _
      $region16: #{fcdensenet_forward.11} parent=11 // pred_fallthru
        _
      // Predicated region
      $region17: #{fcdensenet_forward.11} parent=11 // pred_check
        %p143 = pneg %p78
      $region18: #{fcdensenet_forward.11} parent=11 // pred_check_branch
        %145 = sbr.rel (%p143) target = $region20
      $region19: #{fcdensenet_forward.11} parent=11 // pred_region
        _
      $region20: #{fcdensenet_forward.11} parent=11 // pred_fallthru
        _
      // Predicated region
      $region21: #{fcdensenet_forward.11} parent=11 // pred_check
        %p146 = pneg %p99
      $region22: #{fcdensenet_forward.11} parent=11 // pred_check_branch
        %148 = sbr.rel (%p146) target = $region24
      $region23: #{fcdensenet_forward.11} parent=11 // pred_region
        _
      $region24: #{fcdensenet_forward.11} parent=11 // pred_fallthru
        _
    $region12: #{fcdensenet_forward.11} parent=5 // pred_fallthru
      _
    %p149 = scmp.lt.s32.totalorder %s10, 2
    // Predicated region
    $region25: #{fcdensenet_forward.11} parent=5 // pred_check
      %p150 = pneg %p149
    $region26: #{fcdensenet_forward.11} parent=5 // pred_check_branch
      %152 = sbr.rel (%p150) target = $region28
    $region27: #{fcdensenet_forward.11} parent=5 // pred_region
      // Predicated region
      $region29: #{fcdensenet_forward.11} parent=27 // pred_check
        %p153 = pneg %p30
      $region30: #{fcdensenet_forward.11} parent=27 // pred_check_branch
        %155 = sbr.rel (%p153) target = $region32
      $region31: #{fcdensenet_forward.11} parent=27 // pred_region
        %p156 = scmp.lt.s32.totalorder %s10, 1
        %s157 = scalar_select %p156, %s10, 1
        %s158 = smul.addr %s157, 3
        %s159 = smul.addr %s158, 4
        %s160 = scalar_lea.vmem %s0, %s159
      $region32: #{fcdensenet_forward.11} parent=27 // pred_fallthru
        _
    $region28: #{fcdensenet_forward.11} parent=5 // pred_fallthru
      _
    %p161 = scmp.le.s32.totalorder 1, %s10
    %p162 = scmp.lt.s32.totalorder %s10, 3
    %p163 = pnand %p161, %p162
    %p164 = pneg %p163
    // Predicated region
    $region33: #{fcdensenet_forward.11} parent=5 // pred_check
      _
    $region34: #{fcdensenet_forward.11} parent=5 // pred_check_branch
      %166 = sbr.rel (%p163) target = $region36
    $region35: #{fcdensenet_forward.11} parent=5 // pred_region
      %s167 = ssub.s32 %s10, 1
      %p168 = scmp.lt.s32.totalorder %s15, 1
      %s169 = scalar_select %p168, %s15, 1
      %s170 = smul.addr %s169, 3
      %s171 = smul.addr %s170, 4
      %s172 = scalar_lea.vmem %s0, %s171
      %p173 = pneg %p36
      %p174 = pneg %p33
      %p175 = pneg %p57
      %p176 = pneg %p54
      %p177 = pneg %p78
      %p178 = pneg %p75
      %p179 = pneg %p99
      %p180 = pneg %p96
      %p181 = pneg %p125
      %p182 = pneg %p122
      %p183 = scmp.lt.s32.totalorder %s15, 1
      %s184 = scalar_select %p183, %s15, 1
      %s185 = smul.addr %s184, 3
      %s186 = smul.addr %s185, 8
      %s187 = scalar_lea.vmem %s4, %s186
      %p188 = scmp.lt.s32.totalorder %s15, 1
      %s189 = scalar_select %p188, %s15, 1
      %s190 = smul.addr %s189, 3
      %s191 = smul.addr %s190, 4
      %s192 = scalar_lea.vmem %s0, %s191
      %p193 = scmp.lt.s32.totalorder %s15, 1
      %s194 = scalar_select %p193, %s15, 1
      %s195 = smul.addr %s194, 3
      %s196 = smul.addr %s195, 8
      %s197 = scalar_lea.vmem %s4, %s196
      %v199 = vld [vmem:[%s1] sm:$0x7]
      %vm200 = vcmp.gt.f32.partialorder %v199, 0.5
      %v201 = vld [vmem:[%s192] sm:$0x77]
      %v202 = vld [vmem:[%s192 + $0x8] sm:$0x7]
      %v203 = vsel %vm200, 1, 0
      %v204 = vperm.slane %v203, 0
      %v205 = vperm.slane %v203, 1
      %v206 = vperm.slane %v203, 2
      %vm207 = vcmp.eq.s32.totalorder %v204, 1
      %vm208 = vcmp.eq.s32.totalorder %v205, 1
      %vm209 = vcmp.eq.s32.totalorder %v206, 1
      %212 = vst [vmem:[#allocation1] ss:$2 sm:$0xff] %v201
      %s213 = scalar_lea.vmem [#allocation1], 16
      %214 = vst [vmem:[%s213] ss:$2 sm:$0xff] %v202
      %v215 = vld.sshfl [vmem:[#allocation1] sm:$0xff pattern:$0x75316420]
      %v216 = vld.sshfl [vmem:[#allocation1 + $0x8] sm:$0xff pattern:$0x75316420]
      %v217 = vld.sshfl [vmem:[#allocation1 + $0x10] sm:$0xff pattern:$0x75316420]
      %v221 = vsel %vm207, %v215, 0.0
      %v222 = vsel %vm208, %v216, 0.0
      %v223 = vsel %vm209, %v217, 0.0
      %v224 = vpack.c.bf16 %v222, %v221
      %v225 = vpack.c.bf16 %v223, %v223
      %v228 = vunpack.c.l.b16 %v224
      %v229 = vunpack.c.h.b16 %v224
      %v230 = vunpack.c.l.b16 %v225
      %v231 = vpack.c.b16 %v228, %v228
      %v232 = vpack.c.b16 %v229, %v229
      %v233 = vpack.c.b16 %v230, %v230
      %v238 = vshrl.u32 %v231, 16
      %v240 = vrot.slane %v238, 6
      %v241 = vshll.u32 %v231, 16
      %v243 = vrot.slane %v241, 7
      %v244 = vor.u32 %v240, %v243
      %v246 = vshrl.u32 %v232, 16
      %v248 = vrot.slane %v246, 6
      %v249 = vshll.u32 %v232, 16
      %v251 = vrot.slane %v249, 7
      %v252 = vor.u32 %v248, %v251
      %v254 = vshrl.u32 %v233, 16
      %v256 = vrot.slane %v254, 6
      %v257 = vshll.u32 %v233, 16
      %v259 = vrot.slane %v257, 7
      %v260 = vor.u32 %v256, %v259
      %261 = vrot.lane.b32.xlu0 %v244, 127
      %v262 = vpop.permute.xlu0 %261
      %263 = vrot.lane.b32.xlu0 %v252, 127
      %v264 = vpop.permute.xlu0 %263
      %265 = vrot.lane.b32.xlu0 %v260, 127
      %v266 = vpop.permute.xlu0 %265
      %vm267 = vcmask 1039360
      %v268 = vsel %vm267, %v262, %v264
      %v269 = vsel %vm267, %v264, %v266
      %v273 = vrot.slane %v231, 5
      %v274 = vrot.slane %v232, 5
      %v275 = vrot.slane %v233, 5
      %276 = vrot.lane.b32.xlu0 %v273, 126
      %v277 = vpop.permute.xlu0 %276
      %278 = vrot.lane.b32.xlu0 %v274, 126
      %v279 = vpop.permute.xlu0 %278
      %280 = vrot.lane.b32.xlu0 %v275, 126
      %v281 = vpop.permute.xlu0 %280
      %vm282 = vcmask 1031168
      %v283 = vsel %vm282, %v277, %v279
      %v284 = vsel %vm282, %v279, %v281
      %v285 = vrot.slane %v238, 3
      %v286 = vrot.slane %v241, 4
      %v287 = vor.u32 %v285, %v286
      %v288 = vrot.slane %v246, 3
      %v289 = vrot.slane %v249, 4
      %v290 = vor.u32 %v288, %v289
      %v291 = vrot.slane %v254, 3
      %v292 = vrot.slane %v257, 4
      %v293 = vor.u32 %v291, %v292
      %294 = vrot.lane.b32.xlu0 %v287, 110
      %v295 = vpop.permute.xlu0 %294
      %296 = vrot.lane.b32.xlu0 %v290, 110
      %v297 = vpop.permute.xlu0 %296
      %298 = vrot.lane.b32.xlu0 %v293, 110
      %v299 = vpop.permute.xlu0 %298
      %vm300 = vcmask 900096
      %v301 = vsel %vm300, %v295, %v297
      %v302 = vsel %vm300, %v297, %v299
      %v306 = vrot.slane %v231, 2
      %v307 = vrot.slane %v232, 2
      %v308 = vrot.slane %v233, 2
      %309 = vrot.lane.b32.xlu0 %v306, 109
      %v310 = vpop.permute.xlu0 %309
      %311 = vrot.lane.b32.xlu0 %v307, 109
      %v312 = vpop.permute.xlu0 %311
      %313 = vrot.lane.b32.xlu0 %v308, 109
      %v314 = vpop.permute.xlu0 %313
      %vm315 = vcmask 891904
      %v316 = vsel %vm315, %v310, %v312
      %v317 = vsel %vm315, %v312, %v314
      %v318 = vrot.slane %v241, 1
      %v319 = vrot.slane %v249, 1
      %v320 = vrot.slane %v257, 1
      %v321 = vor.u32 %v238, %v318
      %v322 = vor.u32 %v246, %v319
      %v323 = vor.u32 %v254, %v320
      %324 = vrot.lane.b32.xlu0 %v318, 108
      %v325 = vpop.permute.xlu0 %324
      %326 = vrot.lane.b32.xlu0 %v319, 108
      %v327 = vpop.permute.xlu0 %326
      %328 = vrot.lane.b32.xlu0 %v320, 108
      %v329 = vpop.permute.xlu0 %328
      %330 = vrot.lane.b32.xlu0 %v321, 108
      %v331 = vpop.permute.xlu0 %330
      %332 = vrot.lane.b32.xlu0 %v322, 108
      %v333 = vpop.permute.xlu0 %332
      %334 = vrot.lane.b32.xlu0 %v323, 108
      %v335 = vpop.permute.xlu0 %334
      %vm336 = vcmask 883712
      %v337 = vsel %vm336, %v325, %v327
      %v338 = vsel %vm336, %v327, %v329
      %v339 = vsel %vm336, %v331, %v333
      %v340 = vsel %vm336, %v333, %v335
      %v344 = vrot.slane %v231, 7
      %v345 = vrot.slane %v232, 7
      %v346 = vrot.slane %v233, 7
      %347 = vrot.lane.b32.xlu0 %v344, 92
      %v348 = vpop.permute.xlu0 %347
      %349 = vrot.lane.b32.xlu0 %v345, 92
      %v350 = vpop.permute.xlu0 %349
      %351 = vrot.lane.b32.xlu0 %v346, 92
      %v352 = vpop.permute.xlu0 %351
      %vm353 = vcmask 752640
      %v354 = vsel %vm353, %v348, %v350
      %v355 = vsel %vm353, %v350, %v352
      %v356 = vrot.slane %v238, 5
      %v357 = vrot.slane %v241, 6
      %v358 = vor.u32 %v356, %v357
      %v359 = vrot.slane %v246, 5
      %v360 = vrot.slane %v249, 6
      %v361 = vor.u32 %v359, %v360
      %v362 = vrot.slane %v254, 5
      %v363 = vrot.slane %v257, 6
      %v364 = vor.u32 %v362, %v363
      %365 = vrot.lane.b32.xlu0 %v358, 91
      %v366 = vpop.permute.xlu0 %365
      %367 = vrot.lane.b32.xlu0 %v361, 91
      %v368 = vpop.permute.xlu0 %367
      %369 = vrot.lane.b32.xlu0 %v364, 91
      %v370 = vpop.permute.xlu0 %369
      %vm371 = vcmask 744448
      %v372 = vsel %vm371, %v366, %v368
      %v373 = vsel %vm371, %v368, %v370
      %377 = vrot.lane.b32.xlu0 %v231, 90
      %v378 = vpop.permute.xlu0 %377
      %379 = vrot.lane.b32.xlu0 %v232, 90
      %v380 = vpop.permute.xlu0 %379
      %381 = vrot.lane.b32.xlu0 %v233, 90
      %v382 = vpop.permute.xlu0 %381
      %vm383 = vcmask 736256
      %v384 = vsel %vm383, %v378, %v380
      %v385 = vsel %vm383, %v380, %v382
      %vm386 = vcmask 1041408
      %vm387 = vsmask.f32 1280
      %vm388 = vmand %vm386, %vm387
      %v389 = vsel %vm388, %v231, %v268
      %v390 = vsel %vm388, %v232, %v269
      %v391 = vsel %vm388, %v233, %v266
      %vm392 = vcmask 1042432
      %v395 = vsel %vm392, %v389, %v283
      %v399 = vsel %vm392, %v390, %v284
      %v403 = vsel %vm392, %v391, %v281
      %vm405 = vcmask 1044480
      %vm406 = vsmask.f32 4352
      %vm407 = vmand %vm405, %vm406
      %v408 = vsel %vm407, %v395, %v301
      %v409 = vsel %vm407, %v399, %v302
      %v410 = vsel %vm407, %v403, %v299
      %vm411 = vcmask 1045504
      %v414 = vsel %vm411, %v408, %v316
      %v418 = vsel %vm411, %v409, %v317
      %v422 = vsel %vm411, %v410, %v314
      %vm424 = vcmask 1047552
      %vm425 = vsmask.f32 7424
      %vm426 = vmand %vm424, %vm425
      %v427 = vsel %vm426, %v414, %v337
      %v428 = vsel %vm426, %v418, %v338
      %v429 = vsel %vm426, %v422, %v329
      %vm430 = vcmask 1040384
      %v433 = vsel %vm430, %v339, %v354
      %v437 = vsel %vm430, %v340, %v355
      %v441 = vsel %vm430, %v335, %v352
      %vm443 = vcmask 1042432
      %vm444 = vsmask.f32 2304
      %vm445 = vmand %vm443, %vm444
      %v446 = vsel %vm445, %v433, %v372
      %v447 = vsel %vm445, %v437, %v373
      %v448 = vsel %vm445, %v441, %v370
      %vm449 = vcmask 1043456
      %v452 = vsel %vm449, %v446, %v384
      %v455 = vsel %vm449, %v447, %v385
      %v458 = vsel %vm449, %v448, %v382
      %v459 = vld [vmem:[%s2] sm:$0xf]
      %v460 = vld [vmem:[%s3] sm:$0xff]
      %462 = vset.pattern.permute.xlu0 0
      %463 = vperm.xlu0 %462, %v460
      %v464 = vpop.permute.xlu0 %463
      %vm466 = vcmask 220160
      %v468 = vsel %vm466, %v459, 0
      %vm470 = vcmask 1044480
      %v471 = vsel %vm470, 4294967295, 65535
      %v472 = vsel %vm411, %v471, 0
      %v473 = vand.u32 %v452, %v472
      %v475 = vand.u32 %v455, %v472
      %v477 = vand.u32 %v458, %v472
      %479 = vmatpush.bf16.msra.mxu0 0
      %480 = vmatpush.bf16.msra.mxu0 0
      %481 = vmatpush.bf16.msra.mxu0 0
      %482 = vmatpush.bf16.msra.mxu0 0
      %483 = vmatpush.bf16.msra.mxu0 0
      %484 = vmatpush.bf16.msra.mxu0 0
      %485 = vmatpush.bf16.msra.mxu0 %v473
      %486 = vmatpush.bf16.msra.mxu0 %v427
      %487 = vmatmul.bf16.gmra.mxu0 %v468
      %v488 = vpop.f32.mrf.mxu0
      %v489 = vadd.f32 %v464, %v488
      %v490 = vpop.f32.mrf.mxu0
      %491 = vdwg.mxu0
      %492 = vmatpush.bf16.msra.mxu0 0
      %493 = vmatpush.bf16.msra.mxu0 0
      %494 = vmatpush.bf16.msra.mxu0 0
      %495 = vmatpush.bf16.msra.mxu0 0
      %496 = vmatpush.bf16.msra.mxu0 0
      %497 = vmatpush.bf16.msra.mxu0 0
      %498 = vmatpush.bf16.msra.mxu0 %v475
      %499 = vmatpush.bf16.msra.mxu0 %v428
      %500 = vmatmul.bf16.gmra.mxu0 %v468
      %v501 = vpop.f32.mrf.mxu0
      %v502 = vadd.f32 %v464, %v501
      %v503 = vpop.f32.mrf.mxu0
      %504 = vdwg.mxu0
      %505 = vmatpush.bf16.msra.mxu0 0
      %506 = vmatpush.bf16.msra.mxu0 0
      %507 = vmatpush.bf16.msra.mxu0 0
      %508 = vmatpush.bf16.msra.mxu0 0
      %509 = vmatpush.bf16.msra.mxu0 0
      %510 = vmatpush.bf16.msra.mxu0 0
      %511 = vmatpush.bf16.msra.mxu0 %v477
      %512 = vmatpush.bf16.msra.mxu0 %v429
      %513 = vmatmul.bf16.gmra.mxu0 %v468
      %v514 = vpop.f32.mrf.mxu0
      %v515 = vadd.f32 %v464, %v514
      %v516 = vpop.f32.mrf.mxu0
      %517 = vdwg.mxu0
      %521 = vrot.lane.b32.xlu0 %v489, 19
      %v522 = vpop.permute.xlu0 %521
      %523 = vrot.lane.b32.xlu0 %v502, 19
      %v524 = vpop.permute.xlu0 %523
      %525 = vrot.lane.b32.xlu0 %v515, 19
      %v526 = vpop.permute.xlu0 %525
      %vm527 = vcmask 154624
      %v528 = vsel %vm527, %v522, %v524
      %v529 = vsel %vm527, %v524, %v526
      %vm533 = vcmask 1047704
      %534 = vst.msk [vmem:[%s197] sm:$0xff] %vm533, %v522
      %535 = vst [vmem:[%s197 + $0x8] sm:$0xff] %v528
      %vm536 = vcmask 400384
      %537 = vst.msk [vmem:[%s197 + $0x10] sm:$0xff] %vm536, %v529
      %p538 = scmp.lt.s32.totalorder %s15, 1
      %s539 = scalar_select %p538, %s15, 1
      %s540 = smul.addr %s539, 3
      %s541 = smul.addr %s540, 8
      %s542 = scalar_lea.vmem %s4, %s541
      // Predicated region
      $region37: #{fcdensenet_forward.11} parent=35 // pred_check
        %p543 = pneg %p122
      $region38: #{fcdensenet_forward.11} parent=35 // pred_check_branch
        %545 = sbr.rel (%p543) target = $region40
      $region39: #{fcdensenet_forward.11} parent=35 // pred_region
        _
      $region40: #{fcdensenet_forward.11} parent=35 // pred_fallthru
        _
    $region36: #{fcdensenet_forward.11} parent=5 // pred_fallthru
      _
    %p546 = scmp.le.s32.totalorder 2, %s10
    // Predicated region
    $region41: #{fcdensenet_forward.11} parent=5 // pred_check
      %p547 = pneg %p546
    $region42: #{fcdensenet_forward.11} parent=5 // pred_check_branch
      %549 = sbr.rel (%p547) target = $region44
    $region43: #{fcdensenet_forward.11} parent=5 // pred_region
      %s550 = ssub.s32 %s10, 2
      // Predicated region
      $region45: #{fcdensenet_forward.11} parent=43 // pred_check
        %p551 = pneg %p128
      $region46: #{fcdensenet_forward.11} parent=43 // pred_check_branch
        %553 = sbr.rel (%p551) target = $region48
      $region47: #{fcdensenet_forward.11} parent=43 // pred_region
        %p554 = scmp.lt.s32.totalorder %s16, 1
        %s555 = scalar_select %p554, %s16, 1
        %s556 = smul.addr %s555, 3
        %s557 = smul.addr %s556, 8
        %s558 = scalar_lea.vmem %s4, %s557
      $region48: #{fcdensenet_forward.11} parent=43 // pred_fallthru
        _
    $region44: #{fcdensenet_forward.11} parent=5 // pred_fallthru
      _
  $region6: #{fcdensenet_forward.11} parent=0 // loop_footer
    %s14 = sadd.s32 1, %s10
  $region7: #{fcdensenet_forward.11} parent=0 // loop_footer_branch
    %9 = sbr.rel target = $region3
  $region8: #{fcdensenet_forward.11} parent=0 // loop_exit
    _

// kernel: fcdensenet_forward.13
$region0: #{fcdensenet_forward.13}
  #allocation0 [shape = 'u32[]', space=smem, size = 0x4, offset = 0x4, fixed_abs, tag = 'smem constant byte address 0x4 - core index']
  #allocation1 [shape = 'u32[72,128]{1,0:T(1,128)}', space=vmem, size = 0x9000, scoped, tag = 'internal scratch']
  %s0 = inlined_call_operand.vmem [shape: f32[2,16,324], index: 0, kind: input, shape index: {}]
  %s1 = inlined_call_operand.vmem [shape: f32[1,324], index: 1, kind: input, shape index: {}]
  %s2 = inlined_call_operand.vmem [shape: f32[16,1], index: 2, kind: input, shape index: {}]
  %s3 = inlined_call_operand.vmem [shape: f32[16,1], index: 3, kind: input, shape index: {}]
  %s4 = inlined_call_operand.vmem [shape: bf16[16,16], index: 4, kind: input, shape index: {}]
  %s5 = inlined_call_operand.vmem [shape: f32[16,1], index: 5, kind: input, shape index: {}]
  %s6 = inlined_call_operand.vmem [shape: f32[305,100], index: 6, kind: input, shape index: {}]
  %s7 = inlined_call_operand.vmem [shape: f32[2,16,100], index: 7, kind: output, shape index: {}]
  %s8 = sld [smem:[#allocation0]]
  $region61: #{fcdensenet_forward.13} parent=0
    _
  %s10 = ssub.s32 1, %s8
  %s11 = scalar_select 0, %s10, %s8
  loop: start=0, step=1, limit=4
  $region2: #{fcdensenet_forward.13} parent=0 // loop_pre_header
    _
  $region3: #{fcdensenet_forward.13} parent=0 // loop_header
    %s13 = sphi 0, %s17
    %p14 = scmp.ge.s32.totalorder %s13, 4
    %s23 = sphi 0, %s25
    %s26 = sphi 0, %s23
    %s27 = sphi 0, %s26
    %s43 = sphi 0, %s27
    %s47 = sphi 0, %s47
    %s49 = sphi 0, %s47
    %s50 = sphi 0, %s49
    %s64 = sphi 0, %s50
    %s68 = sphi 0, %s68
    %s70 = sphi 0, %s68
    %s71 = sphi 0, %s70
    %s85 = sphi 0, %s71
    %s89 = sphi 0, %s89
    %s91 = sphi 0, %s89
    %s92 = sphi 0, %s91
    %s106 = sphi 0, %s92
    %s110 = sphi 0, %s110
    %s112 = sphi 0, %s110
    %s113 = sphi 0, %s112
    %s127 = sphi 0, %s113
    %s131 = sphi 0, %s131
    %s133 = sphi 0, %s131
    %s134 = sphi 0, %s133
    %s148 = sphi 0, %s134
    %s152 = sphi 0, %s152
    %s154 = sphi 0, %s152
    %s155 = sphi 0, %s154
    %s169 = sphi 0, %s155
    %s175 = sphi 0, %s177
    %s178 = sphi 0, %s175
    %s179 = sphi 0, %s178
    %s195 = sphi 0, %s179
  $region4: #{fcdensenet_forward.13} parent=0 // loop_header_branch
    %16 = sbr.rel (%p14) target = $region8
  $region5: #{fcdensenet_forward.13} parent=0 // loop_body
    %s18 = ssub.s32 %s13, 1
    %s19 = ssub.s32 %s13, 2
    %s20 = sadd.s32 %s13, 1
    %s21 = ssub.s32 %s13, %s20
    %p22 = scmp.eq.s32.totalorder %s21, 0
    %s24 = sadd.s32 %s23, 1
    %s25 = scalar_select %p22, %s23, %s24
    %p28 = pneg %p22
    %p29 = scmp.eq.s32.totalorder %s13, 1
    %p30 = por %p28, %p29
    %p31 = scmp.ne.s32.totalorder %s23, %s26
    %p32 = scmp.eq.s32.totalorder %s13, 0
    %p33 = por %p31, %p32
    %p34 = scmp.ne.s32.totalorder %s23, %s26
    %p35 = scmp.eq.s32.totalorder %s18, 1
    %p36 = por %p34, %p35
    %p37 = scmp.ne.s32.totalorder %s26, %s27
    %p38 = scmp.eq.s32.totalorder %s18, 0
    %p39 = por %p37, %p38
    %p40 = scmp.ne.s32.totalorder %s26, %s27
    %p41 = scmp.eq.s32.totalorder %s19, 1
    %p42 = por %p40, %p41
    %p44 = scmp.ne.s32.totalorder %s27, %s43
    %p45 = scmp.eq.s32.totalorder %s19, 0
    %p46 = por %p44, %p45
    %s48 = sadd.s32 %s47, 1
    %p51 = scmp.eq.s32.totalorder %s13, 1
    %p52 = scmp.ne.s32.totalorder %s47, %s49
    %p53 = scmp.eq.s32.totalorder %s13, 0
    %p54 = por %p52, %p53
    %p55 = scmp.ne.s32.totalorder %s47, %s49
    %p56 = scmp.eq.s32.totalorder %s18, 1
    %p57 = por %p55, %p56
    %p58 = scmp.ne.s32.totalorder %s49, %s50
    %p59 = scmp.eq.s32.totalorder %s18, 0
    %p60 = por %p58, %p59
    %p61 = scmp.ne.s32.totalorder %s49, %s50
    %p62 = scmp.eq.s32.totalorder %s19, 1
    %p63 = por %p61, %p62
    %p65 = scmp.ne.s32.totalorder %s50, %s64
    %p66 = scmp.eq.s32.totalorder %s19, 0
    %p67 = por %p65, %p66
    %s69 = sadd.s32 %s68, 1
    %p72 = scmp.eq.s32.totalorder %s13, 1
    %p73 = scmp.ne.s32.totalorder %s68, %s70
    %p74 = scmp.eq.s32.totalorder %s13, 0
    %p75 = por %p73, %p74
    %p76 = scmp.ne.s32.totalorder %s68, %s70
    %p77 = scmp.eq.s32.totalorder %s18, 1
    %p78 = por %p76, %p77
    %p79 = scmp.ne.s32.totalorder %s70, %s71
    %p80 = scmp.eq.s32.totalorder %s18, 0
    %p81 = por %p79, %p80
    %p82 = scmp.ne.s32.totalorder %s70, %s71
    %p83 = scmp.eq.s32.totalorder %s19, 1
    %p84 = por %p82, %p83
    %p86 = scmp.ne.s32.totalorder %s71, %s85
    %p87 = scmp.eq.s32.totalorder %s19, 0
    %p88 = por %p86, %p87
    %s90 = sadd.s32 %s89, 1
    %p93 = scmp.eq.s32.totalorder %s13, 1
    %p94 = scmp.ne.s32.totalorder %s89, %s91
    %p95 = scmp.eq.s32.totalorder %s13, 0
    %p96 = por %p94, %p95
    %p97 = scmp.ne.s32.totalorder %s89, %s91
    %p98 = scmp.eq.s32.totalorder %s18, 1
    %p99 = por %p97, %p98
    %p100 = scmp.ne.s32.totalorder %s91, %s92
    %p101 = scmp.eq.s32.totalorder %s18, 0
    %p102 = por %p100, %p101
    %p103 = scmp.ne.s32.totalorder %s91, %s92
    %p104 = scmp.eq.s32.totalorder %s19, 1
    %p105 = por %p103, %p104
    %p107 = scmp.ne.s32.totalorder %s92, %s106
    %p108 = scmp.eq.s32.totalorder %s19, 0
    %p109 = por %p107, %p108
    %s111 = sadd.s32 %s110, 1
    %p114 = scmp.eq.s32.totalorder %s13, 1
    %p115 = scmp.ne.s32.totalorder %s110, %s112
    %p116 = scmp.eq.s32.totalorder %s13, 0
    %p117 = por %p115, %p116
    %p118 = scmp.ne.s32.totalorder %s110, %s112
    %p119 = scmp.eq.s32.totalorder %s18, 1
    %p120 = por %p118, %p119
    %p121 = scmp.ne.s32.totalorder %s112, %s113
    %p122 = scmp.eq.s32.totalorder %s18, 0
    %p123 = por %p121, %p122
    %p124 = scmp.ne.s32.totalorder %s112, %s113
    %p125 = scmp.eq.s32.totalorder %s19, 1
    %p126 = por %p124, %p125
    %p128 = scmp.ne.s32.totalorder %s113, %s127
    %p129 = scmp.eq.s32.totalorder %s19, 0
    %p130 = por %p128, %p129
    %s132 = sadd.s32 %s131, 1
    %p135 = scmp.eq.s32.totalorder %s13, 1
    %p136 = scmp.ne.s32.totalorder %s131, %s133
    %p137 = scmp.eq.s32.totalorder %s13, 0
    %p138 = por %p136, %p137
    %p139 = scmp.ne.s32.totalorder %s131, %s133
    %p140 = scmp.eq.s32.totalorder %s18, 1
    %p141 = por %p139, %p140
    %p142 = scmp.ne.s32.totalorder %s133, %s134
    %p143 = scmp.eq.s32.totalorder %s18, 0
    %p144 = por %p142, %p143
    %p145 = scmp.ne.s32.totalorder %s133, %s134
    %p146 = scmp.eq.s32.totalorder %s19, 1
    %p147 = por %p145, %p146
    %p149 = scmp.ne.s32.totalorder %s134, %s148
    %p150 = scmp.eq.s32.totalorder %s19, 0
    %p151 = por %p149, %p150
    %s153 = sadd.s32 %s152, 1
    %p156 = scmp.eq.s32.totalorder %s13, 1
    %p157 = scmp.ne.s32.totalorder %s152, %s154
    %p158 = scmp.eq.s32.totalorder %s13, 0
    %p159 = por %p157, %p158
    %p160 = scmp.ne.s32.totalorder %s152, %s154
    %p161 = scmp.eq.s32.totalorder %s18, 1
    %p162 = por %p160, %p161
    %p163 = scmp.ne.s32.totalorder %s154, %s155
    %p164 = scmp.eq.s32.totalorder %s18, 0
    %p165 = por %p163, %p164
    %p166 = scmp.ne.s32.totalorder %s154, %s155
    %p167 = scmp.eq.s32.totalorder %s19, 1
    %p168 = por %p166, %p167
    %p170 = scmp.ne.s32.totalorder %s155, %s169
    %p171 = scmp.eq.s32.totalorder %s19, 0
    %p172 = por %p170, %p171
    %s173 = ssub.s32 %s13, %s20
    %p174 = scmp.eq.s32.totalorder %s173, 0
    %s176 = sadd.s32 %s175, 1
    %s177 = scalar_select %p174, %s175, %s176
    %p180 = pneg %p174
    %p181 = scmp.eq.s32.totalorder %s13, 1
    %p182 = por %p180, %p181
    %p183 = scmp.ne.s32.totalorder %s175, %s178
    %p184 = scmp.eq.s32.totalorder %s13, 0
    %p185 = por %p183, %p184
    %p186 = scmp.ne.s32.totalorder %s175, %s178
    %p187 = scmp.eq.s32.totalorder %s18, 1
    %p188 = por %p186, %p187
    %p189 = scmp.ne.s32.totalorder %s178, %s179
    %p190 = scmp.eq.s32.totalorder %s18, 0
    %p191 = por %p189, %p190
    %p192 = scmp.ne.s32.totalorder %s178, %s179
    %p193 = scmp.eq.s32.totalorder %s19, 1
    %p194 = por %p192, %p193
    %p196 = scmp.ne.s32.totalorder %s179, %s195
    %p197 = scmp.eq.s32.totalorder %s19, 0
    %p198 = por %p196, %p197
    %p199 = scmp.le.s32.totalorder 1, %s13
    %p200 = scmp.lt.s32.totalorder %s13, 3
    %p201 = pnand %p199, %p200
    %p202 = pneg %p201
    // Predicated region
    $region9: #{fcdensenet_forward.13} parent=5 // pred_check
      _
    $region10: #{fcdensenet_forward.13} parent=5 // pred_check_branch
      %204 = sbr.rel (%p201) target = $region12
    $region11: #{fcdensenet_forward.13} parent=5 // pred_region
      %s205 = ssub.s32 %s13, 1
      // Predicated region
      $region13: #{fcdensenet_forward.13} parent=11 // pred_check
        %p206 = pneg %p60
      $region14: #{fcdensenet_forward.13} parent=11 // pred_check_branch
        %208 = sbr.rel (%p206) target = $region16
      $region15: #{fcdensenet_forward.13} parent=11 // pred_region
        _
      $region16: #{fcdensenet_forward.13} parent=11 // pred_fallthru
        _
      // Predicated region
      $region17: #{fcdensenet_forward.13} parent=11 // pred_check
        %p209 = pneg %p81
      $region18: #{fcdensenet_forward.13} parent=11 // pred_check_branch
        %211 = sbr.rel (%p209) target = $region20
      $region19: #{fcdensenet_forward.13} parent=11 // pred_region
        _
      $region20: #{fcdensenet_forward.13} parent=11 // pred_fallthru
        _
      // Predicated region
      $region21: #{fcdensenet_forward.13} parent=11 // pred_check
        %p212 = pneg %p102
      $region22: #{fcdensenet_forward.13} parent=11 // pred_check_branch
        %214 = sbr.rel (%p212) target = $region24
      $region23: #{fcdensenet_forward.13} parent=11 // pred_region
        _
      $region24: #{fcdensenet_forward.13} parent=11 // pred_fallthru
        _
      // Predicated region
      $region25: #{fcdensenet_forward.13} parent=11 // pred_check
        %p215 = pneg %p123
      $region26: #{fcdensenet_forward.13} parent=11 // pred_check_branch
        %217 = sbr.rel (%p215) target = $region28
      $region27: #{fcdensenet_forward.13} parent=11 // pred_region
        _
      $region28: #{fcdensenet_forward.13} parent=11 // pred_fallthru
        _
      // Predicated region
      $region29: #{fcdensenet_forward.13} parent=11 // pred_check
        %p218 = pneg %p144
      $region30: #{fcdensenet_forward.13} parent=11 // pred_check_branch
        %220 = sbr.rel (%p218) target = $region32
      $region31: #{fcdensenet_forward.13} parent=11 // pred_region
        _
      $region32: #{fcdensenet_forward.13} parent=11 // pred_fallthru
        _
      // Predicated region
      $region33: #{fcdensenet_forward.13} parent=11 // pred_check
        %p221 = pneg %p165
      $region34: #{fcdensenet_forward.13} parent=11 // pred_check_branch
        %223 = sbr.rel (%p221) target = $region36
      $region35: #{fcdensenet_forward.13} parent=11 // pred_region
        _
      $region36: #{fcdensenet_forward.13} parent=11 // pred_fallthru
        _
    $region12: #{fcdensenet_forward.13} parent=5 // pred_fallthru
      _
    %p224 = scmp.lt.s32.totalorder %s13, 2
    // Predicated region
    $region37: #{fcdensenet_forward.13} parent=5 // pred_check
      %p225 = pneg %p224
    $region38: #{fcdensenet_forward.13} parent=5 // pred_check_branch
      %227 = sbr.rel (%p225) target = $region40
    $region39: #{fcdensenet_forward.13} parent=5 // pred_region
      // Predicated region
      $region41: #{fcdensenet_forward.13} parent=39 // pred_check
        %p228 = pneg %p33
      $region42: #{fcdensenet_forward.13} parent=39 // pred_check_branch
        %230 = sbr.rel (%p228) target = $region44
      $region43: #{fcdensenet_forward.13} parent=39 // pred_region
        %p231 = scmp.lt.s32.totalorder %s13, 1
        %s232 = scalar_select %p231, %s13, 1
        %s233 = smul.addr %s232, 6
        %s234 = smul.addr %s233, 8
        %s235 = scalar_lea.vmem %s0, %s234
      $region44: #{fcdensenet_forward.13} parent=39 // pred_fallthru
        _
    $region40: #{fcdensenet_forward.13} parent=5 // pred_fallthru
      _
    %p236 = scmp.le.s32.totalorder 1, %s13
    %p237 = scmp.lt.s32.totalorder %s13, 3
    %p238 = pnand %p236, %p237
    %p239 = pneg %p238
    // Predicated region
    $region45: #{fcdensenet_forward.13} parent=5 // pred_check
      _
    $region46: #{fcdensenet_forward.13} parent=5 // pred_check_branch
      %241 = sbr.rel (%p238) target = $region48
    $region47: #{fcdensenet_forward.13} parent=5 // pred_region
      %s242 = ssub.s32 %s13, 1
      %p243 = scmp.lt.s32.totalorder %s18, 1
      %s244 = scalar_select %p243, %s18, 1
      %s245 = smul.addr %s244, 6
      %s246 = smul.addr %s245, 8
      %s247 = scalar_lea.vmem %s0, %s246
      %p248 = pneg %p39
      %p249 = pneg %p36
      %p250 = pneg %p60
      %p251 = pneg %p57
      %p252 = pneg %p81
      %p253 = pneg %p78
      %p254 = pneg %p102
      %p255 = pneg %p99
      %p256 = pneg %p123
      %p257 = pneg %p120
      %p258 = pneg %p144
      %p259 = pneg %p141
      %p260 = pneg %p165
      %p261 = pneg %p162
      %p262 = pneg %p191
      %p263 = pneg %p188
      %p264 = scmp.lt.s32.totalorder %s18, 1
      %s265 = scalar_select %p264, %s18, 1
      %s266 = smul.addr %s265, 2
      %s267 = smul.addr %s266, 8
      %s268 = scalar_lea.vmem %s7, %s267
      %p269 = scmp.lt.s32.totalorder %s18, 1
      %s270 = scalar_select %p269, %s18, 1
      %s271 = smul.addr %s270, 6
      %s272 = smul.addr %s271, 8
      %s273 = scalar_lea.vmem %s0, %s272
      %p274 = scmp.lt.s32.totalorder %s18, 1
      %s275 = scalar_select %p274, %s18, 1
      %s276 = smul.addr %s275, 2
      %s277 = smul.addr %s276, 8
      %s278 = scalar_lea.vmem %s7, %s277
      %v280 = vld [vmem:[%s1] sm:$0x7]
      %vm281 = vcmp.gt.f32.partialorder %v280, 0.5
      %v282 = vld [vmem:[%s273] sm:$0xff]
      %v283 = vld [vmem:[%s273 + $0x8] sm:$0xff]
      %v284 = vld [vmem:[%s273 + $0x10] sm:$0xff]
      %v285 = vld [vmem:[%s273 + $0x18] sm:$0xff]
      %v286 = vld [vmem:[%s273 + $0x20] sm:$0xff]
      %v287 = vld [vmem:[%s273 + $0x28] sm:$0xff]
      %v288 = vld [vmem:[%s2] sm:$0xff]
      %v289 = vld [vmem:[%s2 + $0x8] sm:$0xff]
      %291 = vset.pattern.permute.xlu0 0
      %292 = vperm.xlu0 %291, %v288
      %v293 = vpop.permute.xlu0 %292
      %296 = vset.pattern.permute.xlu0 0
      %297 = vperm.xlu0 %296, %v289
      %v298 = vpop.permute.xlu0 %297
      %v300 = vmul.f32 %v282, %v293
      %v301 = vmul.f32 %v283, %v293
      %v302 = vmul.f32 %v284, %v293
      %v303 = vmul.f32 %v285, %v298
      %v304 = vmul.f32 %v286, %v298
      %v305 = vmul.f32 %v287, %v298
      %v306 = vld [vmem:[%s3] sm:$0xff]
      %v307 = vld [vmem:[%s3 + $0x8] sm:$0xff]
      %309 = vset.pattern.permute.xlu0 0
      %310 = vperm.xlu0 %309, %v306
      %v311 = vpop.permute.xlu0 %310
      %314 = vset.pattern.permute.xlu0 0
      %315 = vperm.xlu0 %314, %v307
      %v316 = vpop.permute.xlu0 %315
      %v318 = vadd.f32 %v300, %v311
      %v319 = vadd.f32 %v301, %v311
      %v320 = vadd.f32 %v302, %v311
      %v321 = vadd.f32 %v303, %v316
      %v322 = vadd.f32 %v304, %v316
      %v323 = vadd.f32 %v305, %v316
      %v324 = vmax.f32 %v318, 0.0
      %v325 = vmax.f32 %v319, 0.0
      %v326 = vmax.f32 %v320, 0.0
      %v327 = vmax.f32 %v321, 0.0
      %v328 = vmax.f32 %v322, 0.0
      %v329 = vmax.f32 %v323, 0.0
      %v330 = vsel %vm281, 1, 0
      %v331 = vperm.slane %v330, 0
      %v332 = vperm.slane %v330, 1
      %v333 = vperm.slane %v330, 2
      %vm334 = vcmp.eq.s32.totalorder %v331, 1
      %vm335 = vcmp.eq.s32.totalorder %v332, 1
      %vm336 = vcmp.eq.s32.totalorder %v333, 1
      %v337 = vsel %vm334, %v324, 0.0
      %v338 = vsel %vm335, %v325, 0.0
      %v339 = vsel %vm336, %v326, 0.0
      %v340 = vsel %vm334, %v327, 0.0
      %v341 = vsel %vm335, %v328, 0.0
      %v342 = vsel %vm336, %v329, 0.0
      %v343 = vld [vmem:[%s4] sm:$0xf]
      %v344 = vld [vmem:[%s4 + $0x4] sm:$0xf]
      %v345 = vpack.c.bf16 %v340, %v337
      %v346 = vpack.c.bf16 %v341, %v338
      %v347 = vpack.c.bf16 %v342, %v339
      %v348 = vld [vmem:[%s5] sm:$0xff]
      %v349 = vld [vmem:[%s5 + $0x8] sm:$0xff]
      %351 = vset.pattern.permute.xlu0 0
      %352 = vperm.xlu0 %351, %v348
      %v353 = vpop.permute.xlu0 %352
      %356 = vset.pattern.permute.xlu0 0
      %357 = vperm.xlu0 %356, %v349
      %v358 = vpop.permute.xlu0 %357
      %v362 = vunpack.c.l.b16 %v343
      %v363 = vunpack.c.l.b16 %v344
      %v364 = vpack.c.b16 %v363, %v362
      %vm365 = vcmask 130048
      %v367 = vsel %vm365, %v364, 0
      %369 = vmatpush.bf16.msra.mxu0 0
      %370 = vmatpush.bf16.msra.mxu0 0
      %371 = vmatpush.bf16.msra.mxu0 0
      %372 = vmatpush.bf16.msra.mxu0 0
      %373 = vmatpush.bf16.msra.mxu0 0
      %374 = vmatpush.bf16.msra.mxu0 0
      %375 = vmatpush.bf16.msra.mxu0 0
      %376 = vmatpush.bf16.msra.mxu0 %v345
      %377 = vmatmul.bf16.gmra.mxu0 %v367
      %v378 = vpop.f32.mrf.mxu0
      %v379 = vadd.f32 %v353, %v378
      %v380 = vpop.f32.mrf.mxu0
      %v381 = vadd.f32 %v358, %v380
      %382 = vdwg.mxu0
      %383 = vmatpush.bf16.msra.mxu0 0
      %384 = vmatpush.bf16.msra.mxu0 0
      %385 = vmatpush.bf16.msra.mxu0 0
      %386 = vmatpush.bf16.msra.mxu0 0
      %387 = vmatpush.bf16.msra.mxu0 0
      %388 = vmatpush.bf16.msra.mxu0 0
      %389 = vmatpush.bf16.msra.mxu0 0
      %390 = vmatpush.bf16.msra.mxu0 %v346
      %391 = vmatmul.bf16.gmra.mxu0 %v367
      %v392 = vpop.f32.mrf.mxu0
      %v393 = vadd.f32 %v353, %v392
      %v394 = vpop.f32.mrf.mxu0
      %v395 = vadd.f32 %v358, %v394
      %396 = vdwg.mxu0
      %397 = vmatpush.bf16.msra.mxu0 0
      %398 = vmatpush.bf16.msra.mxu0 0
      %399 = vmatpush.bf16.msra.mxu0 0
      %400 = vmatpush.bf16.msra.mxu0 0
      %401 = vmatpush.bf16.msra.mxu0 0
      %402 = vmatpush.bf16.msra.mxu0 0
      %403 = vmatpush.bf16.msra.mxu0 0
      %404 = vmatpush.bf16.msra.mxu0 %v347
      %405 = vmatmul.bf16.gmra.mxu0 %v367
      %v406 = vpop.f32.mrf.mxu0
      %v407 = vadd.f32 %v353, %v406
      %v408 = vpop.f32.mrf.mxu0
      %v409 = vadd.f32 %v358, %v408
      %410 = vdwg.mxu0
      %417 = vrot.lane.b32.xlu0 %v379, 127
      %v418 = vpop.permute.xlu0 %417
      %419 = vrot.lane.b32.xlu0 %v393, 127
      %v420 = vpop.permute.xlu0 %419
      %421 = vrot.lane.b32.xlu0 %v407, 127
      %v422 = vpop.permute.xlu0 %421
      %423 = vrot.lane.b32.xlu0 %v381, 127
      %v424 = vpop.permute.xlu0 %423
      %425 = vrot.lane.b32.xlu0 %v395, 127
      %v426 = vpop.permute.xlu0 %425
      %427 = vrot.lane.b32.xlu0 %v409, 127
      %v428 = vpop.permute.xlu0 %427
      %vm429 = vcmask 1039360
      %v430 = vsel %vm429, %v418, %v420
      %v431 = vsel %vm429, %v420, %v422
      %v432 = vsel %vm429, %v424, %v426
      %v433 = vsel %vm429, %v426, %v428
      %v440 = vmax.f32 %v379, %v430
      %v441 = vmax.f32 %v393, %v431
      %v442 = vmax.f32 %v407, %v422
      %v443 = vmax.f32 %v381, %v432
      %v444 = vmax.f32 %v395, %v433
      %v445 = vmax.f32 %v409, %v428
      %452 = vrot.lane.b32.xlu0 %v440, 110
      %v453 = vpop.permute.xlu0 %452
      %454 = vrot.lane.b32.xlu0 %v441, 110
      %v455 = vpop.permute.xlu0 %454
      %456 = vrot.lane.b32.xlu0 %v442, 110
      %v457 = vpop.permute.xlu0 %456
      %458 = vrot.lane.b32.xlu0 %v443, 110
      %v459 = vpop.permute.xlu0 %458
      %460 = vrot.lane.b32.xlu0 %v444, 110
      %v461 = vpop.permute.xlu0 %460
      %462 = vrot.lane.b32.xlu0 %v445, 110
      %v463 = vpop.permute.xlu0 %462
      %vm464 = vcmask 900096
      %v465 = vsel %vm464, %v453, %v455
      %v466 = vsel %vm464, %v455, %v457
      %v467 = vsel %vm464, %v459, %v461
      %v468 = vsel %vm464, %v461, %v463
      %v475 = vmax.f32 %v440, %v465
      %v476 = vmax.f32 %v441, %v466
      %v477 = vmax.f32 %v442, %v457
      %v478 = vmax.f32 %v443, %v467
      %v479 = vmax.f32 %v444, %v468
      %v480 = vmax.f32 %v445, %v463
      %v481 = vld [vmem:[%s6] sm:$0xff]
      %v482 = vld [vmem:[%s6 + $0x8] sm:$0xff]
      %v483 = vld [vmem:[%s6 + $0x10] sm:$0xff]
      %v484 = vld [vmem:[%s6 + $0x18] sm:$0xff]
      %v485 = vld [vmem:[%s6 + $0x20] sm:$0xff]
      %v486 = vld [vmem:[%s6 + $0x28] sm:$0xff]
      %v487 = vld [vmem:[%s6 + $0x30] sm:$0xff]
      %v488 = vld [vmem:[%s6 + $0x38] sm:$0xff]
      %v489 = vld [vmem:[%s6 + $0x40] sm:$0xff]
      %v490 = vld [vmem:[%s6 + $0x48] sm:$0xff]
      %v491 = vld [vmem:[%s6 + $0x50] sm:$0xff]
      %v492 = vld [vmem:[%s6 + $0x58] sm:$0xff]
      %v493 = vld [vmem:[%s6 + $0x60] sm:$0xff]
      %v494 = vld [vmem:[%s6 + $0x68] sm:$0xff]
      %v495 = vld [vmem:[%s6 + $0x70] sm:$0xff]
      %v496 = vld [vmem:[%s6 + $0x78] sm:$0xff]
      %v497 = vld [vmem:[%s6 + $0x80] sm:$0xff]
      %v498 = vld [vmem:[%s6 + $0x88] sm:$0xff]
      %v499 = vld [vmem:[%s6 + $0x90] sm:$0xff]
      %v500 = vld [vmem:[%s6 + $0x98] sm:$0xff]
      %v501 = vld [vmem:[%s6 + $0xa0] sm:$0xff]
      %v502 = vld [vmem:[%s6 + $0xa8] sm:$0xff]
      %v503 = vld [vmem:[%s6 + $0xb0] sm:$0xff]
      %v504 = vld [vmem:[%s6 + $0xb8] sm:$0xff]
      %v505 = vld [vmem:[%s6 + $0xc0] sm:$0xff]
      %v506 = vld [vmem:[%s6 + $0xc8] sm:$0xff]
      %v507 = vld [vmem:[%s6 + $0xd0] sm:$0xff]
      %v508 = vld [vmem:[%s6 + $0xd8] sm:$0xff]
      %v509 = vld [vmem:[%s6 + $0xe0] sm:$0xff]
      %v510 = vld [vmem:[%s6 + $0xe8] sm:$0xff]
      %v511 = vld [vmem:[%s6 + $0xf0] sm:$0xff]
      %v512 = vld [vmem:[%s6 + $0xf8] sm:$0xff]
      %v513 = vld [vmem:[%s6 + $0x100] sm:$0xff]
      %v514 = vld [vmem:[%s6 + $0x108] sm:$0xff]
      %v515 = vld [vmem:[%s6 + $0x110] sm:$0xff]
      %v516 = vld [vmem:[%s6 + $0x118] sm:$0xff]
      %v517 = vld [vmem:[%s6 + $0x120] sm:$0xff]
      %v518 = vld [vmem:[%s6 + $0x128] sm:$0xff]
      %v519 = vld [vmem:[%s6 + $0x130] sm:$0x1]
      %vm520 = vcmask 400384
      %v522 = vsel %vm520, %v477, 0
      %v525 = vsel %vm520, %v480, 0
      %vm527 = vcmask 1040384
      %v529 = vsel %vm527, %v519, 0
      %531 = vmatpush.msra.mxu0 %v496
      %532 = vmatpush.msra.mxu0 %v495
      %533 = vmatpush.msra.mxu0 %v494
      %534 = vmatpush.msra.mxu0 %v493
      %535 = vmatpush.msra.mxu0 %v492
      %536 = vmatpush.msra.mxu0 %v491
      %537 = vmatpush.msra.mxu0 %v490
      %538 = vmatpush.msra.mxu0 %v489
      %539 = vmatpush.msra.mxu0 %v488
      %540 = vmatpush.msra.mxu0 %v487
      %541 = vmatpush.msra.mxu0 %v486
      %542 = vmatpush.msra.mxu0 %v485
      %543 = vmatpush.msra.mxu0 %v484
      %544 = vmatpush.msra.mxu0 %v483
      %545 = vmatpush.msra.mxu0 %v482
      %546 = vmatpush.msra.mxu0 %v481
      %547 = vmatmul.f32.gmra.mxu0 %v475
      %v548 = vpop.f32.mrf.mxu0
      %v549 = vadd.f32 0.0, %v548
      %550 = vmatmul.f32.gmra.mxu0 %v478
      %v551 = vpop.f32.mrf.mxu0
      %v552 = vadd.f32 0.0, %v551
      %553 = vdwg.mxu0
      %554 = vmatpush.msra.mxu0 %v512
      %555 = vmatpush.msra.mxu0 %v511
      %556 = vmatpush.msra.mxu0 %v510
      %557 = vmatpush.msra.mxu0 %v509
      %558 = vmatpush.msra.mxu0 %v508
      %559 = vmatpush.msra.mxu0 %v507
      %560 = vmatpush.msra.mxu0 %v506
      %561 = vmatpush.msra.mxu0 %v505
      %562 = vmatpush.msra.mxu0 %v504
      %563 = vmatpush.msra.mxu0 %v503
      %564 = vmatpush.msra.mxu0 %v502
      %565 = vmatpush.msra.mxu0 %v501
      %566 = vmatpush.msra.mxu0 %v500
      %567 = vmatpush.msra.mxu0 %v499
      %568 = vmatpush.msra.mxu0 %v498
      %569 = vmatpush.msra.mxu0 %v497
      %570 = vmatmul.f32.gmra.mxu0 %v476
      %v571 = vpop.f32.mrf.mxu0
      %v572 = vadd.f32 %v549, %v571
      %573 = vmatmul.f32.gmra.mxu0 %v479
      %v574 = vpop.f32.mrf.mxu0
      %v575 = vadd.f32 %v552, %v574
      %576 = vdwg.mxu0
      %577 = vmatpush.msra.mxu0 0.0
      %578 = vmatpush.msra.mxu0 0.0
      %579 = vmatpush.msra.mxu0 0.0
      %580 = vmatpush.msra.mxu0 0.0
      %581 = vmatpush.msra.mxu0 0.0
      %582 = vmatpush.msra.mxu0 0.0
      %583 = vmatpush.msra.mxu0 0.0
      %584 = vmatpush.msra.mxu0 0.0
      %585 = vmatpush.msra.mxu0 0.0
      %586 = vmatpush.msra.mxu0 %v529
      %587 = vmatpush.msra.mxu0 %v518
      %588 = vmatpush.msra.mxu0 %v517
      %589 = vmatpush.msra.mxu0 %v516
      %590 = vmatpush.msra.mxu0 %v515
      %591 = vmatpush.msra.mxu0 %v514
      %592 = vmatpush.msra.mxu0 %v513
      %593 = vmatmul.f32.gmra.mxu0 %v522
      %v594 = vpop.f32.mrf.mxu0
      %v595 = vadd.f32 %v572, %v594
      %596 = vmatmul.f32.gmra.mxu0 %v525
      %v597 = vpop.f32.mrf.mxu0
      %v598 = vadd.f32 %v575, %v597
      %599 = vdwg.mxu0
      %vm600 = vcmask 818176
      %601 = vst.msk [vmem:[%s278] sm:$0xff] %vm600, %v595
      %602 = vst.msk [vmem:[%s278 + $0x8] sm:$0xff] %vm600, %v598
      %p603 = scmp.lt.s32.totalorder %s18, 1
      %s604 = scalar_select %p603, %s18, 1
      %s605 = smul.addr %s604, 2
      %s606 = smul.addr %s605, 8
      %s607 = scalar_lea.vmem %s7, %s606
      // Predicated region
      $region49: #{fcdensenet_forward.13} parent=47 // pred_check
        %p608 = pneg %p188
      $region50: #{fcdensenet_forward.13} parent=47 // pred_check_branch
        %610 = sbr.rel (%p608) target = $region52
      $region51: #{fcdensenet_forward.13} parent=47 // pred_region
        _
      $region52: #{fcdensenet_forward.13} parent=47 // pred_fallthru
        _
    $region48: #{fcdensenet_forward.13} parent=5 // pred_fallthru
      _
    %p611 = scmp.le.s32.totalorder 2, %s13
    // Predicated region
    $region53: #{fcdensenet_forward.13} parent=5 // pred_check
      %p612 = pneg %p611
    $region54: #{fcdensenet_forward.13} parent=5 // pred_check_branch
      %614 = sbr.rel (%p612) target = $region56
    $region55: #{fcdensenet_forward.13} parent=5 // pred_region
      %s615 = ssub.s32 %s13, 2
      // Predicated region
      $region57: #{fcdensenet_forward.13} parent=55 // pred_check
        %p616 = pneg %p194
      $region58: #{fcdensenet_forward.13} parent=55 // pred_check_branch
        %618 = sbr.rel (%p616) target = $region60
      $region59: #{fcdensenet_forward.13} parent=55 // pred_region
        %p619 = scmp.lt.s32.totalorder %s19, 1
        %s620 = scalar_select %p619, %s19, 1
        %s621 = smul.addr %s620, 2
        %s622 = smul.addr %s621, 8
        %s623 = scalar_lea.vmem %s7, %s622
      $region60: #{fcdensenet_forward.13} parent=55 // pred_fallthru
        _
    $region56: #{fcdensenet_forward.13} parent=5 // pred_fallthru
      _
  $region6: #{fcdensenet_forward.13} parent=0 // loop_footer
    %s17 = sadd.s32 1, %s13
  $region7: #{fcdensenet_forward.13} parent=0 // loop_footer_branch
    %12 = sbr.rel target = $region3
  $region8: #{fcdensenet_forward.13} parent=0 // loop_exit
    _

// kernel: fcdensenet_forward.14
$region0: #{fcdensenet_forward.14}
  #allocation0 [shape = 'u32[]', space=smem, size = 0x4, offset = 0x4, fixed_abs, tag = 'smem constant byte address 0x4 - core index']
  #allocation1 [shape = 'u32[72,128]{1,0:T(1,128)}', space=vmem, size = 0x9000, scoped, tag = 'internal scratch']
  %s0 = inlined_call_operand.vmem [shape: f32[2,16,100], index: 0, kind: input, shape index: {}]
  %s1 = inlined_call_operand.vmem [shape: f32[1,100], index: 1, kind: input, shape index: {}]
  %s2 = inlined_call_operand.vmem [shape: f32[16,1], index: 2, kind: input, shape index: {}]
  %s3 = inlined_call_operand.vmem [shape: f32[16,1], index: 3, kind: input, shape index: {}]
  %s4 = inlined_call_operand.vmem [shape: bf16[4,144], index: 4, kind: input, shape index: {}]
  %s5 = inlined_call_operand.vmem [shape: f32[4,1], index: 5, kind: input, shape index: {}]
  %s6 = inlined_call_operand.vmem [shape: f32[20,1], index: 6, kind: input, shape index: {}]
  %s7 = inlined_call_operand.vmem [shape: f32[20,1], index: 7, kind: input, shape index: {}]
  %s8 = inlined_call_operand.vmem [shape: bf16[4,180], index: 8, kind: input, shape index: {}]
  %s9 = inlined_call_operand.vmem [shape: f32[4,1], index: 9, kind: input, shape index: {}]
  %s10 = inlined_call_operand.vmem [shape: f32[2,24,100], index: 10, kind: output, shape index: {}]
  %s11 = sld [smem:[#allocation0]]
  $region73: #{fcdensenet_forward.14} parent=0
    _
  %s13 = ssub.s32 1, %s11
  %s14 = scalar_select 0, %s13, %s11
  loop: start=0, step=1, limit=4
  $region2: #{fcdensenet_forward.14} parent=0 // loop_pre_header
    _
  $region3: #{fcdensenet_forward.14} parent=0 // loop_header
    %s16 = sphi 0, %s20
    %p17 = scmp.ge.s32.totalorder %s16, 4
    %s26 = sphi 0, %s28
    %s29 = sphi 0, %s26
    %s30 = sphi 0, %s29
    %s46 = sphi 0, %s30
    %s50 = sphi 0, %s50
    %s52 = sphi 0, %s50
    %s53 = sphi 0, %s52
    %s67 = sphi 0, %s53
    %s71 = sphi 0, %s71
    %s73 = sphi 0, %s71
    %s74 = sphi 0, %s73
    %s88 = sphi 0, %s74
    %s92 = sphi 0, %s92
    %s94 = sphi 0, %s92
    %s95 = sphi 0, %s94
    %s109 = sphi 0, %s95
    %s113 = sphi 0, %s113
    %s115 = sphi 0, %s113
    %s116 = sphi 0, %s115
    %s130 = sphi 0, %s116
    %s134 = sphi 0, %s134
    %s136 = sphi 0, %s134
    %s137 = sphi 0, %s136
    %s151 = sphi 0, %s137
    %s155 = sphi 0, %s155
    %s157 = sphi 0, %s155
    %s158 = sphi 0, %s157
    %s172 = sphi 0, %s158
    %s176 = sphi 0, %s176
    %s178 = sphi 0, %s176
    %s179 = sphi 0, %s178
    %s193 = sphi 0, %s179
    %s197 = sphi 0, %s197
    %s199 = sphi 0, %s197
    %s200 = sphi 0, %s199
    %s214 = sphi 0, %s200
    %s218 = sphi 0, %s218
    %s220 = sphi 0, %s218
    %s221 = sphi 0, %s220
    %s235 = sphi 0, %s221
    %s241 = sphi 0, %s243
    %s244 = sphi 0, %s241
    %s245 = sphi 0, %s244
    %s261 = sphi 0, %s245
  $region4: #{fcdensenet_forward.14} parent=0 // loop_header_branch
    %19 = sbr.rel (%p17) target = $region8
  $region5: #{fcdensenet_forward.14} parent=0 // loop_body
    %s21 = ssub.s32 %s16, 1
    %s22 = ssub.s32 %s16, 2
    %s23 = sadd.s32 %s16, 1
    %s24 = ssub.s32 %s16, %s23
    %p25 = scmp.eq.s32.totalorder %s24, 0
    %s27 = sadd.s32 %s26, 1
    %s28 = scalar_select %p25, %s26, %s27
    %p31 = pneg %p25
    %p32 = scmp.eq.s32.totalorder %s16, 1
    %p33 = por %p31, %p32
    %p34 = scmp.ne.s32.totalorder %s26, %s29
    %p35 = scmp.eq.s32.totalorder %s16, 0
    %p36 = por %p34, %p35
    %p37 = scmp.ne.s32.totalorder %s26, %s29
    %p38 = scmp.eq.s32.totalorder %s21, 1
    %p39 = por %p37, %p38
    %p40 = scmp.ne.s32.totalorder %s29, %s30
    %p41 = scmp.eq.s32.totalorder %s21, 0
    %p42 = por %p40, %p41
    %p43 = scmp.ne.s32.totalorder %s29, %s30
    %p44 = scmp.eq.s32.totalorder %s22, 1
    %p45 = por %p43, %p44
    %p47 = scmp.ne.s32.totalorder %s30, %s46
    %p48 = scmp.eq.s32.totalorder %s22, 0
    %p49 = por %p47, %p48
    %s51 = sadd.s32 %s50, 1
    %p54 = scmp.eq.s32.totalorder %s16, 1
    %p55 = scmp.ne.s32.totalorder %s50, %s52
    %p56 = scmp.eq.s32.totalorder %s16, 0
    %p57 = por %p55, %p56
    %p58 = scmp.ne.s32.totalorder %s50, %s52
    %p59 = scmp.eq.s32.totalorder %s21, 1
    %p60 = por %p58, %p59
    %p61 = scmp.ne.s32.totalorder %s52, %s53
    %p62 = scmp.eq.s32.totalorder %s21, 0
    %p63 = por %p61, %p62
    %p64 = scmp.ne.s32.totalorder %s52, %s53
    %p65 = scmp.eq.s32.totalorder %s22, 1
    %p66 = por %p64, %p65
    %p68 = scmp.ne.s32.totalorder %s53, %s67
    %p69 = scmp.eq.s32.totalorder %s22, 0
    %p70 = por %p68, %p69
    %s72 = sadd.s32 %s71, 1
    %p75 = scmp.eq.s32.totalorder %s16, 1
    %p76 = scmp.ne.s32.totalorder %s71, %s73
    %p77 = scmp.eq.s32.totalorder %s16, 0
    %p78 = por %p76, %p77
    %p79 = scmp.ne.s32.totalorder %s71, %s73
    %p80 = scmp.eq.s32.totalorder %s21, 1
    %p81 = por %p79, %p80
    %p82 = scmp.ne.s32.totalorder %s73, %s74
    %p83 = scmp.eq.s32.totalorder %s21, 0
    %p84 = por %p82, %p83
    %p85 = scmp.ne.s32.totalorder %s73, %s74
    %p86 = scmp.eq.s32.totalorder %s22, 1
    %p87 = por %p85, %p86
    %p89 = scmp.ne.s32.totalorder %s74, %s88
    %p90 = scmp.eq.s32.totalorder %s22, 0
    %p91 = por %p89, %p90
    %s93 = sadd.s32 %s92, 1
    %p96 = scmp.eq.s32.totalorder %s16, 1
    %p97 = scmp.ne.s32.totalorder %s92, %s94
    %p98 = scmp.eq.s32.totalorder %s16, 0
    %p99 = por %p97, %p98
    %p100 = scmp.ne.s32.totalorder %s92, %s94
    %p101 = scmp.eq.s32.totalorder %s21, 1
    %p102 = por %p100, %p101
    %p103 = scmp.ne.s32.totalorder %s94, %s95
    %p104 = scmp.eq.s32.totalorder %s21, 0
    %p105 = por %p103, %p104
    %p106 = scmp.ne.s32.totalorder %s94, %s95
    %p107 = scmp.eq.s32.totalorder %s22, 1
    %p108 = por %p106, %p107
    %p110 = scmp.ne.s32.totalorder %s95, %s109
    %p111 = scmp.eq.s32.totalorder %s22, 0
    %p112 = por %p110, %p111
    %s114 = sadd.s32 %s113, 1
    %p117 = scmp.eq.s32.totalorder %s16, 1
    %p118 = scmp.ne.s32.totalorder %s113, %s115
    %p119 = scmp.eq.s32.totalorder %s16, 0
    %p120 = por %p118, %p119
    %p121 = scmp.ne.s32.totalorder %s113, %s115
    %p122 = scmp.eq.s32.totalorder %s21, 1
    %p123 = por %p121, %p122
    %p124 = scmp.ne.s32.totalorder %s115, %s116
    %p125 = scmp.eq.s32.totalorder %s21, 0
    %p126 = por %p124, %p125
    %p127 = scmp.ne.s32.totalorder %s115, %s116
    %p128 = scmp.eq.s32.totalorder %s22, 1
    %p129 = por %p127, %p128
    %p131 = scmp.ne.s32.totalorder %s116, %s130
    %p132 = scmp.eq.s32.totalorder %s22, 0
    %p133 = por %p131, %p132
    %s135 = sadd.s32 %s134, 1
    %p138 = scmp.eq.s32.totalorder %s16, 1
    %p139 = scmp.ne.s32.totalorder %s134, %s136
    %p140 = scmp.eq.s32.totalorder %s16, 0
    %p141 = por %p139, %p140
    %p142 = scmp.ne.s32.totalorder %s134, %s136
    %p143 = scmp.eq.s32.totalorder %s21, 1
    %p144 = por %p142, %p143
    %p145 = scmp.ne.s32.totalorder %s136, %s137
    %p146 = scmp.eq.s32.totalorder %s21, 0
    %p147 = por %p145, %p146
    %p148 = scmp.ne.s32.totalorder %s136, %s137
    %p149 = scmp.eq.s32.totalorder %s22, 1
    %p150 = por %p148, %p149
    %p152 = scmp.ne.s32.totalorder %s137, %s151
    %p153 = scmp.eq.s32.totalorder %s22, 0
    %p154 = por %p152, %p153
    %s156 = sadd.s32 %s155, 1
    %p159 = scmp.eq.s32.totalorder %s16, 1
    %p160 = scmp.ne.s32.totalorder %s155, %s157
    %p161 = scmp.eq.s32.totalorder %s16, 0
    %p162 = por %p160, %p161
    %p163 = scmp.ne.s32.totalorder %s155, %s157
    %p164 = scmp.eq.s32.totalorder %s21, 1
    %p165 = por %p163, %p164
    %p166 = scmp.ne.s32.totalorder %s157, %s158
    %p167 = scmp.eq.s32.totalorder %s21, 0
    %p168 = por %p166, %p167
    %p169 = scmp.ne.s32.totalorder %s157, %s158
    %p170 = scmp.eq.s32.totalorder %s22, 1
    %p171 = por %p169, %p170
    %p173 = scmp.ne.s32.totalorder %s158, %s172
    %p174 = scmp.eq.s32.totalorder %s22, 0
    %p175 = por %p173, %p174
    %s177 = sadd.s32 %s176, 1
    %p180 = scmp.eq.s32.totalorder %s16, 1
    %p181 = scmp.ne.s32.totalorder %s176, %s178
    %p182 = scmp.eq.s32.totalorder %s16, 0
    %p183 = por %p181, %p182
    %p184 = scmp.ne.s32.totalorder %s176, %s178
    %p185 = scmp.eq.s32.totalorder %s21, 1
    %p186 = por %p184, %p185
    %p187 = scmp.ne.s32.totalorder %s178, %s179
    %p188 = scmp.eq.s32.totalorder %s21, 0
    %p189 = por %p187, %p188
    %p190 = scmp.ne.s32.totalorder %s178, %s179
    %p191 = scmp.eq.s32.totalorder %s22, 1
    %p192 = por %p190, %p191
    %p194 = scmp.ne.s32.totalorder %s179, %s193
    %p195 = scmp.eq.s32.totalorder %s22, 0
    %p196 = por %p194, %p195
    %s198 = sadd.s32 %s197, 1
    %p201 = scmp.eq.s32.totalorder %s16, 1
    %p202 = scmp.ne.s32.totalorder %s197, %s199
    %p203 = scmp.eq.s32.totalorder %s16, 0
    %p204 = por %p202, %p203
    %p205 = scmp.ne.s32.totalorder %s197, %s199
    %p206 = scmp.eq.s32.totalorder %s21, 1
    %p207 = por %p205, %p206
    %p208 = scmp.ne.s32.totalorder %s199, %s200
    %p209 = scmp.eq.s32.totalorder %s21, 0
    %p210 = por %p208, %p209
    %p211 = scmp.ne.s32.totalorder %s199, %s200
    %p212 = scmp.eq.s32.totalorder %s22, 1
    %p213 = por %p211, %p212
    %p215 = scmp.ne.s32.totalorder %s200, %s214
    %p216 = scmp.eq.s32.totalorder %s22, 0
    %p217 = por %p215, %p216
    %s219 = sadd.s32 %s218, 1
    %p222 = scmp.eq.s32.totalorder %s16, 1
    %p223 = scmp.ne.s32.totalorder %s218, %s220
    %p224 = scmp.eq.s32.totalorder %s16, 0
    %p225 = por %p223, %p224
    %p226 = scmp.ne.s32.totalorder %s218, %s220
    %p227 = scmp.eq.s32.totalorder %s21, 1
    %p228 = por %p226, %p227
    %p229 = scmp.ne.s32.totalorder %s220, %s221
    %p230 = scmp.eq.s32.totalorder %s21, 0
    %p231 = por %p229, %p230
    %p232 = scmp.ne.s32.totalorder %s220, %s221
    %p233 = scmp.eq.s32.totalorder %s22, 1
    %p234 = por %p232, %p233
    %p236 = scmp.ne.s32.totalorder %s221, %s235
    %p237 = scmp.eq.s32.totalorder %s22, 0
    %p238 = por %p236, %p237
    %s239 = ssub.s32 %s16, %s23
    %p240 = scmp.eq.s32.totalorder %s239, 0
    %s242 = sadd.s32 %s241, 1
    %s243 = scalar_select %p240, %s241, %s242
    %p246 = pneg %p240
    %p247 = scmp.eq.s32.totalorder %s16, 1
    %p248 = por %p246, %p247
    %p249 = scmp.ne.s32.totalorder %s241, %s244
    %p250 = scmp.eq.s32.totalorder %s16, 0
    %p251 = por %p249, %p250
    %p252 = scmp.ne.s32.totalorder %s241, %s244
    %p253 = scmp.eq.s32.totalorder %s21, 1
    %p254 = por %p252, %p253
    %p255 = scmp.ne.s32.totalorder %s244, %s245
    %p256 = scmp.eq.s32.totalorder %s21, 0
    %p257 = por %p255, %p256
    %p258 = scmp.ne.s32.totalorder %s244, %s245
    %p259 = scmp.eq.s32.totalorder %s22, 1
    %p260 = por %p258, %p259
    %p262 = scmp.ne.s32.totalorder %s245, %s261
    %p263 = scmp.eq.s32.totalorder %s22, 0
    %p264 = por %p262, %p263
    %p265 = scmp.le.s32.totalorder 1, %s16
    %p266 = scmp.lt.s32.totalorder %s16, 3
    %p267 = pnand %p265, %p266
    %p268 = pneg %p267
    // Predicated region
    $region9: #{fcdensenet_forward.14} parent=5 // pred_check
      _
    $region10: #{fcdensenet_forward.14} parent=5 // pred_check_branch
      %270 = sbr.rel (%p267) target = $region12
    $region11: #{fcdensenet_forward.14} parent=5 // pred_region
      %s271 = ssub.s32 %s16, 1
      // Predicated region
      $region13: #{fcdensenet_forward.14} parent=11 // pred_check
        %p272 = pneg %p63
      $region14: #{fcdensenet_forward.14} parent=11 // pred_check_branch
        %274 = sbr.rel (%p272) target = $region16
      $region15: #{fcdensenet_forward.14} parent=11 // pred_region
        _
      $region16: #{fcdensenet_forward.14} parent=11 // pred_fallthru
        _
      // Predicated region
      $region17: #{fcdensenet_forward.14} parent=11 // pred_check
        %p275 = pneg %p84
      $region18: #{fcdensenet_forward.14} parent=11 // pred_check_branch
        %277 = sbr.rel (%p275) target = $region20
      $region19: #{fcdensenet_forward.14} parent=11 // pred_region
        _
      $region20: #{fcdensenet_forward.14} parent=11 // pred_fallthru
        _
      // Predicated region
      $region21: #{fcdensenet_forward.14} parent=11 // pred_check
        %p278 = pneg %p105
      $region22: #{fcdensenet_forward.14} parent=11 // pred_check_branch
        %280 = sbr.rel (%p278) target = $region24
      $region23: #{fcdensenet_forward.14} parent=11 // pred_region
        _
      $region24: #{fcdensenet_forward.14} parent=11 // pred_fallthru
        _
      // Predicated region
      $region25: #{fcdensenet_forward.14} parent=11 // pred_check
        %p281 = pneg %p126
      $region26: #{fcdensenet_forward.14} parent=11 // pred_check_branch
        %283 = sbr.rel (%p281) target = $region28
      $region27: #{fcdensenet_forward.14} parent=11 // pred_region
        _
      $region28: #{fcdensenet_forward.14} parent=11 // pred_fallthru
        _
      // Predicated region
      $region29: #{fcdensenet_forward.14} parent=11 // pred_check
        %p284 = pneg %p147
      $region30: #{fcdensenet_forward.14} parent=11 // pred_check_branch
        %286 = sbr.rel (%p284) target = $region32
      $region31: #{fcdensenet_forward.14} parent=11 // pred_region
        _
      $region32: #{fcdensenet_forward.14} parent=11 // pred_fallthru
        _
      // Predicated region
      $region33: #{fcdensenet_forward.14} parent=11 // pred_check
        %p287 = pneg %p168
      $region34: #{fcdensenet_forward.14} parent=11 // pred_check_branch
        %289 = sbr.rel (%p287) target = $region36
      $region35: #{fcdensenet_forward.14} parent=11 // pred_region
        _
      $region36: #{fcdensenet_forward.14} parent=11 // pred_fallthru
        _
      // Predicated region
      $region37: #{fcdensenet_forward.14} parent=11 // pred_check
        %p290 = pneg %p189
      $region38: #{fcdensenet_forward.14} parent=11 // pred_check_branch
        %292 = sbr.rel (%p290) target = $region40
      $region39: #{fcdensenet_forward.14} parent=11 // pred_region
        _
      $region40: #{fcdensenet_forward.14} parent=11 // pred_fallthru
        _
      // Predicated region
      $region41: #{fcdensenet_forward.14} parent=11 // pred_check
        %p293 = pneg %p210
      $region42: #{fcdensenet_forward.14} parent=11 // pred_check_branch
        %295 = sbr.rel (%p293) target = $region44
      $region43: #{fcdensenet_forward.14} parent=11 // pred_region
        _
      $region44: #{fcdensenet_forward.14} parent=11 // pred_fallthru
        _
      // Predicated region
      $region45: #{fcdensenet_forward.14} parent=11 // pred_check
        %p296 = pneg %p231
      $region46: #{fcdensenet_forward.14} parent=11 // pred_check_branch
        %298 = sbr.rel (%p296) target = $region48
      $region47: #{fcdensenet_forward.14} parent=11 // pred_region
        _
      $region48: #{fcdensenet_forward.14} parent=11 // pred_fallthru
        _
    $region12: #{fcdensenet_forward.14} parent=5 // pred_fallthru
      _
    %p299 = scmp.lt.s32.totalorder %s16, 2
    // Predicated region
    $region49: #{fcdensenet_forward.14} parent=5 // pred_check
      %p300 = pneg %p299
    $region50: #{fcdensenet_forward.14} parent=5 // pred_check_branch
      %302 = sbr.rel (%p300) target = $region52
    $region51: #{fcdensenet_forward.14} parent=5 // pred_region
      // Predicated region
      $region53: #{fcdensenet_forward.14} parent=51 // pred_check
        %p303 = pneg %p36
      $region54: #{fcdensenet_forward.14} parent=51 // pred_check_branch
        %305 = sbr.rel (%p303) target = $region56
      $region55: #{fcdensenet_forward.14} parent=51 // pred_region
        %p306 = scmp.lt.s32.totalorder %s16, 1
        %s307 = scalar_select %p306, %s16, 1
        %s308 = smul.addr %s307, 2
        %s309 = smul.addr %s308, 8
        %s310 = scalar_lea.vmem %s0, %s309
      $region56: #{fcdensenet_forward.14} parent=51 // pred_fallthru
        _
    $region52: #{fcdensenet_forward.14} parent=5 // pred_fallthru
      _
    %p311 = scmp.le.s32.totalorder 1, %s16
    %p312 = scmp.lt.s32.totalorder %s16, 3
    %p313 = pnand %p311, %p312
    %p314 = pneg %p313
    // Predicated region
    $region57: #{fcdensenet_forward.14} parent=5 // pred_check
      _
    $region58: #{fcdensenet_forward.14} parent=5 // pred_check_branch
      %316 = sbr.rel (%p313) target = $region60
    $region59: #{fcdensenet_forward.14} parent=5 // pred_region
      %s317 = ssub.s32 %s16, 1
      %p318 = scmp.lt.s32.totalorder %s21, 1
      %s319 = scalar_select %p318, %s21, 1
      %s320 = smul.addr %s319, 2
      %s321 = smul.addr %s320, 8
      %s322 = scalar_lea.vmem %s0, %s321
      %p323 = pneg %p42
      %p324 = pneg %p39
      %p325 = pneg %p63
      %p326 = pneg %p60
      %p327 = pneg %p84
      %p328 = pneg %p81
      %p329 = pneg %p105
      %p330 = pneg %p102
      %p331 = pneg %p126
      %p332 = pneg %p123
      %p333 = pneg %p147
      %p334 = pneg %p144
      %p335 = pneg %p168
      %p336 = pneg %p165
      %p337 = pneg %p189
      %p338 = pneg %p186
      %p339 = pneg %p210
      %p340 = pneg %p207
      %p341 = pneg %p231
      %p342 = pneg %p228
      %p343 = pneg %p257
      %p344 = pneg %p254
      %p345 = scmp.lt.s32.totalorder %s21, 1
      %s346 = scalar_select %p345, %s21, 1
      %s347 = smul.addr %s346, 3
      %s348 = smul.addr %s347, 8
      %s349 = scalar_lea.vmem %s10, %s348
      %p350 = scmp.lt.s32.totalorder %s21, 1
      %s351 = scalar_select %p350, %s21, 1
      %s352 = smul.addr %s351, 2
      %s353 = smul.addr %s352, 8
      %s354 = scalar_lea.vmem %s0, %s353
      %p355 = scmp.lt.s32.totalorder %s21, 1
      %s356 = scalar_select %p355, %s21, 1
      %s357 = smul.addr %s356, 3
      %s358 = smul.addr %s357, 8
      %s359 = scalar_lea.vmem %s10, %s358
      %v361 = vld [vmem:[%s1] sm:$0x1]
      %vm362 = vcmp.gt.f32.partialorder %v361, 0.5
      %v363 = vld [vmem:[%s354] sm:$0xff]
      %v364 = vld [vmem:[%s354 + $0x8] sm:$0xff]
      %vm365 = vcmask 818176
      %366 = vst.msk [vmem:[%s359] sm:$0xff] %vm365, %v363
      %367 = vst.msk [vmem:[%s359 + $0x8] sm:$0xff] %vm365, %v364
      %v368 = vld [vmem:[%s359] sm:$0xff]
      %v369 = vld [vmem:[%s359 + $0x8] sm:$0xff]
      %v370 = vld [vmem:[%s2] sm:$0xff]
      %v371 = vld [vmem:[%s2 + $0x8] sm:$0xff]
      %v372 = vld [vmem:[%s3] sm:$0xff]
      %v373 = vld [vmem:[%s3 + $0x8] sm:$0xff]
      %375 = vset.pattern.permute.xlu0 0
      %376 = vperm.xlu0 %375, %v370
      %v377 = vpop.permute.xlu0 %376
      %380 = vset.pattern.permute.xlu0 0
      %381 = vperm.xlu0 %380, %v371
      %v382 = vpop.permute.xlu0 %381
      %v384 = vmul.f32 %v368, %v377
      %v385 = vmul.f32 %v369, %v382
      %387 = vset.pattern.permute.xlu0 0
      %388 = vperm.xlu0 %387, %v372
      %v389 = vpop.permute.xlu0 %388
      %392 = vset.pattern.permute.xlu0 0
      %393 = vperm.xlu0 %392, %v373
      %v394 = vpop.permute.xlu0 %393
      %v396 = vadd.f32 %v384, %v389
      %v397 = vadd.f32 %v385, %v394
      %v398 = vmax.f32 %v396, 0.0
      %v399 = vmax.f32 %v397, 0.0
      %v400 = vsel %vm362, 1, 0
      %v401 = vperm.slane %v400, 0
      %vm402 = vcmp.eq.s32.totalorder %v401, 1
      %v403 = vsel %vm402, %v398, 0.0
      %v404 = vsel %vm402, %v399, 0.0
      %v405 = vpack.c.bf16 %v403, %v403
      %v406 = vpack.c.bf16 %v404, %v404
      %v409 = vunpack.c.l.b16 %v405
      %v410 = vunpack.c.l.b16 %v406
      %v411 = vpack.c.b16 %v410, %v409
      %413 = vrot.lane.b32.xlu0 %v411, 127
      %v414 = vpop.permute.xlu0 %413
      %416 = vrot.lane.b32.xlu0 %v411, 126
      %v417 = vpop.permute.xlu0 %416
      %419 = vrot.lane.b32.xlu0 %v411, 118
      %v420 = vpop.permute.xlu0 %419
      %422 = vrot.lane.b32.xlu0 %v411, 117
      %v423 = vpop.permute.xlu0 %422
      %425 = vrot.lane.b32.xlu0 %v411, 116
      %v426 = vpop.permute.xlu0 %425
      %428 = vrot.lane.b32.xlu0 %v411, 108
      %v429 = vpop.permute.xlu0 %428
      %431 = vrot.lane.b32.xlu0 %v411, 107
      %v432 = vpop.permute.xlu0 %431
      %434 = vrot.lane.b32.xlu0 %v411, 106
      %v435 = vpop.permute.xlu0 %434
      %v437 = vld [vmem:[%s4] sm:$0xf]
      %v438 = vld [vmem:[%s5] sm:$0xf]
      %440 = vset.pattern.permute.xlu0 0
      %441 = vperm.xlu0 %440, %v438
      %v442 = vpop.permute.xlu0 %441
      %445 = vst [vmem:[#allocation1] ss:$4 sm:$0xff] %v437
      %v446 = vld.sshfl [vmem:[#allocation1] sm:$0xff pattern:$0x73625140]
      %v447 = vld.sshfl [vmem:[#allocation1 + $0x8] sm:$0xff pattern:$0x73625140]
      %vm449 = vcmask 130048
      %v450 = vsel %vm449, %v447, 0
      %452 = vmatpush.bf16.msra.mxu0 %v432
      %453 = vmatpush.bf16.msra.mxu0 %v429
      %454 = vmatpush.bf16.msra.mxu0 %v426
      %455 = vmatpush.bf16.msra.mxu0 %v423
      %456 = vmatpush.bf16.msra.mxu0 %v420
      %457 = vmatpush.bf16.msra.mxu0 %v417
      %458 = vmatpush.bf16.msra.mxu0 %v414
      %459 = vmatpush.bf16.msra.mxu0 %v411
      %460 = vmatmul.bf16.gmra.mxu0 %v446
      %v461 = vpop.f32.mrf.mxu0
      %v462 = vadd.f32 %v442, %v461
      %v463 = vpop.f32.mrf.mxu0
      %464 = vdwg.mxu0
      %465 = vmatpush.bf16.msra.mxu0 0
      %466 = vmatpush.bf16.msra.mxu0 0
      %467 = vmatpush.bf16.msra.mxu0 0
      %468 = vmatpush.bf16.msra.mxu0 0
      %469 = vmatpush.bf16.msra.mxu0 0
      %470 = vmatpush.bf16.msra.mxu0 0
      %471 = vmatpush.bf16.msra.mxu0 0
      %472 = vmatpush.bf16.msra.mxu0 %v435
      %473 = vmatmul.bf16.gmra.mxu0 %v450
      %v474 = vpop.f32.mrf.mxu0
      %v475 = vadd.f32 %v462, %v474
      %v476 = vpop.f32.mrf.mxu0
      %477 = vdwg.mxu0
      %479 = vrot.lane.b32.xlu0 %v475, 11
      %v480 = vpop.permute.xlu0 %479
      %vm482 = vcmask 724056
      %483 = vst.msk [vmem:[%s359 + $0x10] sm:$0xf] %vm482, %v480
      %v484 = vld [vmem:[%s359] sm:$0xff]
      %v485 = vld [vmem:[%s359 + $0x8] sm:$0xff]
      %v486 = vld [vmem:[%s359 + $0x10] sm:$0xf]
      %v487 = vld [vmem:[%s6] sm:$0xff]
      %v488 = vld [vmem:[%s6 + $0x8] sm:$0xff]
      %v489 = vld [vmem:[%s6 + $0x10] sm:$0xf]
      %v490 = vld [vmem:[%s7] sm:$0xff]
      %v491 = vld [vmem:[%s7 + $0x8] sm:$0xff]
      %v492 = vld [vmem:[%s7 + $0x10] sm:$0xf]
      %494 = vset.pattern.permute.xlu0 0
      %495 = vperm.xlu0 %494, %v487
      %v496 = vpop.permute.xlu0 %495
      %499 = vset.pattern.permute.xlu0 0
      %500 = vperm.xlu0 %499, %v488
      %v501 = vpop.permute.xlu0 %500
      %504 = vset.pattern.permute.xlu0 0
      %505 = vperm.xlu0 %504, %v489
      %v506 = vpop.permute.xlu0 %505
      %v508 = vmul.f32 %v484, %v496
      %v509 = vmul.f32 %v485, %v501
      %v510 = vmul.f32 %v486, %v506
      %512 = vset.pattern.permute.xlu0 0
      %513 = vperm.xlu0 %512, %v490
      %v514 = vpop.permute.xlu0 %513
      %517 = vset.pattern.permute.xlu0 0
      %518 = vperm.xlu0 %517, %v491
      %v519 = vpop.permute.xlu0 %518
      %522 = vset.pattern.permute.xlu0 0
      %523 = vperm.xlu0 %522, %v492
      %v524 = vpop.permute.xlu0 %523
      %v526 = vadd.f32 %v508, %v514
      %v527 = vadd.f32 %v509, %v519
      %v528 = vadd.f32 %v510, %v524
      %v529 = vmax.f32 %v526, 0.0
      %v530 = vmax.f32 %v527, 0.0
      %v531 = vmax.f32 %v528, 0.0
      %v532 = vsel %vm402, %v529, 0.0
      %v533 = vsel %vm402, %v530, 0.0
      %v534 = vsel %vm402, %v531, 0.0
      %v535 = vpack.c.bf16 %v532, %v532
      %v536 = vpack.c.bf16 %v533, %v533
      %v537 = vpack.c.bf16 %v534, %v534
      %v541 = vunpack.c.l.b16 %v535
      %v542 = vunpack.c.l.b16 %v536
      %v543 = vunpack.c.l.b16 %v537
      %v544 = vpack.c.b16 %v542, %v541
      %v545 = vpack.c.b16 %v543, %v543
      %vm547 = vcmask 1041408
      %v548 = vrot.slane %v544, 6
      %v549 = vrot.slane %v545, 6
      %v550 = vsel %vm547, %v548, %v549
      %551 = vrot.lane.b32.xlu0 %v548, 127
      %v552 = vpop.permute.xlu0 %551
      %553 = vrot.lane.b32.xlu0 %v550, 127
      %v554 = vpop.permute.xlu0 %553
      %v555 = vpack.c.b16 %v541, %v541
      %v556 = vpack.c.b16 %v543, %v542
      %557 = vrot.lane.b32.xlu0 %v555, 126
      %v558 = vpop.permute.xlu0 %557
      %559 = vrot.lane.b32.xlu0 %v556, 126
      %v560 = vpop.permute.xlu0 %559
      %vm561 = vcmask 1045504
      %v562 = vrot.slane %v544, 2
      %v563 = vrot.slane %v545, 2
      %v564 = vsel %vm561, %v562, %v563
      %565 = vrot.lane.b32.xlu0 %v562, 118
      %v566 = vpop.permute.xlu0 %565
      %567 = vrot.lane.b32.xlu0 %v564, 118
      %v568 = vpop.permute.xlu0 %567
      %570 = vrot.lane.b32.xlu0 %v544, 117
      %v571 = vpop.permute.xlu0 %570
      %572 = vrot.lane.b32.xlu0 %v545, 117
      %v573 = vpop.permute.xlu0 %572
      %575 = vrot.lane.b32.xlu0 %v548, 116
      %v576 = vpop.permute.xlu0 %575
      %577 = vrot.lane.b32.xlu0 %v550, 116
      %v578 = vpop.permute.xlu0 %577
      %579 = vrot.lane.b32.xlu0 %v555, 108
      %v580 = vpop.permute.xlu0 %579
      %581 = vrot.lane.b32.xlu0 %v556, 108
      %v582 = vpop.permute.xlu0 %581
      %583 = vrot.lane.b32.xlu0 %v562, 107
      %v584 = vpop.permute.xlu0 %583
      %585 = vrot.lane.b32.xlu0 %v564, 107
      %v586 = vpop.permute.xlu0 %585
      %588 = vrot.lane.b32.xlu0 %v544, 106
      %v589 = vpop.permute.xlu0 %588
      %590 = vrot.lane.b32.xlu0 %v545, 106
      %v591 = vpop.permute.xlu0 %590
      %vm593 = vcmask 1041408
      %v596 = vsel %vm593, %v545, %v552
      %vm598 = vcmask 1043456
      %v601 = vsel %vm598, %v554, %v558
      %vm603 = vcmask 1045504
      %v606 = vsel %vm603, %v560, %v566
      %v610 = vsel %vm593, %v573, %v576
      %v614 = vsel %vm598, %v578, %v580
      %v618 = vsel %vm603, %v582, %v584
      %v620 = vld [vmem:[%s8] sm:$0xf]
      %v621 = vld [vmem:[%s9] sm:$0xf]
      %623 = vset.pattern.permute.xlu0 0
      %624 = vperm.xlu0 %623, %v621
      %v625 = vpop.permute.xlu0 %624
      %628 = vst [vmem:[#allocation1] ss:$4 sm:$0xff] %v620
      %v629 = vld.sshfl [vmem:[#allocation1] sm:$0xff pattern:$0x73625140]
      %v630 = vld.sshfl [vmem:[#allocation1 + $0x8] sm:$0xff pattern:$0x73625140]
      %vm632 = vcmask 424960
      %v633 = vsel %vm632, %v630, 0
      %v636 = vsel %vm593, %v591, 0
      %638 = vmatpush.bf16.msra.mxu0 %v614
      %639 = vmatpush.bf16.msra.mxu0 %v610
      %640 = vmatpush.bf16.msra.mxu0 %v571
      %641 = vmatpush.bf16.msra.mxu0 %v568
      %642 = vmatpush.bf16.msra.mxu0 %v606
      %643 = vmatpush.bf16.msra.mxu0 %v601
      %644 = vmatpush.bf16.msra.mxu0 %v596
      %645 = vmatpush.bf16.msra.mxu0 %v544
      %646 = vmatmul.bf16.gmra.mxu0 %v629
      %v647 = vpop.f32.mrf.mxu0
      %v648 = vadd.f32 %v625, %v647
      %v649 = vpop.f32.mrf.mxu0
      %650 = vdwg.mxu0
      %651 = vmatpush.bf16.msra.mxu0 0
      %652 = vmatpush.bf16.msra.mxu0 0
      %653 = vmatpush.bf16.msra.mxu0 0
      %654 = vmatpush.bf16.msra.mxu0 0
      %655 = vmatpush.bf16.msra.mxu0 %v636
      %656 = vmatpush.bf16.msra.mxu0 %v589
      %657 = vmatpush.bf16.msra.mxu0 %v586
      %658 = vmatpush.bf16.msra.mxu0 %v618
      %659 = vmatmul.bf16.gmra.mxu0 %v633
      %v660 = vpop.f32.mrf.mxu0
      %v661 = vadd.f32 %v648, %v660
      %v662 = vpop.f32.mrf.mxu0
      %663 = vdwg.mxu0
      %665 = vrot.lane.b32.xlu0 %v661, 11
      %v666 = vpop.permute.xlu0 %665
      %668 = vst.msk [vmem:[%s359 + $0x14] sm:$0xf] %vm482, %v666
      %p669 = scmp.lt.s32.totalorder %s21, 1
      %s670 = scalar_select %p669, %s21, 1
      %s671 = smul.addr %s670, 3
      %s672 = smul.addr %s671, 8
      %s673 = scalar_lea.vmem %s10, %s672
      // Predicated region
      $region61: #{fcdensenet_forward.14} parent=59 // pred_check
        %p674 = pneg %p254
      $region62: #{fcdensenet_forward.14} parent=59 // pred_check_branch
        %676 = sbr.rel (%p674) target = $region64
      $region63: #{fcdensenet_forward.14} parent=59 // pred_region
        _
      $region64: #{fcdensenet_forward.14} parent=59 // pred_fallthru
        _
    $region60: #{fcdensenet_forward.14} parent=5 // pred_fallthru
      _
    %p677 = scmp.le.s32.totalorder 2, %s16
    // Predicated region
    $region65: #{fcdensenet_forward.14} parent=5 // pred_check
      %p678 = pneg %p677
    $region66: #{fcdensenet_forward.14} parent=5 // pred_check_branch
      %680 = sbr.rel (%p678) target = $region68
    $region67: #{fcdensenet_forward.14} parent=5 // pred_region
      %s681 = ssub.s32 %s16, 2
      // Predicated region
      $region69: #{fcdensenet_forward.14} parent=67 // pred_check
        %p682 = pneg %p260
      $region70: #{fcdensenet_forward.14} parent=67 // pred_check_branch
        %684 = sbr.rel (%p682) target = $region72
      $region71: #{fcdensenet_forward.14} parent=67 // pred_region
        %p685 = scmp.lt.s32.totalorder %s22, 1
        %s686 = scalar_select %p685, %s22, 1
        %s687 = smul.addr %s686, 3
        %s688 = smul.addr %s687, 8
        %s689 = scalar_lea.vmem %s10, %s688
      $region72: #{fcdensenet_forward.14} parent=67 // pred_fallthru
        _
    $region68: #{fcdensenet_forward.14} parent=5 // pred_fallthru
      _
  $region6: #{fcdensenet_forward.14} parent=0 // loop_footer
    %s20 = sadd.s32 1, %s16
  $region7: #{fcdensenet_forward.14} parent=0 // loop_footer_branch
    %15 = sbr.rel target = $region3
  $region8: #{fcdensenet_forward.14} parent=0 // loop_exit
    _

// kernel: fcdensenet_forward.15
$region0: #{fcdensenet_forward.15}
  #allocation0 [shape = 'u32[]', space=smem, size = 0x4, offset = 0x4, fixed_abs, tag = 'smem constant byte address 0x4 - core index']
  #allocation1 [shape = 'u32[72,128]{1,0:T(1,128)}', space=vmem, size = 0x9000, scoped, tag = 'internal scratch']
  %s0 = inlined_call_operand.vmem [shape: f32[2,24,100], index: 0, kind: input, shape index: {}]
  %s1 = inlined_call_operand.vmem [shape: f32[1,100], index: 1, kind: input, shape index: {}]
  %s2 = inlined_call_operand.vmem [shape: f32[24,1], index: 2, kind: input, shape index: {}]
  %s3 = inlined_call_operand.vmem [shape: f32[24,1], index: 3, kind: input, shape index: {}]
  %s4 = inlined_call_operand.vmem [shape: bf16[24,24], index: 4, kind: input, shape index: {}]
  %s5 = inlined_call_operand.vmem [shape: f32[24,1], index: 5, kind: input, shape index: {}]
  %s6 = inlined_call_operand.vmem [shape: f32[89,36], index: 6, kind: input, shape index: {}]
  %s7 = inlined_call_operand.vmem [shape: f32[2,24,36], index: 7, kind: output, shape index: {}]
  %s8 = sld [smem:[#allocation0]]
  $region61: #{fcdensenet_forward.15} parent=0
    _
  %s10 = ssub.s32 1, %s8
  %s11 = scalar_select 0, %s10, %s8
  loop: start=0, step=1, limit=4
  $region2: #{fcdensenet_forward.15} parent=0 // loop_pre_header
    _
  $region3: #{fcdensenet_forward.15} parent=0 // loop_header
    %s13 = sphi 0, %s17
    %p14 = scmp.ge.s32.totalorder %s13, 4
    %s23 = sphi 0, %s25
    %s26 = sphi 0, %s23
    %s27 = sphi 0, %s26
    %s43 = sphi 0, %s27
    %s47 = sphi 0, %s47
    %s49 = sphi 0, %s47
    %s50 = sphi 0, %s49
    %s64 = sphi 0, %s50
    %s68 = sphi 0, %s68
    %s70 = sphi 0, %s68
    %s71 = sphi 0, %s70
    %s85 = sphi 0, %s71
    %s89 = sphi 0, %s89
    %s91 = sphi 0, %s89
    %s92 = sphi 0, %s91
    %s106 = sphi 0, %s92
    %s110 = sphi 0, %s110
    %s112 = sphi 0, %s110
    %s113 = sphi 0, %s112
    %s127 = sphi 0, %s113
    %s131 = sphi 0, %s131
    %s133 = sphi 0, %s131
    %s134 = sphi 0, %s133
    %s148 = sphi 0, %s134
    %s152 = sphi 0, %s152
    %s154 = sphi 0, %s152
    %s155 = sphi 0, %s154
    %s169 = sphi 0, %s155
    %s175 = sphi 0, %s177
    %s178 = sphi 0, %s175
    %s179 = sphi 0, %s178
    %s195 = sphi 0, %s179
  $region4: #{fcdensenet_forward.15} parent=0 // loop_header_branch
    %16 = sbr.rel (%p14) target = $region8
  $region5: #{fcdensenet_forward.15} parent=0 // loop_body
    %s18 = ssub.s32 %s13, 1
    %s19 = ssub.s32 %s13, 2
    %s20 = sadd.s32 %s13, 1
    %s21 = ssub.s32 %s13, %s20
    %p22 = scmp.eq.s32.totalorder %s21, 0
    %s24 = sadd.s32 %s23, 1
    %s25 = scalar_select %p22, %s23, %s24
    %p28 = pneg %p22
    %p29 = scmp.eq.s32.totalorder %s13, 1
    %p30 = por %p28, %p29
    %p31 = scmp.ne.s32.totalorder %s23, %s26
    %p32 = scmp.eq.s32.totalorder %s13, 0
    %p33 = por %p31, %p32
    %p34 = scmp.ne.s32.totalorder %s23, %s26
    %p35 = scmp.eq.s32.totalorder %s18, 1
    %p36 = por %p34, %p35
    %p37 = scmp.ne.s32.totalorder %s26, %s27
    %p38 = scmp.eq.s32.totalorder %s18, 0
    %p39 = por %p37, %p38
    %p40 = scmp.ne.s32.totalorder %s26, %s27
    %p41 = scmp.eq.s32.totalorder %s19, 1
    %p42 = por %p40, %p41
    %p44 = scmp.ne.s32.totalorder %s27, %s43
    %p45 = scmp.eq.s32.totalorder %s19, 0
    %p46 = por %p44, %p45
    %s48 = sadd.s32 %s47, 1
    %p51 = scmp.eq.s32.totalorder %s13, 1
    %p52 = scmp.ne.s32.totalorder %s47, %s49
    %p53 = scmp.eq.s32.totalorder %s13, 0
    %p54 = por %p52, %p53
    %p55 = scmp.ne.s32.totalorder %s47, %s49
    %p56 = scmp.eq.s32.totalorder %s18, 1
    %p57 = por %p55, %p56
    %p58 = scmp.ne.s32.totalorder %s49, %s50
    %p59 = scmp.eq.s32.totalorder %s18, 0
    %p60 = por %p58, %p59
    %p61 = scmp.ne.s32.totalorder %s49, %s50
    %p62 = scmp.eq.s32.totalorder %s19, 1
    %p63 = por %p61, %p62
    %p65 = scmp.ne.s32.totalorder %s50, %s64
    %p66 = scmp.eq.s32.totalorder %s19, 0
    %p67 = por %p65, %p66
    %s69 = sadd.s32 %s68, 1
    %p72 = scmp.eq.s32.totalorder %s13, 1
    %p73 = scmp.ne.s32.totalorder %s68, %s70
    %p74 = scmp.eq.s32.totalorder %s13, 0
    %p75 = por %p73, %p74
    %p76 = scmp.ne.s32.totalorder %s68, %s70
    %p77 = scmp.eq.s32.totalorder %s18, 1
    %p78 = por %p76, %p77
    %p79 = scmp.ne.s32.totalorder %s70, %s71
    %p80 = scmp.eq.s32.totalorder %s18, 0
    %p81 = por %p79, %p80
    %p82 = scmp.ne.s32.totalorder %s70, %s71
    %p83 = scmp.eq.s32.totalorder %s19, 1
    %p84 = por %p82, %p83
    %p86 = scmp.ne.s32.totalorder %s71, %s85
    %p87 = scmp.eq.s32.totalorder %s19, 0
    %p88 = por %p86, %p87
    %s90 = sadd.s32 %s89, 1
    %p93 = scmp.eq.s32.totalorder %s13, 1
    %p94 = scmp.ne.s32.totalorder %s89, %s91
    %p95 = scmp.eq.s32.totalorder %s13, 0
    %p96 = por %p94, %p95
    %p97 = scmp.ne.s32.totalorder %s89, %s91
    %p98 = scmp.eq.s32.totalorder %s18, 1
    %p99 = por %p97, %p98
    %p100 = scmp.ne.s32.totalorder %s91, %s92
    %p101 = scmp.eq.s32.totalorder %s18, 0
    %p102 = por %p100, %p101
    %p103 = scmp.ne.s32.totalorder %s91, %s92
    %p104 = scmp.eq.s32.totalorder %s19, 1
    %p105 = por %p103, %p104
    %p107 = scmp.ne.s32.totalorder %s92, %s106
    %p108 = scmp.eq.s32.totalorder %s19, 0
    %p109 = por %p107, %p108
    %s111 = sadd.s32 %s110, 1
    %p114 = scmp.eq.s32.totalorder %s13, 1
    %p115 = scmp.ne.s32.totalorder %s110, %s112
    %p116 = scmp.eq.s32.totalorder %s13, 0
    %p117 = por %p115, %p116
    %p118 = scmp.ne.s32.totalorder %s110, %s112
    %p119 = scmp.eq.s32.totalorder %s18, 1
    %p120 = por %p118, %p119
    %p121 = scmp.ne.s32.totalorder %s112, %s113
    %p122 = scmp.eq.s32.totalorder %s18, 0
    %p123 = por %p121, %p122
    %p124 = scmp.ne.s32.totalorder %s112, %s113
    %p125 = scmp.eq.s32.totalorder %s19, 1
    %p126 = por %p124, %p125
    %p128 = scmp.ne.s32.totalorder %s113, %s127
    %p129 = scmp.eq.s32.totalorder %s19, 0
    %p130 = por %p128, %p129
    %s132 = sadd.s32 %s131, 1
    %p135 = scmp.eq.s32.totalorder %s13, 1
    %p136 = scmp.ne.s32.totalorder %s131, %s133
    %p137 = scmp.eq.s32.totalorder %s13, 0
    %p138 = por %p136, %p137
    %p139 = scmp.ne.s32.totalorder %s131, %s133
    %p140 = scmp.eq.s32.totalorder %s18, 1
    %p141 = por %p139, %p140
    %p142 = scmp.ne.s32.totalorder %s133, %s134
    %p143 = scmp.eq.s32.totalorder %s18, 0
    %p144 = por %p142, %p143
    %p145 = scmp.ne.s32.totalorder %s133, %s134
    %p146 = scmp.eq.s32.totalorder %s19, 1
    %p147 = por %p145, %p146
    %p149 = scmp.ne.s32.totalorder %s134, %s148
    %p150 = scmp.eq.s32.totalorder %s19, 0
    %p151 = por %p149, %p150
    %s153 = sadd.s32 %s152, 1
    %p156 = scmp.eq.s32.totalorder %s13, 1
    %p157 = scmp.ne.s32.totalorder %s152, %s154
    %p158 = scmp.eq.s32.totalorder %s13, 0
    %p159 = por %p157, %p158
    %p160 = scmp.ne.s32.totalorder %s152, %s154
    %p161 = scmp.eq.s32.totalorder %s18, 1
    %p162 = por %p160, %p161
    %p163 = scmp.ne.s32.totalorder %s154, %s155
    %p164 = scmp.eq.s32.totalorder %s18, 0
    %p165 = por %p163, %p164
    %p166 = scmp.ne.s32.totalorder %s154, %s155
    %p167 = scmp.eq.s32.totalorder %s19, 1
    %p168 = por %p166, %p167
    %p170 = scmp.ne.s32.totalorder %s155, %s169
    %p171 = scmp.eq.s32.totalorder %s19, 0
    %p172 = por %p170, %p171
    %s173 = ssub.s32 %s13, %s20
    %p174 = scmp.eq.s32.totalorder %s173, 0
    %s176 = sadd.s32 %s175, 1
    %s177 = scalar_select %p174, %s175, %s176
    %p180 = pneg %p174
    %p181 = scmp.eq.s32.totalorder %s13, 1
    %p182 = por %p180, %p181
    %p183 = scmp.ne.s32.totalorder %s175, %s178
    %p184 = scmp.eq.s32.totalorder %s13, 0
    %p185 = por %p183, %p184
    %p186 = scmp.ne.s32.totalorder %s175, %s178
    %p187 = scmp.eq.s32.totalorder %s18, 1
    %p188 = por %p186, %p187
    %p189 = scmp.ne.s32.totalorder %s178, %s179
    %p190 = scmp.eq.s32.totalorder %s18, 0
    %p191 = por %p189, %p190
    %p192 = scmp.ne.s32.totalorder %s178, %s179
    %p193 = scmp.eq.s32.totalorder %s19, 1
    %p194 = por %p192, %p193
    %p196 = scmp.ne.s32.totalorder %s179, %s195
    %p197 = scmp.eq.s32.totalorder %s19, 0
    %p198 = por %p196, %p197
    %p199 = scmp.le.s32.totalorder 1, %s13
    %p200 = scmp.lt.s32.totalorder %s13, 3
    %p201 = pnand %p199, %p200
    %p202 = pneg %p201
    // Predicated region
    $region9: #{fcdensenet_forward.15} parent=5 // pred_check
      _
    $region10: #{fcdensenet_forward.15} parent=5 // pred_check_branch
      %204 = sbr.rel (%p201) target = $region12
    $region11: #{fcdensenet_forward.15} parent=5 // pred_region
      %s205 = ssub.s32 %s13, 1
      // Predicated region
      $region13: #{fcdensenet_forward.15} parent=11 // pred_check
        %p206 = pneg %p60
      $region14: #{fcdensenet_forward.15} parent=11 // pred_check_branch
        %208 = sbr.rel (%p206) target = $region16
      $region15: #{fcdensenet_forward.15} parent=11 // pred_region
        _
      $region16: #{fcdensenet_forward.15} parent=11 // pred_fallthru
        _
      // Predicated region
      $region17: #{fcdensenet_forward.15} parent=11 // pred_check
        %p209 = pneg %p81
      $region18: #{fcdensenet_forward.15} parent=11 // pred_check_branch
        %211 = sbr.rel (%p209) target = $region20
      $region19: #{fcdensenet_forward.15} parent=11 // pred_region
        _
      $region20: #{fcdensenet_forward.15} parent=11 // pred_fallthru
        _
      // Predicated region
      $region21: #{fcdensenet_forward.15} parent=11 // pred_check
        %p212 = pneg %p102
      $region22: #{fcdensenet_forward.15} parent=11 // pred_check_branch
        %214 = sbr.rel (%p212) target = $region24
      $region23: #{fcdensenet_forward.15} parent=11 // pred_region
        _
      $region24: #{fcdensenet_forward.15} parent=11 // pred_fallthru
        _
      // Predicated region
      $region25: #{fcdensenet_forward.15} parent=11 // pred_check
        %p215 = pneg %p123
      $region26: #{fcdensenet_forward.15} parent=11 // pred_check_branch
        %217 = sbr.rel (%p215) target = $region28
      $region27: #{fcdensenet_forward.15} parent=11 // pred_region
        _
      $region28: #{fcdensenet_forward.15} parent=11 // pred_fallthru
        _
      // Predicated region
      $region29: #{fcdensenet_forward.15} parent=11 // pred_check
        %p218 = pneg %p144
      $region30: #{fcdensenet_forward.15} parent=11 // pred_check_branch
        %220 = sbr.rel (%p218) target = $region32
      $region31: #{fcdensenet_forward.15} parent=11 // pred_region
        _
      $region32: #{fcdensenet_forward.15} parent=11 // pred_fallthru
        _
      // Predicated region
      $region33: #{fcdensenet_forward.15} parent=11 // pred_check
        %p221 = pneg %p165
      $region34: #{fcdensenet_forward.15} parent=11 // pred_check_branch
        %223 = sbr.rel (%p221) target = $region36
      $region35: #{fcdensenet_forward.15} parent=11 // pred_region
        _
      $region36: #{fcdensenet_forward.15} parent=11 // pred_fallthru
        _
    $region12: #{fcdensenet_forward.15} parent=5 // pred_fallthru
      _
    %p224 = scmp.lt.s32.totalorder %s13, 2
    // Predicated region
    $region37: #{fcdensenet_forward.15} parent=5 // pred_check
      %p225 = pneg %p224
    $region38: #{fcdensenet_forward.15} parent=5 // pred_check_branch
      %227 = sbr.rel (%p225) target = $region40
    $region39: #{fcdensenet_forward.15} parent=5 // pred_region
      // Predicated region
      $region41: #{fcdensenet_forward.15} parent=39 // pred_check
        %p228 = pneg %p33
      $region42: #{fcdensenet_forward.15} parent=39 // pred_check_branch
        %230 = sbr.rel (%p228) target = $region44
      $region43: #{fcdensenet_forward.15} parent=39 // pred_region
        %p231 = scmp.lt.s32.totalorder %s13, 1
        %s232 = scalar_select %p231, %s13, 1
        %s233 = smul.addr %s232, 3
        %s234 = smul.addr %s233, 8
        %s235 = scalar_lea.vmem %s0, %s234
      $region44: #{fcdensenet_forward.15} parent=39 // pred_fallthru
        _
    $region40: #{fcdensenet_forward.15} parent=5 // pred_fallthru
      _
    %p236 = scmp.le.s32.totalorder 1, %s13
    %p237 = scmp.lt.s32.totalorder %s13, 3
    %p238 = pnand %p236, %p237
    %p239 = pneg %p238
    // Predicated region
    $region45: #{fcdensenet_forward.15} parent=5 // pred_check
      _
    $region46: #{fcdensenet_forward.15} parent=5 // pred_check_branch
      %241 = sbr.rel (%p238) target = $region48
    $region47: #{fcdensenet_forward.15} parent=5 // pred_region
      %s242 = ssub.s32 %s13, 1
      %p243 = scmp.lt.s32.totalorder %s18, 1
      %s244 = scalar_select %p243, %s18, 1
      %s245 = smul.addr %s244, 3
      %s246 = smul.addr %s245, 8
      %s247 = scalar_lea.vmem %s0, %s246
      %p248 = pneg %p39
      %p249 = pneg %p36
      %p250 = pneg %p60
      %p251 = pneg %p57
      %p252 = pneg %p81
      %p253 = pneg %p78
      %p254 = pneg %p102
      %p255 = pneg %p99
      %p256 = pneg %p123
      %p257 = pneg %p120
      %p258 = pneg %p144
      %p259 = pneg %p141
      %p260 = pneg %p165
      %p261 = pneg %p162
      %p262 = pneg %p191
      %p263 = pneg %p188
      %p264 = scmp.lt.s32.totalorder %s18, 1
      %s265 = scalar_select %p264, %s18, 1
      %s266 = smul.addr %s265, 3
      %s267 = smul.addr %s266, 8
      %s268 = scalar_lea.vmem %s7, %s267
      %p269 = scmp.lt.s32.totalorder %s18, 1
      %s270 = scalar_select %p269, %s18, 1
      %s271 = smul.addr %s270, 3
      %s272 = smul.addr %s271, 8
      %s273 = scalar_lea.vmem %s0, %s272
      %p274 = scmp.lt.s32.totalorder %s18, 1
      %s275 = scalar_select %p274, %s18, 1
      %s276 = smul.addr %s275, 3
      %s277 = smul.addr %s276, 8
      %s278 = scalar_lea.vmem %s7, %s277
      %v280 = vld [vmem:[%s1] sm:$0x1]
      %vm281 = vcmp.gt.f32.partialorder %v280, 0.5
      %v282 = vld [vmem:[%s273] sm:$0xff]
      %v283 = vld [vmem:[%s273 + $0x8] sm:$0xff]
      %v284 = vld [vmem:[%s273 + $0x10] sm:$0xff]
      %v285 = vld [vmem:[%s2] sm:$0xff]
      %v286 = vld [vmem:[%s2 + $0x8] sm:$0xff]
      %v287 = vld [vmem:[%s2 + $0x10] sm:$0xff]
      %289 = vset.pattern.permute.xlu0 0
      %290 = vperm.xlu0 %289, %v285
      %v291 = vpop.permute.xlu0 %290
      %294 = vset.pattern.permute.xlu0 0
      %295 = vperm.xlu0 %294, %v286
      %v296 = vpop.permute.xlu0 %295
      %299 = vset.pattern.permute.xlu0 0
      %300 = vperm.xlu0 %299, %v287
      %v301 = vpop.permute.xlu0 %300
      %v303 = vmul.f32 %v282, %v291
      %v304 = vmul.f32 %v283, %v296
      %v305 = vmul.f32 %v284, %v301
      %v306 = vld [vmem:[%s3] sm:$0xff]
      %v307 = vld [vmem:[%s3 + $0x8] sm:$0xff]
      %v308 = vld [vmem:[%s3 + $0x10] sm:$0xff]
      %310 = vset.pattern.permute.xlu0 0
      %311 = vperm.xlu0 %310, %v306
      %v312 = vpop.permute.xlu0 %311
      %315 = vset.pattern.permute.xlu0 0
      %316 = vperm.xlu0 %315, %v307
      %v317 = vpop.permute.xlu0 %316
      %320 = vset.pattern.permute.xlu0 0
      %321 = vperm.xlu0 %320, %v308
      %v322 = vpop.permute.xlu0 %321
      %v324 = vadd.f32 %v303, %v312
      %v325 = vadd.f32 %v304, %v317
      %v326 = vadd.f32 %v305, %v322
      %v327 = vmax.f32 %v324, 0.0
      %v328 = vmax.f32 %v325, 0.0
      %v329 = vmax.f32 %v326, 0.0
      %v330 = vsel %vm281, 1, 0
      %v331 = vperm.slane %v330, 0
      %vm332 = vcmp.eq.s32.totalorder %v331, 1
      %v333 = vsel %vm332, %v327, 0.0
      %v334 = vsel %vm332, %v328, 0.0
      %v335 = vsel %vm332, %v329, 0.0
      %v336 = vld [vmem:[%s4] sm:$0xf]
      %v337 = vld [vmem:[%s4 + $0x4] sm:$0xf]
      %v338 = vld [vmem:[%s4 + $0x8] sm:$0xf]
      %v339 = vpack.c.bf16 %v334, %v333
      %v340 = vpack.c.bf16 %v335, %v335
      %v341 = vld [vmem:[%s5] sm:$0xff]
      %v342 = vld [vmem:[%s5 + $0x8] sm:$0xff]
      %v343 = vld [vmem:[%s5 + $0x10] sm:$0xff]
      %345 = vset.pattern.permute.xlu0 0
      %346 = vperm.xlu0 %345, %v341
      %v347 = vpop.permute.xlu0 %346
      %350 = vset.pattern.permute.xlu0 0
      %351 = vperm.xlu0 %350, %v342
      %v352 = vpop.permute.xlu0 %351
      %355 = vset.pattern.permute.xlu0 0
      %356 = vperm.xlu0 %355, %v343
      %v357 = vpop.permute.xlu0 %356
      %v362 = vunpack.c.l.b16 %v336
      %v363 = vunpack.c.l.b16 %v337
      %v364 = vunpack.c.l.b16 %v338
      %v365 = vpack.c.b16 %v363, %v362
      %v366 = vpack.c.b16 %v364, %v364
      %vm367 = vcmask 195584
      %v369 = vsel %vm367, %v365, 0
      %v372 = vsel %vm367, %v366, 0
      %vm374 = vcmask 1043456
      %v376 = vsel %vm374, %v340, 0
      %378 = vmatpush.bf16.msra.mxu0 0
      %379 = vmatpush.bf16.msra.mxu0 0
      %380 = vmatpush.bf16.msra.mxu0 0
      %381 = vmatpush.bf16.msra.mxu0 0
      %382 = vmatpush.bf16.msra.mxu0 0
      %383 = vmatpush.bf16.msra.mxu0 0
      %384 = vmatpush.bf16.msra.mxu0 %v376
      %385 = vmatpush.bf16.msra.mxu0 %v339
      %386 = vmatmul.bf16.gmra.mxu0 %v369
      %v387 = vpop.f32.mrf.mxu0
      %v388 = vadd.f32 %v347, %v387
      %v389 = vpop.f32.mrf.mxu0
      %v390 = vadd.f32 %v352, %v389
      %391 = vmatmul.bf16.gmra.mxu0 %v372
      %v392 = vpop.f32.mrf.mxu0
      %v393 = vadd.f32 %v357, %v392
      %v394 = vpop.f32.mrf.mxu0
      %395 = vdwg.mxu0
      %399 = vrot.lane.b32.xlu0 %v388, 127
      %v400 = vpop.permute.xlu0 %399
      %401 = vrot.lane.b32.xlu0 %v390, 127
      %v402 = vpop.permute.xlu0 %401
      %403 = vrot.lane.b32.xlu0 %v393, 127
      %v404 = vpop.permute.xlu0 %403
      %v408 = vmax.f32 %v388, %v400
      %v409 = vmax.f32 %v390, %v402
      %v410 = vmax.f32 %v393, %v404
      %414 = vrot.lane.b32.xlu0 %v408, 118
      %v415 = vpop.permute.xlu0 %414
      %416 = vrot.lane.b32.xlu0 %v409, 118
      %v417 = vpop.permute.xlu0 %416
      %418 = vrot.lane.b32.xlu0 %v410, 118
      %v419 = vpop.permute.xlu0 %418
      %v423 = vmax.f32 %v408, %v415
      %v424 = vmax.f32 %v409, %v417
      %v425 = vmax.f32 %v410, %v419
      %v426 = vld [vmem:[%s6] sm:$0xff]
      %v427 = vld [vmem:[%s6 + $0x8] sm:$0xff]
      %v428 = vld [vmem:[%s6 + $0x10] sm:$0xff]
      %v429 = vld [vmem:[%s6 + $0x18] sm:$0xff]
      %v430 = vld [vmem:[%s6 + $0x20] sm:$0xff]
      %v431 = vld [vmem:[%s6 + $0x28] sm:$0xff]
      %v432 = vld [vmem:[%s6 + $0x30] sm:$0xff]
      %v433 = vld [vmem:[%s6 + $0x38] sm:$0xff]
      %v434 = vld [vmem:[%s6 + $0x40] sm:$0xff]
      %v435 = vld [vmem:[%s6 + $0x48] sm:$0xff]
      %v436 = vld [vmem:[%s6 + $0x50] sm:$0xff]
      %v437 = vld [vmem:[%s6 + $0x58] sm:$0x1]
      %vm438 = vcmask 728064
      %v440 = vsel %vm438, %v423, 0
      %v443 = vsel %vm438, %v424, 0
      %v446 = vsel %vm438, %v425, 0
      %vm448 = vcmask 1040384
      %v450 = vsel %vm448, %v437, 0
      %452 = vmatpush.msra.mxu0 0.0
      %453 = vmatpush.msra.mxu0 0.0
      %454 = vmatpush.msra.mxu0 0.0
      %455 = vmatpush.msra.mxu0 0.0
      %456 = vmatpush.msra.mxu0 %v450
      %457 = vmatpush.msra.mxu0 %v436
      %458 = vmatpush.msra.mxu0 %v435
      %459 = vmatpush.msra.mxu0 %v434
      %460 = vmatpush.msra.mxu0 %v433
      %461 = vmatpush.msra.mxu0 %v432
      %462 = vmatpush.msra.mxu0 %v431
      %463 = vmatpush.msra.mxu0 %v430
      %464 = vmatpush.msra.mxu0 %v429
      %465 = vmatpush.msra.mxu0 %v428
      %466 = vmatpush.msra.mxu0 %v427
      %467 = vmatpush.msra.mxu0 %v426
      %468 = vmatmul.f32.gmra.mxu0 %v440
      %v469 = vpop.f32.mrf.mxu0
      %v470 = vadd.f32 0.0, %v469
      %471 = vmatmul.f32.gmra.mxu0 %v443
      %v472 = vpop.f32.mrf.mxu0
      %v473 = vadd.f32 0.0, %v472
      %474 = vmatmul.f32.gmra.mxu0 %v446
      %v475 = vpop.f32.mrf.mxu0
      %v476 = vadd.f32 0.0, %v475
      %477 = vdwg.mxu0
      %vm478 = vcmask 293888
      %479 = vst.msk [vmem:[%s278] sm:$0xff] %vm478, %v470
      %480 = vst.msk [vmem:[%s278 + $0x8] sm:$0xff] %vm478, %v473
      %481 = vst.msk [vmem:[%s278 + $0x10] sm:$0xff] %vm478, %v476
      %p482 = scmp.lt.s32.totalorder %s18, 1
      %s483 = scalar_select %p482, %s18, 1
      %s484 = smul.addr %s483, 3
      %s485 = smul.addr %s484, 8
      %s486 = scalar_lea.vmem %s7, %s485
      // Predicated region
      $region49: #{fcdensenet_forward.15} parent=47 // pred_check
        %p487 = pneg %p188
      $region50: #{fcdensenet_forward.15} parent=47 // pred_check_branch
        %489 = sbr.rel (%p487) target = $region52
      $region51: #{fcdensenet_forward.15} parent=47 // pred_region
        _
      $region52: #{fcdensenet_forward.15} parent=47 // pred_fallthru
        _
    $region48: #{fcdensenet_forward.15} parent=5 // pred_fallthru
      _
    %p490 = scmp.le.s32.totalorder 2, %s13
    // Predicated region
    $region53: #{fcdensenet_forward.15} parent=5 // pred_check
      %p491 = pneg %p490
    $region54: #{fcdensenet_forward.15} parent=5 // pred_check_branch
      %493 = sbr.rel (%p491) target = $region56
    $region55: #{fcdensenet_forward.15} parent=5 // pred_region
      %s494 = ssub.s32 %s13, 2
      // Predicated region
      $region57: #{fcdensenet_forward.15} parent=55 // pred_check
        %p495 = pneg %p194
      $region58: #{fcdensenet_forward.15} parent=55 // pred_check_branch
        %497 = sbr.rel (%p495) target = $region60
      $region59: #{fcdensenet_forward.15} parent=55 // pred_region
        %p498 = scmp.lt.s32.totalorder %s19, 1
        %s499 = scalar_select %p498, %s19, 1
        %s500 = smul.addr %s499, 3
        %s501 = smul.addr %s500, 8
        %s502 = scalar_lea.vmem %s7, %s501
      $region60: #{fcdensenet_forward.15} parent=55 // pred_fallthru
        _
    $region56: #{fcdensenet_forward.15} parent=5 // pred_fallthru
      _
  $region6: #{fcdensenet_forward.15} parent=0 // loop_footer
    %s17 = sadd.s32 1, %s13
  $region7: #{fcdensenet_forward.15} parent=0 // loop_footer_branch
    %12 = sbr.rel target = $region3
  $region8: #{fcdensenet_forward.15} parent=0 // loop_exit
    _

// kernel: fcdensenet_forward.17
$region0: #{fcdensenet_forward.17}
  #allocation0 [shape = 'u32[]', space=smem, size = 0x4, offset = 0x4, fixed_abs, tag = 'smem constant byte address 0x4 - core index']
  #allocation1 [shape = 'u32[72,128]{1,0:T(1,128)}', space=vmem, size = 0x9000, scoped, tag = 'internal scratch']
  %s0 = inlined_call_operand.vmem [shape: f32[2,8,36], index: 0, kind: input, shape index: {}]
  %s1 = inlined_call_operand.vmem [shape: f32[2,8,1], index: 1, kind: input, shape index: {}]
  %s2 = inlined_call_operand.vmem [shape: f32[1,36], index: 2, kind: input, shape index: {}]
  %s3 = inlined_call_operand.vmem [shape: bf16[32,64], index: 3, kind: input, shape index: {}]
  %s4 = inlined_call_operand.vmem [shape: f32[8,1], index: 4, kind: input, shape index: {}]
  %s5 = inlined_call_operand.vmem [shape: f32[4,24,100], index: 5, kind: input, shape index: {}]
  %s6 = inlined_call_operand.vmem [shape: f32[2,8,100], index: 6, kind: output, shape index: {}]
  %s7 = sld [smem:[#allocation0]]
  $region57: #{fcdensenet_forward.17} parent=0
    _
  %s9 = ssub.s32 1, %s7
  %s10 = scalar_select 0, %s9, %s7
  loop: start=0, step=1, limit=4
  $region2: #{fcdensenet_forward.17} parent=0 // loop_pre_header
    _
  $region3: #{fcdensenet_forward.17} parent=0 // loop_header
    %s12 = sphi 0, %s16
    %p13 = scmp.ge.s32.totalorder %s12, 4
    %s22 = sphi 0, %s24
    %s25 = sphi 0, %s22
    %s26 = sphi 0, %s25
    %s42 = sphi 0, %s26
    %s48 = sphi 0, %s50
    %s51 = sphi 0, %s48
    %s52 = sphi 0, %s51
    %s68 = sphi 0, %s52
    %s72 = sphi 0, %s72
    %s74 = sphi 0, %s72
    %s75 = sphi 0, %s74
    %s89 = sphi 0, %s75
    %s93 = sphi 0, %s93
    %s95 = sphi 0, %s93
    %s96 = sphi 0, %s95
    %s110 = sphi 0, %s96
    %s114 = sphi 0, %s114
    %s116 = sphi 0, %s114
    %s117 = sphi 0, %s116
    %s131 = sphi 0, %s117
    %s135 = sphi 0, %s135
    %s137 = sphi 0, %s135
    %s138 = sphi 0, %s137
    %s152 = sphi 0, %s138
    %s158 = sphi 0, %s160
    %s161 = sphi 0, %s158
    %s162 = sphi 0, %s161
    %s178 = sphi 0, %s162
  $region4: #{fcdensenet_forward.17} parent=0 // loop_header_branch
    %15 = sbr.rel (%p13) target = $region8
  $region5: #{fcdensenet_forward.17} parent=0 // loop_body
    %s17 = ssub.s32 %s12, 1
    %s18 = ssub.s32 %s12, 2
    %s19 = sadd.s32 %s12, 1
    %s20 = ssub.s32 %s12, %s19
    %p21 = scmp.eq.s32.totalorder %s20, 0
    %s23 = sadd.s32 %s22, 1
    %s24 = scalar_select %p21, %s22, %s23
    %p27 = pneg %p21
    %p28 = scmp.eq.s32.totalorder %s12, 1
    %p29 = por %p27, %p28
    %p30 = scmp.ne.s32.totalorder %s22, %s25
    %p31 = scmp.eq.s32.totalorder %s12, 0
    %p32 = por %p30, %p31
    %p33 = scmp.ne.s32.totalorder %s22, %s25
    %p34 = scmp.eq.s32.totalorder %s17, 1
    %p35 = por %p33, %p34
    %p36 = scmp.ne.s32.totalorder %s25, %s26
    %p37 = scmp.eq.s32.totalorder %s17, 0
    %p38 = por %p36, %p37
    %p39 = scmp.ne.s32.totalorder %s25, %s26
    %p40 = scmp.eq.s32.totalorder %s18, 1
    %p41 = por %p39, %p40
    %p43 = scmp.ne.s32.totalorder %s26, %s42
    %p44 = scmp.eq.s32.totalorder %s18, 0
    %p45 = por %p43, %p44
    %s46 = ssub.s32 %s12, %s19
    %p47 = scmp.eq.s32.totalorder %s46, 0
    %s49 = sadd.s32 %s48, 1
    %s50 = scalar_select %p47, %s48, %s49
    %p53 = pneg %p47
    %p54 = scmp.eq.s32.totalorder %s12, 1
    %p55 = por %p53, %p54
    %p56 = scmp.ne.s32.totalorder %s48, %s51
    %p57 = scmp.eq.s32.totalorder %s12, 0
    %p58 = por %p56, %p57
    %p59 = scmp.ne.s32.totalorder %s48, %s51
    %p60 = scmp.eq.s32.totalorder %s17, 1
    %p61 = por %p59, %p60
    %p62 = scmp.ne.s32.totalorder %s51, %s52
    %p63 = scmp.eq.s32.totalorder %s17, 0
    %p64 = por %p62, %p63
    %p65 = scmp.ne.s32.totalorder %s51, %s52
    %p66 = scmp.eq.s32.totalorder %s18, 1
    %p67 = por %p65, %p66
    %p69 = scmp.ne.s32.totalorder %s52, %s68
    %p70 = scmp.eq.s32.totalorder %s18, 0
    %p71 = por %p69, %p70
    %s73 = sadd.s32 %s72, 1
    %p76 = scmp.eq.s32.totalorder %s12, 1
    %p77 = scmp.ne.s32.totalorder %s72, %s74
    %p78 = scmp.eq.s32.totalorder %s12, 0
    %p79 = por %p77, %p78
    %p80 = scmp.ne.s32.totalorder %s72, %s74
    %p81 = scmp.eq.s32.totalorder %s17, 1
    %p82 = por %p80, %p81
    %p83 = scmp.ne.s32.totalorder %s74, %s75
    %p84 = scmp.eq.s32.totalorder %s17, 0
    %p85 = por %p83, %p84
    %p86 = scmp.ne.s32.totalorder %s74, %s75
    %p87 = scmp.eq.s32.totalorder %s18, 1
    %p88 = por %p86, %p87
    %p90 = scmp.ne.s32.totalorder %s75, %s89
    %p91 = scmp.eq.s32.totalorder %s18, 0
    %p92 = por %p90, %p91
    %s94 = sadd.s32 %s93, 1
    %p97 = scmp.eq.s32.totalorder %s12, 1
    %p98 = scmp.ne.s32.totalorder %s93, %s95
    %p99 = scmp.eq.s32.totalorder %s12, 0
    %p100 = por %p98, %p99
    %p101 = scmp.ne.s32.totalorder %s93, %s95
    %p102 = scmp.eq.s32.totalorder %s17, 1
    %p103 = por %p101, %p102
    %p104 = scmp.ne.s32.totalorder %s95, %s96
    %p105 = scmp.eq.s32.totalorder %s17, 0
    %p106 = por %p104, %p105
    %p107 = scmp.ne.s32.totalorder %s95, %s96
    %p108 = scmp.eq.s32.totalorder %s18, 1
    %p109 = por %p107, %p108
    %p111 = scmp.ne.s32.totalorder %s96, %s110
    %p112 = scmp.eq.s32.totalorder %s18, 0
    %p113 = por %p111, %p112
    %s115 = sadd.s32 %s114, 1
    %p118 = scmp.eq.s32.totalorder %s12, 1
    %p119 = scmp.ne.s32.totalorder %s114, %s116
    %p120 = scmp.eq.s32.totalorder %s12, 0
    %p121 = por %p119, %p120
    %p122 = scmp.ne.s32.totalorder %s114, %s116
    %p123 = scmp.eq.s32.totalorder %s17, 1
    %p124 = por %p122, %p123
    %p125 = scmp.ne.s32.totalorder %s116, %s117
    %p126 = scmp.eq.s32.totalorder %s17, 0
    %p127 = por %p125, %p126
    %p128 = scmp.ne.s32.totalorder %s116, %s117
    %p129 = scmp.eq.s32.totalorder %s18, 1
    %p130 = por %p128, %p129
    %p132 = scmp.ne.s32.totalorder %s117, %s131
    %p133 = scmp.eq.s32.totalorder %s18, 0
    %p134 = por %p132, %p133
    %s136 = sadd.s32 %s135, 1
    %p139 = scmp.eq.s32.totalorder %s12, 1
    %p140 = scmp.ne.s32.totalorder %s135, %s137
    %p141 = scmp.eq.s32.totalorder %s12, 0
    %p142 = por %p140, %p141
    %p143 = scmp.ne.s32.totalorder %s135, %s137
    %p144 = scmp.eq.s32.totalorder %s17, 1
    %p145 = por %p143, %p144
    %p146 = scmp.ne.s32.totalorder %s137, %s138
    %p147 = scmp.eq.s32.totalorder %s17, 0
    %p148 = por %p146, %p147
    %p149 = scmp.ne.s32.totalorder %s137, %s138
    %p150 = scmp.eq.s32.totalorder %s18, 1
    %p151 = por %p149, %p150
    %p153 = scmp.ne.s32.totalorder %s138, %s152
    %p154 = scmp.eq.s32.totalorder %s18, 0
    %p155 = por %p153, %p154
    %s156 = ssub.s32 %s12, %s19
    %p157 = scmp.eq.s32.totalorder %s156, 0
    %s159 = sadd.s32 %s158, 1
    %s160 = scalar_select %p157, %s158, %s159
    %p163 = pneg %p157
    %p164 = scmp.eq.s32.totalorder %s12, 1
    %p165 = por %p163, %p164
    %p166 = scmp.ne.s32.totalorder %s158, %s161
    %p167 = scmp.eq.s32.totalorder %s12, 0
    %p168 = por %p166, %p167
    %p169 = scmp.ne.s32.totalorder %s158, %s161
    %p170 = scmp.eq.s32.totalorder %s17, 1
    %p171 = por %p169, %p170
    %p172 = scmp.ne.s32.totalorder %s161, %s162
    %p173 = scmp.eq.s32.totalorder %s17, 0
    %p174 = por %p172, %p173
    %p175 = scmp.ne.s32.totalorder %s161, %s162
    %p176 = scmp.eq.s32.totalorder %s18, 1
    %p177 = por %p175, %p176
    %p179 = scmp.ne.s32.totalorder %s162, %s178
    %p180 = scmp.eq.s32.totalorder %s18, 0
    %p181 = por %p179, %p180
    %p182 = scmp.le.s32.totalorder 1, %s12
    %p183 = scmp.lt.s32.totalorder %s12, 3
    %p184 = pnand %p182, %p183
    %p185 = pneg %p184
    // Predicated region
    $region9: #{fcdensenet_forward.17} parent=5 // pred_check
      _
    $region10: #{fcdensenet_forward.17} parent=5 // pred_check_branch
      %187 = sbr.rel (%p184) target = $region12
    $region11: #{fcdensenet_forward.17} parent=5 // pred_region
      %s188 = ssub.s32 %s12, 1
      // Predicated region
      $region13: #{fcdensenet_forward.17} parent=11 // pred_check
        %p189 = pneg %p85
      $region14: #{fcdensenet_forward.17} parent=11 // pred_check_branch
        %191 = sbr.rel (%p189) target = $region16
      $region15: #{fcdensenet_forward.17} parent=11 // pred_region
        _
      $region16: #{fcdensenet_forward.17} parent=11 // pred_fallthru
        _
      // Predicated region
      $region17: #{fcdensenet_forward.17} parent=11 // pred_check
        %p192 = pneg %p106
      $region18: #{fcdensenet_forward.17} parent=11 // pred_check_branch
        %194 = sbr.rel (%p192) target = $region20
      $region19: #{fcdensenet_forward.17} parent=11 // pred_region
        _
      $region20: #{fcdensenet_forward.17} parent=11 // pred_fallthru
        _
      // Predicated region
      $region21: #{fcdensenet_forward.17} parent=11 // pred_check
        %p195 = pneg %p127
      $region22: #{fcdensenet_forward.17} parent=11 // pred_check_branch
        %197 = sbr.rel (%p195) target = $region24
      $region23: #{fcdensenet_forward.17} parent=11 // pred_region
        _
      $region24: #{fcdensenet_forward.17} parent=11 // pred_fallthru
        _
      // Predicated region
      $region25: #{fcdensenet_forward.17} parent=11 // pred_check
        %p198 = pneg %p148
      $region26: #{fcdensenet_forward.17} parent=11 // pred_check_branch
        %200 = sbr.rel (%p198) target = $region28
      $region27: #{fcdensenet_forward.17} parent=11 // pred_region
        _
      $region28: #{fcdensenet_forward.17} parent=11 // pred_fallthru
        _
    $region12: #{fcdensenet_forward.17} parent=5 // pred_fallthru
      _
    %p201 = scmp.lt.s32.totalorder %s12, 2
    // Predicated region
    $region29: #{fcdensenet_forward.17} parent=5 // pred_check
      %p202 = pneg %p201
    $region30: #{fcdensenet_forward.17} parent=5 // pred_check_branch
      %204 = sbr.rel (%p202) target = $region32
    $region31: #{fcdensenet_forward.17} parent=5 // pred_region
      // Predicated region
      $region33: #{fcdensenet_forward.17} parent=31 // pred_check
        %p205 = pneg %p32
      $region34: #{fcdensenet_forward.17} parent=31 // pred_check_branch
        %207 = sbr.rel (%p205) target = $region36
      $region35: #{fcdensenet_forward.17} parent=31 // pred_region
        %p208 = scmp.lt.s32.totalorder %s12, 1
        %s209 = scalar_select %p208, %s12, 1
        %s210 = smul.addr %s209, 8
        %s211 = scalar_lea.vmem %s0, %s210
      $region36: #{fcdensenet_forward.17} parent=31 // pred_fallthru
        _
      // Predicated region
      $region37: #{fcdensenet_forward.17} parent=31 // pred_check
        %p212 = pneg %p58
      $region38: #{fcdensenet_forward.17} parent=31 // pred_check_branch
        %214 = sbr.rel (%p212) target = $region40
      $region39: #{fcdensenet_forward.17} parent=31 // pred_region
        %p215 = scmp.lt.s32.totalorder %s12, 1
        %s216 = scalar_select %p215, %s12, 1
        %s217 = smul.addr %s216, 8
        %s218 = scalar_lea.vmem %s1, %s217
      $region40: #{fcdensenet_forward.17} parent=31 // pred_fallthru
        _
    $region32: #{fcdensenet_forward.17} parent=5 // pred_fallthru
      _
    %p219 = scmp.le.s32.totalorder 1, %s12
    %p220 = scmp.lt.s32.totalorder %s12, 3
    %p221 = pnand %p219, %p220
    %p222 = pneg %p221
    // Predicated region
    $region41: #{fcdensenet_forward.17} parent=5 // pred_check
      _
    $region42: #{fcdensenet_forward.17} parent=5 // pred_check_branch
      %224 = sbr.rel (%p221) target = $region44
    $region43: #{fcdensenet_forward.17} parent=5 // pred_region
      %s225 = ssub.s32 %s12, 1
      %p226 = scmp.lt.s32.totalorder %s17, 1
      %s227 = scalar_select %p226, %s17, 1
      %s228 = smul.addr %s227, 8
      %s229 = scalar_lea.vmem %s0, %s228
      %p230 = pneg %p38
      %p231 = pneg %p35
      %p232 = scmp.lt.s32.totalorder %s17, 1
      %s233 = scalar_select %p232, %s17, 1
      %s234 = smul.addr %s233, 8
      %s235 = scalar_lea.vmem %s1, %s234
      %p236 = pneg %p64
      %p237 = pneg %p61
      %p238 = pneg %p85
      %p239 = pneg %p82
      %p240 = pneg %p106
      %p241 = pneg %p103
      %p242 = pneg %p127
      %p243 = pneg %p124
      %p244 = pneg %p148
      %p245 = pneg %p145
      %p246 = pneg %p174
      %p247 = pneg %p171
      %p248 = scmp.lt.s32.totalorder %s17, 1
      %s249 = scalar_select %p248, %s17, 1
      %s250 = smul.addr %s249, 8
      %s251 = scalar_lea.vmem %s6, %s250
      %p252 = scmp.lt.s32.totalorder %s17, 1
      %s253 = scalar_select %p252, %s17, 1
      %s254 = smul.addr %s253, 8
      %s255 = scalar_lea.vmem %s0, %s254
      %p256 = scmp.lt.s32.totalorder %s17, 1
      %s257 = scalar_select %p256, %s17, 1
      %s258 = smul.addr %s257, 8
      %s259 = scalar_lea.vmem %s1, %s258
      %p260 = scmp.lt.s32.totalorder %s17, 1
      %s261 = scalar_select %p260, %s17, 1
      %s262 = smul.addr %s261, 8
      %s263 = scalar_lea.vmem %s6, %s262
      %v265 = vld [vmem:[%s2] sm:$0x1]
      %vm266 = vcmp.gt.f32.partialorder %v265, 0.5
      %v267 = vld [vmem:[%s255] sm:$0xff]
      %v268 = vsel %vm266, 1, 0
      %v269 = vperm.slane %v268, 0
      %vm270 = vcmp.eq.s32.totalorder %v269, 1
      %v271 = vsel %vm270, %v267, 0.0
      %v272 = vld [vmem:[%s259] sm:$0xff]
      %274 = vset.pattern.permute.xlu0 0
      %275 = vperm.xlu0 %274, %v272
      %v276 = vpop.permute.xlu0 %275
      %v278 = vsel %vm270, %v276, 0.0
      %v279 = vpack.c.bf16 %v271, %v271
      %v280 = vpack.c.bf16 %v278, %v278
      %v283 = vunpack.c.l.b16 %v279
      %v284 = vunpack.c.l.b16 %v280
      %v285 = vpack.c.b16 %v284, %v283
      %287 = vrot.lane.b32.xlu0 %v285, 127
      %v288 = vpop.permute.xlu0 %287
      %290 = vrot.lane.b32.xlu0 %v285, 122
      %v291 = vpop.permute.xlu0 %290
      %293 = vrot.lane.b32.xlu0 %v285, 121
      %v294 = vpop.permute.xlu0 %293
      %v296 = vld [vmem:[%s3] sm:$0xf]
      %v297 = vld [vmem:[%s3 + $0x4] sm:$0xf]
      %v298 = vld [vmem:[%s3 + $0x8] sm:$0xf]
      %v299 = vld [vmem:[%s3 + $0xc] sm:$0xf]
      %v304 = vunpack.c.l.b16 %v296
      %v305 = vunpack.c.l.b16 %v297
      %v306 = vunpack.c.l.b16 %v298
      %v307 = vunpack.c.l.b16 %v299
      %v308 = vpack.c.b16 %v305, %v304
      %v309 = vpack.c.b16 %v307, %v306
      %vm310 = vcmask 523264
      %v312 = vsel %vm310, %v308, 0
      %v315 = vsel %vm310, %v309, 0
      %317 = vmatpush.bf16.msra.mxu0 0
      %318 = vmatpush.bf16.msra.mxu0 0
      %319 = vmatpush.bf16.msra.mxu0 0
      %320 = vmatpush.bf16.msra.mxu0 0
      %321 = vmatpush.bf16.msra.mxu0 %v294
      %322 = vmatpush.bf16.msra.mxu0 %v291
      %323 = vmatpush.bf16.msra.mxu0 %v288
      %324 = vmatpush.bf16.msra.mxu0 %v285
      %325 = vmatmul.bf16.gmra.mxu0 %v312
      %v326 = vpop.f32.mrf.mxu0
      %v327 = vadd.f32 0.0, %v326
      %v328 = vpop.f32.mrf.mxu0
      %v329 = vadd.f32 0.0, %v328
      %330 = vmatmul.bf16.gmra.mxu0 %v315
      %v331 = vpop.f32.mrf.mxu0
      %v332 = vadd.f32 0.0, %v331
      %v333 = vpop.f32.mrf.mxu0
      %v334 = vadd.f32 0.0, %v333
      %335 = vdwg.mxu0
      %v336 = vld [vmem:[%s4] sm:$0xff]
      %338 = vset.pattern.permute.xlu0 0
      %339 = vperm.xlu0 %338, %v336
      %v340 = vpop.permute.xlu0 %339
      %v342 = vadd.f32 %v327, %v340
      %v343 = vld [vmem:[%s5] sm:$0xff]
      %v344 = vld [vmem:[%s5 + $0x8] sm:$0xff]
      %v345 = vld [vmem:[%s5 + $0x10] sm:$0xff]
      %v346 = vadd.f32 %v329, %v340
      %s347 = scalar_lea.vmem %s5, 24
      %v348 = vld [vmem:[%s347] sm:$0xff]
      %v349 = vld [vmem:[%s347 + $0x8] sm:$0xff]
      %v350 = vld [vmem:[%s347 + $0x10] sm:$0xff]
      %vm351 = vcmask 195584
      %v353 = vsel %vm351, %v346, 0
      %355 = vmatpush.msra.mxu0 0.0
      %356 = vmatpush.msra.mxu0 0.0
      %357 = vmatpush.msra.mxu0 0.0
      %358 = vmatpush.msra.mxu0 0.0
      %359 = vmatpush.msra.mxu0 0.0
      %360 = vmatpush.msra.mxu0 0.0
      %361 = vmatpush.msra.mxu0 0.0
      %362 = vmatpush.msra.mxu0 0.0
      %363 = vmatpush.msra.mxu0 0.0
      %364 = vmatpush.msra.mxu0 0.0
      %365 = vmatpush.msra.mxu0 0.0
      %366 = vmatpush.msra.mxu0 0.0
      %367 = vmatpush.msra.mxu0 0.0
      %368 = vmatpush.msra.mxu0 %v350
      %369 = vmatpush.msra.mxu0 %v349
      %370 = vmatpush.msra.mxu0 %v348
      %371 = vmatmul.f32.gmra.mxu0 %v353
      %v372 = vpop.f32.mrf.mxu0
      %v373 = vadd.f32 0.0, %v372
      %374 = vdwg.mxu0
      %v376 = vsel %vm351, %v342, 0
      %378 = vmatpush.msra.mxu0 0.0
      %379 = vmatpush.msra.mxu0 0.0
      %380 = vmatpush.msra.mxu0 0.0
      %381 = vmatpush.msra.mxu0 0.0
      %382 = vmatpush.msra.mxu0 0.0
      %383 = vmatpush.msra.mxu0 0.0
      %384 = vmatpush.msra.mxu0 0.0
      %385 = vmatpush.msra.mxu0 0.0
      %386 = vmatpush.msra.mxu0 0.0
      %387 = vmatpush.msra.mxu0 0.0
      %388 = vmatpush.msra.mxu0 0.0
      %389 = vmatpush.msra.mxu0 0.0
      %390 = vmatpush.msra.mxu0 0.0
      %391 = vmatpush.msra.mxu0 %v345
      %392 = vmatpush.msra.mxu0 %v344
      %393 = vmatpush.msra.mxu0 %v343
      %394 = vmatmul.f32.gmra.mxu0 %v376
      %v395 = vpop.f32.mrf.mxu0
      %v396 = vadd.f32 %v373, %v395
      %397 = vdwg.mxu0
      %v398 = vadd.f32 %v332, %v340
      %s399 = scalar_lea.vmem %s5, 48
      %v400 = vld [vmem:[%s399] sm:$0xff]
      %v401 = vld [vmem:[%s399 + $0x8] sm:$0xff]
      %v402 = vld [vmem:[%s399 + $0x10] sm:$0xff]
      %v404 = vsel %vm351, %v398, 0
      %406 = vmatpush.msra.mxu0 0.0
      %407 = vmatpush.msra.mxu0 0.0
      %408 = vmatpush.msra.mxu0 0.0
      %409 = vmatpush.msra.mxu0 0.0
      %410 = vmatpush.msra.mxu0 0.0
      %411 = vmatpush.msra.mxu0 0.0
      %412 = vmatpush.msra.mxu0 0.0
      %413 = vmatpush.msra.mxu0 0.0
      %414 = vmatpush.msra.mxu0 0.0
      %415 = vmatpush.msra.mxu0 0.0
      %416 = vmatpush.msra.mxu0 0.0
      %417 = vmatpush.msra.mxu0 0.0
      %418 = vmatpush.msra.mxu0 0.0
      %419 = vmatpush.msra.mxu0 %v402
      %420 = vmatpush.msra.mxu0 %v401
      %421 = vmatpush.msra.mxu0 %v400
      %422 = vmatmul.f32.gmra.mxu0 %v404
      %v423 = vpop.f32.mrf.mxu0
      %v424 = vadd.f32 0.0, %v423
      %425 = vdwg.mxu0
      %v426 = vadd.f32 %v396, %v424
      %v427 = vadd.f32 %v334, %v340
      %s428 = scalar_lea.vmem %s5, 72
      %v429 = vld [vmem:[%s428] sm:$0xff]
      %v430 = vld [vmem:[%s428 + $0x8] sm:$0xff]
      %v431 = vld [vmem:[%s428 + $0x10] sm:$0xff]
      %v433 = vsel %vm351, %v427, 0
      %435 = vmatpush.msra.mxu0 0.0
      %436 = vmatpush.msra.mxu0 0.0
      %437 = vmatpush.msra.mxu0 0.0
      %438 = vmatpush.msra.mxu0 0.0
      %439 = vmatpush.msra.mxu0 0.0
      %440 = vmatpush.msra.mxu0 0.0
      %441 = vmatpush.msra.mxu0 0.0
      %442 = vmatpush.msra.mxu0 0.0
      %443 = vmatpush.msra.mxu0 0.0
      %444 = vmatpush.msra.mxu0 0.0
      %445 = vmatpush.msra.mxu0 0.0
      %446 = vmatpush.msra.mxu0 0.0
      %447 = vmatpush.msra.mxu0 0.0
      %448 = vmatpush.msra.mxu0 %v431
      %449 = vmatpush.msra.mxu0 %v430
      %450 = vmatpush.msra.mxu0 %v429
      %451 = vmatmul.f32.gmra.mxu0 %v433
      %v452 = vpop.f32.mrf.mxu0
      %v453 = vadd.f32 0.0, %v452
      %454 = vdwg.mxu0
      %v455 = vadd.f32 %v426, %v453
      %vm456 = vcmask 818176
      %457 = vst.msk [vmem:[%s263] sm:$0xff] %vm456, %v455
      %p458 = scmp.lt.s32.totalorder %s17, 1
      %s459 = scalar_select %p458, %s17, 1
      %s460 = smul.addr %s459, 8
      %s461 = scalar_lea.vmem %s6, %s460
      // Predicated region
      $region45: #{fcdensenet_forward.17} parent=43 // pred_check
        %p462 = pneg %p171
      $region46: #{fcdensenet_forward.17} parent=43 // pred_check_branch
        %464 = sbr.rel (%p462) target = $region48
      $region47: #{fcdensenet_forward.17} parent=43 // pred_region
        _
      $region48: #{fcdensenet_forward.17} parent=43 // pred_fallthru
        _
    $region44: #{fcdensenet_forward.17} parent=5 // pred_fallthru
      _
    %p465 = scmp.le.s32.totalorder 2, %s12
    // Predicated region
    $region49: #{fcdensenet_forward.17} parent=5 // pred_check
      %p466 = pneg %p465
    $region50: #{fcdensenet_forward.17} parent=5 // pred_check_branch
      %468 = sbr.rel (%p466) target = $region52
    $region51: #{fcdensenet_forward.17} parent=5 // pred_region
      %s469 = ssub.s32 %s12, 2
      // Predicated region
      $region53: #{fcdensenet_forward.17} parent=51 // pred_check
        %p470 = pneg %p177
      $region54: #{fcdensenet_forward.17} parent=51 // pred_check_branch
        %472 = sbr.rel (%p470) target = $region56
      $region55: #{fcdensenet_forward.17} parent=51 // pred_region
        %p473 = scmp.lt.s32.totalorder %s18, 1
        %s474 = scalar_select %p473, %s18, 1
        %s475 = smul.addr %s474, 8
        %s476 = scalar_lea.vmem %s6, %s475
      $region56: #{fcdensenet_forward.17} parent=51 // pred_fallthru
        _
    $region52: #{fcdensenet_forward.17} parent=5 // pred_fallthru
      _
  $region6: #{fcdensenet_forward.17} parent=0 // loop_footer
    %s16 = sadd.s32 1, %s12
  $region7: #{fcdensenet_forward.17} parent=0 // loop_footer_branch
    %11 = sbr.rel target = $region3
  $region8: #{fcdensenet_forward.17} parent=0 // loop_exit
    _

// kernel: fcdensenet_forward.16
$region0: #{fcdensenet_forward.16}
  #allocation0 [shape = 'u32[]', space=smem, size = 0x4, offset = 0x4, fixed_abs, tag = 'smem constant byte address 0x4 - core index']
  #allocation1 [shape = 'u32[72,128]{1,0:T(1,128)}', space=vmem, size = 0x9000, scoped, tag = 'internal scratch']
  %s0 = inlined_call_operand.vmem [shape: f32[2,24,36], index: 0, kind: input, shape index: {}]
  %s1 = inlined_call_operand.vmem [shape: f32[1,36], index: 1, kind: input, shape index: {}]
  %s2 = inlined_call_operand.vmem [shape: f32[24,1], index: 2, kind: input, shape index: {}]
  %s3 = inlined_call_operand.vmem [shape: f32[24,1], index: 3, kind: input, shape index: {}]
  %s4 = inlined_call_operand.vmem [shape: bf16[4,216], index: 4, kind: input, shape index: {}]
  %s5 = inlined_call_operand.vmem [shape: f32[4,1], index: 5, kind: input, shape index: {}]
  %s6 = inlined_call_operand.vmem [shape: f32[28,1], index: 6, kind: input, shape index: {}]
  %s7 = inlined_call_operand.vmem [shape: f32[28,1], index: 7, kind: input, shape index: {}]
  %s8 = inlined_call_operand.vmem [shape: bf16[4,252], index: 8, kind: input, shape index: {}]
  %s9 = inlined_call_operand.vmem [shape: f32[4,1], index: 9, kind: input, shape index: {}]
  %s10 = inlined_call_operand.vmem [shape: f32[2,8,36], index: 10, kind: output, shape index: {}]
  %s11 = sld [smem:[#allocation0]]
  $region73: #{fcdensenet_forward.16} parent=0
    _
  %s13 = ssub.s32 1, %s11
  %s14 = scalar_select 0, %s13, %s11
  loop: start=0, step=1, limit=4
  $region2: #{fcdensenet_forward.16} parent=0 // loop_pre_header
    _
  $region3: #{fcdensenet_forward.16} parent=0 // loop_header
    %s16 = sphi 0, %s20
    %p17 = scmp.ge.s32.totalorder %s16, 4
    %s26 = sphi 0, %s28
    %s29 = sphi 0, %s26
    %s30 = sphi 0, %s29
    %s46 = sphi 0, %s30
    %s50 = sphi 0, %s50
    %s52 = sphi 0, %s50
    %s53 = sphi 0, %s52
    %s67 = sphi 0, %s53
    %s71 = sphi 0, %s71
    %s73 = sphi 0, %s71
    %s74 = sphi 0, %s73
    %s88 = sphi 0, %s74
    %s92 = sphi 0, %s92
    %s94 = sphi 0, %s92
    %s95 = sphi 0, %s94
    %s109 = sphi 0, %s95
    %s113 = sphi 0, %s113
    %s115 = sphi 0, %s113
    %s116 = sphi 0, %s115
    %s130 = sphi 0, %s116
    %s134 = sphi 0, %s134
    %s136 = sphi 0, %s134
    %s137 = sphi 0, %s136
    %s151 = sphi 0, %s137
    %s155 = sphi 0, %s155
    %s157 = sphi 0, %s155
    %s158 = sphi 0, %s157
    %s172 = sphi 0, %s158
    %s176 = sphi 0, %s176
    %s178 = sphi 0, %s176
    %s179 = sphi 0, %s178
    %s193 = sphi 0, %s179
    %s197 = sphi 0, %s197
    %s199 = sphi 0, %s197
    %s200 = sphi 0, %s199
    %s214 = sphi 0, %s200
    %s218 = sphi 0, %s218
    %s220 = sphi 0, %s218
    %s221 = sphi 0, %s220
    %s235 = sphi 0, %s221
    %s241 = sphi 0, %s243
    %s244 = sphi 0, %s241
    %s245 = sphi 0, %s244
    %s261 = sphi 0, %s245
  $region4: #{fcdensenet_forward.16} parent=0 // loop_header_branch
    %19 = sbr.rel (%p17) target = $region8
  $region5: #{fcdensenet_forward.16} parent=0 // loop_body
    %s21 = ssub.s32 %s16, 1
    %s22 = ssub.s32 %s16, 2
    %s23 = sadd.s32 %s16, 1
    %s24 = ssub.s32 %s16, %s23
    %p25 = scmp.eq.s32.totalorder %s24, 0
    %s27 = sadd.s32 %s26, 1
    %s28 = scalar_select %p25, %s26, %s27
    %p31 = pneg %p25
    %p32 = scmp.eq.s32.totalorder %s16, 1
    %p33 = por %p31, %p32
    %p34 = scmp.ne.s32.totalorder %s26, %s29
    %p35 = scmp.eq.s32.totalorder %s16, 0
    %p36 = por %p34, %p35
    %p37 = scmp.ne.s32.totalorder %s26, %s29
    %p38 = scmp.eq.s32.totalorder %s21, 1
    %p39 = por %p37, %p38
    %p40 = scmp.ne.s32.totalorder %s29, %s30
    %p41 = scmp.eq.s32.totalorder %s21, 0
    %p42 = por %p40, %p41
    %p43 = scmp.ne.s32.totalorder %s29, %s30
    %p44 = scmp.eq.s32.totalorder %s22, 1
    %p45 = por %p43, %p44
    %p47 = scmp.ne.s32.totalorder %s30, %s46
    %p48 = scmp.eq.s32.totalorder %s22, 0
    %p49 = por %p47, %p48
    %s51 = sadd.s32 %s50, 1
    %p54 = scmp.eq.s32.totalorder %s16, 1
    %p55 = scmp.ne.s32.totalorder %s50, %s52
    %p56 = scmp.eq.s32.totalorder %s16, 0
    %p57 = por %p55, %p56
    %p58 = scmp.ne.s32.totalorder %s50, %s52
    %p59 = scmp.eq.s32.totalorder %s21, 1
    %p60 = por %p58, %p59
    %p61 = scmp.ne.s32.totalorder %s52, %s53
    %p62 = scmp.eq.s32.totalorder %s21, 0
    %p63 = por %p61, %p62
    %p64 = scmp.ne.s32.totalorder %s52, %s53
    %p65 = scmp.eq.s32.totalorder %s22, 1
    %p66 = por %p64, %p65
    %p68 = scmp.ne.s32.totalorder %s53, %s67
    %p69 = scmp.eq.s32.totalorder %s22, 0
    %p70 = por %p68, %p69
    %s72 = sadd.s32 %s71, 1
    %p75 = scmp.eq.s32.totalorder %s16, 1
    %p76 = scmp.ne.s32.totalorder %s71, %s73
    %p77 = scmp.eq.s32.totalorder %s16, 0
    %p78 = por %p76, %p77
    %p79 = scmp.ne.s32.totalorder %s71, %s73
    %p80 = scmp.eq.s32.totalorder %s21, 1
    %p81 = por %p79, %p80
    %p82 = scmp.ne.s32.totalorder %s73, %s74
    %p83 = scmp.eq.s32.totalorder %s21, 0
    %p84 = por %p82, %p83
    %p85 = scmp.ne.s32.totalorder %s73, %s74
    %p86 = scmp.eq.s32.totalorder %s22, 1
    %p87 = por %p85, %p86
    %p89 = scmp.ne.s32.totalorder %s74, %s88
    %p90 = scmp.eq.s32.totalorder %s22, 0
    %p91 = por %p89, %p90
    %s93 = sadd.s32 %s92, 1
    %p96 = scmp.eq.s32.totalorder %s16, 1
    %p97 = scmp.ne.s32.totalorder %s92, %s94
    %p98 = scmp.eq.s32.totalorder %s16, 0
    %p99 = por %p97, %p98
    %p100 = scmp.ne.s32.totalorder %s92, %s94
    %p101 = scmp.eq.s32.totalorder %s21, 1
    %p102 = por %p100, %p101
    %p103 = scmp.ne.s32.totalorder %s94, %s95
    %p104 = scmp.eq.s32.totalorder %s21, 0
    %p105 = por %p103, %p104
    %p106 = scmp.ne.s32.totalorder %s94, %s95
    %p107 = scmp.eq.s32.totalorder %s22, 1
    %p108 = por %p106, %p107
    %p110 = scmp.ne.s32.totalorder %s95, %s109
    %p111 = scmp.eq.s32.totalorder %s22, 0
    %p112 = por %p110, %p111
    %s114 = sadd.s32 %s113, 1
    %p117 = scmp.eq.s32.totalorder %s16, 1
    %p118 = scmp.ne.s32.totalorder %s113, %s115
    %p119 = scmp.eq.s32.totalorder %s16, 0
    %p120 = por %p118, %p119
    %p121 = scmp.ne.s32.totalorder %s113, %s115
    %p122 = scmp.eq.s32.totalorder %s21, 1
    %p123 = por %p121, %p122
    %p124 = scmp.ne.s32.totalorder %s115, %s116
    %p125 = scmp.eq.s32.totalorder %s21, 0
    %p126 = por %p124, %p125
    %p127 = scmp.ne.s32.totalorder %s115, %s116
    %p128 = scmp.eq.s32.totalorder %s22, 1
    %p129 = por %p127, %p128
    %p131 = scmp.ne.s32.totalorder %s116, %s130
    %p132 = scmp.eq.s32.totalorder %s22, 0
    %p133 = por %p131, %p132
    %s135 = sadd.s32 %s134, 1
    %p138 = scmp.eq.s32.totalorder %s16, 1
    %p139 = scmp.ne.s32.totalorder %s134, %s136
    %p140 = scmp.eq.s32.totalorder %s16, 0
    %p141 = por %p139, %p140
    %p142 = scmp.ne.s32.totalorder %s134, %s136
    %p143 = scmp.eq.s32.totalorder %s21, 1
    %p144 = por %p142, %p143
    %p145 = scmp.ne.s32.totalorder %s136, %s137
    %p146 = scmp.eq.s32.totalorder %s21, 0
    %p147 = por %p145, %p146
    %p148 = scmp.ne.s32.totalorder %s136, %s137
    %p149 = scmp.eq.s32.totalorder %s22, 1
    %p150 = por %p148, %p149
    %p152 = scmp.ne.s32.totalorder %s137, %s151
    %p153 = scmp.eq.s32.totalorder %s22, 0
    %p154 = por %p152, %p153
    %s156 = sadd.s32 %s155, 1
    %p159 = scmp.eq.s32.totalorder %s16, 1
    %p160 = scmp.ne.s32.totalorder %s155, %s157
    %p161 = scmp.eq.s32.totalorder %s16, 0
    %p162 = por %p160, %p161
    %p163 = scmp.ne.s32.totalorder %s155, %s157
    %p164 = scmp.eq.s32.totalorder %s21, 1
    %p165 = por %p163, %p164
    %p166 = scmp.ne.s32.totalorder %s157, %s158
    %p167 = scmp.eq.s32.totalorder %s21, 0
    %p168 = por %p166, %p167
    %p169 = scmp.ne.s32.totalorder %s157, %s158
    %p170 = scmp.eq.s32.totalorder %s22, 1
    %p171 = por %p169, %p170
    %p173 = scmp.ne.s32.totalorder %s158, %s172
    %p174 = scmp.eq.s32.totalorder %s22, 0
    %p175 = por %p173, %p174
    %s177 = sadd.s32 %s176, 1
    %p180 = scmp.eq.s32.totalorder %s16, 1
    %p181 = scmp.ne.s32.totalorder %s176, %s178
    %p182 = scmp.eq.s32.totalorder %s16, 0
    %p183 = por %p181, %p182
    %p184 = scmp.ne.s32.totalorder %s176, %s178
    %p185 = scmp.eq.s32.totalorder %s21, 1
    %p186 = por %p184, %p185
    %p187 = scmp.ne.s32.totalorder %s178, %s179
    %p188 = scmp.eq.s32.totalorder %s21, 0
    %p189 = por %p187, %p188
    %p190 = scmp.ne.s32.totalorder %s178, %s179
    %p191 = scmp.eq.s32.totalorder %s22, 1
    %p192 = por %p190, %p191
    %p194 = scmp.ne.s32.totalorder %s179, %s193
    %p195 = scmp.eq.s32.totalorder %s22, 0
    %p196 = por %p194, %p195
    %s198 = sadd.s32 %s197, 1
    %p201 = scmp.eq.s32.totalorder %s16, 1
    %p202 = scmp.ne.s32.totalorder %s197, %s199
    %p203 = scmp.eq.s32.totalorder %s16, 0
    %p204 = por %p202, %p203
    %p205 = scmp.ne.s32.totalorder %s197, %s199
    %p206 = scmp.eq.s32.totalorder %s21, 1
    %p207 = por %p205, %p206
    %p208 = scmp.ne.s32.totalorder %s199, %s200
    %p209 = scmp.eq.s32.totalorder %s21, 0
    %p210 = por %p208, %p209
    %p211 = scmp.ne.s32.totalorder %s199, %s200
    %p212 = scmp.eq.s32.totalorder %s22, 1
    %p213 = por %p211, %p212
    %p215 = scmp.ne.s32.totalorder %s200, %s214
    %p216 = scmp.eq.s32.totalorder %s22, 0
    %p217 = por %p215, %p216
    %s219 = sadd.s32 %s218, 1
    %p222 = scmp.eq.s32.totalorder %s16, 1
    %p223 = scmp.ne.s32.totalorder %s218, %s220
    %p224 = scmp.eq.s32.totalorder %s16, 0
    %p225 = por %p223, %p224
    %p226 = scmp.ne.s32.totalorder %s218, %s220
    %p227 = scmp.eq.s32.totalorder %s21, 1
    %p228 = por %p226, %p227
    %p229 = scmp.ne.s32.totalorder %s220, %s221
    %p230 = scmp.eq.s32.totalorder %s21, 0
    %p231 = por %p229, %p230
    %p232 = scmp.ne.s32.totalorder %s220, %s221
    %p233 = scmp.eq.s32.totalorder %s22, 1
    %p234 = por %p232, %p233
    %p236 = scmp.ne.s32.totalorder %s221, %s235
    %p237 = scmp.eq.s32.totalorder %s22, 0
    %p238 = por %p236, %p237
    %s239 = ssub.s32 %s16, %s23
    %p240 = scmp.eq.s32.totalorder %s239, 0
    %s242 = sadd.s32 %s241, 1
    %s243 = scalar_select %p240, %s241, %s242
    %p246 = pneg %p240
    %p247 = scmp.eq.s32.totalorder %s16, 1
    %p248 = por %p246, %p247
    %p249 = scmp.ne.s32.totalorder %s241, %s244
    %p250 = scmp.eq.s32.totalorder %s16, 0
    %p251 = por %p249, %p250
    %p252 = scmp.ne.s32.totalorder %s241, %s244
    %p253 = scmp.eq.s32.totalorder %s21, 1
    %p254 = por %p252, %p253
    %p255 = scmp.ne.s32.totalorder %s244, %s245
    %p256 = scmp.eq.s32.totalorder %s21, 0
    %p257 = por %p255, %p256
    %p258 = scmp.ne.s32.totalorder %s244, %s245
    %p259 = scmp.eq.s32.totalorder %s22, 1
    %p260 = por %p258, %p259
    %p262 = scmp.ne.s32.totalorder %s245, %s261
    %p263 = scmp.eq.s32.totalorder %s22, 0
    %p264 = por %p262, %p263
    %p265 = scmp.le.s32.totalorder 1, %s16
    %p266 = scmp.lt.s32.totalorder %s16, 3
    %p267 = pnand %p265, %p266
    %p268 = pneg %p267
    // Predicated region
    $region9: #{fcdensenet_forward.16} parent=5 // pred_check
      _
    $region10: #{fcdensenet_forward.16} parent=5 // pred_check_branch
      %270 = sbr.rel (%p267) target = $region12
    $region11: #{fcdensenet_forward.16} parent=5 // pred_region
      %s271 = ssub.s32 %s16, 1
      // Predicated region
      $region13: #{fcdensenet_forward.16} parent=11 // pred_check
        %p272 = pneg %p63
      $region14: #{fcdensenet_forward.16} parent=11 // pred_check_branch
        %274 = sbr.rel (%p272) target = $region16
      $region15: #{fcdensenet_forward.16} parent=11 // pred_region
        _
      $region16: #{fcdensenet_forward.16} parent=11 // pred_fallthru
        _
      // Predicated region
      $region17: #{fcdensenet_forward.16} parent=11 // pred_check
        %p275 = pneg %p84
      $region18: #{fcdensenet_forward.16} parent=11 // pred_check_branch
        %277 = sbr.rel (%p275) target = $region20
      $region19: #{fcdensenet_forward.16} parent=11 // pred_region
        _
      $region20: #{fcdensenet_forward.16} parent=11 // pred_fallthru
        _
      // Predicated region
      $region21: #{fcdensenet_forward.16} parent=11 // pred_check
        %p278 = pneg %p105
      $region22: #{fcdensenet_forward.16} parent=11 // pred_check_branch
        %280 = sbr.rel (%p278) target = $region24
      $region23: #{fcdensenet_forward.16} parent=11 // pred_region
        _
      $region24: #{fcdensenet_forward.16} parent=11 // pred_fallthru
        _
      // Predicated region
      $region25: #{fcdensenet_forward.16} parent=11 // pred_check
        %p281 = pneg %p126
      $region26: #{fcdensenet_forward.16} parent=11 // pred_check_branch
        %283 = sbr.rel (%p281) target = $region28
      $region27: #{fcdensenet_forward.16} parent=11 // pred_region
        _
      $region28: #{fcdensenet_forward.16} parent=11 // pred_fallthru
        _
      // Predicated region
      $region29: #{fcdensenet_forward.16} parent=11 // pred_check
        %p284 = pneg %p147
      $region30: #{fcdensenet_forward.16} parent=11 // pred_check_branch
        %286 = sbr.rel (%p284) target = $region32
      $region31: #{fcdensenet_forward.16} parent=11 // pred_region
        _
      $region32: #{fcdensenet_forward.16} parent=11 // pred_fallthru
        _
      // Predicated region
      $region33: #{fcdensenet_forward.16} parent=11 // pred_check
        %p287 = pneg %p168
      $region34: #{fcdensenet_forward.16} parent=11 // pred_check_branch
        %289 = sbr.rel (%p287) target = $region36
      $region35: #{fcdensenet_forward.16} parent=11 // pred_region
        _
      $region36: #{fcdensenet_forward.16} parent=11 // pred_fallthru
        _
      // Predicated region
      $region37: #{fcdensenet_forward.16} parent=11 // pred_check
        %p290 = pneg %p189
      $region38: #{fcdensenet_forward.16} parent=11 // pred_check_branch
        %292 = sbr.rel (%p290) target = $region40
      $region39: #{fcdensenet_forward.16} parent=11 // pred_region
        _
      $region40: #{fcdensenet_forward.16} parent=11 // pred_fallthru
        _
      // Predicated region
      $region41: #{fcdensenet_forward.16} parent=11 // pred_check
        %p293 = pneg %p210
      $region42: #{fcdensenet_forward.16} parent=11 // pred_check_branch
        %295 = sbr.rel (%p293) target = $region44
      $region43: #{fcdensenet_forward.16} parent=11 // pred_region
        _
      $region44: #{fcdensenet_forward.16} parent=11 // pred_fallthru
        _
      // Predicated region
      $region45: #{fcdensenet_forward.16} parent=11 // pred_check
        %p296 = pneg %p231
      $region46: #{fcdensenet_forward.16} parent=11 // pred_check_branch
        %298 = sbr.rel (%p296) target = $region48
      $region47: #{fcdensenet_forward.16} parent=11 // pred_region
        _
      $region48: #{fcdensenet_forward.16} parent=11 // pred_fallthru
        _
    $region12: #{fcdensenet_forward.16} parent=5 // pred_fallthru
      _
    %p299 = scmp.lt.s32.totalorder %s16, 2
    // Predicated region
    $region49: #{fcdensenet_forward.16} parent=5 // pred_check
      %p300 = pneg %p299
    $region50: #{fcdensenet_forward.16} parent=5 // pred_check_branch
      %302 = sbr.rel (%p300) target = $region52
    $region51: #{fcdensenet_forward.16} parent=5 // pred_region
      // Predicated region
      $region53: #{fcdensenet_forward.16} parent=51 // pred_check
        %p303 = pneg %p36
      $region54: #{fcdensenet_forward.16} parent=51 // pred_check_branch
        %305 = sbr.rel (%p303) target = $region56
      $region55: #{fcdensenet_forward.16} parent=51 // pred_region
        %p306 = scmp.lt.s32.totalorder %s16, 1
        %s307 = scalar_select %p306, %s16, 1
        %s308 = smul.addr %s307, 3
        %s309 = smul.addr %s308, 8
        %s310 = scalar_lea.vmem %s0, %s309
      $region56: #{fcdensenet_forward.16} parent=51 // pred_fallthru
        _
    $region52: #{fcdensenet_forward.16} parent=5 // pred_fallthru
      _
    %p311 = scmp.le.s32.totalorder 1, %s16
    %p312 = scmp.lt.s32.totalorder %s16, 3
    %p313 = pnand %p311, %p312
    %p314 = pneg %p313
    // Predicated region
    $region57: #{fcdensenet_forward.16} parent=5 // pred_check
      _
    $region58: #{fcdensenet_forward.16} parent=5 // pred_check_branch
      %316 = sbr.rel (%p313) target = $region60
    $region59: #{fcdensenet_forward.16} parent=5 // pred_region
      %s317 = ssub.s32 %s16, 1
      %p318 = scmp.lt.s32.totalorder %s21, 1
      %s319 = scalar_select %p318, %s21, 1
      %s320 = smul.addr %s319, 3
      %s321 = smul.addr %s320, 8
      %s322 = scalar_lea.vmem %s0, %s321
      %p323 = pneg %p42
      %p324 = pneg %p39
      %p325 = pneg %p63
      %p326 = pneg %p60
      %p327 = pneg %p84
      %p328 = pneg %p81
      %p329 = pneg %p105
      %p330 = pneg %p102
      %p331 = pneg %p126
      %p332 = pneg %p123
      %p333 = pneg %p147
      %p334 = pneg %p144
      %p335 = pneg %p168
      %p336 = pneg %p165
      %p337 = pneg %p189
      %p338 = pneg %p186
      %p339 = pneg %p210
      %p340 = pneg %p207
      %p341 = pneg %p231
      %p342 = pneg %p228
      %p343 = pneg %p257
      %p344 = pneg %p254
      %p345 = scmp.lt.s32.totalorder %s21, 1
      %s346 = scalar_select %p345, %s21, 1
      %s347 = smul.addr %s346, 8
      %s348 = scalar_lea.vmem %s10, %s347
      %p349 = scmp.lt.s32.totalorder %s21, 1
      %s350 = scalar_select %p349, %s21, 1
      %s351 = smul.addr %s350, 3
      %s352 = smul.addr %s351, 8
      %s353 = scalar_lea.vmem %s0, %s352
      %p354 = scmp.lt.s32.totalorder %s21, 1
      %s355 = scalar_select %p354, %s21, 1
      %s356 = smul.addr %s355, 8
      %s357 = scalar_lea.vmem %s10, %s356
      %v359 = vld [vmem:[%s1] sm:$0x1]
      %vm360 = vcmp.gt.f32.partialorder %v359, 0.5
      %v361 = vld [vmem:[%s353] sm:$0xff]
      %v362 = vld [vmem:[%s353 + $0x8] sm:$0xff]
      %v363 = vld [vmem:[%s353 + $0x10] sm:$0xff]
      %v364 = vld [vmem:[%s2] sm:$0xff]
      %v365 = vld [vmem:[%s2 + $0x8] sm:$0xff]
      %v366 = vld [vmem:[%s2 + $0x10] sm:$0xff]
      %v367 = vld [vmem:[%s3] sm:$0xff]
      %v368 = vld [vmem:[%s3 + $0x8] sm:$0xff]
      %v369 = vld [vmem:[%s3 + $0x10] sm:$0xff]
      %371 = vset.pattern.permute.xlu0 0
      %372 = vperm.xlu0 %371, %v364
      %v373 = vpop.permute.xlu0 %372
      %376 = vset.pattern.permute.xlu0 0
      %377 = vperm.xlu0 %376, %v365
      %v378 = vpop.permute.xlu0 %377
      %381 = vset.pattern.permute.xlu0 0
      %382 = vperm.xlu0 %381, %v366
      %v383 = vpop.permute.xlu0 %382
      %v385 = vmul.f32 %v361, %v373
      %v386 = vmul.f32 %v362, %v378
      %v387 = vmul.f32 %v363, %v383
      %389 = vset.pattern.permute.xlu0 0
      %390 = vperm.xlu0 %389, %v367
      %v391 = vpop.permute.xlu0 %390
      %394 = vset.pattern.permute.xlu0 0
      %395 = vperm.xlu0 %394, %v368
      %v396 = vpop.permute.xlu0 %395
      %399 = vset.pattern.permute.xlu0 0
      %400 = vperm.xlu0 %399, %v369
      %v401 = vpop.permute.xlu0 %400
      %v403 = vadd.f32 %v385, %v391
      %v404 = vadd.f32 %v386, %v396
      %v405 = vadd.f32 %v387, %v401
      %v406 = vmax.f32 %v403, 0.0
      %v407 = vmax.f32 %v404, 0.0
      %v408 = vmax.f32 %v405, 0.0
      %v409 = vsel %vm360, 1, 0
      %v410 = vperm.slane %v409, 0
      %vm411 = vcmp.eq.s32.totalorder %v410, 1
      %v412 = vsel %vm411, %v406, 0.0
      %v413 = vsel %vm411, %v407, 0.0
      %v414 = vsel %vm411, %v408, 0.0
      %v415 = vpack.c.bf16 %v412, %v412
      %v416 = vpack.c.bf16 %v413, %v413
      %v417 = vpack.c.bf16 %v414, %v414
      %v421 = vunpack.c.l.b16 %v415
      %v422 = vunpack.c.l.b16 %v416
      %v423 = vunpack.c.l.b16 %v417
      %v424 = vpack.c.b16 %v422, %v421
      %v425 = vpack.c.b16 %v423, %v423
      %v427 = vpack.c.b16 %v421, %v421
      %v428 = vpack.c.b16 %v423, %v422
      %429 = vrot.lane.b32.xlu0 %v427, 127
      %v430 = vpop.permute.xlu0 %429
      %431 = vrot.lane.b32.xlu0 %v428, 127
      %v432 = vpop.permute.xlu0 %431
      %434 = vrot.lane.b32.xlu0 %v424, 126
      %v435 = vpop.permute.xlu0 %434
      %436 = vrot.lane.b32.xlu0 %v425, 126
      %v437 = vpop.permute.xlu0 %436
      %439 = vrot.lane.b32.xlu0 %v427, 122
      %v440 = vpop.permute.xlu0 %439
      %441 = vrot.lane.b32.xlu0 %v428, 122
      %v442 = vpop.permute.xlu0 %441
      %444 = vrot.lane.b32.xlu0 %v424, 121
      %v445 = vpop.permute.xlu0 %444
      %446 = vrot.lane.b32.xlu0 %v425, 121
      %v447 = vpop.permute.xlu0 %446
      %449 = vrot.lane.b32.xlu0 %v427, 120
      %v450 = vpop.permute.xlu0 %449
      %451 = vrot.lane.b32.xlu0 %v428, 120
      %v452 = vpop.permute.xlu0 %451
      %454 = vrot.lane.b32.xlu0 %v424, 116
      %v455 = vpop.permute.xlu0 %454
      %456 = vrot.lane.b32.xlu0 %v425, 116
      %v457 = vpop.permute.xlu0 %456
      %459 = vrot.lane.b32.xlu0 %v427, 115
      %v460 = vpop.permute.xlu0 %459
      %461 = vrot.lane.b32.xlu0 %v428, 115
      %v462 = vpop.permute.xlu0 %461
      %464 = vrot.lane.b32.xlu0 %v424, 114
      %v465 = vpop.permute.xlu0 %464
      %466 = vrot.lane.b32.xlu0 %v425, 114
      %v467 = vpop.permute.xlu0 %466
      %vm469 = vcmask 1043456
      %v472 = vsel %vm469, %v425, %v430
      %v476 = vsel %vm469, %v437, %v440
      %v480 = vsel %vm469, %v447, %v450
      %v484 = vsel %vm469, %v457, %v460
      %v486 = vld [vmem:[%s4] sm:$0xf]
      %v487 = vld [vmem:[%s5] sm:$0xf]
      %489 = vset.pattern.permute.xlu0 0
      %490 = vperm.xlu0 %489, %v487
      %v491 = vpop.permute.xlu0 %490
      %494 = vst [vmem:[#allocation1] ss:$4 sm:$0xff] %v486
      %v495 = vld.sshfl [vmem:[#allocation1] sm:$0xff pattern:$0x73625140]
      %v496 = vld.sshfl [vmem:[#allocation1 + $0x8] sm:$0xff pattern:$0x73625140]
      %vm498 = vcmask 719872
      %v499 = vsel %vm498, %v496, 0
      %v502 = vsel %vm469, %v467, 0
      %504 = vmatpush.bf16.msra.mxu0 %v480
      %505 = vmatpush.bf16.msra.mxu0 %v445
      %506 = vmatpush.bf16.msra.mxu0 %v442
      %507 = vmatpush.bf16.msra.mxu0 %v476
      %508 = vmatpush.bf16.msra.mxu0 %v435
      %509 = vmatpush.bf16.msra.mxu0 %v432
      %510 = vmatpush.bf16.msra.mxu0 %v472
      %511 = vmatpush.bf16.msra.mxu0 %v424
      %512 = vmatmul.bf16.gmra.mxu0 %v495
      %v513 = vpop.f32.mrf.mxu0
      %v514 = vadd.f32 %v491, %v513
      %v515 = vpop.f32.mrf.mxu0
      %516 = vdwg.mxu0
      %517 = vmatpush.bf16.msra.mxu0 0
      %518 = vmatpush.bf16.msra.mxu0 0
      %519 = vmatpush.bf16.msra.mxu0 %v502
      %520 = vmatpush.bf16.msra.mxu0 %v465
      %521 = vmatpush.bf16.msra.mxu0 %v462
      %522 = vmatpush.bf16.msra.mxu0 %v484
      %523 = vmatpush.bf16.msra.mxu0 %v455
      %524 = vmatpush.bf16.msra.mxu0 %v452
      %525 = vmatmul.bf16.gmra.mxu0 %v499
      %v526 = vpop.f32.mrf.mxu0
      %v527 = vadd.f32 %v514, %v526
      %v528 = vpop.f32.mrf.mxu0
      %529 = vdwg.mxu0
      %531 = vrot.lane.b32.xlu0 %v527, 7
      %v532 = vpop.permute.xlu0 %531
      %vm534 = vcmask 232504
      %535 = vst.msk [vmem:[%s357] sm:$0xf] %vm534, %v532
      %v536 = vld [vmem:[%s353] sm:$0xff]
      %v537 = vld [vmem:[%s353 + $0x8] sm:$0xff]
      %v538 = vld [vmem:[%s353 + $0x10] sm:$0xff]
      %v539 = vld [vmem:[%s357] sm:$0xf]
      %v540 = vld [vmem:[%s6] sm:$0xff]
      %v541 = vld [vmem:[%s6 + $0x8] sm:$0xff]
      %v542 = vld [vmem:[%s6 + $0x10] sm:$0xff]
      %v543 = vld [vmem:[%s6 + $0x18] sm:$0xf]
      %v544 = vld [vmem:[%s7] sm:$0xff]
      %v545 = vld [vmem:[%s7 + $0x8] sm:$0xff]
      %v546 = vld [vmem:[%s7 + $0x10] sm:$0xff]
      %v547 = vld [vmem:[%s7 + $0x18] sm:$0xf]
      %549 = vset.pattern.permute.xlu0 0
      %550 = vperm.xlu0 %549, %v540
      %v551 = vpop.permute.xlu0 %550
      %554 = vset.pattern.permute.xlu0 0
      %555 = vperm.xlu0 %554, %v541
      %v556 = vpop.permute.xlu0 %555
      %559 = vset.pattern.permute.xlu0 0
      %560 = vperm.xlu0 %559, %v542
      %v561 = vpop.permute.xlu0 %560
      %564 = vset.pattern.permute.xlu0 0
      %565 = vperm.xlu0 %564, %v543
      %v566 = vpop.permute.xlu0 %565
      %v568 = vmul.f32 %v536, %v551
      %v569 = vmul.f32 %v537, %v556
      %v570 = vmul.f32 %v538, %v561
      %v571 = vmul.f32 %v539, %v566
      %573 = vset.pattern.permute.xlu0 0
      %574 = vperm.xlu0 %573, %v544
      %v575 = vpop.permute.xlu0 %574
      %578 = vset.pattern.permute.xlu0 0
      %579 = vperm.xlu0 %578, %v545
      %v580 = vpop.permute.xlu0 %579
      %583 = vset.pattern.permute.xlu0 0
      %584 = vperm.xlu0 %583, %v546
      %v585 = vpop.permute.xlu0 %584
      %588 = vset.pattern.permute.xlu0 0
      %589 = vperm.xlu0 %588, %v547
      %v590 = vpop.permute.xlu0 %589
      %v592 = vadd.f32 %v568, %v575
      %v593 = vadd.f32 %v569, %v580
      %v594 = vadd.f32 %v570, %v585
      %v595 = vadd.f32 %v571, %v590
      %v596 = vmax.f32 %v592, 0.0
      %v597 = vmax.f32 %v593, 0.0
      %v598 = vmax.f32 %v594, 0.0
      %v599 = vmax.f32 %v595, 0.0
      %v600 = vsel %vm411, %v596, 0.0
      %v601 = vsel %vm411, %v597, 0.0
      %v602 = vsel %vm411, %v598, 0.0
      %v603 = vsel %vm411, %v599, 0.0
      %v604 = vpack.c.bf16 %v600, %v600
      %v605 = vpack.c.bf16 %v601, %v601
      %v606 = vpack.c.bf16 %v602, %v602
      %v607 = vpack.c.bf16 %v603, %v603
      %v612 = vunpack.c.l.b16 %v604
      %v613 = vunpack.c.l.b16 %v605
      %v614 = vunpack.c.l.b16 %v606
      %v615 = vunpack.c.l.b16 %v607
      %v616 = vpack.c.b16 %v613, %v612
      %v617 = vpack.c.b16 %v615, %v614
      %vm619 = vcmask 1045504
      %v620 = vrot.slane %v616, 2
      %v621 = vrot.slane %v617, 2
      %v622 = vsel %vm619, %v620, %v621
      %623 = vrot.lane.b32.xlu0 %v620, 127
      %v624 = vpop.permute.xlu0 %623
      %625 = vrot.lane.b32.xlu0 %v622, 127
      %v626 = vpop.permute.xlu0 %625
      %627 = vrot.lane.b32.xlu0 %v621, 127
      %v628 = vpop.permute.xlu0 %627
      %v630 = vpack.c.b16 %v612, %v612
      %v631 = vpack.c.b16 %v614, %v613
      %v632 = vpack.c.b16 %v615, %v615
      %633 = vrot.lane.b32.xlu0 %v630, 126
      %v634 = vpop.permute.xlu0 %633
      %635 = vrot.lane.b32.xlu0 %v631, 126
      %v636 = vpop.permute.xlu0 %635
      %637 = vrot.lane.b32.xlu0 %v632, 126
      %v638 = vpop.permute.xlu0 %637
      %vm640 = vcmask 1041408
      %v641 = vrot.slane %v616, 6
      %v642 = vrot.slane %v617, 6
      %v643 = vsel %vm640, %v641, %v642
      %644 = vrot.lane.b32.xlu0 %v641, 122
      %v645 = vpop.permute.xlu0 %644
      %646 = vrot.lane.b32.xlu0 %v643, 122
      %v647 = vpop.permute.xlu0 %646
      %649 = vrot.lane.b32.xlu0 %v616, 121
      %v650 = vpop.permute.xlu0 %649
      %651 = vrot.lane.b32.xlu0 %v617, 121
      %v652 = vpop.permute.xlu0 %651
      %654 = vrot.lane.b32.xlu0 %v620, 120
      %v655 = vpop.permute.xlu0 %654
      %656 = vrot.lane.b32.xlu0 %v622, 120
      %v657 = vpop.permute.xlu0 %656
      %658 = vrot.lane.b32.xlu0 %v621, 120
      %v659 = vpop.permute.xlu0 %658
      %661 = vrot.lane.b32.xlu0 %v630, 116
      %v662 = vpop.permute.xlu0 %661
      %663 = vrot.lane.b32.xlu0 %v631, 116
      %v664 = vpop.permute.xlu0 %663
      %665 = vrot.lane.b32.xlu0 %v632, 116
      %v666 = vpop.permute.xlu0 %665
      %668 = vrot.lane.b32.xlu0 %v641, 115
      %v669 = vpop.permute.xlu0 %668
      %670 = vrot.lane.b32.xlu0 %v643, 115
      %v671 = vpop.permute.xlu0 %670
      %673 = vrot.lane.b32.xlu0 %v616, 114
      %v674 = vpop.permute.xlu0 %673
      %675 = vrot.lane.b32.xlu0 %v617, 114
      %v676 = vpop.permute.xlu0 %675
      %vm678 = vcmask 1045504
      %v681 = vsel %vm678, %v617, %v624
      %v685 = vsel %vm469, %v628, %v634
      %vm687 = vcmask 1041408
      %v690 = vsel %vm687, %v638, %v645
      %v694 = vsel %vm678, %v652, %v655
      %v698 = vsel %vm469, %v659, %v662
      %v702 = vsel %vm687, %v666, %v669
      %v704 = vld [vmem:[%s8] sm:$0xf]
      %v705 = vld [vmem:[%s9] sm:$0xf]
      %707 = vset.pattern.permute.xlu0 0
      %708 = vperm.xlu0 %707, %v705
      %v709 = vpop.permute.xlu0 %708
      %712 = vst [vmem:[#allocation1] ss:$4 sm:$0xff] %v704
      %v713 = vld.sshfl [vmem:[#allocation1] sm:$0xff pattern:$0x73625140]
      %v714 = vld.sshfl [vmem:[#allocation1 + $0x8] sm:$0xff pattern:$0x73625140]
      %vm716 = vcmask 1014784
      %v717 = vsel %vm716, %v714, 0
      %v720 = vsel %vm678, %v676, 0
      %722 = vmatpush.bf16.msra.mxu0 %v650
      %723 = vmatpush.bf16.msra.mxu0 %v647
      %724 = vmatpush.bf16.msra.mxu0 %v690
      %725 = vmatpush.bf16.msra.mxu0 %v636
      %726 = vmatpush.bf16.msra.mxu0 %v685
      %727 = vmatpush.bf16.msra.mxu0 %v626
      %728 = vmatpush.bf16.msra.mxu0 %v681
      %729 = vmatpush.bf16.msra.mxu0 %v616
      %730 = vmatmul.bf16.gmra.mxu0 %v713
      %v731 = vpop.f32.mrf.mxu0
      %v732 = vadd.f32 %v709, %v731
      %v733 = vpop.f32.mrf.mxu0
      %734 = vdwg.mxu0
      %735 = vmatpush.bf16.msra.mxu0 %v720
      %736 = vmatpush.bf16.msra.mxu0 %v674
      %737 = vmatpush.bf16.msra.mxu0 %v671
      %738 = vmatpush.bf16.msra.mxu0 %v702
      %739 = vmatpush.bf16.msra.mxu0 %v664
      %740 = vmatpush.bf16.msra.mxu0 %v698
      %741 = vmatpush.bf16.msra.mxu0 %v657
      %742 = vmatpush.bf16.msra.mxu0 %v694
      %743 = vmatmul.bf16.gmra.mxu0 %v717
      %v744 = vpop.f32.mrf.mxu0
      %v745 = vadd.f32 %v732, %v744
      %v746 = vpop.f32.mrf.mxu0
      %747 = vdwg.mxu0
      %749 = vrot.lane.b32.xlu0 %v745, 7
      %v750 = vpop.permute.xlu0 %749
      %752 = vst.msk [vmem:[%s357 + $0x4] sm:$0xf] %vm534, %v750
      %p753 = scmp.lt.s32.totalorder %s21, 1
      %s754 = scalar_select %p753, %s21, 1
      %s755 = smul.addr %s754, 8
      %s756 = scalar_lea.vmem %s10, %s755
      // Predicated region
      $region61: #{fcdensenet_forward.16} parent=59 // pred_check
        %p757 = pneg %p254
      $region62: #{fcdensenet_forward.16} parent=59 // pred_check_branch
        %759 = sbr.rel (%p757) target = $region64
      $region63: #{fcdensenet_forward.16} parent=59 // pred_region
        _
      $region64: #{fcdensenet_forward.16} parent=59 // pred_fallthru
        _
    $region60: #{fcdensenet_forward.16} parent=5 // pred_fallthru
      _
    %p760 = scmp.le.s32.totalorder 2, %s16
    // Predicated region
    $region65: #{fcdensenet_forward.16} parent=5 // pred_check
      %p761 = pneg %p760
    $region66: #{fcdensenet_forward.16} parent=5 // pred_check_branch
      %763 = sbr.rel (%p761) target = $region68
    $region67: #{fcdensenet_forward.16} parent=5 // pred_region
      %s764 = ssub.s32 %s16, 2
      // Predicated region
      $region69: #{fcdensenet_forward.16} parent=67 // pred_check
        %p765 = pneg %p260
      $region70: #{fcdensenet_forward.16} parent=67 // pred_check_branch
        %767 = sbr.rel (%p765) target = $region72
      $region71: #{fcdensenet_forward.16} parent=67 // pred_region
        %p768 = scmp.lt.s32.totalorder %s22, 1
        %s769 = scalar_select %p768, %s22, 1
        %s770 = smul.addr %s769, 8
        %s771 = scalar_lea.vmem %s10, %s770
      $region72: #{fcdensenet_forward.16} parent=67 // pred_fallthru
        _
    $region68: #{fcdensenet_forward.16} parent=5 // pred_fallthru
      _
  $region6: #{fcdensenet_forward.16} parent=0 // loop_footer
    %s20 = sadd.s32 1, %s16
  $region7: #{fcdensenet_forward.16} parent=0 // loop_footer_branch
    %15 = sbr.rel target = $region3
  $region8: #{fcdensenet_forward.16} parent=0 // loop_exit
    _

// kernel: fcdensenet_forward.19
$region0: #{fcdensenet_forward.19}
  #allocation0 [shape = 'u32[]', space=smem, size = 0x4, offset = 0x4, fixed_abs, tag = 'smem constant byte address 0x4 - core index']
  #allocation1 [shape = 'u32[72,128]{1,0:T(1,128)}', space=vmem, size = 0x9000, scoped, tag = 'internal scratch']
  %s0 = inlined_call_operand.vmem [shape: f32[2,8,100], index: 0, kind: input, shape index: {}]
  %s1 = inlined_call_operand.vmem [shape: f32[2,4,1], index: 1, kind: input, shape index: {}]
  %s2 = inlined_call_operand.vmem [shape: f32[1,100], index: 2, kind: input, shape index: {}]
  %s3 = inlined_call_operand.vmem [shape: bf16[32,48], index: 3, kind: input, shape index: {}]
  %s4 = inlined_call_operand.vmem [shape: f32[8,1], index: 4, kind: input, shape index: {}]
  %s5 = inlined_call_operand.hbm [shape: f32[4,80,324], index: 5, kind: input, shape index: {}]
  %s6 = inlined_call_operand.vmem [shape: f32[2,8,324], index: 6, kind: output, shape index: {}]
  %s7 = sld [smem:[#allocation0]]
  $region61: #{fcdensenet_forward.19} parent=0
    _
  %s9 = ssub.s32 1, %s7
  %s10 = scalar_select 0, %s9, %s7
  $region1: #{fcdensenet_forward.19} parent=0
    #allocation2 [shape = 'u8[491520]{0}', space=vmem, size = 0x78000, scoped, tag = 'input window, operand 5, single buffered']
    #allocation3 [shape = 's32[2]{0}', space=sflag, size = 0x8, scoped, tag = 'scoped memory for fcdensenet_forward.19']
    %11 = vsyncpa [#allocation3], 0
    loop: start=0, step=1, limit=4
    $region2: #{fcdensenet_forward.19} parent=1 // loop_pre_header
      _
    $region3: #{fcdensenet_forward.19} parent=1 // loop_header
      %s13 = sphi 0, %s17
      %p14 = scmp.ge.s32.totalorder %s13, 4
      %s23 = sphi 0, %s25
      %s26 = sphi 0, %s23
      %s27 = sphi 0, %s26
      %s43 = sphi 0, %s27
      %s49 = sphi 0, %s51
      %s52 = sphi 0, %s49
      %s53 = sphi 0, %s52
      %s69 = sphi 0, %s53
      %s73 = sphi 0, %s73
      %s75 = sphi 0, %s73
      %s76 = sphi 0, %s75
      %s90 = sphi 0, %s76
      %s94 = sphi 0, %s94
      %s96 = sphi 0, %s94
      %s97 = sphi 0, %s96
      %s111 = sphi 0, %s97
      %s115 = sphi 0, %s115
      %s117 = sphi 0, %s115
      %s118 = sphi 0, %s117
      %s132 = sphi 0, %s118
      %s136 = sphi 0, %s136
      %s138 = sphi 0, %s136
      %s139 = sphi 0, %s138
      %s153 = sphi 0, %s139
      %s159 = sphi 0, %s161
      %s162 = sphi 0, %s159
      %s163 = sphi 0, %s162
      %s179 = sphi 0, %s163
    $region4: #{fcdensenet_forward.19} parent=1 // loop_header_branch
      %16 = sbr.rel (%p14) target = $region8
    $region5: #{fcdensenet_forward.19} parent=1 // loop_body
      %s18 = ssub.s32 %s13, 1
      %s19 = ssub.s32 %s13, 2
      %s20 = sadd.s32 %s13, 1
      %s21 = ssub.s32 %s13, %s20
      %p22 = scmp.eq.s32.totalorder %s21, 0
      %s24 = sadd.s32 %s23, 1
      %s25 = scalar_select %p22, %s23, %s24
      %p28 = pneg %p22
      %p29 = scmp.eq.s32.totalorder %s13, 1
      %p30 = por %p28, %p29
      %p31 = scmp.ne.s32.totalorder %s23, %s26
      %p32 = scmp.eq.s32.totalorder %s13, 0
      %p33 = por %p31, %p32
      %p34 = scmp.ne.s32.totalorder %s23, %s26
      %p35 = scmp.eq.s32.totalorder %s18, 1
      %p36 = por %p34, %p35
      %p37 = scmp.ne.s32.totalorder %s26, %s27
      %p38 = scmp.eq.s32.totalorder %s18, 0
      %p39 = por %p37, %p38
      %p40 = scmp.ne.s32.totalorder %s26, %s27
      %p41 = scmp.eq.s32.totalorder %s19, 1
      %p42 = por %p40, %p41
      %p44 = scmp.ne.s32.totalorder %s27, %s43
      %p45 = scmp.eq.s32.totalorder %s19, 0
      %p46 = por %p44, %p45
      %s47 = ssub.s32 %s13, %s20
      %p48 = scmp.eq.s32.totalorder %s47, 0
      %s50 = sadd.s32 %s49, 1
      %s51 = scalar_select %p48, %s49, %s50
      %p54 = pneg %p48
      %p55 = scmp.eq.s32.totalorder %s13, 1
      %p56 = por %p54, %p55
      %p57 = scmp.ne.s32.totalorder %s49, %s52
      %p58 = scmp.eq.s32.totalorder %s13, 0
      %p59 = por %p57, %p58
      %p60 = scmp.ne.s32.totalorder %s49, %s52
      %p61 = scmp.eq.s32.totalorder %s18, 1
      %p62 = por %p60, %p61
      %p63 = scmp.ne.s32.totalorder %s52, %s53
      %p64 = scmp.eq.s32.totalorder %s18, 0
      %p65 = por %p63, %p64
      %p66 = scmp.ne.s32.totalorder %s52, %s53
      %p67 = scmp.eq.s32.totalorder %s19, 1
      %p68 = por %p66, %p67
      %p70 = scmp.ne.s32.totalorder %s53, %s69
      %p71 = scmp.eq.s32.totalorder %s19, 0
      %p72 = por %p70, %p71
      %s74 = sadd.s32 %s73, 1
      %p77 = scmp.eq.s32.totalorder %s13, 1
      %p78 = scmp.ne.s32.totalorder %s73, %s75
      %p79 = scmp.eq.s32.totalorder %s13, 0
      %p80 = por %p78, %p79
      %p81 = scmp.ne.s32.totalorder %s73, %s75
      %p82 = scmp.eq.s32.totalorder %s18, 1
      %p83 = por %p81, %p82
      %p84 = scmp.ne.s32.totalorder %s75, %s76
      %p85 = scmp.eq.s32.totalorder %s18, 0
      %p86 = por %p84, %p85
      %p87 = scmp.ne.s32.totalorder %s75, %s76
      %p88 = scmp.eq.s32.totalorder %s19, 1
      %p89 = por %p87, %p88
      %p91 = scmp.ne.s32.totalorder %s76, %s90
      %p92 = scmp.eq.s32.totalorder %s19, 0
      %p93 = por %p91, %p92
      %s95 = sadd.s32 %s94, 1
      %p98 = scmp.eq.s32.totalorder %s13, 1
      %p99 = scmp.ne.s32.totalorder %s94, %s96
      %p100 = scmp.eq.s32.totalorder %s13, 0
      %p101 = por %p99, %p100
      %p102 = scmp.ne.s32.totalorder %s94, %s96
      %p103 = scmp.eq.s32.totalorder %s18, 1
      %p104 = por %p102, %p103
      %p105 = scmp.ne.s32.totalorder %s96, %s97
      %p106 = scmp.eq.s32.totalorder %s18, 0
      %p107 = por %p105, %p106
      %p108 = scmp.ne.s32.totalorder %s96, %s97
      %p109 = scmp.eq.s32.totalorder %s19, 1
      %p110 = por %p108, %p109
      %p112 = scmp.ne.s32.totalorder %s97, %s111
      %p113 = scmp.eq.s32.totalorder %s19, 0
      %p114 = por %p112, %p113
      %s116 = sadd.s32 %s115, 1
      %p119 = scmp.eq.s32.totalorder %s13, 1
      %p120 = scmp.ne.s32.totalorder %s115, %s117
      %p121 = scmp.eq.s32.totalorder %s13, 0
      %p122 = por %p120, %p121
      %p123 = scmp.ne.s32.totalorder %s115, %s117
      %p124 = scmp.eq.s32.totalorder %s18, 1
      %p125 = por %p123, %p124
      %p126 = scmp.ne.s32.totalorder %s117, %s118
      %p127 = scmp.eq.s32.totalorder %s18, 0
      %p128 = por %p126, %p127
      %p129 = scmp.ne.s32.totalorder %s117, %s118
      %p130 = scmp.eq.s32.totalorder %s19, 1
      %p131 = por %p129, %p130
      %p133 = scmp.ne.s32.totalorder %s118, %s132
      %p134 = scmp.eq.s32.totalorder %s19, 0
      %p135 = por %p133, %p134
      %s137 = sadd.s32 %s136, 1
      %p140 = scmp.eq.s32.totalorder %s13, 1
      %p141 = scmp.ne.s32.totalorder %s136, %s138
      %p142 = scmp.eq.s32.totalorder %s13, 0
      %p143 = por %p141, %p142
      %p144 = scmp.ne.s32.totalorder %s136, %s138
      %p145 = scmp.eq.s32.totalorder %s18, 1
      %p146 = por %p144, %p145
      %p147 = scmp.ne.s32.totalorder %s138, %s139
      %p148 = scmp.eq.s32.totalorder %s18, 0
      %p149 = por %p147, %p148
      %p150 = scmp.ne.s32.totalorder %s138, %s139
      %p151 = scmp.eq.s32.totalorder %s19, 1
      %p152 = por %p150, %p151
      %p154 = scmp.ne.s32.totalorder %s139, %s153
      %p155 = scmp.eq.s32.totalorder %s19, 0
      %p156 = por %p154, %p155
      %s157 = ssub.s32 %s13, %s20
      %p158 = scmp.eq.s32.totalorder %s157, 0
      %s160 = sadd.s32 %s159, 1
      %s161 = scalar_select %p158, %s159, %s160
      %p164 = pneg %p158
      %p165 = scmp.eq.s32.totalorder %s13, 1
      %p166 = por %p164, %p165
      %p167 = scmp.ne.s32.totalorder %s159, %s162
      %p168 = scmp.eq.s32.totalorder %s13, 0
      %p169 = por %p167, %p168
      %p170 = scmp.ne.s32.totalorder %s159, %s162
      %p171 = scmp.eq.s32.totalorder %s18, 1
      %p172 = por %p170, %p171
      %p173 = scmp.ne.s32.totalorder %s162, %s163
      %p174 = scmp.eq.s32.totalorder %s18, 0
      %p175 = por %p173, %p174
      %p176 = scmp.ne.s32.totalorder %s162, %s163
      %p177 = scmp.eq.s32.totalorder %s19, 1
      %p178 = por %p176, %p177
      %p180 = scmp.ne.s32.totalorder %s163, %s179
      %p181 = scmp.eq.s32.totalorder %s19, 0
      %p182 = por %p180, %p181
      %p183 = scmp.le.s32.totalorder 1, %s13
      %p184 = scmp.lt.s32.totalorder %s13, 3
      %p185 = pnand %p183, %p184
      %p186 = pneg %p185
      // Predicated region
      $region9: #{fcdensenet_forward.19} parent=5 // pred_check
        _
      $region10: #{fcdensenet_forward.19} parent=5 // pred_check_branch
        %188 = sbr.rel (%p185) target = $region12
      $region11: #{fcdensenet_forward.19} parent=5 // pred_region
        %s189 = ssub.s32 %s13, 1
        // Predicated region
        $region13: #{fcdensenet_forward.19} parent=11 // pred_check
          %p190 = pneg %p86
        $region14: #{fcdensenet_forward.19} parent=11 // pred_check_branch
          %192 = sbr.rel (%p190) target = $region16
        $region15: #{fcdensenet_forward.19} parent=11 // pred_region
          _
        $region16: #{fcdensenet_forward.19} parent=11 // pred_fallthru
          _
        // Predicated region
        $region17: #{fcdensenet_forward.19} parent=11 // pred_check
          %p193 = pneg %p107
        $region18: #{fcdensenet_forward.19} parent=11 // pred_check_branch
          %195 = sbr.rel (%p193) target = $region20
        $region19: #{fcdensenet_forward.19} parent=11 // pred_region
          _
        $region20: #{fcdensenet_forward.19} parent=11 // pred_fallthru
          _
        // Predicated region
        $region21: #{fcdensenet_forward.19} parent=11 // pred_check
          %p196 = pneg %p128
        $region22: #{fcdensenet_forward.19} parent=11 // pred_check_branch
          %198 = sbr.rel (%p196) target = $region24
        $region23: #{fcdensenet_forward.19} parent=11 // pred_region
          _
        $region24: #{fcdensenet_forward.19} parent=11 // pred_fallthru
          _
        // Predicated region
        $region25: #{fcdensenet_forward.19} parent=11 // pred_check
          %p199 = pneg %p149
        $region26: #{fcdensenet_forward.19} parent=11 // pred_check_branch
          %201 = sbr.rel (%p199) target = $region28
        $region27: #{fcdensenet_forward.19} parent=11 // pred_region
          %203 = vsyncadd [#allocation3], 0
          %s204 = sshll.u32 %s5, 4
          %s205 = int_to_ptr.hbm [resolvable:$true] %s204
          %s206 = sshll.u32 [#allocation2], 4
          %s207 = int_to_ptr.vmem [resolvable:$true] %s206
          %212 = dma.hbm_to_vmem [thread:$0]  %s205, 15360, %s207, [#allocation3], 384, 384, 24
        $region28: #{fcdensenet_forward.19} parent=11 // pred_fallthru
          _
      $region12: #{fcdensenet_forward.19} parent=5 // pred_fallthru
        _
      %p213 = scmp.lt.s32.totalorder %s13, 2
      // Predicated region
      $region29: #{fcdensenet_forward.19} parent=5 // pred_check
        %p214 = pneg %p213
      $region30: #{fcdensenet_forward.19} parent=5 // pred_check_branch
        %216 = sbr.rel (%p214) target = $region32
      $region31: #{fcdensenet_forward.19} parent=5 // pred_region
        // Predicated region
        $region33: #{fcdensenet_forward.19} parent=31 // pred_check
          %p217 = pneg %p33
        $region34: #{fcdensenet_forward.19} parent=31 // pred_check_branch
          %219 = sbr.rel (%p217) target = $region36
        $region35: #{fcdensenet_forward.19} parent=31 // pred_region
          %p220 = scmp.lt.s32.totalorder %s13, 1
          %s221 = scalar_select %p220, %s13, 1
          %s222 = smul.addr %s221, 8
          %s223 = scalar_lea.vmem %s0, %s222
        $region36: #{fcdensenet_forward.19} parent=31 // pred_fallthru
          _
        // Predicated region
        $region37: #{fcdensenet_forward.19} parent=31 // pred_check
          %p224 = pneg %p59
        $region38: #{fcdensenet_forward.19} parent=31 // pred_check_branch
          %226 = sbr.rel (%p224) target = $region40
        $region39: #{fcdensenet_forward.19} parent=31 // pred_region
          %p227 = scmp.lt.s32.totalorder %s13, 1
          %s228 = scalar_select %p227, %s13, 1
          %s229 = smul.addr %s228, 4
          %s230 = scalar_lea.vmem %s1, %s229
        $region40: #{fcdensenet_forward.19} parent=31 // pred_fallthru
          _
      $region32: #{fcdensenet_forward.19} parent=5 // pred_fallthru
        _
      %p231 = scmp.le.s32.totalorder 1, %s13
      %p232 = scmp.lt.s32.totalorder %s13, 3
      %p233 = pnand %p231, %p232
      %p234 = pneg %p233
      // Predicated region
      $region41: #{fcdensenet_forward.19} parent=5 // pred_check
        _
      $region42: #{fcdensenet_forward.19} parent=5 // pred_check_branch
        %236 = sbr.rel (%p233) target = $region44
      $region43: #{fcdensenet_forward.19} parent=5 // pred_region
        %s237 = ssub.s32 %s13, 1
        // Predicated region
        $region45: #{fcdensenet_forward.19} parent=43 // pred_check
          %p238 = pneg %p149
        $region46: #{fcdensenet_forward.19} parent=43 // pred_check_branch
          %240 = sbr.rel (%p238) target = $region48
        $region47: #{fcdensenet_forward.19} parent=43 // pred_region
          %242 = dma.done [#allocation3], 15360
        $region48: #{fcdensenet_forward.19} parent=43 // pred_fallthru
          _
        %p243 = scmp.lt.s32.totalorder %s18, 1
        %s244 = scalar_select %p243, %s18, 1
        %s245 = smul.addr %s244, 8
        %s246 = scalar_lea.vmem %s0, %s245
        %p247 = pneg %p39
        %p248 = pneg %p36
        %p249 = scmp.lt.s32.totalorder %s18, 1
        %s250 = scalar_select %p249, %s18, 1
        %s251 = smul.addr %s250, 4
        %s252 = scalar_lea.vmem %s1, %s251
        %p253 = pneg %p65
        %p254 = pneg %p62
        %p255 = pneg %p86
        %p256 = pneg %p83
        %p257 = pneg %p107
        %p258 = pneg %p104
        %p259 = pneg %p128
        %p260 = pneg %p125
        %p261 = pneg %p149
        %p262 = pneg %p146
        %p263 = pneg %p175
        %p264 = pneg %p172
        %p265 = scmp.lt.s32.totalorder %s18, 1
        %s266 = scalar_select %p265, %s18, 1
        %s267 = smul.addr %s266, 3
        %s268 = smul.addr %s267, 8
        %s269 = scalar_lea.vmem %s6, %s268
        %p270 = scmp.lt.s32.totalorder %s18, 1
        %s271 = scalar_select %p270, %s18, 1
        %s272 = smul.addr %s271, 8
        %s273 = scalar_lea.vmem %s0, %s272
        %p274 = scmp.lt.s32.totalorder %s18, 1
        %s275 = scalar_select %p274, %s18, 1
        %s276 = smul.addr %s275, 4
        %s277 = scalar_lea.vmem %s1, %s276
        %p278 = scmp.lt.s32.totalorder %s18, 1
        %s279 = scalar_select %p278, %s18, 1
        %s280 = smul.addr %s279, 3
        %s281 = smul.addr %s280, 8
        %s282 = scalar_lea.vmem %s6, %s281
        %v284 = vld [vmem:[%s2] sm:$0x1]
        %vm285 = vcmp.gt.f32.partialorder %v284, 0.5
        %v286 = vld [vmem:[%s273] sm:$0xff]
        %v287 = vsel %vm285, 1, 0
        %v288 = vperm.slane %v287, 0
        %vm289 = vcmp.eq.s32.totalorder %v288, 1
        %v290 = vsel %vm289, %v286, 0.0
        %v291 = vld [vmem:[%s277] sm:$0xf]
        %293 = vset.pattern.permute.xlu0 0
        %294 = vperm.xlu0 %293, %v291
        %v295 = vpop.permute.xlu0 %294
        %v297 = vsel %vm289, %v295, 0.0
        %v298 = vpack.c.bf16 %v290, %v290
        %v299 = vpack.c.bf16 %v297, %v297
        %v302 = vunpack.c.l.b16 %v298
        %v303 = vunpack.c.l.b16 %v299
        %v304 = vpack.c.b16 %v303, %v302
        %v305 = vrot.slane %v304, 2
        %306 = vrot.lane.b32.xlu0 %v305, 127
        %v307 = vpop.permute.xlu0 %306
        %v308 = vpack.c.b16 %v302, %v302
        %v309 = vpack.c.b16 %v303, %v303
        %310 = vrot.lane.b32.xlu0 %v308, 118
        %v311 = vpop.permute.xlu0 %310
        %312 = vrot.lane.b32.xlu0 %v309, 118
        %v313 = vpop.permute.xlu0 %312
        %v314 = vrot.slane %v304, 6
        %315 = vrot.lane.b32.xlu0 %v314, 117
        %v316 = vpop.permute.xlu0 %315
        %vm317 = vcmask 1045504
        %v320 = vsel %vm317, %v304, %v307
        %vm322 = vcmask 1043456
        %v324 = vsel %vm322, %v307, %v311
        %vm326 = vcmask 1041408
        %v329 = vsel %vm326, %v313, %v316
        %v331 = vld [vmem:[%s3] sm:$0xf]
        %v332 = vld [vmem:[%s3 + $0x4] sm:$0xf]
        %v333 = vld [vmem:[%s3 + $0x8] sm:$0xf]
        %v334 = vld [vmem:[%s3 + $0xc] sm:$0xf]
        %v339 = vunpack.c.l.b16 %v331
        %v340 = vunpack.c.l.b16 %v332
        %v341 = vunpack.c.l.b16 %v333
        %v342 = vunpack.c.l.b16 %v334
        %v343 = vpack.c.b16 %v340, %v339
        %v344 = vpack.c.b16 %v342, %v341
        %vm345 = vcmask 392192
        %v347 = vsel %vm345, %v343, 0
        %v350 = vsel %vm345, %v344, 0
        %352 = vmatpush.bf16.msra.mxu0 0
        %353 = vmatpush.bf16.msra.mxu0 0
        %354 = vmatpush.bf16.msra.mxu0 0
        %355 = vmatpush.bf16.msra.mxu0 0
        %356 = vmatpush.bf16.msra.mxu0 0
        %357 = vmatpush.bf16.msra.mxu0 %v329
        %358 = vmatpush.bf16.msra.mxu0 %v324
        %359 = vmatpush.bf16.msra.mxu0 %v320
        %360 = vmatmul.bf16.gmra.mxu0 %v347
        %v361 = vpop.f32.mrf.mxu0
        %v362 = vadd.f32 0.0, %v361
        %v363 = vpop.f32.mrf.mxu0
        %v364 = vadd.f32 0.0, %v363
        %365 = vmatmul.bf16.gmra.mxu0 %v350
        %v366 = vpop.f32.mrf.mxu0
        %v367 = vadd.f32 0.0, %v366
        %v368 = vpop.f32.mrf.mxu0
        %v369 = vadd.f32 0.0, %v368
        %370 = vdwg.mxu0
        %v371 = vld [vmem:[%s4] sm:$0xff]
        %373 = vset.pattern.permute.xlu0 0
        %374 = vperm.xlu0 %373, %v371
        %v375 = vpop.permute.xlu0 %374
        %v377 = vadd.f32 %v362, %v375
        %v378 = vld [vmem:[#allocation2] sm:$0xff]
        %v379 = vld [vmem:[#allocation2 + $0x8] sm:$0xff]
        %v380 = vld [vmem:[#allocation2 + $0x10] sm:$0xff]
        %v381 = vld [vmem:[#allocation2 + $0x18] sm:$0xff]
        %v382 = vld [vmem:[#allocation2 + $0x20] sm:$0xff]
        %v383 = vld [vmem:[#allocation2 + $0x28] sm:$0xff]
        %v384 = vld [vmem:[#allocation2 + $0x30] sm:$0xff]
        %v385 = vld [vmem:[#allocation2 + $0x38] sm:$0xff]
        %v386 = vld [vmem:[#allocation2 + $0x40] sm:$0xff]
        %v387 = vld [vmem:[#allocation2 + $0x48] sm:$0xff]
        %v388 = vld [vmem:[#allocation2 + $0x50] sm:$0xff]
        %v389 = vld [vmem:[#allocation2 + $0x58] sm:$0xff]
        %v390 = vld [vmem:[#allocation2 + $0x60] sm:$0xff]
        %v391 = vld [vmem:[#allocation2 + $0x68] sm:$0xff]
        %v392 = vld [vmem:[#allocation2 + $0x70] sm:$0xff]
        %v393 = vld [vmem:[#allocation2 + $0x78] sm:$0xff]
        %v394 = vld [vmem:[#allocation2 + $0x80] sm:$0xff]
        %v395 = vld [vmem:[#allocation2 + $0x88] sm:$0xff]
        %v396 = vld [vmem:[#allocation2 + $0x90] sm:$0xff]
        %v397 = vld [vmem:[#allocation2 + $0x98] sm:$0xff]
        %v398 = vld [vmem:[#allocation2 + $0xa0] sm:$0xff]
        %v399 = vld [vmem:[#allocation2 + $0xa8] sm:$0xff]
        %v400 = vld [vmem:[#allocation2 + $0xb0] sm:$0xff]
        %v401 = vld [vmem:[#allocation2 + $0xb8] sm:$0xff]
        %v402 = vld [vmem:[#allocation2 + $0xc0] sm:$0xff]
        %v403 = vld [vmem:[#allocation2 + $0xc8] sm:$0xff]
        %v404 = vld [vmem:[#allocation2 + $0xd0] sm:$0xff]
        %v405 = vld [vmem:[#allocation2 + $0xd8] sm:$0xff]
        %v406 = vld [vmem:[#allocation2 + $0xe0] sm:$0xff]
        %v407 = vld [vmem:[#allocation2 + $0xe8] sm:$0xff]
        %v408 = vadd.f32 %v364, %v375
        %s409 = scalar_lea.vmem [#allocation2], 240
        %v410 = vld [vmem:[%s409] sm:$0xff]
        %v411 = vld [vmem:[%s409 + $0x8] sm:$0xff]
        %v412 = vld [vmem:[%s409 + $0x10] sm:$0xff]
        %v413 = vld [vmem:[%s409 + $0x18] sm:$0xff]
        %v414 = vld [vmem:[%s409 + $0x20] sm:$0xff]
        %v415 = vld [vmem:[%s409 + $0x28] sm:$0xff]
        %v416 = vld [vmem:[%s409 + $0x30] sm:$0xff]
        %v417 = vld [vmem:[%s409 + $0x38] sm:$0xff]
        %v418 = vld [vmem:[%s409 + $0x40] sm:$0xff]
        %v419 = vld [vmem:[%s409 + $0x48] sm:$0xff]
        %v420 = vld [vmem:[%s409 + $0x50] sm:$0xff]
        %v421 = vld [vmem:[%s409 + $0x58] sm:$0xff]
        %v422 = vld [vmem:[%s409 + $0x60] sm:$0xff]
        %v423 = vld [vmem:[%s409 + $0x68] sm:$0xff]
        %v424 = vld [vmem:[%s409 + $0x70] sm:$0xff]
        %v425 = vld [vmem:[%s409 + $0x78] sm:$0xff]
        %v426 = vld [vmem:[%s409 + $0x80] sm:$0xff]
        %v427 = vld [vmem:[%s409 + $0x88] sm:$0xff]
        %v428 = vld [vmem:[%s409 + $0x90] sm:$0xff]
        %v429 = vld [vmem:[%s409 + $0x98] sm:$0xff]
        %v430 = vld [vmem:[%s409 + $0xa0] sm:$0xff]
        %v431 = vld [vmem:[%s409 + $0xa8] sm:$0xff]
        %v432 = vld [vmem:[%s409 + $0xb0] sm:$0xff]
        %v433 = vld [vmem:[%s409 + $0xb8] sm:$0xff]
        %v434 = vld [vmem:[%s409 + $0xc0] sm:$0xff]
        %v435 = vld [vmem:[%s409 + $0xc8] sm:$0xff]
        %v436 = vld [vmem:[%s409 + $0xd0] sm:$0xff]
        %v437 = vld [vmem:[%s409 + $0xd8] sm:$0xff]
        %v438 = vld [vmem:[%s409 + $0xe0] sm:$0xff]
        %v439 = vld [vmem:[%s409 + $0xe8] sm:$0xff]
        %vm440 = vcmask 654336
        %v442 = vsel %vm440, %v408, 0
        %444 = vmatpush.msra.mxu0 0.0
        %445 = vmatpush.msra.mxu0 0.0
        %446 = vmatpush.msra.mxu0 0.0
        %447 = vmatpush.msra.mxu0 0.0
        %448 = vmatpush.msra.mxu0 0.0
        %449 = vmatpush.msra.mxu0 0.0
        %450 = vmatpush.msra.mxu0 %v437
        %451 = vmatpush.msra.mxu0 %v434
        %452 = vmatpush.msra.mxu0 %v431
        %453 = vmatpush.msra.mxu0 %v428
        %454 = vmatpush.msra.mxu0 %v425
        %455 = vmatpush.msra.mxu0 %v422
        %456 = vmatpush.msra.mxu0 %v419
        %457 = vmatpush.msra.mxu0 %v416
        %458 = vmatpush.msra.mxu0 %v413
        %459 = vmatpush.msra.mxu0 %v410
        %460 = vmatmul.f32.gmra.mxu0 %v442
        %v461 = vpop.f32.mrf.mxu0
        %v462 = vadd.f32 0.0, %v461
        %463 = vdwg.mxu0
        %464 = vmatpush.msra.mxu0 0.0
        %465 = vmatpush.msra.mxu0 0.0
        %466 = vmatpush.msra.mxu0 0.0
        %467 = vmatpush.msra.mxu0 0.0
        %468 = vmatpush.msra.mxu0 0.0
        %469 = vmatpush.msra.mxu0 0.0
        %470 = vmatpush.msra.mxu0 %v438
        %471 = vmatpush.msra.mxu0 %v435
        %472 = vmatpush.msra.mxu0 %v432
        %473 = vmatpush.msra.mxu0 %v429
        %474 = vmatpush.msra.mxu0 %v426
        %475 = vmatpush.msra.mxu0 %v423
        %476 = vmatpush.msra.mxu0 %v420
        %477 = vmatpush.msra.mxu0 %v417
        %478 = vmatpush.msra.mxu0 %v414
        %479 = vmatpush.msra.mxu0 %v411
        %480 = vmatmul.f32.gmra.mxu0 %v442
        %v481 = vpop.f32.mrf.mxu0
        %v482 = vadd.f32 0.0, %v481
        %483 = vdwg.mxu0
        %484 = vmatpush.msra.mxu0 0.0
        %485 = vmatpush.msra.mxu0 0.0
        %486 = vmatpush.msra.mxu0 0.0
        %487 = vmatpush.msra.mxu0 0.0
        %488 = vmatpush.msra.mxu0 0.0
        %489 = vmatpush.msra.mxu0 0.0
        %490 = vmatpush.msra.mxu0 %v439
        %491 = vmatpush.msra.mxu0 %v436
        %492 = vmatpush.msra.mxu0 %v433
        %493 = vmatpush.msra.mxu0 %v430
        %494 = vmatpush.msra.mxu0 %v427
        %495 = vmatpush.msra.mxu0 %v424
        %496 = vmatpush.msra.mxu0 %v421
        %497 = vmatpush.msra.mxu0 %v418
        %498 = vmatpush.msra.mxu0 %v415
        %499 = vmatpush.msra.mxu0 %v412
        %500 = vmatmul.f32.gmra.mxu0 %v442
        %v501 = vpop.f32.mrf.mxu0
        %v502 = vadd.f32 0.0, %v501
        %503 = vdwg.mxu0
        %v505 = vsel %vm440, %v377, 0
        %507 = vmatpush.msra.mxu0 0.0
        %508 = vmatpush.msra.mxu0 0.0
        %509 = vmatpush.msra.mxu0 0.0
        %510 = vmatpush.msra.mxu0 0.0
        %511 = vmatpush.msra.mxu0 0.0
        %512 = vmatpush.msra.mxu0 0.0
        %513 = vmatpush.msra.mxu0 %v405
        %514 = vmatpush.msra.mxu0 %v402
        %515 = vmatpush.msra.mxu0 %v399
        %516 = vmatpush.msra.mxu0 %v396
        %517 = vmatpush.msra.mxu0 %v393
        %518 = vmatpush.msra.mxu0 %v390
        %519 = vmatpush.msra.mxu0 %v387
        %520 = vmatpush.msra.mxu0 %v384
        %521 = vmatpush.msra.mxu0 %v381
        %522 = vmatpush.msra.mxu0 %v378
        %523 = vmatmul.f32.gmra.mxu0 %v505
        %v524 = vpop.f32.mrf.mxu0
        %v525 = vadd.f32 %v462, %v524
        %526 = vdwg.mxu0
        %527 = vmatpush.msra.mxu0 0.0
        %528 = vmatpush.msra.mxu0 0.0
        %529 = vmatpush.msra.mxu0 0.0
        %530 = vmatpush.msra.mxu0 0.0
        %531 = vmatpush.msra.mxu0 0.0
        %532 = vmatpush.msra.mxu0 0.0
        %533 = vmatpush.msra.mxu0 %v406
        %534 = vmatpush.msra.mxu0 %v403
        %535 = vmatpush.msra.mxu0 %v400
        %536 = vmatpush.msra.mxu0 %v397
        %537 = vmatpush.msra.mxu0 %v394
        %538 = vmatpush.msra.mxu0 %v391
        %539 = vmatpush.msra.mxu0 %v388
        %540 = vmatpush.msra.mxu0 %v385
        %541 = vmatpush.msra.mxu0 %v382
        %542 = vmatpush.msra.mxu0 %v379
        %543 = vmatmul.f32.gmra.mxu0 %v505
        %v544 = vpop.f32.mrf.mxu0
        %v545 = vadd.f32 %v482, %v544
        %546 = vdwg.mxu0
        %547 = vmatpush.msra.mxu0 0.0
        %548 = vmatpush.msra.mxu0 0.0
        %549 = vmatpush.msra.mxu0 0.0
        %550 = vmatpush.msra.mxu0 0.0
        %551 = vmatpush.msra.mxu0 0.0
        %552 = vmatpush.msra.mxu0 0.0
        %553 = vmatpush.msra.mxu0 %v407
        %554 = vmatpush.msra.mxu0 %v404
        %555 = vmatpush.msra.mxu0 %v401
        %556 = vmatpush.msra.mxu0 %v398
        %557 = vmatpush.msra.mxu0 %v395
        %558 = vmatpush.msra.mxu0 %v392
        %559 = vmatpush.msra.mxu0 %v389
        %560 = vmatpush.msra.mxu0 %v386
        %561 = vmatpush.msra.mxu0 %v383
        %562 = vmatpush.msra.mxu0 %v380
        %563 = vmatmul.f32.gmra.mxu0 %v505
        %v564 = vpop.f32.mrf.mxu0
        %v565 = vadd.f32 %v502, %v564
        %566 = vdwg.mxu0
        %v567 = vadd.f32 %v367, %v375
        %s568 = scalar_lea.vmem [#allocation2], 480
        %v569 = vld [vmem:[%s568] sm:$0xff]
        %v570 = vld [vmem:[%s568 + $0x8] sm:$0xff]
        %v571 = vld [vmem:[%s568 + $0x10] sm:$0xff]
        %v572 = vld [vmem:[%s568 + $0x18] sm:$0xff]
        %v573 = vld [vmem:[%s568 + $0x20] sm:$0xff]
        %v574 = vld [vmem:[%s568 + $0x28] sm:$0xff]
        %v575 = vld [vmem:[%s568 + $0x30] sm:$0xff]
        %v576 = vld [vmem:[%s568 + $0x38] sm:$0xff]
        %v577 = vld [vmem:[%s568 + $0x40] sm:$0xff]
        %v578 = vld [vmem:[%s568 + $0x48] sm:$0xff]
        %v579 = vld [vmem:[%s568 + $0x50] sm:$0xff]
        %v580 = vld [vmem:[%s568 + $0x58] sm:$0xff]
        %v581 = vld [vmem:[%s568 + $0x60] sm:$0xff]
        %v582 = vld [vmem:[%s568 + $0x68] sm:$0xff]
        %v583 = vld [vmem:[%s568 + $0x70] sm:$0xff]
        %v584 = vld [vmem:[%s568 + $0x78] sm:$0xff]
        %v585 = vld [vmem:[%s568 + $0x80] sm:$0xff]
        %v586 = vld [vmem:[%s568 + $0x88] sm:$0xff]
        %v587 = vld [vmem:[%s568 + $0x90] sm:$0xff]
        %v588 = vld [vmem:[%s568 + $0x98] sm:$0xff]
        %v589 = vld [vmem:[%s568 + $0xa0] sm:$0xff]
        %v590 = vld [vmem:[%s568 + $0xa8] sm:$0xff]
        %v591 = vld [vmem:[%s568 + $0xb0] sm:$0xff]
        %v592 = vld [vmem:[%s568 + $0xb8] sm:$0xff]
        %v593 = vld [vmem:[%s568 + $0xc0] sm:$0xff]
        %v594 = vld [vmem:[%s568 + $0xc8] sm:$0xff]
        %v595 = vld [vmem:[%s568 + $0xd0] sm:$0xff]
        %v596 = vld [vmem:[%s568 + $0xd8] sm:$0xff]
        %v597 = vld [vmem:[%s568 + $0xe0] sm:$0xff]
        %v598 = vld [vmem:[%s568 + $0xe8] sm:$0xff]
        %v600 = vsel %vm440, %v567, 0
        %602 = vmatpush.msra.mxu0 0.0
        %603 = vmatpush.msra.mxu0 0.0
        %604 = vmatpush.msra.mxu0 0.0
        %605 = vmatpush.msra.mxu0 0.0
        %606 = vmatpush.msra.mxu0 0.0
        %607 = vmatpush.msra.mxu0 0.0
        %608 = vmatpush.msra.mxu0 %v596
        %609 = vmatpush.msra.mxu0 %v593
        %610 = vmatpush.msra.mxu0 %v590
        %611 = vmatpush.msra.mxu0 %v587
        %612 = vmatpush.msra.mxu0 %v584
        %613 = vmatpush.msra.mxu0 %v581
        %614 = vmatpush.msra.mxu0 %v578
        %615 = vmatpush.msra.mxu0 %v575
        %616 = vmatpush.msra.mxu0 %v572
        %617 = vmatpush.msra.mxu0 %v569
        %618 = vmatmul.f32.gmra.mxu0 %v600
        %v619 = vpop.f32.mrf.mxu0
        %v620 = vadd.f32 0.0, %v619
        %621 = vdwg.mxu0
        %622 = vmatpush.msra.mxu0 0.0
        %623 = vmatpush.msra.mxu0 0.0
        %624 = vmatpush.msra.mxu0 0.0
        %625 = vmatpush.msra.mxu0 0.0
        %626 = vmatpush.msra.mxu0 0.0
        %627 = vmatpush.msra.mxu0 0.0
        %628 = vmatpush.msra.mxu0 %v597
        %629 = vmatpush.msra.mxu0 %v594
        %630 = vmatpush.msra.mxu0 %v591
        %631 = vmatpush.msra.mxu0 %v588
        %632 = vmatpush.msra.mxu0 %v585
        %633 = vmatpush.msra.mxu0 %v582
        %634 = vmatpush.msra.mxu0 %v579
        %635 = vmatpush.msra.mxu0 %v576
        %636 = vmatpush.msra.mxu0 %v573
        %637 = vmatpush.msra.mxu0 %v570
        %638 = vmatmul.f32.gmra.mxu0 %v600
        %v639 = vpop.f32.mrf.mxu0
        %v640 = vadd.f32 0.0, %v639
        %641 = vdwg.mxu0
        %642 = vmatpush.msra.mxu0 0.0
        %643 = vmatpush.msra.mxu0 0.0
        %644 = vmatpush.msra.mxu0 0.0
        %645 = vmatpush.msra.mxu0 0.0
        %646 = vmatpush.msra.mxu0 0.0
        %647 = vmatpush.msra.mxu0 0.0
        %648 = vmatpush.msra.mxu0 %v598
        %649 = vmatpush.msra.mxu0 %v595
        %650 = vmatpush.msra.mxu0 %v592
        %651 = vmatpush.msra.mxu0 %v589
        %652 = vmatpush.msra.mxu0 %v586
        %653 = vmatpush.msra.mxu0 %v583
        %654 = vmatpush.msra.mxu0 %v580
        %655 = vmatpush.msra.mxu0 %v577
        %656 = vmatpush.msra.mxu0 %v574
        %657 = vmatpush.msra.mxu0 %v571
        %658 = vmatmul.f32.gmra.mxu0 %v600
        %v659 = vpop.f32.mrf.mxu0
        %v660 = vadd.f32 0.0, %v659
        %661 = vdwg.mxu0
        %v662 = vadd.f32 %v525, %v620
        %v663 = vadd.f32 %v545, %v640
        %v664 = vadd.f32 %v565, %v660
        %v665 = vadd.f32 %v369, %v375
        %s666 = scalar_lea.vmem [#allocation2], 720
        %v667 = vld [vmem:[%s666] sm:$0xff]
        %v668 = vld [vmem:[%s666 + $0x8] sm:$0xff]
        %v669 = vld [vmem:[%s666 + $0x10] sm:$0xff]
        %v670 = vld [vmem:[%s666 + $0x18] sm:$0xff]
        %v671 = vld [vmem:[%s666 + $0x20] sm:$0xff]
        %v672 = vld [vmem:[%s666 + $0x28] sm:$0xff]
        %v673 = vld [vmem:[%s666 + $0x30] sm:$0xff]
        %v674 = vld [vmem:[%s666 + $0x38] sm:$0xff]
        %v675 = vld [vmem:[%s666 + $0x40] sm:$0xff]
        %v676 = vld [vmem:[%s666 + $0x48] sm:$0xff]
        %v677 = vld [vmem:[%s666 + $0x50] sm:$0xff]
        %v678 = vld [vmem:[%s666 + $0x58] sm:$0xff]
        %v679 = vld [vmem:[%s666 + $0x60] sm:$0xff]
        %v680 = vld [vmem:[%s666 + $0x68] sm:$0xff]
        %v681 = vld [vmem:[%s666 + $0x70] sm:$0xff]
        %v682 = vld [vmem:[%s666 + $0x78] sm:$0xff]
        %v683 = vld [vmem:[%s666 + $0x80] sm:$0xff]
        %v684 = vld [vmem:[%s666 + $0x88] sm:$0xff]
        %v685 = vld [vmem:[%s666 + $0x90] sm:$0xff]
        %v686 = vld [vmem:[%s666 + $0x98] sm:$0xff]
        %v687 = vld [vmem:[%s666 + $0xa0] sm:$0xff]
        %v688 = vld [vmem:[%s666 + $0xa8] sm:$0xff]
        %v689 = vld [vmem:[%s666 + $0xb0] sm:$0xff]
        %v690 = vld [vmem:[%s666 + $0xb8] sm:$0xff]
        %v691 = vld [vmem:[%s666 + $0xc0] sm:$0xff]
        %v692 = vld [vmem:[%s666 + $0xc8] sm:$0xff]
        %v693 = vld [vmem:[%s666 + $0xd0] sm:$0xff]
        %v694 = vld [vmem:[%s666 + $0xd8] sm:$0xff]
        %v695 = vld [vmem:[%s666 + $0xe0] sm:$0xff]
        %v696 = vld [vmem:[%s666 + $0xe8] sm:$0xff]
        %v698 = vsel %vm440, %v665, 0
        %700 = vmatpush.msra.mxu0 0.0
        %701 = vmatpush.msra.mxu0 0.0
        %702 = vmatpush.msra.mxu0 0.0
        %703 = vmatpush.msra.mxu0 0.0
        %704 = vmatpush.msra.mxu0 0.0
        %705 = vmatpush.msra.mxu0 0.0
        %706 = vmatpush.msra.mxu0 %v694
        %707 = vmatpush.msra.mxu0 %v691
        %708 = vmatpush.msra.mxu0 %v688
        %709 = vmatpush.msra.mxu0 %v685
        %710 = vmatpush.msra.mxu0 %v682
        %711 = vmatpush.msra.mxu0 %v679
        %712 = vmatpush.msra.mxu0 %v676
        %713 = vmatpush.msra.mxu0 %v673
        %714 = vmatpush.msra.mxu0 %v670
        %715 = vmatpush.msra.mxu0 %v667
        %716 = vmatmul.f32.gmra.mxu0 %v698
        %v717 = vpop.f32.mrf.mxu0
        %v718 = vadd.f32 0.0, %v717
        %719 = vdwg.mxu0
        %720 = vmatpush.msra.mxu0 0.0
        %721 = vmatpush.msra.mxu0 0.0
        %722 = vmatpush.msra.mxu0 0.0
        %723 = vmatpush.msra.mxu0 0.0
        %724 = vmatpush.msra.mxu0 0.0
        %725 = vmatpush.msra.mxu0 0.0
        %726 = vmatpush.msra.mxu0 %v695
        %727 = vmatpush.msra.mxu0 %v692
        %728 = vmatpush.msra.mxu0 %v689
        %729 = vmatpush.msra.mxu0 %v686
        %730 = vmatpush.msra.mxu0 %v683
        %731 = vmatpush.msra.mxu0 %v680
        %732 = vmatpush.msra.mxu0 %v677
        %733 = vmatpush.msra.mxu0 %v674
        %734 = vmatpush.msra.mxu0 %v671
        %735 = vmatpush.msra.mxu0 %v668
        %736 = vmatmul.f32.gmra.mxu0 %v698
        %v737 = vpop.f32.mrf.mxu0
        %v738 = vadd.f32 0.0, %v737
        %739 = vdwg.mxu0
        %740 = vmatpush.msra.mxu0 0.0
        %741 = vmatpush.msra.mxu0 0.0
        %742 = vmatpush.msra.mxu0 0.0
        %743 = vmatpush.msra.mxu0 0.0
        %744 = vmatpush.msra.mxu0 0.0
        %745 = vmatpush.msra.mxu0 0.0
        %746 = vmatpush.msra.mxu0 %v696
        %747 = vmatpush.msra.mxu0 %v693
        %748 = vmatpush.msra.mxu0 %v690
        %749 = vmatpush.msra.mxu0 %v687
        %750 = vmatpush.msra.mxu0 %v684
        %751 = vmatpush.msra.mxu0 %v681
        %752 = vmatpush.msra.mxu0 %v678
        %753 = vmatpush.msra.mxu0 %v675
        %754 = vmatpush.msra.mxu0 %v672
        %755 = vmatpush.msra.mxu0 %v669
        %756 = vmatmul.f32.gmra.mxu0 %v698
        %v757 = vpop.f32.mrf.mxu0
        %v758 = vadd.f32 0.0, %v757
        %759 = vdwg.mxu0
        %v760 = vadd.f32 %v662, %v718
        %v761 = vadd.f32 %v663, %v738
        %v762 = vadd.f32 %v664, %v758
        %763 = vst [vmem:[%s282] sm:$0xff] %v760
        %764 = vst [vmem:[%s282 + $0x8] sm:$0xff] %v761
        %vm765 = vcmask 556032
        %766 = vst.msk [vmem:[%s282 + $0x10] sm:$0xff] %vm765, %v762
        %p767 = scmp.lt.s32.totalorder %s18, 1
        %s768 = scalar_select %p767, %s18, 1
        %s769 = smul.addr %s768, 3
        %s770 = smul.addr %s769, 8
        %s771 = scalar_lea.vmem %s6, %s770
        // Predicated region
        $region49: #{fcdensenet_forward.19} parent=43 // pred_check
          %p772 = pneg %p172
        $region50: #{fcdensenet_forward.19} parent=43 // pred_check_branch
          %774 = sbr.rel (%p772) target = $region52
        $region51: #{fcdensenet_forward.19} parent=43 // pred_region
          _
        $region52: #{fcdensenet_forward.19} parent=43 // pred_fallthru
          _
      $region44: #{fcdensenet_forward.19} parent=5 // pred_fallthru
        _
      %p775 = scmp.le.s32.totalorder 2, %s13
      // Predicated region
      $region53: #{fcdensenet_forward.19} parent=5 // pred_check
        %p776 = pneg %p775
      $region54: #{fcdensenet_forward.19} parent=5 // pred_check_branch
        %778 = sbr.rel (%p776) target = $region56
      $region55: #{fcdensenet_forward.19} parent=5 // pred_region
        %s779 = ssub.s32 %s13, 2
        // Predicated region
        $region57: #{fcdensenet_forward.19} parent=55 // pred_check
          %p780 = pneg %p178
        $region58: #{fcdensenet_forward.19} parent=55 // pred_check_branch
          %782 = sbr.rel (%p780) target = $region60
        $region59: #{fcdensenet_forward.19} parent=55 // pred_region
          %p783 = scmp.lt.s32.totalorder %s19, 1
          %s784 = scalar_select %p783, %s19, 1
          %s785 = smul.addr %s784, 3
          %s786 = smul.addr %s785, 8
          %s787 = scalar_lea.vmem %s6, %s786
        $region60: #{fcdensenet_forward.19} parent=55 // pred_fallthru
          _
      $region56: #{fcdensenet_forward.19} parent=5 // pred_fallthru
        _
    $region6: #{fcdensenet_forward.19} parent=1 // loop_footer
      %s17 = sadd.s32 1, %s13
    $region7: #{fcdensenet_forward.19} parent=1 // loop_footer_branch
      %12 = sbr.rel target = $region3
    $region8: #{fcdensenet_forward.19} parent=1 // loop_exit
      _
    %788 = vsyncpa [#allocation3], 1
    %s789 = scalar_lea.sflag [#allocation3], 1
    %790 = vsyncpa %s789, 1

// kernel: fcdensenet_forward.18
$region0: #{fcdensenet_forward.18}
  #allocation0 [shape = 'u32[]', space=smem, size = 0x4, offset = 0x4, fixed_abs, tag = 'smem constant byte address 0x4 - core index']
  #allocation1 [shape = 'u32[72,128]{1,0:T(1,128)}', space=vmem, size = 0x9000, scoped, tag = 'internal scratch']
  %s0 = inlined_call_operand.vmem [shape: f32[2,8,100], index: 0, kind: input, shape index: {}]
  %s1 = inlined_call_operand.vmem [shape: f32[2,24,100], index: 1, kind: input, shape index: {}]
  %s2 = inlined_call_operand.vmem [shape: f32[1,100], index: 2, kind: input, shape index: {}]
  %s3 = inlined_call_operand.vmem [shape: f32[32,1], index: 3, kind: input, shape index: {}]
  %s4 = inlined_call_operand.vmem [shape: f32[32,1], index: 4, kind: input, shape index: {}]
  %s5 = inlined_call_operand.vmem [shape: bf16[4,288], index: 5, kind: input, shape index: {}]
  %s6 = inlined_call_operand.vmem [shape: f32[4,1], index: 6, kind: input, shape index: {}]
  %s7 = inlined_call_operand.vmem [shape: f32[36,1], index: 7, kind: input, shape index: {}]
  %s8 = inlined_call_operand.vmem [shape: f32[36,1], index: 8, kind: input, shape index: {}]
  %s9 = inlined_call_operand.vmem [shape: bf16[4,324], index: 9, kind: input, shape index: {}]
  %s10 = inlined_call_operand.vmem [shape: f32[4,1], index: 10, kind: input, shape index: {}]
  %s11 = inlined_call_operand.vmem [shape: f32[2,8,100], index: 11, kind: output, shape index: {}]
  %s12 = sld [smem:[#allocation0]]
  $region77: #{fcdensenet_forward.18} parent=0
    _
  %s14 = ssub.s32 1, %s12
  %s15 = scalar_select 0, %s14, %s12
  loop: start=0, step=1, limit=4
  $region2: #{fcdensenet_forward.18} parent=0 // loop_pre_header
    _
  $region3: #{fcdensenet_forward.18} parent=0 // loop_header
    %s17 = sphi 0, %s21
    %p18 = scmp.ge.s32.totalorder %s17, 4
    %s27 = sphi 0, %s29
    %s30 = sphi 0, %s27
    %s31 = sphi 0, %s30
    %s47 = sphi 0, %s31
    %s53 = sphi 0, %s55
    %s56 = sphi 0, %s53
    %s57 = sphi 0, %s56
    %s73 = sphi 0, %s57
    %s77 = sphi 0, %s77
    %s79 = sphi 0, %s77
    %s80 = sphi 0, %s79
    %s94 = sphi 0, %s80
    %s98 = sphi 0, %s98
    %s100 = sphi 0, %s98
    %s101 = sphi 0, %s100
    %s115 = sphi 0, %s101
    %s119 = sphi 0, %s119
    %s121 = sphi 0, %s119
    %s122 = sphi 0, %s121
    %s136 = sphi 0, %s122
    %s140 = sphi 0, %s140
    %s142 = sphi 0, %s140
    %s143 = sphi 0, %s142
    %s157 = sphi 0, %s143
    %s161 = sphi 0, %s161
    %s163 = sphi 0, %s161
    %s164 = sphi 0, %s163
    %s178 = sphi 0, %s164
    %s182 = sphi 0, %s182
    %s184 = sphi 0, %s182
    %s185 = sphi 0, %s184
    %s199 = sphi 0, %s185
    %s203 = sphi 0, %s203
    %s205 = sphi 0, %s203
    %s206 = sphi 0, %s205
    %s220 = sphi 0, %s206
    %s224 = sphi 0, %s224
    %s226 = sphi 0, %s224
    %s227 = sphi 0, %s226
    %s241 = sphi 0, %s227
    %s245 = sphi 0, %s245
    %s247 = sphi 0, %s245
    %s248 = sphi 0, %s247
    %s262 = sphi 0, %s248
    %s268 = sphi 0, %s270
    %s271 = sphi 0, %s268
    %s272 = sphi 0, %s271
    %s288 = sphi 0, %s272
  $region4: #{fcdensenet_forward.18} parent=0 // loop_header_branch
    %20 = sbr.rel (%p18) target = $region8
  $region5: #{fcdensenet_forward.18} parent=0 // loop_body
    %s22 = ssub.s32 %s17, 1
    %s23 = ssub.s32 %s17, 2
    %s24 = sadd.s32 %s17, 1
    %s25 = ssub.s32 %s17, %s24
    %p26 = scmp.eq.s32.totalorder %s25, 0
    %s28 = sadd.s32 %s27, 1
    %s29 = scalar_select %p26, %s27, %s28
    %p32 = pneg %p26
    %p33 = scmp.eq.s32.totalorder %s17, 1
    %p34 = por %p32, %p33
    %p35 = scmp.ne.s32.totalorder %s27, %s30
    %p36 = scmp.eq.s32.totalorder %s17, 0
    %p37 = por %p35, %p36
    %p38 = scmp.ne.s32.totalorder %s27, %s30
    %p39 = scmp.eq.s32.totalorder %s22, 1
    %p40 = por %p38, %p39
    %p41 = scmp.ne.s32.totalorder %s30, %s31
    %p42 = scmp.eq.s32.totalorder %s22, 0
    %p43 = por %p41, %p42
    %p44 = scmp.ne.s32.totalorder %s30, %s31
    %p45 = scmp.eq.s32.totalorder %s23, 1
    %p46 = por %p44, %p45
    %p48 = scmp.ne.s32.totalorder %s31, %s47
    %p49 = scmp.eq.s32.totalorder %s23, 0
    %p50 = por %p48, %p49
    %s51 = ssub.s32 %s17, %s24
    %p52 = scmp.eq.s32.totalorder %s51, 0
    %s54 = sadd.s32 %s53, 1
    %s55 = scalar_select %p52, %s53, %s54
    %p58 = pneg %p52
    %p59 = scmp.eq.s32.totalorder %s17, 1
    %p60 = por %p58, %p59
    %p61 = scmp.ne.s32.totalorder %s53, %s56
    %p62 = scmp.eq.s32.totalorder %s17, 0
    %p63 = por %p61, %p62
    %p64 = scmp.ne.s32.totalorder %s53, %s56
    %p65 = scmp.eq.s32.totalorder %s22, 1
    %p66 = por %p64, %p65
    %p67 = scmp.ne.s32.totalorder %s56, %s57
    %p68 = scmp.eq.s32.totalorder %s22, 0
    %p69 = por %p67, %p68
    %p70 = scmp.ne.s32.totalorder %s56, %s57
    %p71 = scmp.eq.s32.totalorder %s23, 1
    %p72 = por %p70, %p71
    %p74 = scmp.ne.s32.totalorder %s57, %s73
    %p75 = scmp.eq.s32.totalorder %s23, 0
    %p76 = por %p74, %p75
    %s78 = sadd.s32 %s77, 1
    %p81 = scmp.eq.s32.totalorder %s17, 1
    %p82 = scmp.ne.s32.totalorder %s77, %s79
    %p83 = scmp.eq.s32.totalorder %s17, 0
    %p84 = por %p82, %p83
    %p85 = scmp.ne.s32.totalorder %s77, %s79
    %p86 = scmp.eq.s32.totalorder %s22, 1
    %p87 = por %p85, %p86
    %p88 = scmp.ne.s32.totalorder %s79, %s80
    %p89 = scmp.eq.s32.totalorder %s22, 0
    %p90 = por %p88, %p89
    %p91 = scmp.ne.s32.totalorder %s79, %s80
    %p92 = scmp.eq.s32.totalorder %s23, 1
    %p93 = por %p91, %p92
    %p95 = scmp.ne.s32.totalorder %s80, %s94
    %p96 = scmp.eq.s32.totalorder %s23, 0
    %p97 = por %p95, %p96
    %s99 = sadd.s32 %s98, 1
    %p102 = scmp.eq.s32.totalorder %s17, 1
    %p103 = scmp.ne.s32.totalorder %s98, %s100
    %p104 = scmp.eq.s32.totalorder %s17, 0
    %p105 = por %p103, %p104
    %p106 = scmp.ne.s32.totalorder %s98, %s100
    %p107 = scmp.eq.s32.totalorder %s22, 1
    %p108 = por %p106, %p107
    %p109 = scmp.ne.s32.totalorder %s100, %s101
    %p110 = scmp.eq.s32.totalorder %s22, 0
    %p111 = por %p109, %p110
    %p112 = scmp.ne.s32.totalorder %s100, %s101
    %p113 = scmp.eq.s32.totalorder %s23, 1
    %p114 = por %p112, %p113
    %p116 = scmp.ne.s32.totalorder %s101, %s115
    %p117 = scmp.eq.s32.totalorder %s23, 0
    %p118 = por %p116, %p117
    %s120 = sadd.s32 %s119, 1
    %p123 = scmp.eq.s32.totalorder %s17, 1
    %p124 = scmp.ne.s32.totalorder %s119, %s121
    %p125 = scmp.eq.s32.totalorder %s17, 0
    %p126 = por %p124, %p125
    %p127 = scmp.ne.s32.totalorder %s119, %s121
    %p128 = scmp.eq.s32.totalorder %s22, 1
    %p129 = por %p127, %p128
    %p130 = scmp.ne.s32.totalorder %s121, %s122
    %p131 = scmp.eq.s32.totalorder %s22, 0
    %p132 = por %p130, %p131
    %p133 = scmp.ne.s32.totalorder %s121, %s122
    %p134 = scmp.eq.s32.totalorder %s23, 1
    %p135 = por %p133, %p134
    %p137 = scmp.ne.s32.totalorder %s122, %s136
    %p138 = scmp.eq.s32.totalorder %s23, 0
    %p139 = por %p137, %p138
    %s141 = sadd.s32 %s140, 1
    %p144 = scmp.eq.s32.totalorder %s17, 1
    %p145 = scmp.ne.s32.totalorder %s140, %s142
    %p146 = scmp.eq.s32.totalorder %s17, 0
    %p147 = por %p145, %p146
    %p148 = scmp.ne.s32.totalorder %s140, %s142
    %p149 = scmp.eq.s32.totalorder %s22, 1
    %p150 = por %p148, %p149
    %p151 = scmp.ne.s32.totalorder %s142, %s143
    %p152 = scmp.eq.s32.totalorder %s22, 0
    %p153 = por %p151, %p152
    %p154 = scmp.ne.s32.totalorder %s142, %s143
    %p155 = scmp.eq.s32.totalorder %s23, 1
    %p156 = por %p154, %p155
    %p158 = scmp.ne.s32.totalorder %s143, %s157
    %p159 = scmp.eq.s32.totalorder %s23, 0
    %p160 = por %p158, %p159
    %s162 = sadd.s32 %s161, 1
    %p165 = scmp.eq.s32.totalorder %s17, 1
    %p166 = scmp.ne.s32.totalorder %s161, %s163
    %p167 = scmp.eq.s32.totalorder %s17, 0
    %p168 = por %p166, %p167
    %p169 = scmp.ne.s32.totalorder %s161, %s163
    %p170 = scmp.eq.s32.totalorder %s22, 1
    %p171 = por %p169, %p170
    %p172 = scmp.ne.s32.totalorder %s163, %s164
    %p173 = scmp.eq.s32.totalorder %s22, 0
    %p174 = por %p172, %p173
    %p175 = scmp.ne.s32.totalorder %s163, %s164
    %p176 = scmp.eq.s32.totalorder %s23, 1
    %p177 = por %p175, %p176
    %p179 = scmp.ne.s32.totalorder %s164, %s178
    %p180 = scmp.eq.s32.totalorder %s23, 0
    %p181 = por %p179, %p180
    %s183 = sadd.s32 %s182, 1
    %p186 = scmp.eq.s32.totalorder %s17, 1
    %p187 = scmp.ne.s32.totalorder %s182, %s184
    %p188 = scmp.eq.s32.totalorder %s17, 0
    %p189 = por %p187, %p188
    %p190 = scmp.ne.s32.totalorder %s182, %s184
    %p191 = scmp.eq.s32.totalorder %s22, 1
    %p192 = por %p190, %p191
    %p193 = scmp.ne.s32.totalorder %s184, %s185
    %p194 = scmp.eq.s32.totalorder %s22, 0
    %p195 = por %p193, %p194
    %p196 = scmp.ne.s32.totalorder %s184, %s185
    %p197 = scmp.eq.s32.totalorder %s23, 1
    %p198 = por %p196, %p197
    %p200 = scmp.ne.s32.totalorder %s185, %s199
    %p201 = scmp.eq.s32.totalorder %s23, 0
    %p202 = por %p200, %p201
    %s204 = sadd.s32 %s203, 1
    %p207 = scmp.eq.s32.totalorder %s17, 1
    %p208 = scmp.ne.s32.totalorder %s203, %s205
    %p209 = scmp.eq.s32.totalorder %s17, 0
    %p210 = por %p208, %p209
    %p211 = scmp.ne.s32.totalorder %s203, %s205
    %p212 = scmp.eq.s32.totalorder %s22, 1
    %p213 = por %p211, %p212
    %p214 = scmp.ne.s32.totalorder %s205, %s206
    %p215 = scmp.eq.s32.totalorder %s22, 0
    %p216 = por %p214, %p215
    %p217 = scmp.ne.s32.totalorder %s205, %s206
    %p218 = scmp.eq.s32.totalorder %s23, 1
    %p219 = por %p217, %p218
    %p221 = scmp.ne.s32.totalorder %s206, %s220
    %p222 = scmp.eq.s32.totalorder %s23, 0
    %p223 = por %p221, %p222
    %s225 = sadd.s32 %s224, 1
    %p228 = scmp.eq.s32.totalorder %s17, 1
    %p229 = scmp.ne.s32.totalorder %s224, %s226
    %p230 = scmp.eq.s32.totalorder %s17, 0
    %p231 = por %p229, %p230
    %p232 = scmp.ne.s32.totalorder %s224, %s226
    %p233 = scmp.eq.s32.totalorder %s22, 1
    %p234 = por %p232, %p233
    %p235 = scmp.ne.s32.totalorder %s226, %s227
    %p236 = scmp.eq.s32.totalorder %s22, 0
    %p237 = por %p235, %p236
    %p238 = scmp.ne.s32.totalorder %s226, %s227
    %p239 = scmp.eq.s32.totalorder %s23, 1
    %p240 = por %p238, %p239
    %p242 = scmp.ne.s32.totalorder %s227, %s241
    %p243 = scmp.eq.s32.totalorder %s23, 0
    %p244 = por %p242, %p243
    %s246 = sadd.s32 %s245, 1
    %p249 = scmp.eq.s32.totalorder %s17, 1
    %p250 = scmp.ne.s32.totalorder %s245, %s247
    %p251 = scmp.eq.s32.totalorder %s17, 0
    %p252 = por %p250, %p251
    %p253 = scmp.ne.s32.totalorder %s245, %s247
    %p254 = scmp.eq.s32.totalorder %s22, 1
    %p255 = por %p253, %p254
    %p256 = scmp.ne.s32.totalorder %s247, %s248
    %p257 = scmp.eq.s32.totalorder %s22, 0
    %p258 = por %p256, %p257
    %p259 = scmp.ne.s32.totalorder %s247, %s248
    %p260 = scmp.eq.s32.totalorder %s23, 1
    %p261 = por %p259, %p260
    %p263 = scmp.ne.s32.totalorder %s248, %s262
    %p264 = scmp.eq.s32.totalorder %s23, 0
    %p265 = por %p263, %p264
    %s266 = ssub.s32 %s17, %s24
    %p267 = scmp.eq.s32.totalorder %s266, 0
    %s269 = sadd.s32 %s268, 1
    %s270 = scalar_select %p267, %s268, %s269
    %p273 = pneg %p267
    %p274 = scmp.eq.s32.totalorder %s17, 1
    %p275 = por %p273, %p274
    %p276 = scmp.ne.s32.totalorder %s268, %s271
    %p277 = scmp.eq.s32.totalorder %s17, 0
    %p278 = por %p276, %p277
    %p279 = scmp.ne.s32.totalorder %s268, %s271
    %p280 = scmp.eq.s32.totalorder %s22, 1
    %p281 = por %p279, %p280
    %p282 = scmp.ne.s32.totalorder %s271, %s272
    %p283 = scmp.eq.s32.totalorder %s22, 0
    %p284 = por %p282, %p283
    %p285 = scmp.ne.s32.totalorder %s271, %s272
    %p286 = scmp.eq.s32.totalorder %s23, 1
    %p287 = por %p285, %p286
    %p289 = scmp.ne.s32.totalorder %s272, %s288
    %p290 = scmp.eq.s32.totalorder %s23, 0
    %p291 = por %p289, %p290
    %p292 = scmp.le.s32.totalorder 1, %s17
    %p293 = scmp.lt.s32.totalorder %s17, 3
    %p294 = pnand %p292, %p293
    %p295 = pneg %p294
    // Predicated region
    $region9: #{fcdensenet_forward.18} parent=5 // pred_check
      _
    $region10: #{fcdensenet_forward.18} parent=5 // pred_check_branch
      %297 = sbr.rel (%p294) target = $region12
    $region11: #{fcdensenet_forward.18} parent=5 // pred_region
      %s298 = ssub.s32 %s17, 1
      // Predicated region
      $region13: #{fcdensenet_forward.18} parent=11 // pred_check
        %p299 = pneg %p90
      $region14: #{fcdensenet_forward.18} parent=11 // pred_check_branch
        %301 = sbr.rel (%p299) target = $region16
      $region15: #{fcdensenet_forward.18} parent=11 // pred_region
        _
      $region16: #{fcdensenet_forward.18} parent=11 // pred_fallthru
        _
      // Predicated region
      $region17: #{fcdensenet_forward.18} parent=11 // pred_check
        %p302 = pneg %p111
      $region18: #{fcdensenet_forward.18} parent=11 // pred_check_branch
        %304 = sbr.rel (%p302) target = $region20
      $region19: #{fcdensenet_forward.18} parent=11 // pred_region
        _
      $region20: #{fcdensenet_forward.18} parent=11 // pred_fallthru
        _
      // Predicated region
      $region21: #{fcdensenet_forward.18} parent=11 // pred_check
        %p305 = pneg %p132
      $region22: #{fcdensenet_forward.18} parent=11 // pred_check_branch
        %307 = sbr.rel (%p305) target = $region24
      $region23: #{fcdensenet_forward.18} parent=11 // pred_region
        _
      $region24: #{fcdensenet_forward.18} parent=11 // pred_fallthru
        _
      // Predicated region
      $region25: #{fcdensenet_forward.18} parent=11 // pred_check
        %p308 = pneg %p153
      $region26: #{fcdensenet_forward.18} parent=11 // pred_check_branch
        %310 = sbr.rel (%p308) target = $region28
      $region27: #{fcdensenet_forward.18} parent=11 // pred_region
        _
      $region28: #{fcdensenet_forward.18} parent=11 // pred_fallthru
        _
      // Predicated region
      $region29: #{fcdensenet_forward.18} parent=11 // pred_check
        %p311 = pneg %p174
      $region30: #{fcdensenet_forward.18} parent=11 // pred_check_branch
        %313 = sbr.rel (%p311) target = $region32
      $region31: #{fcdensenet_forward.18} parent=11 // pred_region
        _
      $region32: #{fcdensenet_forward.18} parent=11 // pred_fallthru
        _
      // Predicated region
      $region33: #{fcdensenet_forward.18} parent=11 // pred_check
        %p314 = pneg %p195
      $region34: #{fcdensenet_forward.18} parent=11 // pred_check_branch
        %316 = sbr.rel (%p314) target = $region36
      $region35: #{fcdensenet_forward.18} parent=11 // pred_region
        _
      $region36: #{fcdensenet_forward.18} parent=11 // pred_fallthru
        _
      // Predicated region
      $region37: #{fcdensenet_forward.18} parent=11 // pred_check
        %p317 = pneg %p216
      $region38: #{fcdensenet_forward.18} parent=11 // pred_check_branch
        %319 = sbr.rel (%p317) target = $region40
      $region39: #{fcdensenet_forward.18} parent=11 // pred_region
        _
      $region40: #{fcdensenet_forward.18} parent=11 // pred_fallthru
        _
      // Predicated region
      $region41: #{fcdensenet_forward.18} parent=11 // pred_check
        %p320 = pneg %p237
      $region42: #{fcdensenet_forward.18} parent=11 // pred_check_branch
        %322 = sbr.rel (%p320) target = $region44
      $region43: #{fcdensenet_forward.18} parent=11 // pred_region
        _
      $region44: #{fcdensenet_forward.18} parent=11 // pred_fallthru
        _
      // Predicated region
      $region45: #{fcdensenet_forward.18} parent=11 // pred_check
        %p323 = pneg %p258
      $region46: #{fcdensenet_forward.18} parent=11 // pred_check_branch
        %325 = sbr.rel (%p323) target = $region48
      $region47: #{fcdensenet_forward.18} parent=11 // pred_region
        _
      $region48: #{fcdensenet_forward.18} parent=11 // pred_fallthru
        _
    $region12: #{fcdensenet_forward.18} parent=5 // pred_fallthru
      _
    %p326 = scmp.lt.s32.totalorder %s17, 2
    // Predicated region
    $region49: #{fcdensenet_forward.18} parent=5 // pred_check
      %p327 = pneg %p326
    $region50: #{fcdensenet_forward.18} parent=5 // pred_check_branch
      %329 = sbr.rel (%p327) target = $region52
    $region51: #{fcdensenet_forward.18} parent=5 // pred_region
      // Predicated region
      $region53: #{fcdensenet_forward.18} parent=51 // pred_check
        %p330 = pneg %p37
      $region54: #{fcdensenet_forward.18} parent=51 // pred_check_branch
        %332 = sbr.rel (%p330) target = $region56
      $region55: #{fcdensenet_forward.18} parent=51 // pred_region
        %p333 = scmp.lt.s32.totalorder %s17, 1
        %s334 = scalar_select %p333, %s17, 1
        %s335 = smul.addr %s334, 8
        %s336 = scalar_lea.vmem %s0, %s335
      $region56: #{fcdensenet_forward.18} parent=51 // pred_fallthru
        _
      // Predicated region
      $region57: #{fcdensenet_forward.18} parent=51 // pred_check
        %p337 = pneg %p63
      $region58: #{fcdensenet_forward.18} parent=51 // pred_check_branch
        %339 = sbr.rel (%p337) target = $region60
      $region59: #{fcdensenet_forward.18} parent=51 // pred_region
        %p340 = scmp.lt.s32.totalorder %s17, 1
        %s341 = scalar_select %p340, %s17, 1
        %s342 = smul.addr %s341, 3
        %s343 = smul.addr %s342, 8
        %s344 = scalar_lea.vmem %s1, %s343
      $region60: #{fcdensenet_forward.18} parent=51 // pred_fallthru
        _
    $region52: #{fcdensenet_forward.18} parent=5 // pred_fallthru
      _
    %p345 = scmp.le.s32.totalorder 1, %s17
    %p346 = scmp.lt.s32.totalorder %s17, 3
    %p347 = pnand %p345, %p346
    %p348 = pneg %p347
    // Predicated region
    $region61: #{fcdensenet_forward.18} parent=5 // pred_check
      _
    $region62: #{fcdensenet_forward.18} parent=5 // pred_check_branch
      %350 = sbr.rel (%p347) target = $region64
    $region63: #{fcdensenet_forward.18} parent=5 // pred_region
      %s351 = ssub.s32 %s17, 1
      %p352 = scmp.lt.s32.totalorder %s22, 1
      %s353 = scalar_select %p352, %s22, 1
      %s354 = smul.addr %s353, 8
      %s355 = scalar_lea.vmem %s0, %s354
      %p356 = pneg %p43
      %p357 = pneg %p40
      %p358 = scmp.lt.s32.totalorder %s22, 1
      %s359 = scalar_select %p358, %s22, 1
      %s360 = smul.addr %s359, 3
      %s361 = smul.addr %s360, 8
      %s362 = scalar_lea.vmem %s1, %s361
      %p363 = pneg %p69
      %p364 = pneg %p66
      %p365 = pneg %p90
      %p366 = pneg %p87
      %p367 = pneg %p111
      %p368 = pneg %p108
      %p369 = pneg %p132
      %p370 = pneg %p129
      %p371 = pneg %p153
      %p372 = pneg %p150
      %p373 = pneg %p174
      %p374 = pneg %p171
      %p375 = pneg %p195
      %p376 = pneg %p192
      %p377 = pneg %p216
      %p378 = pneg %p213
      %p379 = pneg %p237
      %p380 = pneg %p234
      %p381 = pneg %p258
      %p382 = pneg %p255
      %p383 = pneg %p284
      %p384 = pneg %p281
      %p385 = scmp.lt.s32.totalorder %s22, 1
      %s386 = scalar_select %p385, %s22, 1
      %s387 = smul.addr %s386, 8
      %s388 = scalar_lea.vmem %s11, %s387
      %p389 = scmp.lt.s32.totalorder %s22, 1
      %s390 = scalar_select %p389, %s22, 1
      %s391 = smul.addr %s390, 8
      %s392 = scalar_lea.vmem %s0, %s391
      %p393 = scmp.lt.s32.totalorder %s22, 1
      %s394 = scalar_select %p393, %s22, 1
      %s395 = smul.addr %s394, 3
      %s396 = smul.addr %s395, 8
      %s397 = scalar_lea.vmem %s1, %s396
      %p398 = scmp.lt.s32.totalorder %s22, 1
      %s399 = scalar_select %p398, %s22, 1
      %s400 = smul.addr %s399, 8
      %s401 = scalar_lea.vmem %s11, %s400
      %v403 = vld [vmem:[%s2] sm:$0x1]
      %vm404 = vcmp.gt.f32.partialorder %v403, 0.5
      %v405 = vld [vmem:[%s392] sm:$0xff]
      %v406 = vld [vmem:[%s397] sm:$0xff]
      %v407 = vld [vmem:[%s397 + $0x8] sm:$0xff]
      %v408 = vld [vmem:[%s397 + $0x10] sm:$0xff]
      %v409 = vld [vmem:[%s3] sm:$0xff]
      %v410 = vld [vmem:[%s3 + $0x8] sm:$0xff]
      %v411 = vld [vmem:[%s3 + $0x10] sm:$0xff]
      %v412 = vld [vmem:[%s3 + $0x18] sm:$0xff]
      %v413 = vld [vmem:[%s4] sm:$0xff]
      %v414 = vld [vmem:[%s4 + $0x8] sm:$0xff]
      %v415 = vld [vmem:[%s4 + $0x10] sm:$0xff]
      %v416 = vld [vmem:[%s4 + $0x18] sm:$0xff]
      %418 = vset.pattern.permute.xlu0 0
      %419 = vperm.xlu0 %418, %v409
      %v420 = vpop.permute.xlu0 %419
      %423 = vset.pattern.permute.xlu0 0
      %424 = vperm.xlu0 %423, %v410
      %v425 = vpop.permute.xlu0 %424
      %428 = vset.pattern.permute.xlu0 0
      %429 = vperm.xlu0 %428, %v411
      %v430 = vpop.permute.xlu0 %429
      %433 = vset.pattern.permute.xlu0 0
      %434 = vperm.xlu0 %433, %v412
      %v435 = vpop.permute.xlu0 %434
      %v437 = vmul.f32 %v405, %v420
      %v438 = vmul.f32 %v406, %v425
      %v439 = vmul.f32 %v407, %v430
      %v440 = vmul.f32 %v408, %v435
      %442 = vset.pattern.permute.xlu0 0
      %443 = vperm.xlu0 %442, %v413
      %v444 = vpop.permute.xlu0 %443
      %447 = vset.pattern.permute.xlu0 0
      %448 = vperm.xlu0 %447, %v414
      %v449 = vpop.permute.xlu0 %448
      %452 = vset.pattern.permute.xlu0 0
      %453 = vperm.xlu0 %452, %v415
      %v454 = vpop.permute.xlu0 %453
      %457 = vset.pattern.permute.xlu0 0
      %458 = vperm.xlu0 %457, %v416
      %v459 = vpop.permute.xlu0 %458
      %v461 = vadd.f32 %v437, %v444
      %v462 = vadd.f32 %v438, %v449
      %v463 = vadd.f32 %v439, %v454
      %v464 = vadd.f32 %v440, %v459
      %v465 = vmax.f32 %v461, 0.0
      %v466 = vmax.f32 %v462, 0.0
      %v467 = vmax.f32 %v463, 0.0
      %v468 = vmax.f32 %v464, 0.0
      %v469 = vsel %vm404, 1, 0
      %v470 = vperm.slane %v469, 0
      %vm471 = vcmp.eq.s32.totalorder %v470, 1
      %v472 = vsel %vm471, %v465, 0.0
      %v473 = vsel %vm471, %v466, 0.0
      %v474 = vsel %vm471, %v467, 0.0
      %v475 = vsel %vm471, %v468, 0.0
      %v476 = vpack.c.bf16 %v472, %v472
      %v477 = vpack.c.bf16 %v473, %v473
      %v478 = vpack.c.bf16 %v474, %v474
      %v479 = vpack.c.bf16 %v475, %v475
      %v484 = vunpack.c.l.b16 %v476
      %v485 = vunpack.c.l.b16 %v477
      %v486 = vunpack.c.l.b16 %v478
      %v487 = vunpack.c.l.b16 %v479
      %v488 = vpack.c.b16 %v485, %v484
      %v489 = vpack.c.b16 %v487, %v486
      %492 = vrot.lane.b32.xlu0 %v488, 127
      %v493 = vpop.permute.xlu0 %492
      %494 = vrot.lane.b32.xlu0 %v489, 127
      %v495 = vpop.permute.xlu0 %494
      %498 = vrot.lane.b32.xlu0 %v488, 126
      %v499 = vpop.permute.xlu0 %498
      %500 = vrot.lane.b32.xlu0 %v489, 126
      %v501 = vpop.permute.xlu0 %500
      %504 = vrot.lane.b32.xlu0 %v488, 118
      %v505 = vpop.permute.xlu0 %504
      %506 = vrot.lane.b32.xlu0 %v489, 118
      %v507 = vpop.permute.xlu0 %506
      %510 = vrot.lane.b32.xlu0 %v488, 117
      %v511 = vpop.permute.xlu0 %510
      %512 = vrot.lane.b32.xlu0 %v489, 117
      %v513 = vpop.permute.xlu0 %512
      %516 = vrot.lane.b32.xlu0 %v488, 116
      %v517 = vpop.permute.xlu0 %516
      %518 = vrot.lane.b32.xlu0 %v489, 116
      %v519 = vpop.permute.xlu0 %518
      %522 = vrot.lane.b32.xlu0 %v488, 108
      %v523 = vpop.permute.xlu0 %522
      %524 = vrot.lane.b32.xlu0 %v489, 108
      %v525 = vpop.permute.xlu0 %524
      %528 = vrot.lane.b32.xlu0 %v488, 107
      %v529 = vpop.permute.xlu0 %528
      %530 = vrot.lane.b32.xlu0 %v489, 107
      %v531 = vpop.permute.xlu0 %530
      %534 = vrot.lane.b32.xlu0 %v488, 106
      %v535 = vpop.permute.xlu0 %534
      %536 = vrot.lane.b32.xlu0 %v489, 106
      %v537 = vpop.permute.xlu0 %536
      %v540 = vld [vmem:[%s5] sm:$0x3f]
      %v541 = vld [vmem:[%s6] sm:$0xf]
      %543 = vset.pattern.permute.xlu0 0
      %544 = vperm.xlu0 %543, %v541
      %v545 = vpop.permute.xlu0 %544
      %548 = vst [vmem:[#allocation1] ss:$4 sm:$0xff] %v540
      %v549 = vld.sshfl [vmem:[#allocation1] sm:$0xff pattern:$0x73625140]
      %v550 = vld.sshfl [vmem:[#allocation1 + $0x8] sm:$0xff pattern:$0x73625140]
      %v551 = vld.sshfl [vmem:[#allocation1 + $0x10] sm:$0xff pattern:$0x73625140]
      %vm554 = vcmask 261120
      %v555 = vsel %vm554, %v551, 0
      %557 = vmatpush.bf16.msra.mxu0 %v507
      %558 = vmatpush.bf16.msra.mxu0 %v505
      %559 = vmatpush.bf16.msra.mxu0 %v501
      %560 = vmatpush.bf16.msra.mxu0 %v499
      %561 = vmatpush.bf16.msra.mxu0 %v495
      %562 = vmatpush.bf16.msra.mxu0 %v493
      %563 = vmatpush.bf16.msra.mxu0 %v489
      %564 = vmatpush.bf16.msra.mxu0 %v488
      %565 = vmatmul.bf16.gmra.mxu0 %v549
      %v566 = vpop.f32.mrf.mxu0
      %v567 = vadd.f32 %v545, %v566
      %v568 = vpop.f32.mrf.mxu0
      %569 = vdwg.mxu0
      %570 = vmatpush.bf16.msra.mxu0 %v531
      %571 = vmatpush.bf16.msra.mxu0 %v529
      %572 = vmatpush.bf16.msra.mxu0 %v525
      %573 = vmatpush.bf16.msra.mxu0 %v523
      %574 = vmatpush.bf16.msra.mxu0 %v519
      %575 = vmatpush.bf16.msra.mxu0 %v517
      %576 = vmatpush.bf16.msra.mxu0 %v513
      %577 = vmatpush.bf16.msra.mxu0 %v511
      %578 = vmatmul.bf16.gmra.mxu0 %v550
      %v579 = vpop.f32.mrf.mxu0
      %v580 = vadd.f32 %v567, %v579
      %v581 = vpop.f32.mrf.mxu0
      %582 = vdwg.mxu0
      %583 = vmatpush.bf16.msra.mxu0 0
      %584 = vmatpush.bf16.msra.mxu0 0
      %585 = vmatpush.bf16.msra.mxu0 0
      %586 = vmatpush.bf16.msra.mxu0 0
      %587 = vmatpush.bf16.msra.mxu0 0
      %588 = vmatpush.bf16.msra.mxu0 0
      %589 = vmatpush.bf16.msra.mxu0 %v537
      %590 = vmatpush.bf16.msra.mxu0 %v535
      %591 = vmatmul.bf16.gmra.mxu0 %v555
      %v592 = vpop.f32.mrf.mxu0
      %v593 = vadd.f32 %v580, %v592
      %v594 = vpop.f32.mrf.mxu0
      %595 = vdwg.mxu0
      %597 = vrot.lane.b32.xlu0 %v593, 11
      %v598 = vpop.permute.xlu0 %597
      %vm600 = vcmask 724056
      %601 = vst.msk [vmem:[%s401] sm:$0xf] %vm600, %v598
      %v602 = vld [vmem:[%s392] sm:$0xff]
      %v603 = vld [vmem:[%s397] sm:$0xff]
      %v604 = vld [vmem:[%s397 + $0x8] sm:$0xff]
      %v605 = vld [vmem:[%s397 + $0x10] sm:$0xff]
      %v606 = vld [vmem:[%s401] sm:$0xf]
      %v607 = vld [vmem:[%s7] sm:$0xff]
      %v608 = vld [vmem:[%s7 + $0x8] sm:$0xff]
      %v609 = vld [vmem:[%s7 + $0x10] sm:$0xff]
      %v610 = vld [vmem:[%s7 + $0x18] sm:$0xff]
      %v611 = vld [vmem:[%s7 + $0x20] sm:$0xf]
      %v612 = vld [vmem:[%s8] sm:$0xff]
      %v613 = vld [vmem:[%s8 + $0x8] sm:$0xff]
      %v614 = vld [vmem:[%s8 + $0x10] sm:$0xff]
      %v615 = vld [vmem:[%s8 + $0x18] sm:$0xff]
      %v616 = vld [vmem:[%s8 + $0x20] sm:$0xf]
      %618 = vset.pattern.permute.xlu0 0
      %619 = vperm.xlu0 %618, %v607
      %v620 = vpop.permute.xlu0 %619
      %623 = vset.pattern.permute.xlu0 0
      %624 = vperm.xlu0 %623, %v608
      %v625 = vpop.permute.xlu0 %624
      %628 = vset.pattern.permute.xlu0 0
      %629 = vperm.xlu0 %628, %v609
      %v630 = vpop.permute.xlu0 %629
      %633 = vset.pattern.permute.xlu0 0
      %634 = vperm.xlu0 %633, %v610
      %v635 = vpop.permute.xlu0 %634
      %638 = vset.pattern.permute.xlu0 0
      %639 = vperm.xlu0 %638, %v611
      %v640 = vpop.permute.xlu0 %639
      %v642 = vmul.f32 %v602, %v620
      %v643 = vmul.f32 %v603, %v625
      %v644 = vmul.f32 %v604, %v630
      %v645 = vmul.f32 %v605, %v635
      %v646 = vmul.f32 %v606, %v640
      %648 = vset.pattern.permute.xlu0 0
      %649 = vperm.xlu0 %648, %v612
      %v650 = vpop.permute.xlu0 %649
      %653 = vset.pattern.permute.xlu0 0
      %654 = vperm.xlu0 %653, %v613
      %v655 = vpop.permute.xlu0 %654
      %658 = vset.pattern.permute.xlu0 0
      %659 = vperm.xlu0 %658, %v614
      %v660 = vpop.permute.xlu0 %659
      %663 = vset.pattern.permute.xlu0 0
      %664 = vperm.xlu0 %663, %v615
      %v665 = vpop.permute.xlu0 %664
      %668 = vset.pattern.permute.xlu0 0
      %669 = vperm.xlu0 %668, %v616
      %v670 = vpop.permute.xlu0 %669
      %v672 = vadd.f32 %v642, %v650
      %v673 = vadd.f32 %v643, %v655
      %v674 = vadd.f32 %v644, %v660
      %v675 = vadd.f32 %v645, %v665
      %v676 = vadd.f32 %v646, %v670
      %v677 = vmax.f32 %v672, 0.0
      %v678 = vmax.f32 %v673, 0.0
      %v679 = vmax.f32 %v674, 0.0
      %v680 = vmax.f32 %v675, 0.0
      %v681 = vmax.f32 %v676, 0.0
      %v682 = vsel %vm471, %v677, 0.0
      %v683 = vsel %vm471, %v678, 0.0
      %v684 = vsel %vm471, %v679, 0.0
      %v685 = vsel %vm471, %v680, 0.0
      %v686 = vsel %vm471, %v681, 0.0
      %v687 = vpack.c.bf16 %v682, %v682
      %v688 = vpack.c.bf16 %v683, %v683
      %v689 = vpack.c.bf16 %v684, %v684
      %v690 = vpack.c.bf16 %v685, %v685
      %v691 = vpack.c.bf16 %v686, %v686
      %v697 = vunpack.c.l.b16 %v687
      %v698 = vunpack.c.l.b16 %v688
      %v699 = vunpack.c.l.b16 %v689
      %v700 = vunpack.c.l.b16 %v690
      %v701 = vunpack.c.l.b16 %v691
      %v702 = vpack.c.b16 %v698, %v697
      %v703 = vpack.c.b16 %v700, %v699
      %v704 = vpack.c.b16 %v701, %v701
      %vm707 = vcmask 1041408
      %v708 = vrot.slane %v702, 6
      %v709 = vrot.slane %v703, 6
      %v710 = vsel %vm707, %v708, %v709
      %v711 = vrot.slane %v704, 6
      %v712 = vsel %vm707, %v709, %v711
      %713 = vrot.lane.b32.xlu0 %v708, 127
      %v714 = vpop.permute.xlu0 %713
      %715 = vrot.lane.b32.xlu0 %v710, 127
      %v716 = vpop.permute.xlu0 %715
      %717 = vrot.lane.b32.xlu0 %v712, 127
      %v718 = vpop.permute.xlu0 %717
      %v720 = vpack.c.b16 %v697, %v697
      %v721 = vpack.c.b16 %v699, %v698
      %v722 = vpack.c.b16 %v701, %v700
      %723 = vrot.lane.b32.xlu0 %v720, 126
      %v724 = vpop.permute.xlu0 %723
      %725 = vrot.lane.b32.xlu0 %v721, 126
      %v726 = vpop.permute.xlu0 %725
      %727 = vrot.lane.b32.xlu0 %v722, 126
      %v728 = vpop.permute.xlu0 %727
      %vm730 = vcmask 1045504
      %v731 = vrot.slane %v702, 2
      %v732 = vrot.slane %v703, 2
      %v733 = vsel %vm730, %v731, %v732
      %v734 = vrot.slane %v704, 2
      %v735 = vsel %vm730, %v732, %v734
      %736 = vrot.lane.b32.xlu0 %v731, 118
      %v737 = vpop.permute.xlu0 %736
      %738 = vrot.lane.b32.xlu0 %v733, 118
      %v739 = vpop.permute.xlu0 %738
      %740 = vrot.lane.b32.xlu0 %v735, 118
      %v741 = vpop.permute.xlu0 %740
      %744 = vrot.lane.b32.xlu0 %v702, 117
      %v745 = vpop.permute.xlu0 %744
      %746 = vrot.lane.b32.xlu0 %v703, 117
      %v747 = vpop.permute.xlu0 %746
      %748 = vrot.lane.b32.xlu0 %v704, 117
      %v749 = vpop.permute.xlu0 %748
      %752 = vrot.lane.b32.xlu0 %v708, 116
      %v753 = vpop.permute.xlu0 %752
      %754 = vrot.lane.b32.xlu0 %v710, 116
      %v755 = vpop.permute.xlu0 %754
      %756 = vrot.lane.b32.xlu0 %v712, 116
      %v757 = vpop.permute.xlu0 %756
      %759 = vrot.lane.b32.xlu0 %v720, 108
      %v760 = vpop.permute.xlu0 %759
      %761 = vrot.lane.b32.xlu0 %v721, 108
      %v762 = vpop.permute.xlu0 %761
      %763 = vrot.lane.b32.xlu0 %v722, 108
      %v764 = vpop.permute.xlu0 %763
      %766 = vrot.lane.b32.xlu0 %v731, 107
      %v767 = vpop.permute.xlu0 %766
      %768 = vrot.lane.b32.xlu0 %v733, 107
      %v769 = vpop.permute.xlu0 %768
      %770 = vrot.lane.b32.xlu0 %v735, 107
      %v771 = vpop.permute.xlu0 %770
      %774 = vrot.lane.b32.xlu0 %v702, 106
      %v775 = vpop.permute.xlu0 %774
      %776 = vrot.lane.b32.xlu0 %v703, 106
      %v777 = vpop.permute.xlu0 %776
      %778 = vrot.lane.b32.xlu0 %v704, 106
      %v779 = vpop.permute.xlu0 %778
      %vm782 = vcmask 1041408
      %v785 = vsel %vm782, %v704, %v714
      %vm787 = vcmask 1043456
      %v790 = vsel %vm787, %v718, %v724
      %vm792 = vcmask 1045504
      %v795 = vsel %vm792, %v728, %v737
      %v799 = vsel %vm782, %v749, %v753
      %v803 = vsel %vm787, %v757, %v760
      %v807 = vsel %vm792, %v764, %v767
      %v809 = vld [vmem:[%s9] sm:$0x3f]
      %v810 = vld [vmem:[%s10] sm:$0xf]
      %812 = vset.pattern.permute.xlu0 0
      %813 = vperm.xlu0 %812, %v810
      %v814 = vpop.permute.xlu0 %813
      %817 = vst [vmem:[#allocation1] ss:$4 sm:$0xff] %v809
      %v818 = vld.sshfl [vmem:[#allocation1] sm:$0xff pattern:$0x73625140]
      %v819 = vld.sshfl [vmem:[#allocation1 + $0x8] sm:$0xff pattern:$0x73625140]
      %v820 = vld.sshfl [vmem:[#allocation1 + $0x10] sm:$0xff pattern:$0x73625140]
      %vm823 = vcmask 556032
      %v824 = vsel %vm823, %v820, 0
      %v827 = vsel %vm782, %v779, 0
      %829 = vmatpush.bf16.msra.mxu0 %v739
      %830 = vmatpush.bf16.msra.mxu0 %v795
      %831 = vmatpush.bf16.msra.mxu0 %v726
      %832 = vmatpush.bf16.msra.mxu0 %v790
      %833 = vmatpush.bf16.msra.mxu0 %v716
      %834 = vmatpush.bf16.msra.mxu0 %v785
      %835 = vmatpush.bf16.msra.mxu0 %v703
      %836 = vmatpush.bf16.msra.mxu0 %v702
      %837 = vmatmul.bf16.gmra.mxu0 %v818
      %v838 = vpop.f32.mrf.mxu0
      %v839 = vadd.f32 %v814, %v838
      %v840 = vpop.f32.mrf.mxu0
      %841 = vdwg.mxu0
      %842 = vmatpush.bf16.msra.mxu0 %v807
      %843 = vmatpush.bf16.msra.mxu0 %v762
      %844 = vmatpush.bf16.msra.mxu0 %v803
      %845 = vmatpush.bf16.msra.mxu0 %v755
      %846 = vmatpush.bf16.msra.mxu0 %v799
      %847 = vmatpush.bf16.msra.mxu0 %v747
      %848 = vmatpush.bf16.msra.mxu0 %v745
      %849 = vmatpush.bf16.msra.mxu0 %v741
      %850 = vmatmul.bf16.gmra.mxu0 %v819
      %v851 = vpop.f32.mrf.mxu0
      %v852 = vadd.f32 %v839, %v851
      %v853 = vpop.f32.mrf.mxu0
      %854 = vdwg.mxu0
      %855 = vmatpush.bf16.msra.mxu0 0
      %856 = vmatpush.bf16.msra.mxu0 0
      %857 = vmatpush.bf16.msra.mxu0 0
      %858 = vmatpush.bf16.msra.mxu0 %v827
      %859 = vmatpush.bf16.msra.mxu0 %v777
      %860 = vmatpush.bf16.msra.mxu0 %v775
      %861 = vmatpush.bf16.msra.mxu0 %v771
      %862 = vmatpush.bf16.msra.mxu0 %v769
      %863 = vmatmul.bf16.gmra.mxu0 %v824
      %v864 = vpop.f32.mrf.mxu0
      %v865 = vadd.f32 %v852, %v864
      %v866 = vpop.f32.mrf.mxu0
      %867 = vdwg.mxu0
      %869 = vrot.lane.b32.xlu0 %v865, 11
      %v870 = vpop.permute.xlu0 %869
      %872 = vst.msk [vmem:[%s401 + $0x4] sm:$0xf] %vm600, %v870
      %p873 = scmp.lt.s32.totalorder %s22, 1
      %s874 = scalar_select %p873, %s22, 1
      %s875 = smul.addr %s874, 8
      %s876 = scalar_lea.vmem %s11, %s875
      // Predicated region
      $region65: #{fcdensenet_forward.18} parent=63 // pred_check
        %p877 = pneg %p281
      $region66: #{fcdensenet_forward.18} parent=63 // pred_check_branch
        %879 = sbr.rel (%p877) target = $region68
      $region67: #{fcdensenet_forward.18} parent=63 // pred_region
        _
      $region68: #{fcdensenet_forward.18} parent=63 // pred_fallthru
        _
    $region64: #{fcdensenet_forward.18} parent=5 // pred_fallthru
      _
    %p880 = scmp.le.s32.totalorder 2, %s17
    // Predicated region
    $region69: #{fcdensenet_forward.18} parent=5 // pred_check
      %p881 = pneg %p880
    $region70: #{fcdensenet_forward.18} parent=5 // pred_check_branch
      %883 = sbr.rel (%p881) target = $region72
    $region71: #{fcdensenet_forward.18} parent=5 // pred_region
      %s884 = ssub.s32 %s17, 2
      // Predicated region
      $region73: #{fcdensenet_forward.18} parent=71 // pred_check
        %p885 = pneg %p287
      $region74: #{fcdensenet_forward.18} parent=71 // pred_check_branch
        %887 = sbr.rel (%p885) target = $region76
      $region75: #{fcdensenet_forward.18} parent=71 // pred_region
        %p888 = scmp.lt.s32.totalorder %s23, 1
        %s889 = scalar_select %p888, %s23, 1
        %s890 = smul.addr %s889, 8
        %s891 = scalar_lea.vmem %s11, %s890
      $region76: #{fcdensenet_forward.18} parent=71 // pred_fallthru
        _
    $region72: #{fcdensenet_forward.18} parent=5 // pred_fallthru
      _
  $region6: #{fcdensenet_forward.18} parent=0 // loop_footer
    %s21 = sadd.s32 1, %s17
  $region7: #{fcdensenet_forward.18} parent=0 // loop_footer_branch
    %16 = sbr.rel target = $region3
  $region8: #{fcdensenet_forward.18} parent=0 // loop_exit
    _

// kernel: fcdensenet_forward.21
$region0: #{fcdensenet_forward.21}
  #allocation0 [shape = 'u32[]', space=smem, size = 0x4, offset = 0x4, fixed_abs, tag = 'smem constant byte address 0x4 - core index']
  #allocation1 [shape = 'u32[72,128]{1,0:T(1,128)}', space=vmem, size = 0x9000, scoped, tag = 'internal scratch']
  #allocation2 [shape = 'f32[1,1]{1,0:T(1,128)S(1)}', space=vmem, size = 0x200, scoped, tag = 'scoped memory for fcdensenet_forward.21']
  %s0 = inlined_call_operand.vmem [shape: f32[2,32,324], index: 0, kind: input, shape index: {}]
  %s1 = inlined_call_operand.vmem [shape: f32[1,324], index: 1, kind: input, shape index: {}]
  %s2 = inlined_call_operand.vmem [shape: bf16[1,32], index: 2, kind: input, shape index: {}]
  %s3 = inlined_call_operand.<no memory space> [shape: f32[1,1], index: 3, kind: input, shape index: {}]
  %s4 = inlined_call_operand.hbm [shape: f32[324,256], index: 4, kind: input, shape index: {}]
  %s5 = inlined_call_operand.vmem [shape: f32[2,1,256], index: 5, kind: output, shape index: {}]
  %s6 = sld [smem:[#allocation0]]
  $region57: #{fcdensenet_forward.21} parent=0
    _
  %s8 = ssub.s32 1, %s6
  %s9 = scalar_select 0, %s8, %s6
  %v10 = vstv %s3
  %11 = vst [vmem:[#allocation2] sm:$0x1] %v10
  $region1: #{fcdensenet_forward.21} parent=0
    #allocation3 [shape = 'u8[335872]{0}', space=vmem, size = 0x52000, scoped, tag = 'input window, operand 4, single buffered']
    #allocation4 [shape = 's32[2]{0}', space=sflag, size = 0x8, scoped, tag = 'scoped memory for fcdensenet_forward.21']
    %12 = vsyncpa [#allocation4], 0
    loop: start=0, step=1, limit=4
    $region2: #{fcdensenet_forward.21} parent=1 // loop_pre_header
      _
    $region3: #{fcdensenet_forward.21} parent=1 // loop_header
      %s14 = sphi 0, %s18
      %p15 = scmp.ge.s32.totalorder %s14, 4
      %s24 = sphi 0, %s26
      %s27 = sphi 0, %s24
      %s28 = sphi 0, %s27
      %s44 = sphi 0, %s28
      %s48 = sphi 0, %s48
      %s50 = sphi 0, %s48
      %s51 = sphi 0, %s50
      %s65 = sphi 0, %s51
      %s69 = sphi 0, %s69
      %s71 = sphi 0, %s69
      %s72 = sphi 0, %s71
      %s86 = sphi 0, %s72
      %s90 = sphi 0, %s90
      %s92 = sphi 0, %s90
      %s93 = sphi 0, %s92
      %s107 = sphi 0, %s93
      %s111 = sphi 0, %s111
      %s113 = sphi 0, %s111
      %s114 = sphi 0, %s113
      %s128 = sphi 0, %s114
      %s134 = sphi 0, %s136
      %s137 = sphi 0, %s134
      %s138 = sphi 0, %s137
      %s154 = sphi 0, %s138
    $region4: #{fcdensenet_forward.21} parent=1 // loop_header_branch
      %17 = sbr.rel (%p15) target = $region8
    $region5: #{fcdensenet_forward.21} parent=1 // loop_body
      %s19 = ssub.s32 %s14, 1
      %s20 = ssub.s32 %s14, 2
      %s21 = sadd.s32 %s14, 1
      %s22 = ssub.s32 %s14, %s21
      %p23 = scmp.eq.s32.totalorder %s22, 0
      %s25 = sadd.s32 %s24, 1
      %s26 = scalar_select %p23, %s24, %s25
      %p29 = pneg %p23
      %p30 = scmp.eq.s32.totalorder %s14, 1
      %p31 = por %p29, %p30
      %p32 = scmp.ne.s32.totalorder %s24, %s27
      %p33 = scmp.eq.s32.totalorder %s14, 0
      %p34 = por %p32, %p33
      %p35 = scmp.ne.s32.totalorder %s24, %s27
      %p36 = scmp.eq.s32.totalorder %s19, 1
      %p37 = por %p35, %p36
      %p38 = scmp.ne.s32.totalorder %s27, %s28
      %p39 = scmp.eq.s32.totalorder %s19, 0
      %p40 = por %p38, %p39
      %p41 = scmp.ne.s32.totalorder %s27, %s28
      %p42 = scmp.eq.s32.totalorder %s20, 1
      %p43 = por %p41, %p42
      %p45 = scmp.ne.s32.totalorder %s28, %s44
      %p46 = scmp.eq.s32.totalorder %s20, 0
      %p47 = por %p45, %p46
      %s49 = sadd.s32 %s48, 1
      %p52 = scmp.eq.s32.totalorder %s14, 1
      %p53 = scmp.ne.s32.totalorder %s48, %s50
      %p54 = scmp.eq.s32.totalorder %s14, 0
      %p55 = por %p53, %p54
      %p56 = scmp.ne.s32.totalorder %s48, %s50
      %p57 = scmp.eq.s32.totalorder %s19, 1
      %p58 = por %p56, %p57
      %p59 = scmp.ne.s32.totalorder %s50, %s51
      %p60 = scmp.eq.s32.totalorder %s19, 0
      %p61 = por %p59, %p60
      %p62 = scmp.ne.s32.totalorder %s50, %s51
      %p63 = scmp.eq.s32.totalorder %s20, 1
      %p64 = por %p62, %p63
      %p66 = scmp.ne.s32.totalorder %s51, %s65
      %p67 = scmp.eq.s32.totalorder %s20, 0
      %p68 = por %p66, %p67
      %s70 = sadd.s32 %s69, 1
      %p73 = scmp.eq.s32.totalorder %s14, 1
      %p74 = scmp.ne.s32.totalorder %s69, %s71
      %p75 = scmp.eq.s32.totalorder %s14, 0
      %p76 = por %p74, %p75
      %p77 = scmp.ne.s32.totalorder %s69, %s71
      %p78 = scmp.eq.s32.totalorder %s19, 1
      %p79 = por %p77, %p78
      %p80 = scmp.ne.s32.totalorder %s71, %s72
      %p81 = scmp.eq.s32.totalorder %s19, 0
      %p82 = por %p80, %p81
      %p83 = scmp.ne.s32.totalorder %s71, %s72
      %p84 = scmp.eq.s32.totalorder %s20, 1
      %p85 = por %p83, %p84
      %p87 = scmp.ne.s32.totalorder %s72, %s86
      %p88 = scmp.eq.s32.totalorder %s20, 0
      %p89 = por %p87, %p88
      %s91 = sadd.s32 %s90, 1
      %p94 = scmp.eq.s32.totalorder %s14, 1
      %p95 = scmp.ne.s32.totalorder %s90, %s92
      %p96 = scmp.eq.s32.totalorder %s14, 0
      %p97 = por %p95, %p96
      %p98 = scmp.ne.s32.totalorder %s90, %s92
      %p99 = scmp.eq.s32.totalorder %s19, 1
      %p100 = por %p98, %p99
      %p101 = scmp.ne.s32.totalorder %s92, %s93
      %p102 = scmp.eq.s32.totalorder %s19, 0
      %p103 = por %p101, %p102
      %p104 = scmp.ne.s32.totalorder %s92, %s93
      %p105 = scmp.eq.s32.totalorder %s20, 1
      %p106 = por %p104, %p105
      %p108 = scmp.ne.s32.totalorder %s93, %s107
      %p109 = scmp.eq.s32.totalorder %s20, 0
      %p110 = por %p108, %p109
      %s112 = sadd.s32 %s111, 1
      %p115 = scmp.eq.s32.totalorder %s14, 1
      %p116 = scmp.ne.s32.totalorder %s111, %s113
      %p117 = scmp.eq.s32.totalorder %s14, 0
      %p118 = por %p116, %p117
      %p119 = scmp.ne.s32.totalorder %s111, %s113
      %p120 = scmp.eq.s32.totalorder %s19, 1
      %p121 = por %p119, %p120
      %p122 = scmp.ne.s32.totalorder %s113, %s114
      %p123 = scmp.eq.s32.totalorder %s19, 0
      %p124 = por %p122, %p123
      %p125 = scmp.ne.s32.totalorder %s113, %s114
      %p126 = scmp.eq.s32.totalorder %s20, 1
      %p127 = por %p125, %p126
      %p129 = scmp.ne.s32.totalorder %s114, %s128
      %p130 = scmp.eq.s32.totalorder %s20, 0
      %p131 = por %p129, %p130
      %s132 = ssub.s32 %s14, %s21
      %p133 = scmp.eq.s32.totalorder %s132, 0
      %s135 = sadd.s32 %s134, 1
      %s136 = scalar_select %p133, %s134, %s135
      %p139 = pneg %p133
      %p140 = scmp.eq.s32.totalorder %s14, 1
      %p141 = por %p139, %p140
      %p142 = scmp.ne.s32.totalorder %s134, %s137
      %p143 = scmp.eq.s32.totalorder %s14, 0
      %p144 = por %p142, %p143
      %p145 = scmp.ne.s32.totalorder %s134, %s137
      %p146 = scmp.eq.s32.totalorder %s19, 1
      %p147 = por %p145, %p146
      %p148 = scmp.ne.s32.totalorder %s137, %s138
      %p149 = scmp.eq.s32.totalorder %s19, 0
      %p150 = por %p148, %p149
      %p151 = scmp.ne.s32.totalorder %s137, %s138
      %p152 = scmp.eq.s32.totalorder %s20, 1
      %p153 = por %p151, %p152
      %p155 = scmp.ne.s32.totalorder %s138, %s154
      %p156 = scmp.eq.s32.totalorder %s20, 0
      %p157 = por %p155, %p156
      %p158 = scmp.le.s32.totalorder 1, %s14
      %p159 = scmp.lt.s32.totalorder %s14, 3
      %p160 = pnand %p158, %p159
      %p161 = pneg %p160
      // Predicated region
      $region9: #{fcdensenet_forward.21} parent=5 // pred_check
        _
      $region10: #{fcdensenet_forward.21} parent=5 // pred_check_branch
        %163 = sbr.rel (%p160) target = $region12
      $region11: #{fcdensenet_forward.21} parent=5 // pred_region
        %s164 = ssub.s32 %s14, 1
        // Predicated region
        $region13: #{fcdensenet_forward.21} parent=11 // pred_check
          %p165 = pneg %p61
        $region14: #{fcdensenet_forward.21} parent=11 // pred_check_branch
          %167 = sbr.rel (%p165) target = $region16
        $region15: #{fcdensenet_forward.21} parent=11 // pred_region
          _
        $region16: #{fcdensenet_forward.21} parent=11 // pred_fallthru
          _
        // Predicated region
        $region17: #{fcdensenet_forward.21} parent=11 // pred_check
          %p168 = pneg %p82
        $region18: #{fcdensenet_forward.21} parent=11 // pred_check_branch
          %170 = sbr.rel (%p168) target = $region20
        $region19: #{fcdensenet_forward.21} parent=11 // pred_region
          _
        $region20: #{fcdensenet_forward.21} parent=11 // pred_fallthru
          _
        // Predicated region
        $region21: #{fcdensenet_forward.21} parent=11 // pred_check
          %p171 = pneg %p103
        $region22: #{fcdensenet_forward.21} parent=11 // pred_check_branch
          %173 = sbr.rel (%p171) target = $region24
        $region23: #{fcdensenet_forward.21} parent=11 // pred_region
          _
        $region24: #{fcdensenet_forward.21} parent=11 // pred_fallthru
          _
        // Predicated region
        $region25: #{fcdensenet_forward.21} parent=11 // pred_check
          %p174 = pneg %p124
        $region26: #{fcdensenet_forward.21} parent=11 // pred_check_branch
          %176 = sbr.rel (%p174) target = $region28
        $region27: #{fcdensenet_forward.21} parent=11 // pred_region
          %178 = vsyncadd [#allocation4], 0
          %s179 = sshll.u32 %s4, 4
          %s180 = int_to_ptr.hbm [resolvable:$true] %s179
          %s181 = sshll.u32 [#allocation3], 4
          %s182 = int_to_ptr.vmem [resolvable:$true] %s181
          %187 = dma.hbm_to_vmem [thread:$0]  %s180, 10496, %s182, [#allocation4], 256, 256, 16
        $region28: #{fcdensenet_forward.21} parent=11 // pred_fallthru
          _
      $region12: #{fcdensenet_forward.21} parent=5 // pred_fallthru
        _
      %p188 = scmp.lt.s32.totalorder %s14, 2
      // Predicated region
      $region29: #{fcdensenet_forward.21} parent=5 // pred_check
        %p189 = pneg %p188
      $region30: #{fcdensenet_forward.21} parent=5 // pred_check_branch
        %191 = sbr.rel (%p189) target = $region32
      $region31: #{fcdensenet_forward.21} parent=5 // pred_region
        // Predicated region
        $region33: #{fcdensenet_forward.21} parent=31 // pred_check
          %p192 = pneg %p34
        $region34: #{fcdensenet_forward.21} parent=31 // pred_check_branch
          %194 = sbr.rel (%p192) target = $region36
        $region35: #{fcdensenet_forward.21} parent=31 // pred_region
          %p195 = scmp.lt.s32.totalorder %s14, 1
          %s196 = scalar_select %p195, %s14, 1
          %s197 = smul.addr %s196, 12
          %s198 = smul.addr %s197, 8
          %s199 = scalar_lea.vmem %s0, %s198
        $region36: #{fcdensenet_forward.21} parent=31 // pred_fallthru
          _
      $region32: #{fcdensenet_forward.21} parent=5 // pred_fallthru
        _
      %p200 = scmp.le.s32.totalorder 1, %s14
      %p201 = scmp.lt.s32.totalorder %s14, 3
      %p202 = pnand %p200, %p201
      %p203 = pneg %p202
      // Predicated region
      $region37: #{fcdensenet_forward.21} parent=5 // pred_check
        _
      $region38: #{fcdensenet_forward.21} parent=5 // pred_check_branch
        %205 = sbr.rel (%p202) target = $region40
      $region39: #{fcdensenet_forward.21} parent=5 // pred_region
        %s206 = ssub.s32 %s14, 1
        // Predicated region
        $region41: #{fcdensenet_forward.21} parent=39 // pred_check
          %p207 = pneg %p124
        $region42: #{fcdensenet_forward.21} parent=39 // pred_check_branch
          %209 = sbr.rel (%p207) target = $region44
        $region43: #{fcdensenet_forward.21} parent=39 // pred_region
          %211 = dma.done [#allocation4], 10496
        $region44: #{fcdensenet_forward.21} parent=39 // pred_fallthru
          _
        %p212 = scmp.lt.s32.totalorder %s19, 1
        %s213 = scalar_select %p212, %s19, 1
        %s214 = smul.addr %s213, 12
        %s215 = smul.addr %s214, 8
        %s216 = scalar_lea.vmem %s0, %s215
        %p217 = pneg %p40
        %p218 = pneg %p37
        %p219 = pneg %p61
        %p220 = pneg %p58
        %p221 = pneg %p82
        %p222 = pneg %p79
        %p223 = pneg %p103
        %p224 = pneg %p100
        %p225 = pneg %p124
        %p226 = pneg %p121
        %p227 = pneg %p150
        %p228 = pneg %p147
        %p229 = scmp.lt.s32.totalorder %s19, 1
        %s230 = scalar_select %p229, %s19, 1
        %s231 = smul.addr %s230, 2
        %s232 = scalar_lea.vmem %s5, %s231
        %p233 = scmp.lt.s32.totalorder %s19, 1
        %s234 = scalar_select %p233, %s19, 1
        %s235 = smul.addr %s234, 12
        %s236 = smul.addr %s235, 8
        %s237 = scalar_lea.vmem %s0, %s236
        %p238 = scmp.lt.s32.totalorder %s19, 1
        %s239 = scalar_select %p238, %s19, 1
        %s240 = smul.addr %s239, 2
        %s241 = scalar_lea.vmem %s5, %s240
        %v243 = vld [vmem:[%s1] sm:$0x7]
        %vm244 = vcmp.gt.f32.partialorder %v243, 0.5
        %v245 = vld [vmem:[%s237] sm:$0xff]
        %v246 = vld [vmem:[%s237 + $0x8] sm:$0xff]
        %v247 = vld [vmem:[%s237 + $0x10] sm:$0xff]
        %v248 = vld [vmem:[%s237 + $0x18] sm:$0xff]
        %v249 = vld [vmem:[%s237 + $0x20] sm:$0xff]
        %v250 = vld [vmem:[%s237 + $0x28] sm:$0xff]
        %v251 = vld [vmem:[%s237 + $0x30] sm:$0xff]
        %v252 = vld [vmem:[%s237 + $0x38] sm:$0xff]
        %v253 = vld [vmem:[%s237 + $0x40] sm:$0xff]
        %v254 = vld [vmem:[%s237 + $0x48] sm:$0xff]
        %v255 = vld [vmem:[%s237 + $0x50] sm:$0xff]
        %v256 = vld [vmem:[%s237 + $0x58] sm:$0xff]
        %v257 = vsel %vm244, 1, 0
        %v258 = vperm.slane %v257, 0
        %v259 = vperm.slane %v257, 1
        %v260 = vperm.slane %v257, 2
        %vm261 = vcmp.eq.s32.totalorder %v258, 1
        %vm262 = vcmp.eq.s32.totalorder %v259, 1
        %vm263 = vcmp.eq.s32.totalorder %v260, 1
        %v264 = vsel %vm261, %v245, 0.0
        %v265 = vsel %vm262, %v246, 0.0
        %v266 = vsel %vm263, %v247, 0.0
        %v267 = vsel %vm261, %v248, 0.0
        %v268 = vsel %vm262, %v249, 0.0
        %v269 = vsel %vm263, %v250, 0.0
        %v270 = vsel %vm261, %v251, 0.0
        %v271 = vsel %vm262, %v252, 0.0
        %v272 = vsel %vm263, %v253, 0.0
        %v273 = vsel %vm261, %v254, 0.0
        %v274 = vsel %vm262, %v255, 0.0
        %v275 = vsel %vm263, %v256, 0.0
        %v276 = vld [vmem:[%s2] sm:$0x1]
        %v277 = vpack.c.bf16 %v267, %v264
        %v278 = vpack.c.bf16 %v268, %v265
        %v279 = vpack.c.bf16 %v269, %v266
        %v280 = vpack.c.bf16 %v273, %v270
        %v281 = vpack.c.bf16 %v274, %v271
        %v282 = vpack.c.bf16 %v275, %v272
        %v283 = vld [vmem:[#allocation2] sm:$0x1]
        %285 = vset.pattern.permute.xlu0 0
        %286 = vperm.xlu0 %285, %v283
        %v287 = vpop.permute.xlu0 %286
        %v289 = vperm.slane %v287, 0
        %vm290 = vcmask 261120
        %v292 = vsel %vm290, %v276, 0
        %294 = vmatpush.bf16.msra.mxu0 0
        %295 = vmatpush.bf16.msra.mxu0 0
        %296 = vmatpush.bf16.msra.mxu0 0
        %297 = vmatpush.bf16.msra.mxu0 0
        %298 = vmatpush.bf16.msra.mxu0 0
        %299 = vmatpush.bf16.msra.mxu0 0
        %300 = vmatpush.bf16.msra.mxu0 %v280
        %301 = vmatpush.bf16.msra.mxu0 %v277
        %302 = vmatmul.bf16.gmra.mxu0 %v292
        %v303 = vpop.f32.mrf.mxu0
        %v304 = vadd.f32 %v289, %v303
        %v305 = vpop.f32.mrf.mxu0
        %306 = vdwg.mxu0
        %307 = vmatpush.bf16.msra.mxu0 0
        %308 = vmatpush.bf16.msra.mxu0 0
        %309 = vmatpush.bf16.msra.mxu0 0
        %310 = vmatpush.bf16.msra.mxu0 0
        %311 = vmatpush.bf16.msra.mxu0 0
        %312 = vmatpush.bf16.msra.mxu0 0
        %313 = vmatpush.bf16.msra.mxu0 %v281
        %314 = vmatpush.bf16.msra.mxu0 %v278
        %315 = vmatmul.bf16.gmra.mxu0 %v292
        %v316 = vpop.f32.mrf.mxu0
        %v317 = vadd.f32 %v289, %v316
        %v318 = vpop.f32.mrf.mxu0
        %319 = vdwg.mxu0
        %320 = vmatpush.bf16.msra.mxu0 0
        %321 = vmatpush.bf16.msra.mxu0 0
        %322 = vmatpush.bf16.msra.mxu0 0
        %323 = vmatpush.bf16.msra.mxu0 0
        %324 = vmatpush.bf16.msra.mxu0 0
        %325 = vmatpush.bf16.msra.mxu0 0
        %326 = vmatpush.bf16.msra.mxu0 %v282
        %327 = vmatpush.bf16.msra.mxu0 %v279
        %328 = vmatmul.bf16.gmra.mxu0 %v292
        %v329 = vpop.f32.mrf.mxu0
        %v330 = vadd.f32 %v289, %v329
        %v331 = vpop.f32.mrf.mxu0
        %332 = vdwg.mxu0
        %v333 = vld [vmem:[#allocation3] sm:$0xff]
        %v334 = vld [vmem:[#allocation3 + $0x8] sm:$0xff]
        %v335 = vld [vmem:[#allocation3 + $0x10] sm:$0xff]
        %v336 = vld [vmem:[#allocation3 + $0x18] sm:$0xff]
        %v337 = vld [vmem:[#allocation3 + $0x20] sm:$0xff]
        %v338 = vld [vmem:[#allocation3 + $0x28] sm:$0xff]
        %v339 = vld [vmem:[#allocation3 + $0x30] sm:$0xff]
        %v340 = vld [vmem:[#allocation3 + $0x38] sm:$0xff]
        %v341 = vld [vmem:[#allocation3 + $0x40] sm:$0xff]
        %v342 = vld [vmem:[#allocation3 + $0x48] sm:$0xff]
        %v343 = vld [vmem:[#allocation3 + $0x50] sm:$0xff]
        %v344 = vld [vmem:[#allocation3 + $0x58] sm:$0xff]
        %v345 = vld [vmem:[#allocation3 + $0x60] sm:$0xff]
        %v346 = vld [vmem:[#allocation3 + $0x68] sm:$0xff]
        %v347 = vld [vmem:[#allocation3 + $0x70] sm:$0xff]
        %v348 = vld [vmem:[#allocation3 + $0x78] sm:$0xff]
        %v349 = vld [vmem:[#allocation3 + $0x80] sm:$0xff]
        %v350 = vld [vmem:[#allocation3 + $0x88] sm:$0xff]
        %v351 = vld [vmem:[#allocation3 + $0x90] sm:$0xff]
        %v352 = vld [vmem:[#allocation3 + $0x98] sm:$0xff]
        %v353 = vld [vmem:[#allocation3 + $0xa0] sm:$0xff]
        %v354 = vld [vmem:[#allocation3 + $0xa8] sm:$0xff]
        %v355 = vld [vmem:[#allocation3 + $0xb0] sm:$0xff]
        %v356 = vld [vmem:[#allocation3 + $0xb8] sm:$0xff]
        %v357 = vld [vmem:[#allocation3 + $0xc0] sm:$0xff]
        %v358 = vld [vmem:[#allocation3 + $0xc8] sm:$0xff]
        %v359 = vld [vmem:[#allocation3 + $0xd0] sm:$0xff]
        %v360 = vld [vmem:[#allocation3 + $0xd8] sm:$0xff]
        %v361 = vld [vmem:[#allocation3 + $0xe0] sm:$0xff]
        %v362 = vld [vmem:[#allocation3 + $0xe8] sm:$0xff]
        %v363 = vld [vmem:[#allocation3 + $0xf0] sm:$0xff]
        %v364 = vld [vmem:[#allocation3 + $0xf8] sm:$0xff]
        %v365 = vld [vmem:[#allocation3 + $0x100] sm:$0xff]
        %v366 = vld [vmem:[#allocation3 + $0x108] sm:$0xff]
        %v367 = vld [vmem:[#allocation3 + $0x110] sm:$0xff]
        %v368 = vld [vmem:[#allocation3 + $0x118] sm:$0xff]
        %v369 = vld [vmem:[#allocation3 + $0x120] sm:$0xff]
        %v370 = vld [vmem:[#allocation3 + $0x128] sm:$0xff]
        %v371 = vld [vmem:[#allocation3 + $0x130] sm:$0xff]
        %v372 = vld [vmem:[#allocation3 + $0x138] sm:$0xff]
        %v373 = vld [vmem:[#allocation3 + $0x140] sm:$0xff]
        %v374 = vld [vmem:[#allocation3 + $0x148] sm:$0xff]
        %v375 = vld [vmem:[#allocation3 + $0x150] sm:$0xff]
        %v376 = vld [vmem:[#allocation3 + $0x158] sm:$0xff]
        %v377 = vld [vmem:[#allocation3 + $0x160] sm:$0xff]
        %v378 = vld [vmem:[#allocation3 + $0x168] sm:$0xff]
        %v379 = vld [vmem:[#allocation3 + $0x170] sm:$0xff]
        %v380 = vld [vmem:[#allocation3 + $0x178] sm:$0xff]
        %v381 = vld [vmem:[#allocation3 + $0x180] sm:$0xff]
        %v382 = vld [vmem:[#allocation3 + $0x188] sm:$0xff]
        %v383 = vld [vmem:[#allocation3 + $0x190] sm:$0xff]
        %v384 = vld [vmem:[#allocation3 + $0x198] sm:$0xff]
        %v385 = vld [vmem:[#allocation3 + $0x1a0] sm:$0xff]
        %v386 = vld [vmem:[#allocation3 + $0x1a8] sm:$0xff]
        %v387 = vld [vmem:[#allocation3 + $0x1b0] sm:$0xff]
        %v388 = vld [vmem:[#allocation3 + $0x1b8] sm:$0xff]
        %v389 = vld [vmem:[#allocation3 + $0x1c0] sm:$0xff]
        %v390 = vld [vmem:[#allocation3 + $0x1c8] sm:$0xff]
        %v391 = vld [vmem:[#allocation3 + $0x1d0] sm:$0xff]
        %v392 = vld [vmem:[#allocation3 + $0x1d8] sm:$0xff]
        %v393 = vld [vmem:[#allocation3 + $0x1e0] sm:$0xff]
        %v394 = vld [vmem:[#allocation3 + $0x1e8] sm:$0xff]
        %v395 = vld [vmem:[#allocation3 + $0x1f0] sm:$0xff]
        %v396 = vld [vmem:[#allocation3 + $0x1f8] sm:$0xff]
        %v397 = vld [vmem:[#allocation3 + $0x200] sm:$0xff]
        %v398 = vld [vmem:[#allocation3 + $0x208] sm:$0xff]
        %v399 = vld [vmem:[#allocation3 + $0x210] sm:$0xff]
        %v400 = vld [vmem:[#allocation3 + $0x218] sm:$0xff]
        %v401 = vld [vmem:[#allocation3 + $0x220] sm:$0xff]
        %v402 = vld [vmem:[#allocation3 + $0x228] sm:$0xff]
        %v403 = vld [vmem:[#allocation3 + $0x230] sm:$0xff]
        %v404 = vld [vmem:[#allocation3 + $0x238] sm:$0xff]
        %v405 = vld [vmem:[#allocation3 + $0x240] sm:$0xff]
        %v406 = vld [vmem:[#allocation3 + $0x248] sm:$0xff]
        %v407 = vld [vmem:[#allocation3 + $0x250] sm:$0xff]
        %v408 = vld [vmem:[#allocation3 + $0x258] sm:$0xff]
        %v409 = vld [vmem:[#allocation3 + $0x260] sm:$0xff]
        %v410 = vld [vmem:[#allocation3 + $0x268] sm:$0xff]
        %v411 = vld [vmem:[#allocation3 + $0x270] sm:$0xff]
        %v412 = vld [vmem:[#allocation3 + $0x278] sm:$0xff]
        %v413 = vld [vmem:[#allocation3 + $0x280] sm:$0xf]
        %v414 = vld [vmem:[#allocation3 + $0x288] sm:$0xf]
        %vm415 = vcmask 556032
        %v417 = vsel %vm415, %v330, 0
        %vm419 = vcmask 1043456
        %v421 = vsel %vm419, %v413, 0
        %v424 = vsel %vm419, %v414, 0
        %426 = vmatpush.msra.mxu0 %v363
        %427 = vmatpush.msra.mxu0 %v361
        %428 = vmatpush.msra.mxu0 %v359
        %429 = vmatpush.msra.mxu0 %v357
        %430 = vmatpush.msra.mxu0 %v355
        %431 = vmatpush.msra.mxu0 %v353
        %432 = vmatpush.msra.mxu0 %v351
        %433 = vmatpush.msra.mxu0 %v349
        %434 = vmatpush.msra.mxu0 %v347
        %435 = vmatpush.msra.mxu0 %v345
        %436 = vmatpush.msra.mxu0 %v343
        %437 = vmatpush.msra.mxu0 %v341
        %438 = vmatpush.msra.mxu0 %v339
        %439 = vmatpush.msra.mxu0 %v337
        %440 = vmatpush.msra.mxu0 %v335
        %441 = vmatpush.msra.mxu0 %v333
        %442 = vmatmul.f32.gmra.mxu0 %v304
        %v443 = vpop.f32.mrf.mxu0
        %v444 = vadd.f32 0.0, %v443
        %445 = vdwg.mxu0
        %446 = vmatpush.msra.mxu0 %v395
        %447 = vmatpush.msra.mxu0 %v393
        %448 = vmatpush.msra.mxu0 %v391
        %449 = vmatpush.msra.mxu0 %v389
        %450 = vmatpush.msra.mxu0 %v387
        %451 = vmatpush.msra.mxu0 %v385
        %452 = vmatpush.msra.mxu0 %v383
        %453 = vmatpush.msra.mxu0 %v381
        %454 = vmatpush.msra.mxu0 %v379
        %455 = vmatpush.msra.mxu0 %v377
        %456 = vmatpush.msra.mxu0 %v375
        %457 = vmatpush.msra.mxu0 %v373
        %458 = vmatpush.msra.mxu0 %v371
        %459 = vmatpush.msra.mxu0 %v369
        %460 = vmatpush.msra.mxu0 %v367
        %461 = vmatpush.msra.mxu0 %v365
        %462 = vmatmul.f32.gmra.mxu0 %v317
        %v463 = vpop.f32.mrf.mxu0
        %v464 = vadd.f32 %v444, %v463
        %465 = vdwg.mxu0
        %466 = vmatpush.msra.mxu0 0.0
        %467 = vmatpush.msra.mxu0 0.0
        %468 = vmatpush.msra.mxu0 0.0
        %469 = vmatpush.msra.mxu0 0.0
        %470 = vmatpush.msra.mxu0 0.0
        %471 = vmatpush.msra.mxu0 0.0
        %472 = vmatpush.msra.mxu0 0.0
        %473 = vmatpush.msra.mxu0 %v421
        %474 = vmatpush.msra.mxu0 %v411
        %475 = vmatpush.msra.mxu0 %v409
        %476 = vmatpush.msra.mxu0 %v407
        %477 = vmatpush.msra.mxu0 %v405
        %478 = vmatpush.msra.mxu0 %v403
        %479 = vmatpush.msra.mxu0 %v401
        %480 = vmatpush.msra.mxu0 %v399
        %481 = vmatpush.msra.mxu0 %v397
        %482 = vmatmul.f32.gmra.mxu0 %v417
        %v483 = vpop.f32.mrf.mxu0
        %v484 = vadd.f32 %v464, %v483
        %485 = vdwg.mxu0
        %486 = vmatpush.msra.mxu0 %v364
        %487 = vmatpush.msra.mxu0 %v362
        %488 = vmatpush.msra.mxu0 %v360
        %489 = vmatpush.msra.mxu0 %v358
        %490 = vmatpush.msra.mxu0 %v356
        %491 = vmatpush.msra.mxu0 %v354
        %492 = vmatpush.msra.mxu0 %v352
        %493 = vmatpush.msra.mxu0 %v350
        %494 = vmatpush.msra.mxu0 %v348
        %495 = vmatpush.msra.mxu0 %v346
        %496 = vmatpush.msra.mxu0 %v344
        %497 = vmatpush.msra.mxu0 %v342
        %498 = vmatpush.msra.mxu0 %v340
        %499 = vmatpush.msra.mxu0 %v338
        %500 = vmatpush.msra.mxu0 %v336
        %501 = vmatpush.msra.mxu0 %v334
        %502 = vmatmul.f32.gmra.mxu0 %v304
        %v503 = vpop.f32.mrf.mxu0
        %v504 = vadd.f32 0.0, %v503
        %505 = vdwg.mxu0
        %506 = vmatpush.msra.mxu0 %v396
        %507 = vmatpush.msra.mxu0 %v394
        %508 = vmatpush.msra.mxu0 %v392
        %509 = vmatpush.msra.mxu0 %v390
        %510 = vmatpush.msra.mxu0 %v388
        %511 = vmatpush.msra.mxu0 %v386
        %512 = vmatpush.msra.mxu0 %v384
        %513 = vmatpush.msra.mxu0 %v382
        %514 = vmatpush.msra.mxu0 %v380
        %515 = vmatpush.msra.mxu0 %v378
        %516 = vmatpush.msra.mxu0 %v376
        %517 = vmatpush.msra.mxu0 %v374
        %518 = vmatpush.msra.mxu0 %v372
        %519 = vmatpush.msra.mxu0 %v370
        %520 = vmatpush.msra.mxu0 %v368
        %521 = vmatpush.msra.mxu0 %v366
        %522 = vmatmul.f32.gmra.mxu0 %v317
        %v523 = vpop.f32.mrf.mxu0
        %v524 = vadd.f32 %v504, %v523
        %525 = vdwg.mxu0
        %526 = vmatpush.msra.mxu0 0.0
        %527 = vmatpush.msra.mxu0 0.0
        %528 = vmatpush.msra.mxu0 0.0
        %529 = vmatpush.msra.mxu0 0.0
        %530 = vmatpush.msra.mxu0 0.0
        %531 = vmatpush.msra.mxu0 0.0
        %532 = vmatpush.msra.mxu0 0.0
        %533 = vmatpush.msra.mxu0 %v424
        %534 = vmatpush.msra.mxu0 %v412
        %535 = vmatpush.msra.mxu0 %v410
        %536 = vmatpush.msra.mxu0 %v408
        %537 = vmatpush.msra.mxu0 %v406
        %538 = vmatpush.msra.mxu0 %v404
        %539 = vmatpush.msra.mxu0 %v402
        %540 = vmatpush.msra.mxu0 %v400
        %541 = vmatpush.msra.mxu0 %v398
        %542 = vmatmul.f32.gmra.mxu0 %v417
        %v543 = vpop.f32.mrf.mxu0
        %v544 = vadd.f32 %v524, %v543
        %545 = vdwg.mxu0
        %v546 = vxor.u32 %v484, 2147483648
        %v547 = vxor.u32 %v544, 2147483648
        %v548 = vmul.f32 %v546, 1.442695
        %v549 = vpow.pop %v548
        %v550 = vmul.f32 %v547, 1.442695
        %v551 = vpow.pop %v550
        %v552 = vadd.f32 %v549, 1.0
        %v553 = vadd.f32 %v551, 1.0
        %v554 = vrcp.pop %v552
        %v555 = vmul.f32 %v552, %v554
        %v556 = vsub.f32 1.0, %v555
        %v557 = vmul.f32 %v554, %v556
        %v558 = vadd.f32 %v554, %v557
        %vm559 = vweird.f32 %v552
        %vm560 = vweird.f32 %v554
        %vm561 = vmor %vm559, %vm560
        %v562 = vsel %vm561, %v554, %v558
        %v563 = vand.u32 2147483647, %v552
        %vm564 = vcmp.eq.f32.partialorder %v563, 8.507059e+37
        %v565 = vand.u32 %v552, 2147483648
        %v566 = vor.u32 1.1754944e-38, %v565
        %v567 = vsel %vm564, %v566, %v562
        %v568 = vmul.f32 1.0, %v567
        %v569 = vrcp.pop %v553
        %v570 = vmul.f32 %v553, %v569
        %v571 = vsub.f32 1.0, %v570
        %v572 = vmul.f32 %v569, %v571
        %v573 = vadd.f32 %v569, %v572
        %vm574 = vweird.f32 %v553
        %vm575 = vweird.f32 %v569
        %vm576 = vmor %vm574, %vm575
        %v577 = vsel %vm576, %v569, %v573
        %v578 = vand.u32 2147483647, %v553
        %vm579 = vcmp.eq.f32.partialorder %v578, 8.507059e+37
        %v580 = vand.u32 %v553, 2147483648
        %v581 = vor.u32 1.1754944e-38, %v580
        %v582 = vsel %vm579, %v581, %v577
        %v583 = vmul.f32 1.0, %v582
        %v586 = vrot.slane %v583, 7
        %vm587 = vcmask 1040384
        %v588 = vsel %vm587, %v568, %v586
        %v590 = vlaneseq
        %vm591 = vcmp.ge.s32.totalorder %v590, 0
        %vm592 = vcmp.lt.s32.totalorder %v590, 256
        %vm593 = vmand %vm591, %vm592
        %594 = vst.msk [vmem:[%s241] sm:$0x3] %vm593, %v588
        %p595 = scmp.lt.s32.totalorder %s19, 1
        %s596 = scalar_select %p595, %s19, 1
        %s597 = smul.addr %s596, 2
        %s598 = scalar_lea.vmem %s5, %s597
        // Predicated region
        $region45: #{fcdensenet_forward.21} parent=39 // pred_check
          %p599 = pneg %p147
        $region46: #{fcdensenet_forward.21} parent=39 // pred_check_branch
          %601 = sbr.rel (%p599) target = $region48
        $region47: #{fcdensenet_forward.21} parent=39 // pred_region
          _
        $region48: #{fcdensenet_forward.21} parent=39 // pred_fallthru
          _
      $region40: #{fcdensenet_forward.21} parent=5 // pred_fallthru
        _
      %p602 = scmp.le.s32.totalorder 2, %s14
      // Predicated region
      $region49: #{fcdensenet_forward.21} parent=5 // pred_check
        %p603 = pneg %p602
      $region50: #{fcdensenet_forward.21} parent=5 // pred_check_branch
        %605 = sbr.rel (%p603) target = $region52
      $region51: #{fcdensenet_forward.21} parent=5 // pred_region
        %s606 = ssub.s32 %s14, 2
        // Predicated region
        $region53: #{fcdensenet_forward.21} parent=51 // pred_check
          %p607 = pneg %p153
        $region54: #{fcdensenet_forward.21} parent=51 // pred_check_branch
          %609 = sbr.rel (%p607) target = $region56
        $region55: #{fcdensenet_forward.21} parent=51 // pred_region
          %p610 = scmp.lt.s32.totalorder %s20, 1
          %s611 = scalar_select %p610, %s20, 1
          %s612 = smul.addr %s611, 2
          %s613 = scalar_lea.vmem %s5, %s612
        $region56: #{fcdensenet_forward.21} parent=51 // pred_fallthru
          _
      $region52: #{fcdensenet_forward.21} parent=5 // pred_fallthru
        _
    $region6: #{fcdensenet_forward.21} parent=1 // loop_footer
      %s18 = sadd.s32 1, %s14
    $region7: #{fcdensenet_forward.21} parent=1 // loop_footer_branch
      %13 = sbr.rel target = $region3
    $region8: #{fcdensenet_forward.21} parent=1 // loop_exit
      _
    %614 = vsyncpa [#allocation4], 1
    %s615 = scalar_lea.sflag [#allocation4], 1
    %616 = vsyncpa %s615, 1

// kernel: fcdensenet_forward.20
$region0: #{fcdensenet_forward.20}
  #allocation0 [shape = 'u32[]', space=smem, size = 0x4, offset = 0x4, fixed_abs, tag = 'smem constant byte address 0x4 - core index']
  #allocation1 [shape = 'u32[72,128]{1,0:T(1,128)}', space=vmem, size = 0x9000, scoped, tag = 'internal scratch']
  %s0 = inlined_call_operand.vmem [shape: f32[2,8,324], index: 0, kind: input, shape index: {}]
  %s1 = inlined_call_operand.vmem [shape: f32[2,16,324], index: 1, kind: input, shape index: {}]
  %s2 = inlined_call_operand.vmem [shape: f32[1,324], index: 2, kind: input, shape index: {}]
  %s3 = inlined_call_operand.vmem [shape: f32[24,1], index: 3, kind: input, shape index: {}]
  %s4 = inlined_call_operand.vmem [shape: f32[24,1], index: 4, kind: input, shape index: {}]
  %s5 = inlined_call_operand.vmem [shape: bf16[4,216], index: 5, kind: input, shape index: {}]
  %s6 = inlined_call_operand.vmem [shape: f32[4,1], index: 6, kind: input, shape index: {}]
  %s7 = inlined_call_operand.vmem [shape: f32[28,1], index: 7, kind: input, shape index: {}]
  %s8 = inlined_call_operand.vmem [shape: f32[28,1], index: 8, kind: input, shape index: {}]
  %s9 = inlined_call_operand.vmem [shape: bf16[4,252], index: 9, kind: input, shape index: {}]
  %s10 = inlined_call_operand.vmem [shape: f32[4,1], index: 10, kind: input, shape index: {}]
  %s11 = inlined_call_operand.vmem [shape: f32[2,32,324], index: 11, kind: output, shape index: {}]
  %s12 = sld [smem:[#allocation0]]
  $region77: #{fcdensenet_forward.20} parent=0
    _
  %s14 = ssub.s32 1, %s12
  %s15 = scalar_select 0, %s14, %s12
  loop: start=0, step=1, limit=4
  $region2: #{fcdensenet_forward.20} parent=0 // loop_pre_header
    _
  $region3: #{fcdensenet_forward.20} parent=0 // loop_header
    %s17 = sphi 0, %s21
    %p18 = scmp.ge.s32.totalorder %s17, 4
    %s27 = sphi 0, %s29
    %s30 = sphi 0, %s27
    %s31 = sphi 0, %s30
    %s47 = sphi 0, %s31
    %s53 = sphi 0, %s55
    %s56 = sphi 0, %s53
    %s57 = sphi 0, %s56
    %s73 = sphi 0, %s57
    %s77 = sphi 0, %s77
    %s79 = sphi 0, %s77
    %s80 = sphi 0, %s79
    %s94 = sphi 0, %s80
    %s98 = sphi 0, %s98
    %s100 = sphi 0, %s98
    %s101 = sphi 0, %s100
    %s115 = sphi 0, %s101
    %s119 = sphi 0, %s119
    %s121 = sphi 0, %s119
    %s122 = sphi 0, %s121
    %s136 = sphi 0, %s122
    %s140 = sphi 0, %s140
    %s142 = sphi 0, %s140
    %s143 = sphi 0, %s142
    %s157 = sphi 0, %s143
    %s161 = sphi 0, %s161
    %s163 = sphi 0, %s161
    %s164 = sphi 0, %s163
    %s178 = sphi 0, %s164
    %s182 = sphi 0, %s182
    %s184 = sphi 0, %s182
    %s185 = sphi 0, %s184
    %s199 = sphi 0, %s185
    %s203 = sphi 0, %s203
    %s205 = sphi 0, %s203
    %s206 = sphi 0, %s205
    %s220 = sphi 0, %s206
    %s224 = sphi 0, %s224
    %s226 = sphi 0, %s224
    %s227 = sphi 0, %s226
    %s241 = sphi 0, %s227
    %s245 = sphi 0, %s245
    %s247 = sphi 0, %s245
    %s248 = sphi 0, %s247
    %s262 = sphi 0, %s248
    %s268 = sphi 0, %s270
    %s271 = sphi 0, %s268
    %s272 = sphi 0, %s271
    %s288 = sphi 0, %s272
  $region4: #{fcdensenet_forward.20} parent=0 // loop_header_branch
    %20 = sbr.rel (%p18) target = $region8
  $region5: #{fcdensenet_forward.20} parent=0 // loop_body
    %s22 = ssub.s32 %s17, 1
    %s23 = ssub.s32 %s17, 2
    %s24 = sadd.s32 %s17, 1
    %s25 = ssub.s32 %s17, %s24
    %p26 = scmp.eq.s32.totalorder %s25, 0
    %s28 = sadd.s32 %s27, 1
    %s29 = scalar_select %p26, %s27, %s28
    %p32 = pneg %p26
    %p33 = scmp.eq.s32.totalorder %s17, 1
    %p34 = por %p32, %p33
    %p35 = scmp.ne.s32.totalorder %s27, %s30
    %p36 = scmp.eq.s32.totalorder %s17, 0
    %p37 = por %p35, %p36
    %p38 = scmp.ne.s32.totalorder %s27, %s30
    %p39 = scmp.eq.s32.totalorder %s22, 1
    %p40 = por %p38, %p39
    %p41 = scmp.ne.s32.totalorder %s30, %s31
    %p42 = scmp.eq.s32.totalorder %s22, 0
    %p43 = por %p41, %p42
    %p44 = scmp.ne.s32.totalorder %s30, %s31
    %p45 = scmp.eq.s32.totalorder %s23, 1
    %p46 = por %p44, %p45
    %p48 = scmp.ne.s32.totalorder %s31, %s47
    %p49 = scmp.eq.s32.totalorder %s23, 0
    %p50 = por %p48, %p49
    %s51 = ssub.s32 %s17, %s24
    %p52 = scmp.eq.s32.totalorder %s51, 0
    %s54 = sadd.s32 %s53, 1
    %s55 = scalar_select %p52, %s53, %s54
    %p58 = pneg %p52
    %p59 = scmp.eq.s32.totalorder %s17, 1
    %p60 = por %p58, %p59
    %p61 = scmp.ne.s32.totalorder %s53, %s56
    %p62 = scmp.eq.s32.totalorder %s17, 0
    %p63 = por %p61, %p62
    %p64 = scmp.ne.s32.totalorder %s53, %s56
    %p65 = scmp.eq.s32.totalorder %s22, 1
    %p66 = por %p64, %p65
    %p67 = scmp.ne.s32.totalorder %s56, %s57
    %p68 = scmp.eq.s32.totalorder %s22, 0
    %p69 = por %p67, %p68
    %p70 = scmp.ne.s32.totalorder %s56, %s57
    %p71 = scmp.eq.s32.totalorder %s23, 1
    %p72 = por %p70, %p71
    %p74 = scmp.ne.s32.totalorder %s57, %s73
    %p75 = scmp.eq.s32.totalorder %s23, 0
    %p76 = por %p74, %p75
    %s78 = sadd.s32 %s77, 1
    %p81 = scmp.eq.s32.totalorder %s17, 1
    %p82 = scmp.ne.s32.totalorder %s77, %s79
    %p83 = scmp.eq.s32.totalorder %s17, 0
    %p84 = por %p82, %p83
    %p85 = scmp.ne.s32.totalorder %s77, %s79
    %p86 = scmp.eq.s32.totalorder %s22, 1
    %p87 = por %p85, %p86
    %p88 = scmp.ne.s32.totalorder %s79, %s80
    %p89 = scmp.eq.s32.totalorder %s22, 0
    %p90 = por %p88, %p89
    %p91 = scmp.ne.s32.totalorder %s79, %s80
    %p92 = scmp.eq.s32.totalorder %s23, 1
    %p93 = por %p91, %p92
    %p95 = scmp.ne.s32.totalorder %s80, %s94
    %p96 = scmp.eq.s32.totalorder %s23, 0
    %p97 = por %p95, %p96
    %s99 = sadd.s32 %s98, 1
    %p102 = scmp.eq.s32.totalorder %s17, 1
    %p103 = scmp.ne.s32.totalorder %s98, %s100
    %p104 = scmp.eq.s32.totalorder %s17, 0
    %p105 = por %p103, %p104
    %p106 = scmp.ne.s32.totalorder %s98, %s100
    %p107 = scmp.eq.s32.totalorder %s22, 1
    %p108 = por %p106, %p107
    %p109 = scmp.ne.s32.totalorder %s100, %s101
    %p110 = scmp.eq.s32.totalorder %s22, 0
    %p111 = por %p109, %p110
    %p112 = scmp.ne.s32.totalorder %s100, %s101
    %p113 = scmp.eq.s32.totalorder %s23, 1
    %p114 = por %p112, %p113
    %p116 = scmp.ne.s32.totalorder %s101, %s115
    %p117 = scmp.eq.s32.totalorder %s23, 0
    %p118 = por %p116, %p117
    %s120 = sadd.s32 %s119, 1
    %p123 = scmp.eq.s32.totalorder %s17, 1
    %p124 = scmp.ne.s32.totalorder %s119, %s121
    %p125 = scmp.eq.s32.totalorder %s17, 0
    %p126 = por %p124, %p125
    %p127 = scmp.ne.s32.totalorder %s119, %s121
    %p128 = scmp.eq.s32.totalorder %s22, 1
    %p129 = por %p127, %p128
    %p130 = scmp.ne.s32.totalorder %s121, %s122
    %p131 = scmp.eq.s32.totalorder %s22, 0
    %p132 = por %p130, %p131
    %p133 = scmp.ne.s32.totalorder %s121, %s122
    %p134 = scmp.eq.s32.totalorder %s23, 1
    %p135 = por %p133, %p134
    %p137 = scmp.ne.s32.totalorder %s122, %s136
    %p138 = scmp.eq.s32.totalorder %s23, 0
    %p139 = por %p137, %p138
    %s141 = sadd.s32 %s140, 1
    %p144 = scmp.eq.s32.totalorder %s17, 1
    %p145 = scmp.ne.s32.totalorder %s140, %s142
    %p146 = scmp.eq.s32.totalorder %s17, 0
    %p147 = por %p145, %p146
    %p148 = scmp.ne.s32.totalorder %s140, %s142
    %p149 = scmp.eq.s32.totalorder %s22, 1
    %p150 = por %p148, %p149
    %p151 = scmp.ne.s32.totalorder %s142, %s143
    %p152 = scmp.eq.s32.totalorder %s22, 0
    %p153 = por %p151, %p152
    %p154 = scmp.ne.s32.totalorder %s142, %s143
    %p155 = scmp.eq.s32.totalorder %s23, 1
    %p156 = por %p154, %p155
    %p158 = scmp.ne.s32.totalorder %s143, %s157
    %p159 = scmp.eq.s32.totalorder %s23, 0
    %p160 = por %p158, %p159
    %s162 = sadd.s32 %s161, 1
    %p165 = scmp.eq.s32.totalorder %s17, 1
    %p166 = scmp.ne.s32.totalorder %s161, %s163
    %p167 = scmp.eq.s32.totalorder %s17, 0
    %p168 = por %p166, %p167
    %p169 = scmp.ne.s32.totalorder %s161, %s163
    %p170 = scmp.eq.s32.totalorder %s22, 1
    %p171 = por %p169, %p170
    %p172 = scmp.ne.s32.totalorder %s163, %s164
    %p173 = scmp.eq.s32.totalorder %s22, 0
    %p174 = por %p172, %p173
    %p175 = scmp.ne.s32.totalorder %s163, %s164
    %p176 = scmp.eq.s32.totalorder %s23, 1
    %p177 = por %p175, %p176
    %p179 = scmp.ne.s32.totalorder %s164, %s178
    %p180 = scmp.eq.s32.totalorder %s23, 0
    %p181 = por %p179, %p180
    %s183 = sadd.s32 %s182, 1
    %p186 = scmp.eq.s32.totalorder %s17, 1
    %p187 = scmp.ne.s32.totalorder %s182, %s184
    %p188 = scmp.eq.s32.totalorder %s17, 0
    %p189 = por %p187, %p188
    %p190 = scmp.ne.s32.totalorder %s182, %s184
    %p191 = scmp.eq.s32.totalorder %s22, 1
    %p192 = por %p190, %p191
    %p193 = scmp.ne.s32.totalorder %s184, %s185
    %p194 = scmp.eq.s32.totalorder %s22, 0
    %p195 = por %p193, %p194
    %p196 = scmp.ne.s32.totalorder %s184, %s185
    %p197 = scmp.eq.s32.totalorder %s23, 1
    %p198 = por %p196, %p197
    %p200 = scmp.ne.s32.totalorder %s185, %s199
    %p201 = scmp.eq.s32.totalorder %s23, 0
    %p202 = por %p200, %p201
    %s204 = sadd.s32 %s203, 1
    %p207 = scmp.eq.s32.totalorder %s17, 1
    %p208 = scmp.ne.s32.totalorder %s203, %s205
    %p209 = scmp.eq.s32.totalorder %s17, 0
    %p210 = por %p208, %p209
    %p211 = scmp.ne.s32.totalorder %s203, %s205
    %p212 = scmp.eq.s32.totalorder %s22, 1
    %p213 = por %p211, %p212
    %p214 = scmp.ne.s32.totalorder %s205, %s206
    %p215 = scmp.eq.s32.totalorder %s22, 0
    %p216 = por %p214, %p215
    %p217 = scmp.ne.s32.totalorder %s205, %s206
    %p218 = scmp.eq.s32.totalorder %s23, 1
    %p219 = por %p217, %p218
    %p221 = scmp.ne.s32.totalorder %s206, %s220
    %p222 = scmp.eq.s32.totalorder %s23, 0
    %p223 = por %p221, %p222
    %s225 = sadd.s32 %s224, 1
    %p228 = scmp.eq.s32.totalorder %s17, 1
    %p229 = scmp.ne.s32.totalorder %s224, %s226
    %p230 = scmp.eq.s32.totalorder %s17, 0
    %p231 = por %p229, %p230
    %p232 = scmp.ne.s32.totalorder %s224, %s226
    %p233 = scmp.eq.s32.totalorder %s22, 1
    %p234 = por %p232, %p233
    %p235 = scmp.ne.s32.totalorder %s226, %s227
    %p236 = scmp.eq.s32.totalorder %s22, 0
    %p237 = por %p235, %p236
    %p238 = scmp.ne.s32.totalorder %s226, %s227
    %p239 = scmp.eq.s32.totalorder %s23, 1
    %p240 = por %p238, %p239
    %p242 = scmp.ne.s32.totalorder %s227, %s241
    %p243 = scmp.eq.s32.totalorder %s23, 0
    %p244 = por %p242, %p243
    %s246 = sadd.s32 %s245, 1
    %p249 = scmp.eq.s32.totalorder %s17, 1
    %p250 = scmp.ne.s32.totalorder %s245, %s247
    %p251 = scmp.eq.s32.totalorder %s17, 0
    %p252 = por %p250, %p251
    %p253 = scmp.ne.s32.totalorder %s245, %s247
    %p254 = scmp.eq.s32.totalorder %s22, 1
    %p255 = por %p253, %p254
    %p256 = scmp.ne.s32.totalorder %s247, %s248
    %p257 = scmp.eq.s32.totalorder %s22, 0
    %p258 = por %p256, %p257
    %p259 = scmp.ne.s32.totalorder %s247, %s248
    %p260 = scmp.eq.s32.totalorder %s23, 1
    %p261 = por %p259, %p260
    %p263 = scmp.ne.s32.totalorder %s248, %s262
    %p264 = scmp.eq.s32.totalorder %s23, 0
    %p265 = por %p263, %p264
    %s266 = ssub.s32 %s17, %s24
    %p267 = scmp.eq.s32.totalorder %s266, 0
    %s269 = sadd.s32 %s268, 1
    %s270 = scalar_select %p267, %s268, %s269
    %p273 = pneg %p267
    %p274 = scmp.eq.s32.totalorder %s17, 1
    %p275 = por %p273, %p274
    %p276 = scmp.ne.s32.totalorder %s268, %s271
    %p277 = scmp.eq.s32.totalorder %s17, 0
    %p278 = por %p276, %p277
    %p279 = scmp.ne.s32.totalorder %s268, %s271
    %p280 = scmp.eq.s32.totalorder %s22, 1
    %p281 = por %p279, %p280
    %p282 = scmp.ne.s32.totalorder %s271, %s272
    %p283 = scmp.eq.s32.totalorder %s22, 0
    %p284 = por %p282, %p283
    %p285 = scmp.ne.s32.totalorder %s271, %s272
    %p286 = scmp.eq.s32.totalorder %s23, 1
    %p287 = por %p285, %p286
    %p289 = scmp.ne.s32.totalorder %s272, %s288
    %p290 = scmp.eq.s32.totalorder %s23, 0
    %p291 = por %p289, %p290
    %p292 = scmp.le.s32.totalorder 1, %s17
    %p293 = scmp.lt.s32.totalorder %s17, 3
    %p294 = pnand %p292, %p293
    %p295 = pneg %p294
    // Predicated region
    $region9: #{fcdensenet_forward.20} parent=5 // pred_check
      _
    $region10: #{fcdensenet_forward.20} parent=5 // pred_check_branch
      %297 = sbr.rel (%p294) target = $region12
    $region11: #{fcdensenet_forward.20} parent=5 // pred_region
      %s298 = ssub.s32 %s17, 1
      // Predicated region
      $region13: #{fcdensenet_forward.20} parent=11 // pred_check
        %p299 = pneg %p90
      $region14: #{fcdensenet_forward.20} parent=11 // pred_check_branch
        %301 = sbr.rel (%p299) target = $region16
      $region15: #{fcdensenet_forward.20} parent=11 // pred_region
        _
      $region16: #{fcdensenet_forward.20} parent=11 // pred_fallthru
        _
      // Predicated region
      $region17: #{fcdensenet_forward.20} parent=11 // pred_check
        %p302 = pneg %p111
      $region18: #{fcdensenet_forward.20} parent=11 // pred_check_branch
        %304 = sbr.rel (%p302) target = $region20
      $region19: #{fcdensenet_forward.20} parent=11 // pred_region
        _
      $region20: #{fcdensenet_forward.20} parent=11 // pred_fallthru
        _
      // Predicated region
      $region21: #{fcdensenet_forward.20} parent=11 // pred_check
        %p305 = pneg %p132
      $region22: #{fcdensenet_forward.20} parent=11 // pred_check_branch
        %307 = sbr.rel (%p305) target = $region24
      $region23: #{fcdensenet_forward.20} parent=11 // pred_region
        _
      $region24: #{fcdensenet_forward.20} parent=11 // pred_fallthru
        _
      // Predicated region
      $region25: #{fcdensenet_forward.20} parent=11 // pred_check
        %p308 = pneg %p153
      $region26: #{fcdensenet_forward.20} parent=11 // pred_check_branch
        %310 = sbr.rel (%p308) target = $region28
      $region27: #{fcdensenet_forward.20} parent=11 // pred_region
        _
      $region28: #{fcdensenet_forward.20} parent=11 // pred_fallthru
        _
      // Predicated region
      $region29: #{fcdensenet_forward.20} parent=11 // pred_check
        %p311 = pneg %p174
      $region30: #{fcdensenet_forward.20} parent=11 // pred_check_branch
        %313 = sbr.rel (%p311) target = $region32
      $region31: #{fcdensenet_forward.20} parent=11 // pred_region
        _
      $region32: #{fcdensenet_forward.20} parent=11 // pred_fallthru
        _
      // Predicated region
      $region33: #{fcdensenet_forward.20} parent=11 // pred_check
        %p314 = pneg %p195
      $region34: #{fcdensenet_forward.20} parent=11 // pred_check_branch
        %316 = sbr.rel (%p314) target = $region36
      $region35: #{fcdensenet_forward.20} parent=11 // pred_region
        _
      $region36: #{fcdensenet_forward.20} parent=11 // pred_fallthru
        _
      // Predicated region
      $region37: #{fcdensenet_forward.20} parent=11 // pred_check
        %p317 = pneg %p216
      $region38: #{fcdensenet_forward.20} parent=11 // pred_check_branch
        %319 = sbr.rel (%p317) target = $region40
      $region39: #{fcdensenet_forward.20} parent=11 // pred_region
        _
      $region40: #{fcdensenet_forward.20} parent=11 // pred_fallthru
        _
      // Predicated region
      $region41: #{fcdensenet_forward.20} parent=11 // pred_check
        %p320 = pneg %p237
      $region42: #{fcdensenet_forward.20} parent=11 // pred_check_branch
        %322 = sbr.rel (%p320) target = $region44
      $region43: #{fcdensenet_forward.20} parent=11 // pred_region
        _
      $region44: #{fcdensenet_forward.20} parent=11 // pred_fallthru
        _
      // Predicated region
      $region45: #{fcdensenet_forward.20} parent=11 // pred_check
        %p323 = pneg %p258
      $region46: #{fcdensenet_forward.20} parent=11 // pred_check_branch
        %325 = sbr.rel (%p323) target = $region48
      $region47: #{fcdensenet_forward.20} parent=11 // pred_region
        _
      $region48: #{fcdensenet_forward.20} parent=11 // pred_fallthru
        _
    $region12: #{fcdensenet_forward.20} parent=5 // pred_fallthru
      _
    %p326 = scmp.lt.s32.totalorder %s17, 2
    // Predicated region
    $region49: #{fcdensenet_forward.20} parent=5 // pred_check
      %p327 = pneg %p326
    $region50: #{fcdensenet_forward.20} parent=5 // pred_check_branch
      %329 = sbr.rel (%p327) target = $region52
    $region51: #{fcdensenet_forward.20} parent=5 // pred_region
      // Predicated region
      $region53: #{fcdensenet_forward.20} parent=51 // pred_check
        %p330 = pneg %p37
      $region54: #{fcdensenet_forward.20} parent=51 // pred_check_branch
        %332 = sbr.rel (%p330) target = $region56
      $region55: #{fcdensenet_forward.20} parent=51 // pred_region
        %p333 = scmp.lt.s32.totalorder %s17, 1
        %s334 = scalar_select %p333, %s17, 1
        %s335 = smul.addr %s334, 3
        %s336 = smul.addr %s335, 8
        %s337 = scalar_lea.vmem %s0, %s336
      $region56: #{fcdensenet_forward.20} parent=51 // pred_fallthru
        _
      // Predicated region
      $region57: #{fcdensenet_forward.20} parent=51 // pred_check
        %p338 = pneg %p63
      $region58: #{fcdensenet_forward.20} parent=51 // pred_check_branch
        %340 = sbr.rel (%p338) target = $region60
      $region59: #{fcdensenet_forward.20} parent=51 // pred_region
        %p341 = scmp.lt.s32.totalorder %s17, 1
        %s342 = scalar_select %p341, %s17, 1
        %s343 = smul.addr %s342, 6
        %s344 = smul.addr %s343, 8
        %s345 = scalar_lea.vmem %s1, %s344
      $region60: #{fcdensenet_forward.20} parent=51 // pred_fallthru
        _
    $region52: #{fcdensenet_forward.20} parent=5 // pred_fallthru
      _
    %p346 = scmp.le.s32.totalorder 1, %s17
    %p347 = scmp.lt.s32.totalorder %s17, 3
    %p348 = pnand %p346, %p347
    %p349 = pneg %p348
    // Predicated region
    $region61: #{fcdensenet_forward.20} parent=5 // pred_check
      _
    $region62: #{fcdensenet_forward.20} parent=5 // pred_check_branch
      %351 = sbr.rel (%p348) target = $region64
    $region63: #{fcdensenet_forward.20} parent=5 // pred_region
      %s352 = ssub.s32 %s17, 1
      %p353 = scmp.lt.s32.totalorder %s22, 1
      %s354 = scalar_select %p353, %s22, 1
      %s355 = smul.addr %s354, 3
      %s356 = smul.addr %s355, 8
      %s357 = scalar_lea.vmem %s0, %s356
      %p358 = pneg %p43
      %p359 = pneg %p40
      %p360 = scmp.lt.s32.totalorder %s22, 1
      %s361 = scalar_select %p360, %s22, 1
      %s362 = smul.addr %s361, 6
      %s363 = smul.addr %s362, 8
      %s364 = scalar_lea.vmem %s1, %s363
      %p365 = pneg %p69
      %p366 = pneg %p66
      %p367 = pneg %p90
      %p368 = pneg %p87
      %p369 = pneg %p111
      %p370 = pneg %p108
      %p371 = pneg %p132
      %p372 = pneg %p129
      %p373 = pneg %p153
      %p374 = pneg %p150
      %p375 = pneg %p174
      %p376 = pneg %p171
      %p377 = pneg %p195
      %p378 = pneg %p192
      %p379 = pneg %p216
      %p380 = pneg %p213
      %p381 = pneg %p237
      %p382 = pneg %p234
      %p383 = pneg %p258
      %p384 = pneg %p255
      %p385 = pneg %p284
      %p386 = pneg %p281
      %p387 = scmp.lt.s32.totalorder %s22, 1
      %s388 = scalar_select %p387, %s22, 1
      %s389 = smul.addr %s388, 12
      %s390 = smul.addr %s389, 8
      %s391 = scalar_lea.vmem %s11, %s390
      %p392 = scmp.lt.s32.totalorder %s22, 1
      %s393 = scalar_select %p392, %s22, 1
      %s394 = smul.addr %s393, 3
      %s395 = smul.addr %s394, 8
      %s396 = scalar_lea.vmem %s0, %s395
      %p397 = scmp.lt.s32.totalorder %s22, 1
      %s398 = scalar_select %p397, %s22, 1
      %s399 = smul.addr %s398, 6
      %s400 = smul.addr %s399, 8
      %s401 = scalar_lea.vmem %s1, %s400
      %p402 = scmp.lt.s32.totalorder %s22, 1
      %s403 = scalar_select %p402, %s22, 1
      %s404 = smul.addr %s403, 12
      %s405 = smul.addr %s404, 8
      %s406 = scalar_lea.vmem %s11, %s405
      %v408 = vld [vmem:[%s2] sm:$0x7]
      %vm409 = vcmp.gt.f32.partialorder %v408, 0.5
      %v410 = vld [vmem:[%s396] sm:$0xff]
      %v411 = vld [vmem:[%s396 + $0x8] sm:$0xff]
      %v412 = vld [vmem:[%s396 + $0x10] sm:$0xff]
      %413 = vst [vmem:[%s406] sm:$0xff] %v410
      %414 = vst [vmem:[%s406 + $0x8] sm:$0xff] %v411
      %vm415 = vcmask 556032
      %416 = vst.msk [vmem:[%s406 + $0x10] sm:$0xff] %vm415, %v412
      %v417 = vld [vmem:[%s401] sm:$0xff]
      %v418 = vld [vmem:[%s401 + $0x8] sm:$0xff]
      %v419 = vld [vmem:[%s401 + $0x10] sm:$0xff]
      %v420 = vld [vmem:[%s401 + $0x18] sm:$0xff]
      %v421 = vld [vmem:[%s401 + $0x20] sm:$0xff]
      %v422 = vld [vmem:[%s401 + $0x28] sm:$0xff]
      %423 = vst [vmem:[%s406 + $0x18] sm:$0xff] %v417
      %424 = vst [vmem:[%s406 + $0x20] sm:$0xff] %v418
      %425 = vst.msk [vmem:[%s406 + $0x28] sm:$0xff] %vm415, %v419
      %426 = vst [vmem:[%s406 + $0x30] sm:$0xff] %v420
      %427 = vst [vmem:[%s406 + $0x38] sm:$0xff] %v421
      %428 = vst.msk [vmem:[%s406 + $0x40] sm:$0xff] %vm415, %v422
      %v429 = vld [vmem:[%s406] sm:$0xff]
      %v430 = vld [vmem:[%s406 + $0x8] sm:$0xff]
      %v431 = vld [vmem:[%s406 + $0x10] sm:$0xff]
      %v432 = vld [vmem:[%s406 + $0x18] sm:$0xff]
      %v433 = vld [vmem:[%s406 + $0x20] sm:$0xff]
      %v434 = vld [vmem:[%s406 + $0x28] sm:$0xff]
      %v435 = vld [vmem:[%s406 + $0x30] sm:$0xff]
      %v436 = vld [vmem:[%s406 + $0x38] sm:$0xff]
      %v437 = vld [vmem:[%s406 + $0x40] sm:$0xff]
      %v438 = vld [vmem:[%s3] sm:$0xff]
      %v439 = vld [vmem:[%s3 + $0x8] sm:$0xff]
      %v440 = vld [vmem:[%s3 + $0x10] sm:$0xff]
      %v441 = vld [vmem:[%s4] sm:$0xff]
      %v442 = vld [vmem:[%s4 + $0x8] sm:$0xff]
      %v443 = vld [vmem:[%s4 + $0x10] sm:$0xff]
      %445 = vset.pattern.permute.xlu0 0
      %446 = vperm.xlu0 %445, %v438
      %v447 = vpop.permute.xlu0 %446
      %450 = vset.pattern.permute.xlu0 0
      %451 = vperm.xlu0 %450, %v439
      %v452 = vpop.permute.xlu0 %451
      %455 = vset.pattern.permute.xlu0 0
      %456 = vperm.xlu0 %455, %v440
      %v457 = vpop.permute.xlu0 %456
      %v459 = vmul.f32 %v429, %v447
      %v460 = vmul.f32 %v430, %v447
      %v461 = vmul.f32 %v431, %v447
      %v462 = vmul.f32 %v432, %v452
      %v463 = vmul.f32 %v433, %v452
      %v464 = vmul.f32 %v434, %v452
      %v465 = vmul.f32 %v435, %v457
      %v466 = vmul.f32 %v436, %v457
      %v467 = vmul.f32 %v437, %v457
      %469 = vset.pattern.permute.xlu0 0
      %470 = vperm.xlu0 %469, %v441
      %v471 = vpop.permute.xlu0 %470
      %474 = vset.pattern.permute.xlu0 0
      %475 = vperm.xlu0 %474, %v442
      %v476 = vpop.permute.xlu0 %475
      %479 = vset.pattern.permute.xlu0 0
      %480 = vperm.xlu0 %479, %v443
      %v481 = vpop.permute.xlu0 %480
      %v483 = vadd.f32 %v459, %v471
      %v484 = vadd.f32 %v460, %v471
      %v485 = vadd.f32 %v461, %v471
      %v486 = vadd.f32 %v462, %v476
      %v487 = vadd.f32 %v463, %v476
      %v488 = vadd.f32 %v464, %v476
      %v489 = vadd.f32 %v465, %v481
      %v490 = vadd.f32 %v466, %v481
      %v491 = vadd.f32 %v467, %v481
      %v492 = vmax.f32 %v483, 0.0
      %v493 = vmax.f32 %v484, 0.0
      %v494 = vmax.f32 %v485, 0.0
      %v495 = vmax.f32 %v486, 0.0
      %v496 = vmax.f32 %v487, 0.0
      %v497 = vmax.f32 %v488, 0.0
      %v498 = vmax.f32 %v489, 0.0
      %v499 = vmax.f32 %v490, 0.0
      %v500 = vmax.f32 %v491, 0.0
      %v501 = vsel %vm409, 1, 0
      %v502 = vperm.slane %v501, 0
      %v503 = vperm.slane %v501, 1
      %v504 = vperm.slane %v501, 2
      %vm505 = vcmp.eq.s32.totalorder %v502, 1
      %vm506 = vcmp.eq.s32.totalorder %v503, 1
      %vm507 = vcmp.eq.s32.totalorder %v504, 1
      %v508 = vsel %vm505, %v492, 0.0
      %v509 = vsel %vm506, %v493, 0.0
      %v510 = vsel %vm507, %v494, 0.0
      %v511 = vsel %vm505, %v495, 0.0
      %v512 = vsel %vm506, %v496, 0.0
      %v513 = vsel %vm507, %v497, 0.0
      %v514 = vsel %vm505, %v498, 0.0
      %v515 = vsel %vm506, %v499, 0.0
      %v516 = vsel %vm507, %v500, 0.0
      %v517 = vpack.c.bf16 %v509, %v508
      %v518 = vpack.c.bf16 %v510, %v510
      %v519 = vpack.c.bf16 %v512, %v511
      %v520 = vpack.c.bf16 %v513, %v513
      %v521 = vpack.c.bf16 %v515, %v514
      %v522 = vpack.c.bf16 %v516, %v516
      %v529 = vunpack.c.l.b16 %v517
      %v530 = vunpack.c.h.b16 %v517
      %v531 = vunpack.c.l.b16 %v518
      %v532 = vunpack.c.l.b16 %v519
      %v533 = vunpack.c.h.b16 %v519
      %v534 = vunpack.c.l.b16 %v520
      %v535 = vunpack.c.l.b16 %v521
      %v536 = vunpack.c.h.b16 %v521
      %v537 = vunpack.c.l.b16 %v522
      %v538 = vpack.c.b16 %v532, %v529
      %v539 = vpack.c.b16 %v533, %v530
      %v540 = vpack.c.b16 %v534, %v531
      %v541 = vpack.c.b16 %v535, %v535
      %v542 = vpack.c.b16 %v536, %v536
      %v543 = vpack.c.b16 %v537, %v537
      %v547 = vpack.c.b16 %v529, %v529
      %v548 = vpack.c.b16 %v530, %v530
      %v549 = vpack.c.b16 %v531, %v531
      %v550 = vpack.c.b16 %v535, %v532
      %v551 = vpack.c.b16 %v536, %v533
      %v552 = vpack.c.b16 %v537, %v534
      %553 = vrot.lane.b32.xlu0 %v547, 127
      %v554 = vpop.permute.xlu0 %553
      %555 = vrot.lane.b32.xlu0 %v548, 127
      %v556 = vpop.permute.xlu0 %555
      %557 = vrot.lane.b32.xlu0 %v549, 127
      %v558 = vpop.permute.xlu0 %557
      %559 = vrot.lane.b32.xlu0 %v550, 127
      %v560 = vpop.permute.xlu0 %559
      %561 = vrot.lane.b32.xlu0 %v551, 127
      %v562 = vpop.permute.xlu0 %561
      %563 = vrot.lane.b32.xlu0 %v552, 127
      %v564 = vpop.permute.xlu0 %563
      %vm565 = vcmask 1039360
      %v566 = vsel %vm565, %v554, %v556
      %v567 = vsel %vm565, %v556, %v558
      %v568 = vsel %vm565, %v560, %v562
      %v569 = vsel %vm565, %v562, %v564
      %573 = vrot.lane.b32.xlu0 %v538, 126
      %v574 = vpop.permute.xlu0 %573
      %575 = vrot.lane.b32.xlu0 %v539, 126
      %v576 = vpop.permute.xlu0 %575
      %577 = vrot.lane.b32.xlu0 %v540, 126
      %v578 = vpop.permute.xlu0 %577
      %579 = vrot.lane.b32.xlu0 %v541, 126
      %v580 = vpop.permute.xlu0 %579
      %581 = vrot.lane.b32.xlu0 %v542, 126
      %v582 = vpop.permute.xlu0 %581
      %583 = vrot.lane.b32.xlu0 %v543, 126
      %v584 = vpop.permute.xlu0 %583
      %vm585 = vcmask 1031168
      %v586 = vsel %vm585, %v574, %v576
      %v587 = vsel %vm585, %v576, %v578
      %v588 = vsel %vm585, %v580, %v582
      %v589 = vsel %vm585, %v582, %v584
      %593 = vrot.lane.b32.xlu0 %v547, 110
      %v594 = vpop.permute.xlu0 %593
      %595 = vrot.lane.b32.xlu0 %v548, 110
      %v596 = vpop.permute.xlu0 %595
      %597 = vrot.lane.b32.xlu0 %v549, 110
      %v598 = vpop.permute.xlu0 %597
      %599 = vrot.lane.b32.xlu0 %v550, 110
      %v600 = vpop.permute.xlu0 %599
      %601 = vrot.lane.b32.xlu0 %v551, 110
      %v602 = vpop.permute.xlu0 %601
      %603 = vrot.lane.b32.xlu0 %v552, 110
      %v604 = vpop.permute.xlu0 %603
      %vm605 = vcmask 900096
      %v606 = vsel %vm605, %v594, %v596
      %v607 = vsel %vm605, %v596, %v598
      %v608 = vsel %vm605, %v600, %v602
      %v609 = vsel %vm605, %v602, %v604
      %613 = vrot.lane.b32.xlu0 %v538, 109
      %v614 = vpop.permute.xlu0 %613
      %615 = vrot.lane.b32.xlu0 %v539, 109
      %v616 = vpop.permute.xlu0 %615
      %617 = vrot.lane.b32.xlu0 %v540, 109
      %v618 = vpop.permute.xlu0 %617
      %619 = vrot.lane.b32.xlu0 %v541, 109
      %v620 = vpop.permute.xlu0 %619
      %621 = vrot.lane.b32.xlu0 %v542, 109
      %v622 = vpop.permute.xlu0 %621
      %623 = vrot.lane.b32.xlu0 %v543, 109
      %v624 = vpop.permute.xlu0 %623
      %vm625 = vcmask 891904
      %v626 = vsel %vm625, %v614, %v616
      %v627 = vsel %vm625, %v616, %v618
      %v628 = vsel %vm625, %v620, %v622
      %v629 = vsel %vm625, %v622, %v624
      %633 = vrot.lane.b32.xlu0 %v547, 108
      %v634 = vpop.permute.xlu0 %633
      %635 = vrot.lane.b32.xlu0 %v548, 108
      %v636 = vpop.permute.xlu0 %635
      %637 = vrot.lane.b32.xlu0 %v549, 108
      %v638 = vpop.permute.xlu0 %637
      %639 = vrot.lane.b32.xlu0 %v550, 108
      %v640 = vpop.permute.xlu0 %639
      %641 = vrot.lane.b32.xlu0 %v551, 108
      %v642 = vpop.permute.xlu0 %641
      %643 = vrot.lane.b32.xlu0 %v552, 108
      %v644 = vpop.permute.xlu0 %643
      %vm645 = vcmask 883712
      %v646 = vsel %vm645, %v634, %v636
      %v647 = vsel %vm645, %v636, %v638
      %v648 = vsel %vm645, %v640, %v642
      %v649 = vsel %vm645, %v642, %v644
      %653 = vrot.lane.b32.xlu0 %v538, 92
      %v654 = vpop.permute.xlu0 %653
      %655 = vrot.lane.b32.xlu0 %v539, 92
      %v656 = vpop.permute.xlu0 %655
      %657 = vrot.lane.b32.xlu0 %v540, 92
      %v658 = vpop.permute.xlu0 %657
      %659 = vrot.lane.b32.xlu0 %v541, 92
      %v660 = vpop.permute.xlu0 %659
      %661 = vrot.lane.b32.xlu0 %v542, 92
      %v662 = vpop.permute.xlu0 %661
      %663 = vrot.lane.b32.xlu0 %v543, 92
      %v664 = vpop.permute.xlu0 %663
      %vm665 = vcmask 752640
      %v666 = vsel %vm665, %v654, %v656
      %v667 = vsel %vm665, %v656, %v658
      %v668 = vsel %vm665, %v660, %v662
      %v669 = vsel %vm665, %v662, %v664
      %673 = vrot.lane.b32.xlu0 %v547, 91
      %v674 = vpop.permute.xlu0 %673
      %675 = vrot.lane.b32.xlu0 %v548, 91
      %v676 = vpop.permute.xlu0 %675
      %677 = vrot.lane.b32.xlu0 %v549, 91
      %v678 = vpop.permute.xlu0 %677
      %679 = vrot.lane.b32.xlu0 %v550, 91
      %v680 = vpop.permute.xlu0 %679
      %681 = vrot.lane.b32.xlu0 %v551, 91
      %v682 = vpop.permute.xlu0 %681
      %683 = vrot.lane.b32.xlu0 %v552, 91
      %v684 = vpop.permute.xlu0 %683
      %vm685 = vcmask 744448
      %v686 = vsel %vm685, %v674, %v676
      %v687 = vsel %vm685, %v676, %v678
      %v688 = vsel %vm685, %v680, %v682
      %v689 = vsel %vm685, %v682, %v684
      %693 = vrot.lane.b32.xlu0 %v538, 90
      %v694 = vpop.permute.xlu0 %693
      %695 = vrot.lane.b32.xlu0 %v539, 90
      %v696 = vpop.permute.xlu0 %695
      %697 = vrot.lane.b32.xlu0 %v540, 90
      %v698 = vpop.permute.xlu0 %697
      %699 = vrot.lane.b32.xlu0 %v541, 90
      %v700 = vpop.permute.xlu0 %699
      %701 = vrot.lane.b32.xlu0 %v542, 90
      %v702 = vpop.permute.xlu0 %701
      %703 = vrot.lane.b32.xlu0 %v543, 90
      %v704 = vpop.permute.xlu0 %703
      %vm705 = vcmask 736256
      %v706 = vsel %vm705, %v694, %v696
      %v707 = vsel %vm705, %v696, %v698
      %v708 = vsel %vm705, %v700, %v702
      %v709 = vsel %vm705, %v702, %v704
      %vm713 = vcmask 1043456
      %v716 = vsel %vm713, %v541, %v566
      %v720 = vsel %vm713, %v542, %v567
      %v724 = vsel %vm713, %v543, %v558
      %v728 = vsel %vm713, %v588, %v606
      %v732 = vsel %vm713, %v589, %v607
      %v736 = vsel %vm713, %v584, %v598
      %v740 = vsel %vm713, %v628, %v646
      %v744 = vsel %vm713, %v629, %v647
      %v748 = vsel %vm713, %v624, %v638
      %v752 = vsel %vm713, %v668, %v686
      %v756 = vsel %vm713, %v669, %v687
      %v760 = vsel %vm713, %v664, %v678
      %v762 = vld [vmem:[%s5] sm:$0xf]
      %v763 = vld [vmem:[%s6] sm:$0xf]
      %765 = vset.pattern.permute.xlu0 0
      %766 = vperm.xlu0 %765, %v763
      %v767 = vpop.permute.xlu0 %766
      %770 = vst [vmem:[#allocation1] ss:$4 sm:$0xff] %v762
      %v771 = vld.sshfl [vmem:[#allocation1] sm:$0xff pattern:$0x73625140]
      %v772 = vld.sshfl [vmem:[#allocation1 + $0x8] sm:$0xff pattern:$0x73625140]
      %vm774 = vcmask 719872
      %v775 = vsel %vm774, %v772, 0
      %v778 = vsel %vm713, %v708, 0
      %v781 = vsel %vm713, %v709, 0
      %v784 = vsel %vm713, %v704, 0
      %786 = vmatpush.bf16.msra.mxu0 %v740
      %787 = vmatpush.bf16.msra.mxu0 %v626
      %788 = vmatpush.bf16.msra.mxu0 %v608
      %789 = vmatpush.bf16.msra.mxu0 %v728
      %790 = vmatpush.bf16.msra.mxu0 %v586
      %791 = vmatpush.bf16.msra.mxu0 %v568
      %792 = vmatpush.bf16.msra.mxu0 %v716
      %793 = vmatpush.bf16.msra.mxu0 %v538
      %794 = vmatmul.bf16.gmra.mxu0 %v771
      %v795 = vpop.f32.mrf.mxu0
      %v796 = vadd.f32 %v767, %v795
      %v797 = vpop.f32.mrf.mxu0
      %798 = vdwg.mxu0
      %799 = vmatpush.bf16.msra.mxu0 0
      %800 = vmatpush.bf16.msra.mxu0 0
      %801 = vmatpush.bf16.msra.mxu0 %v778
      %802 = vmatpush.bf16.msra.mxu0 %v706
      %803 = vmatpush.bf16.msra.mxu0 %v688
      %804 = vmatpush.bf16.msra.mxu0 %v752
      %805 = vmatpush.bf16.msra.mxu0 %v666
      %806 = vmatpush.bf16.msra.mxu0 %v648
      %807 = vmatmul.bf16.gmra.mxu0 %v775
      %v808 = vpop.f32.mrf.mxu0
      %v809 = vadd.f32 %v796, %v808
      %v810 = vpop.f32.mrf.mxu0
      %811 = vdwg.mxu0
      %812 = vmatpush.bf16.msra.mxu0 %v744
      %813 = vmatpush.bf16.msra.mxu0 %v627
      %814 = vmatpush.bf16.msra.mxu0 %v609
      %815 = vmatpush.bf16.msra.mxu0 %v732
      %816 = vmatpush.bf16.msra.mxu0 %v587
      %817 = vmatpush.bf16.msra.mxu0 %v569
      %818 = vmatpush.bf16.msra.mxu0 %v720
      %819 = vmatpush.bf16.msra.mxu0 %v539
      %820 = vmatmul.bf16.gmra.mxu0 %v771
      %v821 = vpop.f32.mrf.mxu0
      %v822 = vadd.f32 %v767, %v821
      %v823 = vpop.f32.mrf.mxu0
      %824 = vdwg.mxu0
      %825 = vmatpush.bf16.msra.mxu0 0
      %826 = vmatpush.bf16.msra.mxu0 0
      %827 = vmatpush.bf16.msra.mxu0 %v781
      %828 = vmatpush.bf16.msra.mxu0 %v707
      %829 = vmatpush.bf16.msra.mxu0 %v689
      %830 = vmatpush.bf16.msra.mxu0 %v756
      %831 = vmatpush.bf16.msra.mxu0 %v667
      %832 = vmatpush.bf16.msra.mxu0 %v649
      %833 = vmatmul.bf16.gmra.mxu0 %v775
      %v834 = vpop.f32.mrf.mxu0
      %v835 = vadd.f32 %v822, %v834
      %v836 = vpop.f32.mrf.mxu0
      %837 = vdwg.mxu0
      %838 = vmatpush.bf16.msra.mxu0 %v748
      %839 = vmatpush.bf16.msra.mxu0 %v618
      %840 = vmatpush.bf16.msra.mxu0 %v604
      %841 = vmatpush.bf16.msra.mxu0 %v736
      %842 = vmatpush.bf16.msra.mxu0 %v578
      %843 = vmatpush.bf16.msra.mxu0 %v564
      %844 = vmatpush.bf16.msra.mxu0 %v724
      %845 = vmatpush.bf16.msra.mxu0 %v540
      %846 = vmatmul.bf16.gmra.mxu0 %v771
      %v847 = vpop.f32.mrf.mxu0
      %v848 = vadd.f32 %v767, %v847
      %v849 = vpop.f32.mrf.mxu0
      %850 = vdwg.mxu0
      %851 = vmatpush.bf16.msra.mxu0 0
      %852 = vmatpush.bf16.msra.mxu0 0
      %853 = vmatpush.bf16.msra.mxu0 %v784
      %854 = vmatpush.bf16.msra.mxu0 %v698
      %855 = vmatpush.bf16.msra.mxu0 %v684
      %856 = vmatpush.bf16.msra.mxu0 %v760
      %857 = vmatpush.bf16.msra.mxu0 %v658
      %858 = vmatpush.bf16.msra.mxu0 %v644
      %859 = vmatmul.bf16.gmra.mxu0 %v775
      %v860 = vpop.f32.mrf.mxu0
      %v861 = vadd.f32 %v848, %v860
      %v862 = vpop.f32.mrf.mxu0
      %863 = vdwg.mxu0
      %867 = vrot.lane.b32.xlu0 %v809, 19
      %v868 = vpop.permute.xlu0 %867
      %869 = vrot.lane.b32.xlu0 %v835, 19
      %v870 = vpop.permute.xlu0 %869
      %871 = vrot.lane.b32.xlu0 %v861, 19
      %v872 = vpop.permute.xlu0 %871
      %vm873 = vcmask 154624
      %v874 = vsel %vm873, %v868, %v870
      %v875 = vsel %vm873, %v870, %v872
      %vm879 = vcmask 1043608
      %880 = vst.msk [vmem:[%s406 + $0x48] sm:$0xf] %vm879, %v868
      %881 = vst [vmem:[%s406 + $0x50] sm:$0xf] %v874
      %vm882 = vcmask 396288
      %883 = vst.msk [vmem:[%s406 + $0x58] sm:$0xf] %vm882, %v875
      %v884 = vld [vmem:[%s406] sm:$0xff]
      %v885 = vld [vmem:[%s406 + $0x8] sm:$0xff]
      %v886 = vld [vmem:[%s406 + $0x10] sm:$0xff]
      %v887 = vld [vmem:[%s406 + $0x18] sm:$0xff]
      %v888 = vld [vmem:[%s406 + $0x20] sm:$0xff]
      %v889 = vld [vmem:[%s406 + $0x28] sm:$0xff]
      %v890 = vld [vmem:[%s406 + $0x30] sm:$0xff]
      %v891 = vld [vmem:[%s406 + $0x38] sm:$0xff]
      %v892 = vld [vmem:[%s406 + $0x40] sm:$0xff]
      %v893 = vld [vmem:[%s406 + $0x48] sm:$0xf]
      %v894 = vld [vmem:[%s406 + $0x50] sm:$0xf]
      %v895 = vld [vmem:[%s406 + $0x58] sm:$0xf]
      %v896 = vld [vmem:[%s7] sm:$0xff]
      %v897 = vld [vmem:[%s7 + $0x8] sm:$0xff]
      %v898 = vld [vmem:[%s7 + $0x10] sm:$0xff]
      %v899 = vld [vmem:[%s7 + $0x18] sm:$0xf]
      %v900 = vld [vmem:[%s8] sm:$0xff]
      %v901 = vld [vmem:[%s8 + $0x8] sm:$0xff]
      %v902 = vld [vmem:[%s8 + $0x10] sm:$0xff]
      %v903 = vld [vmem:[%s8 + $0x18] sm:$0xf]
      %905 = vset.pattern.permute.xlu0 0
      %906 = vperm.xlu0 %905, %v896
      %v907 = vpop.permute.xlu0 %906
      %910 = vset.pattern.permute.xlu0 0
      %911 = vperm.xlu0 %910, %v897
      %v912 = vpop.permute.xlu0 %911
      %915 = vset.pattern.permute.xlu0 0
      %916 = vperm.xlu0 %915, %v898
      %v917 = vpop.permute.xlu0 %916
      %920 = vset.pattern.permute.xlu0 0
      %921 = vperm.xlu0 %920, %v899
      %v922 = vpop.permute.xlu0 %921
      %v924 = vmul.f32 %v884, %v907
      %v925 = vmul.f32 %v885, %v907
      %v926 = vmul.f32 %v886, %v907
      %v927 = vmul.f32 %v887, %v912
      %v928 = vmul.f32 %v888, %v912
      %v929 = vmul.f32 %v889, %v912
      %v930 = vmul.f32 %v890, %v917
      %v931 = vmul.f32 %v891, %v917
      %v932 = vmul.f32 %v892, %v917
      %v933 = vmul.f32 %v893, %v922
      %v934 = vmul.f32 %v894, %v922
      %v935 = vmul.f32 %v895, %v922
      %937 = vset.pattern.permute.xlu0 0
      %938 = vperm.xlu0 %937, %v900
      %v939 = vpop.permute.xlu0 %938
      %942 = vset.pattern.permute.xlu0 0
      %943 = vperm.xlu0 %942, %v901
      %v944 = vpop.permute.xlu0 %943
      %947 = vset.pattern.permute.xlu0 0
      %948 = vperm.xlu0 %947, %v902
      %v949 = vpop.permute.xlu0 %948
      %952 = vset.pattern.permute.xlu0 0
      %953 = vperm.xlu0 %952, %v903
      %v954 = vpop.permute.xlu0 %953
      %v956 = vadd.f32 %v924, %v939
      %v957 = vadd.f32 %v925, %v939
      %v958 = vadd.f32 %v926, %v939
      %v959 = vadd.f32 %v927, %v944
      %v960 = vadd.f32 %v928, %v944
      %v961 = vadd.f32 %v929, %v944
      %v962 = vadd.f32 %v930, %v949
      %v963 = vadd.f32 %v931, %v949
      %v964 = vadd.f32 %v932, %v949
      %v965 = vadd.f32 %v933, %v954
      %v966 = vadd.f32 %v934, %v954
      %v967 = vadd.f32 %v935, %v954
      %v968 = vmax.f32 %v956, 0.0
      %v969 = vmax.f32 %v957, 0.0
      %v970 = vmax.f32 %v958, 0.0
      %v971 = vmax.f32 %v959, 0.0
      %v972 = vmax.f32 %v960, 0.0
      %v973 = vmax.f32 %v961, 0.0
      %v974 = vmax.f32 %v962, 0.0
      %v975 = vmax.f32 %v963, 0.0
      %v976 = vmax.f32 %v964, 0.0
      %v977 = vmax.f32 %v965, 0.0
      %v978 = vmax.f32 %v966, 0.0
      %v979 = vmax.f32 %v967, 0.0
      %v980 = vsel %vm505, %v968, 0.0
      %v981 = vsel %vm506, %v969, 0.0
      %v982 = vsel %vm507, %v970, 0.0
      %v983 = vsel %vm505, %v971, 0.0
      %v984 = vsel %vm506, %v972, 0.0
      %v985 = vsel %vm507, %v973, 0.0
      %v986 = vsel %vm505, %v974, 0.0
      %v987 = vsel %vm506, %v975, 0.0
      %v988 = vsel %vm507, %v976, 0.0
      %v989 = vsel %vm505, %v977, 0.0
      %v990 = vsel %vm506, %v978, 0.0
      %v991 = vsel %vm507, %v979, 0.0
      %v992 = vpack.c.bf16 %v981, %v980
      %v993 = vpack.c.bf16 %v982, %v982
      %v994 = vpack.c.bf16 %v984, %v983
      %v995 = vpack.c.bf16 %v985, %v985
      %v996 = vpack.c.bf16 %v987, %v986
      %v997 = vpack.c.bf16 %v988, %v988
      %v998 = vpack.c.bf16 %v990, %v989
      %v999 = vpack.c.bf16 %v991, %v991
      %v1008 = vunpack.c.l.b16 %v992
      %v1009 = vunpack.c.h.b16 %v992
      %v1010 = vunpack.c.l.b16 %v993
      %v1011 = vunpack.c.l.b16 %v994
      %v1012 = vunpack.c.h.b16 %v994
      %v1013 = vunpack.c.l.b16 %v995
      %v1014 = vunpack.c.l.b16 %v996
      %v1015 = vunpack.c.h.b16 %v996
      %v1016 = vunpack.c.l.b16 %v997
      %v1017 = vunpack.c.l.b16 %v998
      %v1018 = vunpack.c.h.b16 %v998
      %v1019 = vunpack.c.l.b16 %v999
      %v1020 = vpack.c.b16 %v1011, %v1008
      %v1021 = vpack.c.b16 %v1012, %v1009
      %v1022 = vpack.c.b16 %v1013, %v1010
      %v1023 = vpack.c.b16 %v1017, %v1014
      %v1024 = vpack.c.b16 %v1018, %v1015
      %v1025 = vpack.c.b16 %v1019, %v1016
      %vm1029 = vcmask 1045504
      %v1030 = vrot.slane %v1020, 2
      %v1031 = vrot.slane %v1021, 2
      %v1032 = vrot.slane %v1022, 2
      %v1033 = vrot.slane %v1023, 2
      %v1034 = vsel %vm1029, %v1030, %v1033
      %v1035 = vrot.slane %v1024, 2
      %v1036 = vsel %vm1029, %v1031, %v1035
      %v1037 = vrot.slane %v1025, 2
      %v1038 = vsel %vm1029, %v1032, %v1037
      %1039 = vrot.lane.b32.xlu0 %v1030, 127
      %v1040 = vpop.permute.xlu0 %1039
      %1041 = vrot.lane.b32.xlu0 %v1031, 127
      %v1042 = vpop.permute.xlu0 %1041
      %1043 = vrot.lane.b32.xlu0 %v1032, 127
      %v1044 = vpop.permute.xlu0 %1043
      %1045 = vrot.lane.b32.xlu0 %v1034, 127
      %v1046 = vpop.permute.xlu0 %1045
      %1047 = vrot.lane.b32.xlu0 %v1036, 127
      %v1048 = vpop.permute.xlu0 %1047
      %1049 = vrot.lane.b32.xlu0 %v1038, 127
      %v1050 = vpop.permute.xlu0 %1049
      %1051 = vrot.lane.b32.xlu0 %v1033, 127
      %v1052 = vpop.permute.xlu0 %1051
      %1053 = vrot.lane.b32.xlu0 %v1035, 127
      %v1054 = vpop.permute.xlu0 %1053
      %1055 = vrot.lane.b32.xlu0 %v1037, 127
      %v1056 = vpop.permute.xlu0 %1055
      %v1057 = vsel %vm565, %v1040, %v1042
      %v1058 = vsel %vm565, %v1042, %v1044
      %v1059 = vsel %vm565, %v1046, %v1048
      %v1060 = vsel %vm565, %v1048, %v1050
      %v1061 = vsel %vm565, %v1052, %v1054
      %v1062 = vsel %vm565, %v1054, %v1056
      %v1066 = vpack.c.b16 %v1008, %v1008
      %v1067 = vpack.c.b16 %v1009, %v1009
      %v1068 = vpack.c.b16 %v1010, %v1010
      %v1069 = vpack.c.b16 %v1014, %v1011
      %v1070 = vpack.c.b16 %v1015, %v1012
      %v1071 = vpack.c.b16 %v1016, %v1013
      %v1072 = vpack.c.b16 %v1017, %v1017
      %v1073 = vpack.c.b16 %v1018, %v1018
      %v1074 = vpack.c.b16 %v1019, %v1019
      %1075 = vrot.lane.b32.xlu0 %v1066, 126
      %v1076 = vpop.permute.xlu0 %1075
      %1077 = vrot.lane.b32.xlu0 %v1067, 126
      %v1078 = vpop.permute.xlu0 %1077
      %1079 = vrot.lane.b32.xlu0 %v1068, 126
      %v1080 = vpop.permute.xlu0 %1079
      %1081 = vrot.lane.b32.xlu0 %v1069, 126
      %v1082 = vpop.permute.xlu0 %1081
      %1083 = vrot.lane.b32.xlu0 %v1070, 126
      %v1084 = vpop.permute.xlu0 %1083
      %1085 = vrot.lane.b32.xlu0 %v1071, 126
      %v1086 = vpop.permute.xlu0 %1085
      %1087 = vrot.lane.b32.xlu0 %v1072, 126
      %v1088 = vpop.permute.xlu0 %1087
      %1089 = vrot.lane.b32.xlu0 %v1073, 126
      %v1090 = vpop.permute.xlu0 %1089
      %1091 = vrot.lane.b32.xlu0 %v1074, 126
      %v1092 = vpop.permute.xlu0 %1091
      %v1093 = vsel %vm585, %v1076, %v1078
      %v1094 = vsel %vm585, %v1078, %v1080
      %v1095 = vsel %vm585, %v1082, %v1084
      %v1096 = vsel %vm585, %v1084, %v1086
      %v1097 = vsel %vm585, %v1088, %v1090
      %v1098 = vsel %vm585, %v1090, %v1092
      %vm1102 = vcmask 1041408
      %v1103 = vrot.slane %v1020, 6
      %v1104 = vrot.slane %v1021, 6
      %v1105 = vrot.slane %v1022, 6
      %v1106 = vrot.slane %v1023, 6
      %v1107 = vsel %vm1102, %v1103, %v1106
      %v1108 = vrot.slane %v1024, 6
      %v1109 = vsel %vm1102, %v1104, %v1108
      %v1110 = vrot.slane %v1025, 6
      %v1111 = vsel %vm1102, %v1105, %v1110
      %1112 = vrot.lane.b32.xlu0 %v1103, 110
      %v1113 = vpop.permute.xlu0 %1112
      %1114 = vrot.lane.b32.xlu0 %v1104, 110
      %v1115 = vpop.permute.xlu0 %1114
      %1116 = vrot.lane.b32.xlu0 %v1105, 110
      %v1117 = vpop.permute.xlu0 %1116
      %1118 = vrot.lane.b32.xlu0 %v1107, 110
      %v1119 = vpop.permute.xlu0 %1118
      %1120 = vrot.lane.b32.xlu0 %v1109, 110
      %v1121 = vpop.permute.xlu0 %1120
      %1122 = vrot.lane.b32.xlu0 %v1111, 110
      %v1123 = vpop.permute.xlu0 %1122
      %v1124 = vsel %vm605, %v1113, %v1115
      %v1125 = vsel %vm605, %v1115, %v1117
      %v1126 = vsel %vm605, %v1119, %v1121
      %v1127 = vsel %vm605, %v1121, %v1123
      %1131 = vrot.lane.b32.xlu0 %v1020, 109
      %v1132 = vpop.permute.xlu0 %1131
      %1133 = vrot.lane.b32.xlu0 %v1021, 109
      %v1134 = vpop.permute.xlu0 %1133
      %1135 = vrot.lane.b32.xlu0 %v1022, 109
      %v1136 = vpop.permute.xlu0 %1135
      %1137 = vrot.lane.b32.xlu0 %v1023, 109
      %v1138 = vpop.permute.xlu0 %1137
      %1139 = vrot.lane.b32.xlu0 %v1024, 109
      %v1140 = vpop.permute.xlu0 %1139
      %1141 = vrot.lane.b32.xlu0 %v1025, 109
      %v1142 = vpop.permute.xlu0 %1141
      %v1143 = vsel %vm625, %v1132, %v1134
      %v1144 = vsel %vm625, %v1134, %v1136
      %v1145 = vsel %vm625, %v1138, %v1140
      %v1146 = vsel %vm625, %v1140, %v1142
      %1150 = vrot.lane.b32.xlu0 %v1030, 108
      %v1151 = vpop.permute.xlu0 %1150
      %1152 = vrot.lane.b32.xlu0 %v1031, 108
      %v1153 = vpop.permute.xlu0 %1152
      %1154 = vrot.lane.b32.xlu0 %v1032, 108
      %v1155 = vpop.permute.xlu0 %1154
      %1156 = vrot.lane.b32.xlu0 %v1034, 108
      %v1157 = vpop.permute.xlu0 %1156
      %1158 = vrot.lane.b32.xlu0 %v1036, 108
      %v1159 = vpop.permute.xlu0 %1158
      %1160 = vrot.lane.b32.xlu0 %v1038, 108
      %v1161 = vpop.permute.xlu0 %1160
      %1162 = vrot.lane.b32.xlu0 %v1033, 108
      %v1163 = vpop.permute.xlu0 %1162
      %1164 = vrot.lane.b32.xlu0 %v1035, 108
      %v1165 = vpop.permute.xlu0 %1164
      %1166 = vrot.lane.b32.xlu0 %v1037, 108
      %v1167 = vpop.permute.xlu0 %1166
      %v1168 = vsel %vm645, %v1151, %v1153
      %v1169 = vsel %vm645, %v1153, %v1155
      %v1170 = vsel %vm645, %v1157, %v1159
      %v1171 = vsel %vm645, %v1159, %v1161
      %v1172 = vsel %vm645, %v1163, %v1165
      %v1173 = vsel %vm645, %v1165, %v1167
      %1177 = vrot.lane.b32.xlu0 %v1066, 92
      %v1178 = vpop.permute.xlu0 %1177
      %1179 = vrot.lane.b32.xlu0 %v1067, 92
      %v1180 = vpop.permute.xlu0 %1179
      %1181 = vrot.lane.b32.xlu0 %v1068, 92
      %v1182 = vpop.permute.xlu0 %1181
      %1183 = vrot.lane.b32.xlu0 %v1069, 92
      %v1184 = vpop.permute.xlu0 %1183
      %1185 = vrot.lane.b32.xlu0 %v1070, 92
      %v1186 = vpop.permute.xlu0 %1185
      %1187 = vrot.lane.b32.xlu0 %v1071, 92
      %v1188 = vpop.permute.xlu0 %1187
      %1189 = vrot.lane.b32.xlu0 %v1072, 92
      %v1190 = vpop.permute.xlu0 %1189
      %1191 = vrot.lane.b32.xlu0 %v1073, 92
      %v1192 = vpop.permute.xlu0 %1191
      %1193 = vrot.lane.b32.xlu0 %v1074, 92
      %v1194 = vpop.permute.xlu0 %1193
      %v1195 = vsel %vm665, %v1178, %v1180
      %v1196 = vsel %vm665, %v1180, %v1182
      %v1197 = vsel %vm665, %v1184, %v1186
      %v1198 = vsel %vm665, %v1186, %v1188
      %v1199 = vsel %vm665, %v1190, %v1192
      %v1200 = vsel %vm665, %v1192, %v1194
      %1204 = vrot.lane.b32.xlu0 %v1103, 91
      %v1205 = vpop.permute.xlu0 %1204
      %1206 = vrot.lane.b32.xlu0 %v1104, 91
      %v1207 = vpop.permute.xlu0 %1206
      %1208 = vrot.lane.b32.xlu0 %v1105, 91
      %v1209 = vpop.permute.xlu0 %1208
      %1210 = vrot.lane.b32.xlu0 %v1107, 91
      %v1211 = vpop.permute.xlu0 %1210
      %1212 = vrot.lane.b32.xlu0 %v1109, 91
      %v1213 = vpop.permute.xlu0 %1212
      %1214 = vrot.lane.b32.xlu0 %v1111, 91
      %v1215 = vpop.permute.xlu0 %1214
      %v1216 = vsel %vm685, %v1205, %v1207
      %v1217 = vsel %vm685, %v1207, %v1209
      %v1218 = vsel %vm685, %v1211, %v1213
      %v1219 = vsel %vm685, %v1213, %v1215
      %1223 = vrot.lane.b32.xlu0 %v1020, 90
      %v1224 = vpop.permute.xlu0 %1223
      %1225 = vrot.lane.b32.xlu0 %v1021, 90
      %v1226 = vpop.permute.xlu0 %1225
      %1227 = vrot.lane.b32.xlu0 %v1022, 90
      %v1228 = vpop.permute.xlu0 %1227
      %1229 = vrot.lane.b32.xlu0 %v1023, 90
      %v1230 = vpop.permute.xlu0 %1229
      %1231 = vrot.lane.b32.xlu0 %v1024, 90
      %v1232 = vpop.permute.xlu0 %1231
      %1233 = vrot.lane.b32.xlu0 %v1025, 90
      %v1234 = vpop.permute.xlu0 %1233
      %v1235 = vsel %vm705, %v1224, %v1226
      %v1236 = vsel %vm705, %v1226, %v1228
      %v1237 = vsel %vm705, %v1230, %v1232
      %v1238 = vsel %vm705, %v1232, %v1234
      %vm1242 = vcmask 1045504
      %v1245 = vsel %vm1242, %v1023, %v1057
      %v1249 = vsel %vm1242, %v1024, %v1058
      %v1253 = vsel %vm1242, %v1025, %v1044
      %v1257 = vsel %vm713, %v1061, %v1093
      %v1261 = vsel %vm713, %v1062, %v1094
      %v1265 = vsel %vm713, %v1056, %v1080
      %vm1267 = vcmask 1041408
      %v1270 = vsel %vm1267, %v1097, %v1124
      %v1274 = vsel %vm1267, %v1098, %v1125
      %v1278 = vsel %vm1267, %v1092, %v1117
      %v1282 = vsel %vm1242, %v1145, %v1168
      %v1286 = vsel %vm1242, %v1146, %v1169
      %v1290 = vsel %vm1242, %v1142, %v1155
      %v1294 = vsel %vm713, %v1172, %v1195
      %v1298 = vsel %vm713, %v1173, %v1196
      %v1302 = vsel %vm713, %v1167, %v1182
      %v1306 = vsel %vm1267, %v1199, %v1216
      %v1310 = vsel %vm1267, %v1200, %v1217
      %v1314 = vsel %vm1267, %v1194, %v1209
      %v1316 = vld [vmem:[%s9] sm:$0xf]
      %v1317 = vld [vmem:[%s10] sm:$0xf]
      %1319 = vset.pattern.permute.xlu0 0
      %1320 = vperm.xlu0 %1319, %v1317
      %v1321 = vpop.permute.xlu0 %1320
      %1324 = vst [vmem:[#allocation1] ss:$4 sm:$0xff] %v1316
      %v1325 = vld.sshfl [vmem:[#allocation1] sm:$0xff pattern:$0x73625140]
      %v1326 = vld.sshfl [vmem:[#allocation1 + $0x8] sm:$0xff pattern:$0x73625140]
      %vm1328 = vcmask 1014784
      %v1329 = vsel %vm1328, %v1326, 0
      %v1332 = vsel %vm1242, %v1237, 0
      %v1335 = vsel %vm1242, %v1238, 0
      %v1338 = vsel %vm1242, %v1234, 0
      %1340 = vmatpush.bf16.msra.mxu0 %v1143
      %1341 = vmatpush.bf16.msra.mxu0 %v1126
      %1342 = vmatpush.bf16.msra.mxu0 %v1270
      %1343 = vmatpush.bf16.msra.mxu0 %v1095
      %1344 = vmatpush.bf16.msra.mxu0 %v1257
      %1345 = vmatpush.bf16.msra.mxu0 %v1059
      %1346 = vmatpush.bf16.msra.mxu0 %v1245
      %1347 = vmatpush.bf16.msra.mxu0 %v1020
      %1348 = vmatmul.bf16.gmra.mxu0 %v1325
      %v1349 = vpop.f32.mrf.mxu0
      %v1350 = vadd.f32 %v1321, %v1349
      %v1351 = vpop.f32.mrf.mxu0
      %1352 = vdwg.mxu0
      %1353 = vmatpush.bf16.msra.mxu0 %v1332
      %1354 = vmatpush.bf16.msra.mxu0 %v1235
      %1355 = vmatpush.bf16.msra.mxu0 %v1218
      %1356 = vmatpush.bf16.msra.mxu0 %v1306
      %1357 = vmatpush.bf16.msra.mxu0 %v1197
      %1358 = vmatpush.bf16.msra.mxu0 %v1294
      %1359 = vmatpush.bf16.msra.mxu0 %v1170
      %1360 = vmatpush.bf16.msra.mxu0 %v1282
      %1361 = vmatmul.bf16.gmra.mxu0 %v1329
      %v1362 = vpop.f32.mrf.mxu0
      %v1363 = vadd.f32 %v1350, %v1362
      %v1364 = vpop.f32.mrf.mxu0
      %1365 = vdwg.mxu0
      %1366 = vmatpush.bf16.msra.mxu0 %v1144
      %1367 = vmatpush.bf16.msra.mxu0 %v1127
      %1368 = vmatpush.bf16.msra.mxu0 %v1274
      %1369 = vmatpush.bf16.msra.mxu0 %v1096
      %1370 = vmatpush.bf16.msra.mxu0 %v1261
      %1371 = vmatpush.bf16.msra.mxu0 %v1060
      %1372 = vmatpush.bf16.msra.mxu0 %v1249
      %1373 = vmatpush.bf16.msra.mxu0 %v1021
      %1374 = vmatmul.bf16.gmra.mxu0 %v1325
      %v1375 = vpop.f32.mrf.mxu0
      %v1376 = vadd.f32 %v1321, %v1375
      %v1377 = vpop.f32.mrf.mxu0
      %1378 = vdwg.mxu0
      %1379 = vmatpush.bf16.msra.mxu0 %v1335
      %1380 = vmatpush.bf16.msra.mxu0 %v1236
      %1381 = vmatpush.bf16.msra.mxu0 %v1219
      %1382 = vmatpush.bf16.msra.mxu0 %v1310
      %1383 = vmatpush.bf16.msra.mxu0 %v1198
      %1384 = vmatpush.bf16.msra.mxu0 %v1298
      %1385 = vmatpush.bf16.msra.mxu0 %v1171
      %1386 = vmatpush.bf16.msra.mxu0 %v1286
      %1387 = vmatmul.bf16.gmra.mxu0 %v1329
      %v1388 = vpop.f32.mrf.mxu0
      %v1389 = vadd.f32 %v1376, %v1388
      %v1390 = vpop.f32.mrf.mxu0
      %1391 = vdwg.mxu0
      %1392 = vmatpush.bf16.msra.mxu0 %v1136
      %1393 = vmatpush.bf16.msra.mxu0 %v1123
      %1394 = vmatpush.bf16.msra.mxu0 %v1278
      %1395 = vmatpush.bf16.msra.mxu0 %v1086
      %1396 = vmatpush.bf16.msra.mxu0 %v1265
      %1397 = vmatpush.bf16.msra.mxu0 %v1050
      %1398 = vmatpush.bf16.msra.mxu0 %v1253
      %1399 = vmatpush.bf16.msra.mxu0 %v1022
      %1400 = vmatmul.bf16.gmra.mxu0 %v1325
      %v1401 = vpop.f32.mrf.mxu0
      %v1402 = vadd.f32 %v1321, %v1401
      %v1403 = vpop.f32.mrf.mxu0
      %1404 = vdwg.mxu0
      %1405 = vmatpush.bf16.msra.mxu0 %v1338
      %1406 = vmatpush.bf16.msra.mxu0 %v1228
      %1407 = vmatpush.bf16.msra.mxu0 %v1215
      %1408 = vmatpush.bf16.msra.mxu0 %v1314
      %1409 = vmatpush.bf16.msra.mxu0 %v1188
      %1410 = vmatpush.bf16.msra.mxu0 %v1302
      %1411 = vmatpush.bf16.msra.mxu0 %v1161
      %1412 = vmatpush.bf16.msra.mxu0 %v1290
      %1413 = vmatmul.bf16.gmra.mxu0 %v1329
      %v1414 = vpop.f32.mrf.mxu0
      %v1415 = vadd.f32 %v1402, %v1414
      %v1416 = vpop.f32.mrf.mxu0
      %1417 = vdwg.mxu0
      %v1421 = vrot.slane %v1363, 4
      %v1422 = vrot.slane %v1389, 4
      %v1423 = vrot.slane %v1415, 4
      %1424 = vrot.lane.b32.xlu0 %v1421, 19
      %v1425 = vpop.permute.xlu0 %1424
      %1426 = vrot.lane.b32.xlu0 %v1422, 19
      %v1427 = vpop.permute.xlu0 %1426
      %1428 = vrot.lane.b32.xlu0 %v1423, 19
      %v1429 = vpop.permute.xlu0 %1428
      %v1430 = vsel %vm873, %v1425, %v1427
      %v1431 = vsel %vm873, %v1427, %v1429
      %vm1435 = vcmask 1047708
      %1436 = vst.msk [vmem:[%s406 + $0x48] sm:$0xf0] %vm1435, %v1425
      %1437 = vst [vmem:[%s406 + $0x50] sm:$0xf0] %v1430
      %vm1438 = vcmask 400388
      %1439 = vst.msk [vmem:[%s406 + $0x58] sm:$0xf0] %vm1438, %v1431
      %p1440 = scmp.lt.s32.totalorder %s22, 1
      %s1441 = scalar_select %p1440, %s22, 1
      %s1442 = smul.addr %s1441, 12
      %s1443 = smul.addr %s1442, 8
      %s1444 = scalar_lea.vmem %s11, %s1443
      // Predicated region
      $region65: #{fcdensenet_forward.20} parent=63 // pred_check
        %p1445 = pneg %p281
      $region66: #{fcdensenet_forward.20} parent=63 // pred_check_branch
        %1447 = sbr.rel (%p1445) target = $region68
      $region67: #{fcdensenet_forward.20} parent=63 // pred_region
        _
      $region68: #{fcdensenet_forward.20} parent=63 // pred_fallthru
        _
    $region64: #{fcdensenet_forward.20} parent=5 // pred_fallthru
      _
    %p1448 = scmp.le.s32.totalorder 2, %s17
    // Predicated region
    $region69: #{fcdensenet_forward.20} parent=5 // pred_check
      %p1449 = pneg %p1448
    $region70: #{fcdensenet_forward.20} parent=5 // pred_check_branch
      %1451 = sbr.rel (%p1449) target = $region72
    $region71: #{fcdensenet_forward.20} parent=5 // pred_region
      %s1452 = ssub.s32 %s17, 2
      // Predicated region
      $region73: #{fcdensenet_forward.20} parent=71 // pred_check
        %p1453 = pneg %p287
      $region74: #{fcdensenet_forward.20} parent=71 // pred_check_branch
        %1455 = sbr.rel (%p1453) target = $region76
      $region75: #{fcdensenet_forward.20} parent=71 // pred_region
        %p1456 = scmp.lt.s32.totalorder %s23, 1
        %s1457 = scalar_select %p1456, %s23, 1
        %s1458 = smul.addr %s1457, 12
        %s1459 = smul.addr %s1458, 8
        %s1460 = scalar_lea.vmem %s11, %s1459
      $region76: #{fcdensenet_forward.20} parent=71 // pred_fallthru
        _
    $region72: #{fcdensenet_forward.20} parent=5 // pred_fallthru
      _
  $region6: #{fcdensenet_forward.20} parent=0 // loop_footer
    %s21 = sadd.s32 1, %s17
  $region7: #{fcdensenet_forward.20} parent=0 // loop_footer_branch
    %16 = sbr.rel target = $region3
  $region8: #{fcdensenet_forward.20} parent=0 // loop_exit
    _

</llo_original>
